<compile_context>
chip_gen: v7x
topology: tpu7x:2x2x1
jax: 0.10.0
libtpu: 0.0.40
codegen_flags: <defaults>
</compile_context>

<pallas_src>
import jax
import jax.numpy as jnp
import numpy as np
from jax import lax
from jax.experimental import pallas as pl
from jax.experimental.pallas import tpu as pltpu

# ----------------------------- problem sizes -------------------------------
B = 2          # batch (logical)
BP = 8         # batch padded to a full sublane tile
S = 8          # source sequence length
T = 8          # target sequence length
E = 32         # embedding dim
H = 32         # hidden dim
V = 16         # (trg) vocabulary size
SRC_VOCAB = 16 # source vocabulary size


# ------------------------------ Pallas kernel -------------------------------
def enc_dec_kernel(src_ref, trg_ref, p_enc_ref, p_dec_ref,
                   wih_e_ref, whh_e_ref, bih_e_ref, bhh_e_ref,
                   wih_d_ref, whh_d_ref, bih_d_ref, bhh_d_ref,
                   wbr_ref, bbr_ref,
                   watt_ref, wv_ref, bv_ref, wgen_ref, bgen_ref,
                   logp_ref, hid_ref,
                   gi_er, gi_ez, gi_en, gi_dr, gi_dz, gi_dn,
                   enc_out_ref, dec_hid_ref):
    f32 = jnp.float32

    # --- hoisted input-side GRU projections (one batched MXU pass per gate) ---
    src_flat = src_ref[...].reshape(S * BP, E)
    trg_flat = trg_ref[...].reshape(T * BP, E)

    gi_er[...] = (jnp.dot(src_flat, wih_e_ref[0], preferred_element_type=f32)
                  + bih_e_ref[0]).reshape(S, BP, H)
    gi_ez[...] = (jnp.dot(src_flat, wih_e_ref[1], preferred_element_type=f32)
                  + bih_e_ref[1]).reshape(S, BP, H)
    gi_en[...] = (jnp.dot(src_flat, wih_e_ref[2], preferred_element_type=f32)
                  + bih_e_ref[2]).reshape(S, BP, H)
    gi_dr[...] = (jnp.dot(trg_flat, wih_d_ref[0], preferred_element_type=f32)
                  + bih_d_ref[0]).reshape(T, BP, H)
    gi_dz[...] = (jnp.dot(trg_flat, wih_d_ref[1], preferred_element_type=f32)
                  + bih_d_ref[1]).reshape(T, BP, H)
    gi_dn[...] = (jnp.dot(trg_flat, wih_d_ref[2], preferred_element_type=f32)
                  + bih_d_ref[2]).reshape(T, BP, H)

    # --- hoisted recurrent weights / biases, pre-split per gate [r|z|n] ---
    whh_e_r, whh_e_z, whh_e_n = whh_e_ref[0], whh_e_ref[1], whh_e_ref[2]
    bhh_e_r, bhh_e_z, bhh_e_n = bhh_e_ref[0], bhh_e_ref[1], bhh_e_ref[2]
    whh_d_r, whh_d_z, whh_d_n = whh_d_ref[0], whh_d_ref[1], whh_d_ref[2]
    bhh_d_r, bhh_d_z, bhh_d_n = bhh_d_ref[0], bhh_d_ref[1], bhh_d_ref[2]

    # ---------------- encoder GRU: only h @ W_hh on the serial path ----------
    def enc_step(t, h):
        gh_r = jnp.dot(h, whh_e_r, preferred_element_type=f32) + bhh_e_r
        gh_z = jnp.dot(h, whh_e_z, preferred_element_type=f32) + bhh_e_z
        gh_n = jnp.dot(h, whh_e_n, preferred_element_type=f32) + bhh_e_n
        r = jax.nn.sigmoid(gi_er[t] + gh_r)
        z = jax.nn.sigmoid(gi_ez[t] + gh_z)
        n = jnp.tanh(gi_en[t] + r * gh_n)
        h_new = (1.0 - z) * n + z * h
        enc_out_ref[t] = h_new          # full-sublane (8, 32) store
        return h_new

    enc_hidden = lax.fori_loop(0, S, enc_step, jnp.zeros((BP, H), f32),
                               unroll=True)

    # bridge: initial decoder hidden from final encoder hidden
    dec_h0 = jnp.tanh(jnp.dot(enc_hidden, wbr_ref[...],
                              preferred_element_type=f32) + bbr_ref[...])

    # ---------------- decoder GRU: attention/generator hoisted out -----------
    def dec_step(t, h):
        gh_r = jnp.dot(h, whh_d_r, preferred_element_type=f32) + bhh_d_r
        gh_z = jnp.dot(h, whh_d_z, preferred_element_type=f32) + bhh_d_z
        gh_n = jnp.dot(h, whh_d_n, preferred_element_type=f32) + bhh_d_n
        r = jax.nn.sigmoid(gi_dr[t] + gh_r)
        z = jax.nn.sigmoid(gi_dz[t] + gh_z)
        n = jnp.tanh(gi_dn[t] + r * gh_n)
        h_new = (1.0 - z) * n + z * h
        dec_hid_ref[t] = h_new
        return h_new

    dec_hidden = lax.fori_loop(0, T, dec_step, dec_h0, unroll=True)
    hid_ref[...] = dec_hidden

    # ---------------- batched post-pass: attention + generator ---------------
    # time-major -> batch-major via constant permutation matmul (MXU, layout-safe)
    enc_flat_tm = enc_out_ref[...].reshape(S * BP, H)
    dec_flat_tm = dec_hid_ref[...].reshape(T * BP, H)
    enc_bt = jnp.dot(p_enc_ref[...], enc_flat_tm,
                     preferred_element_type=f32).reshape(BP, S, H)
    dec_bt_flat = jnp.dot(p_dec_ref[...], dec_flat_tm,
                          preferred_element_type=f32)          # (BP*T, H), row = b*T+t

    # Luong "general" attention, batched over all (b, t) at once.
    q_bt = jnp.dot(dec_bt_flat, watt_ref[...],
                   preferred_element_type=f32).reshape(BP, T, H)
    scores = jnp.einsum('bth,bsh->bts', q_bt, enc_bt,
                        preferred_element_type=f32)             # (BP, T, S)
    m = jnp.max(scores, axis=-1, keepdims=True)
    e = jnp.exp(scores - m)
    alphas = e * pl.reciprocal(jnp.sum(e, axis=-1, keepdims=True), approx=True)
    context = jnp.einsum('bts,bsh->bth', alphas, enc_bt,
                         preferred_element_type=f32)            # (BP, T, H)

    # attention vector = tanh(W_v [context ; hidden] + b_v)
    att = jnp.tanh(
        jnp.dot(context.reshape(BP * T, H), wv_ref[0], preferred_element_type=f32)
        + jnp.dot(dec_bt_flat, wv_ref[1], preferred_element_type=f32)
        + bv_ref[...])                                          # (BP*T, H)

    # generator: vocab projection + log_softmax, single slab store
    logits = jnp.dot(att, wgen_ref[...], preferred_element_type=f32) + bgen_ref[...]
    lmax = jnp.max(logits, axis=-1, keepdims=True)
    lse = lmax + jnp.log(jnp.sum(jnp.exp(logits - lmax), axis=-1, keepdims=True))
    logp_ref[...] = logits - lse                                # (BP*T, V)


# ------------------------------ wrapper helpers ------------------------------
def _split_gate_w(w):   # packed (X, 3H) -> (3, X, H), gate order [r|z|n]
    return jnp.stack([w[:, :H], w[:, H:2 * H], w[:, 2 * H:]], axis=0)


def _split_gate_b(b):   # packed (1, 3H) -> (3, 1, H)
    return jnp.stack([b[:, :H], b[:, H:2 * H], b[:, 2 * H:]], axis=0)


def _time_to_batch_perm(n_time, n_batch):
    # P such that (P @ x_time_major_flat)[b*n_time + t] = x_time_major_flat[t*n_batch + b]
    p = np.zeros((n_batch * n_time, n_time * n_batch), np.float32)
    for b in range(n_batch):
        for t in range(n_time):
            p[b * n_time + t, t * n_batch + b] = 1.0
    return jnp.asarray(p)


# ------------------------------ wrapper -------------------------------------
def encoder_decoder_forward(src, trg, params):
    """src: (B, S) int32 token ids, trg: (B, T) int32 token ids.

    Returns (log_probs (B, T, V), decoder_hidden (B, H))."""
    # TODO(synk): embedding lookup (token-id gather) stays in XLA glue; a Pallas
    # gather kernel adds nothing at these sizes.
    # Gather directly in time-major order; pad batch to a full sublane tile.
    src_ids = jnp.pad(jnp.transpose(src), ((0, 0), (0, BP - B)))   # (S, BP)
    trg_ids = jnp.pad(jnp.transpose(trg), ((0, 0), (0, BP - B)))   # (T, BP)
    src_emb = jnp.take(params["src_emb_table"], src_ids, axis=0).astype(jnp.float32)
    trg_emb = jnp.take(params["trg_emb_table"], trg_ids, axis=0).astype(jnp.float32)

    ins = [
        src_emb, trg_emb,
        _time_to_batch_perm(S, BP), _time_to_batch_perm(T, BP),
        _split_gate_w(params["wih_e"]), _split_gate_w(params["whh_e"]),
        _split_gate_b(params["bih_e"]), _split_gate_b(params["bhh_e"]),
        _split_gate_w(params["wih_d"]), _split_gate_w(params["whh_d"]),
        _split_gate_b(params["bih_d"]), _split_gate_b(params["bhh_d"]),
        params["wbr"], params["bbr"],
        params["watt"],
        jnp.stack([params["wv"][:H], params["wv"][H:]], axis=0),   # (2, H, H)
        params["bv"], params["wgen"], params["bgen"],
    ]

    logp_flat, hid = pl.pallas_call(
        enc_dec_kernel,
        out_shape=(
            jax.ShapeDtypeStruct((BP * T, V), jnp.float32),
            jax.ShapeDtypeStruct((BP, H), jnp.float32),
        ),
        in_specs=[pl.BlockSpec(memory_space=pltpu.MemorySpace.VMEM)] * len(ins),
        out_specs=(
            pl.BlockSpec(memory_space=pltpu.MemorySpace.VMEM),
            pl.BlockSpec(memory_space=pltpu.MemorySpace.VMEM),
        ),
        scratch_shapes=[
            pltpu.VMEM((S, BP, H), jnp.float32),   # gi_er
            pltpu.VMEM((S, BP, H), jnp.float32),   # gi_ez
            pltpu.VMEM((S, BP, H), jnp.float32),   # gi_en
            pltpu.VMEM((T, BP, H), jnp.float32),   # gi_dr
            pltpu.VMEM((T, BP, H), jnp.float32),   # gi_dz
            pltpu.VMEM((T, BP, H), jnp.float32),   # gi_dn
            pltpu.VMEM((S, BP, H), jnp.float32),   # encoder outputs
            pltpu.VMEM((T, BP, H), jnp.float32),   # decoder hiddens
        ],
    )(*ins)

    log_probs = logp_flat.reshape(BP, T, V)[:B]    # batch-first (B, T, V)
    dec_hidden = hid[:B]
    return log_probs, dec_hidden


# --------------------------- parameter init ----------------------------------
def init_params(key):
    ks = jax.random.split(key, 16)

    def normal(k, shape, scale=0.1):
        return scale * jax.random.normal(k, shape, jnp.float32)

    return {
        "src_emb_table": normal(ks[0], (SRC_VOCAB, E), 0.5),
        "trg_emb_table": normal(ks[1], (V, E), 0.5),
        # encoder GRU (gates packed [r|z|n], PyTorch convention)
        "wih_e": normal(ks[2], (E, 3 * H)),
        "whh_e": normal(ks[3], (H, 3 * H)),
        "bih_e": normal(ks[4], (1, 3 * H)),
        "bhh_e": normal(ks[5], (1, 3 * H)),
        # bridge
        "wbr": normal(ks[6], (H, H)),
        "bbr": normal(ks[7], (1, H)),
        # decoder GRU
        "wih_d": normal(ks[8], (E, 3 * H)),
        "whh_d": normal(ks[9], (H, 3 * H)),
        "bih_d": normal(ks[10], (1, 3 * H)),
        "bhh_d": normal(ks[11], (1, 3 * H)),
        # attention + attention-vector projection
        "watt": normal(ks[12], (H, H)),
        "wv": normal(ks[13], (2 * H, H)),
        "bv": normal(ks[14], (1, H)),
        # generator
        "wgen": normal(ks[15], (H, V)),
        "bgen": jnp.zeros((1, V), jnp.float32),
    }


# ------------------------------- main ----------------------------------------
if __name__ == "__main__":
    key = jax.random.PRNGKey(0)
    kp, ks, kt = jax.random.split(key, 3)

    params = init_params(kp)
    src = jax.random.randint(ks, (B, S), 0, SRC_VOCAB, dtype=jnp.int32)
    trg = jax.random.randint(kt, (B, T), 0, V, dtype=jnp.int32)

    log_probs, dec_hidden = jax.jit(encoder_decoder_forward)(src, trg, params)
    jax.block_until_ready((log_probs, dec_hidden))

    assert log_probs.shape == (B, T, V)
    assert dec_hidden.shape == (B, H)
    # log_softmax rows must sum to ~1 in prob space
    assert bool(jnp.allclose(jnp.sum(jnp.exp(log_probs), axis=-1), 1.0, atol=1e-4))
    assert bool(jnp.all(jnp.isfinite(log_probs)))

    print("KERNEL_OK")
</pallas_src>

<mosaic_0001>
module attributes {stable_mosaic.version = 11 : i64} {
  func.func @enc_dec_kernel(%arg0: memref<8x8x32xf32, #tpu.memory_space<vmem>>, %arg1: memref<8x8x32xf32, #tpu.memory_space<vmem>>, %arg2: memref<64x64xf32, #tpu.memory_space<vmem>>, %arg3: memref<64x64xf32, #tpu.memory_space<vmem>>, %arg4: memref<3x32x32xf32, #tpu.memory_space<vmem>>, %arg5: memref<3x32x32xf32, #tpu.memory_space<vmem>>, %arg6: memref<3x1x32xf32, #tpu.memory_space<vmem>>, %arg7: memref<3x1x32xf32, #tpu.memory_space<vmem>>, %arg8: memref<3x32x32xf32, #tpu.memory_space<vmem>>, %arg9: memref<3x32x32xf32, #tpu.memory_space<vmem>>, %arg10: memref<3x1x32xf32, #tpu.memory_space<vmem>>, %arg11: memref<3x1x32xf32, #tpu.memory_space<vmem>>, %arg12: memref<32x32xf32, #tpu.memory_space<vmem>>, %arg13: memref<1x32xf32, #tpu.memory_space<vmem>>, %arg14: memref<32x32xf32, #tpu.memory_space<vmem>>, %arg15: memref<2x32x32xf32, #tpu.memory_space<vmem>>, %arg16: memref<1x32xf32, #tpu.memory_space<vmem>>, %arg17: memref<32x16xf32, #tpu.memory_space<vmem>>, %arg18: memref<1x16xf32, #tpu.memory_space<vmem>>, %arg19: memref<64x16xf32, #tpu.memory_space<vmem>>, %arg20: memref<8x32xf32, #tpu.memory_space<vmem>>, %arg21: memref<8x8x32xf32, #tpu.memory_space<vmem>>, %arg22: memref<8x8x32xf32, #tpu.memory_space<vmem>>, %arg23: memref<8x8x32xf32, #tpu.memory_space<vmem>>, %arg24: memref<8x8x32xf32, #tpu.memory_space<vmem>>, %arg25: memref<8x8x32xf32, #tpu.memory_space<vmem>>, %arg26: memref<8x8x32xf32, #tpu.memory_space<vmem>>, %arg27: memref<8x8x32xf32, #tpu.memory_space<vmem>>, %arg28: memref<8x8x32xf32, #tpu.memory_space<vmem>>) attributes {dimension_semantics = [], scalar_prefetch = 0 : i64, scratch_operands = 8 : i64, tpu.core_type = #tpu.core_type<tc>} {
    %c0 = arith.constant 0 : index
    %c0_0 = arith.constant 0 : index
    %c0_1 = arith.constant 0 : index
    %0 = vector.load %arg0[%c0, %c0_0, %c0_1] : memref<8x8x32xf32, #tpu.memory_space<vmem>>, vector<8x8x32xf32>
    %1 = vector.shape_cast %0 : vector<8x8x32xf32> to vector<64x32xf32>
    %c0_2 = arith.constant 0 : index
    %c0_3 = arith.constant 0 : index
    %c0_4 = arith.constant 0 : index
    %2 = vector.load %arg1[%c0_2, %c0_3, %c0_4] : memref<8x8x32xf32, #tpu.memory_space<vmem>>, vector<8x8x32xf32>
    %3 = vector.shape_cast %2 : vector<8x8x32xf32> to vector<64x32xf32>
    %c0_5 = arith.constant 0 : index
    %c0_6 = arith.constant 0 : index
    %c0_7 = arith.constant 0 : index
    %4 = vector.load %arg4[%c0_5, %c0_6, %c0_7] : memref<3x32x32xf32, #tpu.memory_space<vmem>>, vector<1x32x32xf32>
    %5 = vector.shape_cast %4 : vector<1x32x32xf32> to vector<32x32xf32>
    %cst = arith.constant dense<0.000000e+00> : vector<64x32xf32>
    %6 = tpu.matmul %1, %5, %cst {dimension_numbers = #tpu.dot_dimension_numbers<[1], [0], [0], [1], [0, 0, 1, 1], [], []>} : vector<64x32xf32>, vector<32x32xf32>, vector<64x32xf32> -> vector<64x32xf32>
    %c0_8 = arith.constant 0 : index
    %c0_9 = arith.constant 0 : index
    %c0_10 = arith.constant 0 : index
    %7 = vector.load %arg6[%c0_8, %c0_9, %c0_10] : memref<3x1x32xf32, #tpu.memory_space<vmem>>, vector<1x1x32xf32>
    %8 = vector.shape_cast %7 : vector<1x1x32xf32> to vector<1x32xf32>
    %9 = vector.broadcast %8 : vector<1x32xf32> to vector<64x32xf32>
    %10 = arith.addf %6, %9 : vector<64x32xf32>
    %11 = vector.shape_cast %10 : vector<64x32xf32> to vector<8x8x32xf32>
    %c0_11 = arith.constant 0 : index
    %c0_12 = arith.constant 0 : index
    %c0_13 = arith.constant 0 : index
    %12 = vector.load %arg21[%c0_11, %c0_12, %c0_13] : memref<8x8x32xf32, #tpu.memory_space<vmem>>, vector<8x8x32xf32>
    tpu.vector_store %arg21[%c0_11, %c0_12, %c0_13], %11 {strides = array<i32>} : memref<8x8x32xf32, #tpu.memory_space<vmem>>, vector<8x8x32xf32>,
    %c1 = arith.constant 1 : index
    %c0_14 = arith.constant 0 : index
    %c0_15 = arith.constant 0 : index
    %13 = vector.load %arg4[%c1, %c0_14, %c0_15] : memref<3x32x32xf32, #tpu.memory_space<vmem>>, vector<1x32x32xf32>
    %14 = vector.shape_cast %13 : vector<1x32x32xf32> to vector<32x32xf32>
    %cst_16 = arith.constant dense<0.000000e+00> : vector<64x32xf32>
    %15 = tpu.matmul %1, %14, %cst_16 {dimension_numbers = #tpu.dot_dimension_numbers<[1], [0], [0], [1], [0, 0, 1, 1], [], []>} : vector<64x32xf32>, vector<32x32xf32>, vector<64x32xf32> -> vector<64x32xf32>
    %c1_17 = arith.constant 1 : index
    %c0_18 = arith.constant 0 : index
    %c0_19 = arith.constant 0 : index
    %16 = vector.load %arg6[%c1_17, %c0_18, %c0_19] : memref<3x1x32xf32, #tpu.memory_space<vmem>>, vector<1x1x32xf32>
    %17 = vector.shape_cast %16 : vector<1x1x32xf32> to vector<1x32xf32>
    %18 = vector.broadcast %17 : vector<1x32xf32> to vector<64x32xf32>
    %19 = arith.addf %15, %18 : vector<64x32xf32>
    %20 = vector.shape_cast %19 : vector<64x32xf32> to vector<8x8x32xf32>
    %c0_20 = arith.constant 0 : index
    %c0_21 = arith.constant 0 : index
    %c0_22 = arith.constant 0 : index
    %21 = vector.load %arg22[%c0_20, %c0_21, %c0_22] : memref<8x8x32xf32, #tpu.memory_space<vmem>>, vector<8x8x32xf32>
    tpu.vector_store %arg22[%c0_20, %c0_21, %c0_22], %20 {strides = array<i32>} : memref<8x8x32xf32, #tpu.memory_space<vmem>>, vector<8x8x32xf32>,
    %c2 = arith.constant 2 : index
    %c0_23 = arith.constant 0 : index
    %c0_24 = arith.constant 0 : index
    %22 = vector.load %arg4[%c2, %c0_23, %c0_24] : memref<3x32x32xf32, #tpu.memory_space<vmem>>, vector<1x32x32xf32>
    %23 = vector.shape_cast %22 : vector<1x32x32xf32> to vector<32x32xf32>
    %cst_25 = arith.constant dense<0.000000e+00> : vector<64x32xf32>
    %24 = tpu.matmul %1, %23, %cst_25 {dimension_numbers = #tpu.dot_dimension_numbers<[1], [0], [0], [1], [0, 0, 1, 1], [], []>} : vector<64x32xf32>, vector<32x32xf32>, vector<64x32xf32> -> vector<64x32xf32>
    %c2_26 = arith.constant 2 : index
    %c0_27 = arith.constant 0 : index
    %c0_28 = arith.constant 0 : index
    %25 = vector.load %arg6[%c2_26, %c0_27, %c0_28] : memref<3x1x32xf32, #tpu.memory_space<vmem>>, vector<1x1x32xf32>
    %26 = vector.shape_cast %25 : vector<1x1x32xf32> to vector<1x32xf32>
    %27 = vector.broadcast %26 : vector<1x32xf32> to vector<64x32xf32>
    %28 = arith.addf %24, %27 : vector<64x32xf32>
    %29 = vector.shape_cast %28 : vector<64x32xf32> to vector<8x8x32xf32>
    %c0_29 = arith.constant 0 : index
    %c0_30 = arith.constant 0 : index
    %c0_31 = arith.constant 0 : index
    %30 = vector.load %arg23[%c0_29, %c0_30, %c0_31] : memref<8x8x32xf32, #tpu.memory_space<vmem>>, vector<8x8x32xf32>
    tpu.vector_store %arg23[%c0_29, %c0_30, %c0_31], %29 {strides = array<i32>} : memref<8x8x32xf32, #tpu.memory_space<vmem>>, vector<8x8x32xf32>,
    %c0_32 = arith.constant 0 : index
    %c0_33 = arith.constant 0 : index
    %c0_34 = arith.constant 0 : index
    %31 = vector.load %arg8[%c0_32, %c0_33, %c0_34] : memref<3x32x32xf32, #tpu.memory_space<vmem>>, vector<1x32x32xf32>
    %32 = vector.shape_cast %31 : vector<1x32x32xf32> to vector<32x32xf32>
    %cst_35 = arith.constant dense<0.000000e+00> : vector<64x32xf32>
    %33 = tpu.matmul %3, %32, %cst_35 {dimension_numbers = #tpu.dot_dimension_numbers<[1], [0], [0], [1], [0, 0, 1, 1], [], []>} : vector<64x32xf32>, vector<32x32xf32>, vector<64x32xf32> -> vector<64x32xf32>
    %c0_36 = arith.constant 0 : index
    %c0_37 = arith.constant 0 : index
    %c0_38 = arith.constant 0 : index
    %34 = vector.load %arg10[%c0_36, %c0_37, %c0_38] : memref<3x1x32xf32, #tpu.memory_space<vmem>>, vector<1x1x32xf32>
    %35 = vector.shape_cast %34 : vector<1x1x32xf32> to vector<1x32xf32>
    %36 = vector.broadcast %35 : vector<1x32xf32> to vector<64x32xf32>
    %37 = arith.addf %33, %36 : vector<64x32xf32>
    %38 = vector.shape_cast %37 : vector<64x32xf32> to vector<8x8x32xf32>
    %c0_39 = arith.constant 0 : index
    %c0_40 = arith.constant 0 : index
    %c0_41 = arith.constant 0 : index
    %39 = vector.load %arg24[%c0_39, %c0_40, %c0_41] : memref<8x8x32xf32, #tpu.memory_space<vmem>>, vector<8x8x32xf32>
    tpu.vector_store %arg24[%c0_39, %c0_40, %c0_41], %38 {strides = array<i32>} : memref<8x8x32xf32, #tpu.memory_space<vmem>>, vector<8x8x32xf32>,
    %c1_42 = arith.constant 1 : index
    %c0_43 = arith.constant 0 : index
    %c0_44 = arith.constant 0 : index
    %40 = vector.load %arg8[%c1_42, %c0_43, %c0_44] : memref<3x32x32xf32, #tpu.memory_space<vmem>>, vector<1x32x32xf32>
    %41 = vector.shape_cast %40 : vector<1x32x32xf32> to vector<32x32xf32>
    %cst_45 = arith.constant dense<0.000000e+00> : vector<64x32xf32>
    %42 = tpu.matmul %3, %41, %cst_45 {dimension_numbers = #tpu.dot_dimension_numbers<[1], [0], [0], [1], [0, 0, 1, 1], [], []>} : vector<64x32xf32>, vector<32x32xf32>, vector<64x32xf32> -> vector<64x32xf32>
    %c1_46 = arith.constant 1 : index
    %c0_47 = arith.constant 0 : index
    %c0_48 = arith.constant 0 : index
    %43 = vector.load %arg10[%c1_46, %c0_47, %c0_48] : memref<3x1x32xf32, #tpu.memory_space<vmem>>, vector<1x1x32xf32>
    %44 = vector.shape_cast %43 : vector<1x1x32xf32> to vector<1x32xf32>
    %45 = vector.broadcast %44 : vector<1x32xf32> to vector<64x32xf32>
    %46 = arith.addf %42, %45 : vector<64x32xf32>
    %47 = vector.shape_cast %46 : vector<64x32xf32> to vector<8x8x32xf32>
    %c0_49 = arith.constant 0 : index
    %c0_50 = arith.constant 0 : index
    %c0_51 = arith.constant 0 : index
    %48 = vector.load %arg25[%c0_49, %c0_50, %c0_51] : memref<8x8x32xf32, #tpu.memory_space<vmem>>, vector<8x8x32xf32>
    tpu.vector_store %arg25[%c0_49, %c0_50, %c0_51], %47 {strides = array<i32>} : memref<8x8x32xf32, #tpu.memory_space<vmem>>, vector<8x8x32xf32>,
    %c2_52 = arith.constant 2 : index
    %c0_53 = arith.constant 0 : index
    %c0_54 = arith.constant 0 : index
    %49 = vector.load %arg8[%c2_52, %c0_53, %c0_54] : memref<3x32x32xf32, #tpu.memory_space<vmem>>, vector<1x32x32xf32>
    %50 = vector.shape_cast %49 : vector<1x32x32xf32> to vector<32x32xf32>
    %cst_55 = arith.constant dense<0.000000e+00> : vector<64x32xf32>
    %51 = tpu.matmul %3, %50, %cst_55 {dimension_numbers = #tpu.dot_dimension_numbers<[1], [0], [0], [1], [0, 0, 1, 1], [], []>} : vector<64x32xf32>, vector<32x32xf32>, vector<64x32xf32> -> vector<64x32xf32>
    %c2_56 = arith.constant 2 : index
    %c0_57 = arith.constant 0 : index
    %c0_58 = arith.constant 0 : index
    %52 = vector.load %arg10[%c2_56, %c0_57, %c0_58] : memref<3x1x32xf32, #tpu.memory_space<vmem>>, vector<1x1x32xf32>
    %53 = vector.shape_cast %52 : vector<1x1x32xf32> to vector<1x32xf32>
    %54 = vector.broadcast %53 : vector<1x32xf32> to vector<64x32xf32>
    %55 = arith.addf %51, %54 : vector<64x32xf32>
    %56 = vector.shape_cast %55 : vector<64x32xf32> to vector<8x8x32xf32>
    %c0_59 = arith.constant 0 : index
    %c0_60 = arith.constant 0 : index
    %c0_61 = arith.constant 0 : index
    %57 = vector.load %arg26[%c0_59, %c0_60, %c0_61] : memref<8x8x32xf32, #tpu.memory_space<vmem>>, vector<8x8x32xf32>
    tpu.vector_store %arg26[%c0_59, %c0_60, %c0_61], %56 {strides = array<i32>} : memref<8x8x32xf32, #tpu.memory_space<vmem>>, vector<8x8x32xf32>,
    %c0_62 = arith.constant 0 : index
    %c0_63 = arith.constant 0 : index
    %c0_64 = arith.constant 0 : index
    %58 = vector.load %arg5[%c0_62, %c0_63, %c0_64] : memref<3x32x32xf32, #tpu.memory_space<vmem>>, vector<1x32x32xf32>
    %59 = vector.shape_cast %58 : vector<1x32x32xf32> to vector<32x32xf32>
    %c1_65 = arith.constant 1 : index
    %c0_66 = arith.constant 0 : index
    %c0_67 = arith.constant 0 : index
    %60 = vector.load %arg5[%c1_65, %c0_66, %c0_67] : memref<3x32x32xf32, #tpu.memory_space<vmem>>, vector<1x32x32xf32>
    %61 = vector.shape_cast %60 : vector<1x32x32xf32> to vector<32x32xf32>
    %c2_68 = arith.constant 2 : index
    %c0_69 = arith.constant 0 : index
    %c0_70 = arith.constant 0 : index
    %62 = vector.load %arg5[%c2_68, %c0_69, %c0_70] : memref<3x32x32xf32, #tpu.memory_space<vmem>>, vector<1x32x32xf32>
    %63 = vector.shape_cast %62 : vector<1x32x32xf32> to vector<32x32xf32>
    %c0_71 = arith.constant 0 : index
    %c0_72 = arith.constant 0 : index
    %c0_73 = arith.constant 0 : index
    %64 = vector.load %arg7[%c0_71, %c0_72, %c0_73] : memref<3x1x32xf32, #tpu.memory_space<vmem>>, vector<1x1x32xf32>
    %65 = vector.shape_cast %64 : vector<1x1x32xf32> to vector<1x32xf32>
    %c1_74 = arith.constant 1 : index
    %c0_75 = arith.constant 0 : index
    %c0_76 = arith.constant 0 : index
    %66 = vector.load %arg7[%c1_74, %c0_75, %c0_76] : memref<3x1x32xf32, #tpu.memory_space<vmem>>, vector<1x1x32xf32>
    %67 = vector.shape_cast %66 : vector<1x1x32xf32> to vector<1x32xf32>
    %c2_77 = arith.constant 2 : index
    %c0_78 = arith.constant 0 : index
    %c0_79 = arith.constant 0 : index
    %68 = vector.load %arg7[%c2_77, %c0_78, %c0_79] : memref<3x1x32xf32, #tpu.memory_space<vmem>>, vector<1x1x32xf32>
    %69 = vector.shape_cast %68 : vector<1x1x32xf32> to vector<1x32xf32>
    %c0_80 = arith.constant 0 : index
    %c0_81 = arith.constant 0 : index
    %c0_82 = arith.constant 0 : index
    %70 = vector.load %arg9[%c0_80, %c0_81, %c0_82] : memref<3x32x32xf32, #tpu.memory_space<vmem>>, vector<1x32x32xf32>
    %71 = vector.shape_cast %70 : vector<1x32x32xf32> to vector<32x32xf32>
    %c1_83 = arith.constant 1 : index
    %c0_84 = arith.constant 0 : index
    %c0_85 = arith.constant 0 : index
    %72 = vector.load %arg9[%c1_83, %c0_84, %c0_85] : memref<3x32x32xf32, #tpu.memory_space<vmem>>, vector<1x32x32xf32>
    %73 = vector.shape_cast %72 : vector<1x32x32xf32> to vector<32x32xf32>
    %c2_86 = arith.constant 2 : index
    %c0_87 = arith.constant 0 : index
    %c0_88 = arith.constant 0 : index
    %74 = vector.load %arg9[%c2_86, %c0_87, %c0_88] : memref<3x32x32xf32, #tpu.memory_space<vmem>>, vector<1x32x32xf32>
    %75 = vector.shape_cast %74 : vector<1x32x32xf32> to vector<32x32xf32>
    %c0_89 = arith.constant 0 : index
    %c0_90 = arith.constant 0 : index
    %c0_91 = arith.constant 0 : index
    %76 = vector.load %arg11[%c0_89, %c0_90, %c0_91] : memref<3x1x32xf32, #tpu.memory_space<vmem>>, vector<1x1x32xf32>
    %77 = vector.shape_cast %76 : vector<1x1x32xf32> to vector<1x32xf32>
    %c1_92 = arith.constant 1 : index
    %c0_93 = arith.constant 0 : index
    %c0_94 = arith.constant 0 : index
    %78 = vector.load %arg11[%c1_92, %c0_93, %c0_94] : memref<3x1x32xf32, #tpu.memory_space<vmem>>, vector<1x1x32xf32>
    %79 = vector.shape_cast %78 : vector<1x1x32xf32> to vector<1x32xf32>
    %c2_95 = arith.constant 2 : index
    %c0_96 = arith.constant 0 : index
    %c0_97 = arith.constant 0 : index
    %80 = vector.load %arg11[%c2_95, %c0_96, %c0_97] : memref<3x1x32xf32, #tpu.memory_space<vmem>>, vector<1x1x32xf32>
    %81 = vector.shape_cast %80 : vector<1x1x32xf32> to vector<1x32xf32>
    %cst_98 = arith.constant 0.000000e+00 : f32
    %82 = vector.broadcast %cst_98 : f32 to vector<8x32xf32>
    %c0_i32 = arith.constant 0 : i32
    %cst_99 = arith.constant dense<0.000000e+00> : vector<8x32xf32>
    %83 = tpu.matmul %82, %59, %cst_99 {dimension_numbers = #tpu.dot_dimension_numbers<[1], [0], [0], [1], [0, 0, 1, 1], [], []>} : vector<8x32xf32>, vector<32x32xf32>, vector<8x32xf32> -> vector<8x32xf32>
    %84 = vector.broadcast %65 : vector<1x32xf32> to vector<8x32xf32>
    %85 = arith.addf %83, %84 : vector<8x32xf32>
    %cst_100 = arith.constant dense<0.000000e+00> : vector<8x32xf32>
    %86 = tpu.matmul %82, %61, %cst_100 {dimension_numbers = #tpu.dot_dimension_numbers<[1], [0], [0], [1], [0, 0, 1, 1], [], []>} : vector<8x32xf32>, vector<32x32xf32>, vector<8x32xf32> -> vector<8x32xf32>
    %87 = vector.broadcast %67 : vector<1x32xf32> to vector<8x32xf32>
    %88 = arith.addf %86, %87 : vector<8x32xf32>
    %cst_101 = arith.constant dense<0.000000e+00> : vector<8x32xf32>
    %89 = tpu.matmul %82, %63, %cst_101 {dimension_numbers = #tpu.dot_dimension_numbers<[1], [0], [0], [1], [0, 0, 1, 1], [], []>} : vector<8x32xf32>, vector<32x32xf32>, vector<8x32xf32> -> vector<8x32xf32>
    %90 = vector.broadcast %69 : vector<1x32xf32> to vector<8x32xf32>
    %91 = arith.addf %89, %90 : vector<8x32xf32>
    %92 = arith.index_cast %c0_i32 : i32 to index
    %c0_102 = arith.constant 0 : index
    %c0_103 = arith.constant 0 : index
    %93 = vector.load %arg21[%92, %c0_102, %c0_103] : memref<8x8x32xf32, #tpu.memory_space<vmem>>, vector<1x8x32xf32>
    %94 = vector.shape_cast %93 : vector<1x8x32xf32> to vector<8x32xf32>
    %95 = arith.addf %94, %85 : vector<8x32xf32>
    %96 = arith.negf %95 : vector<8x32xf32>
    %97 = math.exp %96 : vector<8x32xf32>
    %cst_104 = arith.constant 1.000000e+00 : f32
    %98 = vector.broadcast %cst_104 : f32 to vector<8x32xf32>
    %99 = arith.addf %98, %97 : vector<8x32xf32>
    %100 = arith.divf %98, %99 : vector<8x32xf32>
    %101 = arith.index_cast %c0_i32 : i32 to index
    %c0_105 = arith.constant 0 : index
    %c0_106 = arith.constant 0 : index
    %102 = vector.load %arg22[%101, %c0_105, %c0_106] : memref<8x8x32xf32, #tpu.memory_space<vmem>>, vector<1x8x32xf32>
    %103 = vector.shape_cast %102 : vector<1x8x32xf32> to vector<8x32xf32>
    %104 = arith.addf %103, %88 : vector<8x32xf32>
    %105 = arith.negf %104 : vector<8x32xf32>
    %106 = math.exp %105 : vector<8x32xf32>
    %cst_107 = arith.constant 1.000000e+00 : f32
    %107 = vector.broadcast %cst_107 : f32 to vector<8x32xf32>
    %108 = arith.addf %107, %106 : vector<8x32xf32>
    %109 = arith.divf %107, %108 : vector<8x32xf32>
    %110 = arith.index_cast %c0_i32 : i32 to index
    %c0_108 = arith.constant 0 : index
    %c0_109 = arith.constant 0 : index
    %111 = vector.load %arg23[%110, %c0_108, %c0_109] : memref<8x8x32xf32, #tpu.memory_space<vmem>>, vector<1x8x32xf32>
    %112 = vector.shape_cast %111 : vector<1x8x32xf32> to vector<8x32xf32>
    %113 = arith.mulf %100, %91 : vector<8x32xf32>
    %114 = arith.addf %112, %113 : vector<8x32xf32>
    %115 = math.tanh %114 : vector<8x32xf32>
    %cst_110 = arith.constant 1.000000e+00 : f32
    %116 = vector.broadcast %cst_110 : f32 to vector<8x32xf32>
    %117 = arith.subf %116, %109 : vector<8x32xf32>
    %118 = arith.mulf %117, %115 : vector<8x32xf32>
    %119 = arith.mulf %109, %82 : vector<8x32xf32>
    %120 = arith.addf %118, %119 : vector<8x32xf32>
    %121 = arith.index_cast %c0_i32 : i32 to index
    %c0_111 = arith.constant 0 : index
    %c0_112 = arith.constant 0 : index
    %122 = vector.load %arg27[%121, %c0_111, %c0_112] : memref<8x8x32xf32, #tpu.memory_space<vmem>>, vector<1x8x32xf32>
    %123 = vector.shape_cast %122 : vector<1x8x32xf32> to vector<8x32xf32>
    %124 = vector.shape_cast %120 : vector<8x32xf32> to vector<1x8x32xf32>
    tpu.vector_store %arg27[%121, %c0_111, %c0_112], %124 {strides = array<i32>} : memref<8x8x32xf32, #tpu.memory_space<vmem>>, vector<1x8x32xf32>,
    %c1_i32 = arith.constant 1 : i32
    %cst_113 = arith.constant dense<0.000000e+00> : vector<8x32xf32>
    %125 = tpu.matmul %120, %59, %cst_113 {dimension_numbers = #tpu.dot_dimension_numbers<[1], [0], [0], [1], [0, 0, 1, 1], [], []>} : vector<8x32xf32>, vector<32x32xf32>, vector<8x32xf32> -> vector<8x32xf32>
    %126 = vector.broadcast %65 : vector<1x32xf32> to vector<8x32xf32>
    %127 = arith.addf %125, %126 : vector<8x32xf32>
    %cst_114 = arith.constant dense<0.000000e+00> : vector<8x32xf32>
    %128 = tpu.matmul %120, %61, %cst_114 {dimension_numbers = #tpu.dot_dimension_numbers<[1], [0], [0], [1], [0, 0, 1, 1], [], []>} : vector<8x32xf32>, vector<32x32xf32>, vector<8x32xf32> -> vector<8x32xf32>
    %129 = vector.broadcast %67 : vector<1x32xf32> to vector<8x32xf32>
    %130 = arith.addf %128, %129 : vector<8x32xf32>
    %cst_115 = arith.constant dense<0.000000e+00> : vector<8x32xf32>
    %131 = tpu.matmul %120, %63, %cst_115 {dimension_numbers = #tpu.dot_dimension_numbers<[1], [0], [0], [1], [0, 0, 1, 1], [], []>} : vector<8x32xf32>, vector<32x32xf32>, vector<8x32xf32> -> vector<8x32xf32>
    %132 = vector.broadcast %69 : vector<1x32xf32> to vector<8x32xf32>
    %133 = arith.addf %131, %132 : vector<8x32xf32>
    %134 = arith.index_cast %c1_i32 : i32 to index
    %c0_116 = arith.constant 0 : index
    %c0_117 = arith.constant 0 : index
    %135 = vector.load %arg21[%134, %c0_116, %c0_117] : memref<8x8x32xf32, #tpu.memory_space<vmem>>, vector<1x8x32xf32>
    %136 = vector.shape_cast %135 : vector<1x8x32xf32> to vector<8x32xf32>
    %137 = arith.addf %136, %127 : vector<8x32xf32>
    %138 = arith.negf %137 : vector<8x32xf32>
    %139 = math.exp %138 : vector<8x32xf32>
    %cst_118 = arith.constant 1.000000e+00 : f32
    %140 = vector.broadcast %cst_118 : f32 to vector<8x32xf32>
    %141 = arith.addf %140, %139 : vector<8x32xf32>
    %142 = arith.divf %140, %141 : vector<8x32xf32>
    %143 = arith.index_cast %c1_i32 : i32 to index
    %c0_119 = arith.constant 0 : index
    %c0_120 = arith.constant 0 : index
    %144 = vector.load %arg22[%143, %c0_119, %c0_120] : memref<8x8x32xf32, #tpu.memory_space<vmem>>, vector<1x8x32xf32>
    %145 = vector.shape_cast %144 : vector<1x8x32xf32> to vector<8x32xf32>
    %146 = arith.addf %145, %130 : vector<8x32xf32>
    %147 = arith.negf %146 : vector<8x32xf32>
    %148 = math.exp %147 : vector<8x32xf32>
    %cst_121 = arith.constant 1.000000e+00 : f32
    %149 = vector.broadcast %cst_121 : f32 to vector<8x32xf32>
    %150 = arith.addf %149, %148 : vector<8x32xf32>
    %151 = arith.divf %149, %150 : vector<8x32xf32>
    %152 = arith.index_cast %c1_i32 : i32 to index
    %c0_122 = arith.constant 0 : index
    %c0_123 = arith.constant 0 : index
    %153 = vector.load %arg23[%152, %c0_122, %c0_123] : memref<8x8x32xf32, #tpu.memory_space<vmem>>, vector<1x8x32xf32>
    %154 = vector.shape_cast %153 : vector<1x8x32xf32> to vector<8x32xf32>
    %155 = arith.mulf %142, %133 : vector<8x32xf32>
    %156 = arith.addf %154, %155 : vector<8x32xf32>
    %157 = math.tanh %156 : vector<8x32xf32>
    %cst_124 = arith.constant 1.000000e+00 : f32
    %158 = vector.broadcast %cst_124 : f32 to vector<8x32xf32>
    %159 = arith.subf %158, %151 : vector<8x32xf32>
    %160 = arith.mulf %159, %157 : vector<8x32xf32>
    %161 = arith.mulf %151, %120 : vector<8x32xf32>
    %162 = arith.addf %160, %161 : vector<8x32xf32>
    %163 = arith.index_cast %c1_i32 : i32 to index
    %c0_125 = arith.constant 0 : index
    %c0_126 = arith.constant 0 : index
    %164 = vector.load %arg27[%163, %c0_125, %c0_126] : memref<8x8x32xf32, #tpu.memory_space<vmem>>, vector<1x8x32xf32>
    %165 = vector.shape_cast %164 : vector<1x8x32xf32> to vector<8x32xf32>
    %166 = vector.shape_cast %162 : vector<8x32xf32> to vector<1x8x32xf32>
    tpu.vector_store %arg27[%163, %c0_125, %c0_126], %166 {strides = array<i32>} : memref<8x8x32xf32, #tpu.memory_space<vmem>>, vector<1x8x32xf32>,
    %c2_i32 = arith.constant 2 : i32
    %cst_127 = arith.constant dense<0.000000e+00> : vector<8x32xf32>
    %167 = tpu.matmul %162, %59, %cst_127 {dimension_numbers = #tpu.dot_dimension_numbers<[1], [0], [0], [1], [0, 0, 1, 1], [], []>} : vector<8x32xf32>, vector<32x32xf32>, vector<8x32xf32> -> vector<8x32xf32>
    %168 = vector.broadcast %65 : vector<1x32xf32> to vector<8x32xf32>
    %169 = arith.addf %167, %168 : vector<8x32xf32>
    %cst_128 = arith.constant dense<0.000000e+00> : vector<8x32xf32>
    %170 = tpu.matmul %162, %61, %cst_128 {dimension_numbers = #tpu.dot_dimension_numbers<[1], [0], [0], [1], [0, 0, 1, 1], [], []>} : vector<8x32xf32>, vector<32x32xf32>, vector<8x32xf32> -> vector<8x32xf32>
    %171 = vector.broadcast %67 : vector<1x32xf32> to vector<8x32xf32>
    %172 = arith.addf %170, %171 : vector<8x32xf32>
    %cst_129 = arith.constant dense<0.000000e+00> : vector<8x32xf32>
    %173 = tpu.matmul %162, %63, %cst_129 {dimension_numbers = #tpu.dot_dimension_numbers<[1], [0], [0], [1], [0, 0, 1, 1], [], []>} : vector<8x32xf32>, vector<32x32xf32>, vector<8x32xf32> -> vector<8x32xf32>
    %174 = vector.broadcast %69 : vector<1x32xf32> to vector<8x32xf32>
    %175 = arith.addf %173, %174 : vector<8x32xf32>
    %176 = arith.index_cast %c2_i32 : i32 to index
    %c0_130 = arith.constant 0 : index
    %c0_131 = arith.constant 0 : index
    %177 = vector.load %arg21[%176, %c0_130, %c0_131] : memref<8x8x32xf32, #tpu.memory_space<vmem>>, vector<1x8x32xf32>
    %178 = vector.shape_cast %177 : vector<1x8x32xf32> to vector<8x32xf32>
    %179 = arith.addf %178, %169 : vector<8x32xf32>
    %180 = arith.negf %179 : vector<8x32xf32>
    %181 = math.exp %180 : vector<8x32xf32>
    %cst_132 = arith.constant 1.000000e+00 : f32
    %182 = vector.broadcast %cst_132 : f32 to vector<8x32xf32>
    %183 = arith.addf %182, %181 : vector<8x32xf32>
    %184 = arith.divf %182, %183 : vector<8x32xf32>
    %185 = arith.index_cast %c2_i32 : i32 to index
    %c0_133 = arith.constant 0 : index
    %c0_134 = arith.constant 0 : index
    %186 = vector.load %arg22[%185, %c0_133, %c0_134] : memref<8x8x32xf32, #tpu.memory_space<vmem>>, vector<1x8x32xf32>
    %187 = vector.shape_cast %186 : vector<1x8x32xf32> to vector<8x32xf32>
    %188 = arith.addf %187, %172 : vector<8x32xf32>
    %189 = arith.negf %188 : vector<8x32xf32>
    %190 = math.exp %189 : vector<8x32xf32>
    %cst_135 = arith.constant 1.000000e+00 : f32
    %191 = vector.broadcast %cst_135 : f32 to vector<8x32xf32>
    %192 = arith.addf %191, %190 : vector<8x32xf32>
    %193 = arith.divf %191, %192 : vector<8x32xf32>
    %194 = arith.index_cast %c2_i32 : i32 to index
    %c0_136 = arith.constant 0 : index
    %c0_137 = arith.constant 0 : index
    %195 = vector.load %arg23[%194, %c0_136, %c0_137] : memref<8x8x32xf32, #tpu.memory_space<vmem>>, vector<1x8x32xf32>
    %196 = vector.shape_cast %195 : vector<1x8x32xf32> to vector<8x32xf32>
    %197 = arith.mulf %184, %175 : vector<8x32xf32>
    %198 = arith.addf %196, %197 : vector<8x32xf32>
    %199 = math.tanh %198 : vector<8x32xf32>
    %cst_138 = arith.constant 1.000000e+00 : f32
    %200 = vector.broadcast %cst_138 : f32 to vector<8x32xf32>
    %201 = arith.subf %200, %193 : vector<8x32xf32>
    %202 = arith.mulf %201, %199 : vector<8x32xf32>
    %203 = arith.mulf %193, %162 : vector<8x32xf32>
    %204 = arith.addf %202, %203 : vector<8x32xf32>
    %205 = arith.index_cast %c2_i32 : i32 to index
    %c0_139 = arith.constant 0 : index
    %c0_140 = arith.constant 0 : index
    %206 = vector.load %arg27[%205, %c0_139, %c0_140] : memref<8x8x32xf32, #tpu.memory_space<vmem>>, vector<1x8x32xf32>
    %207 = vector.shape_cast %206 : vector<1x8x32xf32> to vector<8x32xf32>
    %208 = vector.shape_cast %204 : vector<8x32xf32> to vector<1x8x32xf32>
    tpu.vector_store %arg27[%205, %c0_139, %c0_140], %208 {strides = array<i32>} : memref<8x8x32xf32, #tpu.memory_space<vmem>>, vector<1x8x32xf32>,
    %c3_i32 = arith.constant 3 : i32
    %cst_141 = arith.constant dense<0.000000e+00> : vector<8x32xf32>
    %209 = tpu.matmul %204, %59, %cst_141 {dimension_numbers = #tpu.dot_dimension_numbers<[1], [0], [0], [1], [0, 0, 1, 1], [], []>} : vector<8x32xf32>, vector<32x32xf32>, vector<8x32xf32> -> vector<8x32xf32>
    %210 = vector.broadcast %65 : vector<1x32xf32> to vector<8x32xf32>
    %211 = arith.addf %209, %210 : vector<8x32xf32>
    %cst_142 = arith.constant dense<0.000000e+00> : vector<8x32xf32>
    %212 = tpu.matmul %204, %61, %cst_142 {dimension_numbers = #tpu.dot_dimension_numbers<[1], [0], [0], [1], [0, 0, 1, 1], [], []>} : vector<8x32xf32>, vector<32x32xf32>, vector<8x32xf32> -> vector<8x32xf32>
    %213 = vector.broadcast %67 : vector<1x32xf32> to vector<8x32xf32>
    %214 = arith.addf %212, %213 : vector<8x32xf32>
    %cst_143 = arith.constant dense<0.000000e+00> : vector<8x32xf32>
    %215 = tpu.matmul %204, %63, %cst_143 {dimension_numbers = #tpu.dot_dimension_numbers<[1], [0], [0], [1], [0, 0, 1, 1], [], []>} : vector<8x32xf32>, vector<32x32xf32>, vector<8x32xf32> -> vector<8x32xf32>
    %216 = vector.broadcast %69 : vector<1x32xf32> to vector<8x32xf32>
    %217 = arith.addf %215, %216 : vector<8x32xf32>
    %218 = arith.index_cast %c3_i32 : i32 to index
    %c0_144 = arith.constant 0 : index
    %c0_145 = arith.constant 0 : index
    %219 = vector.load %arg21[%218, %c0_144, %c0_145] : memref<8x8x32xf32, #tpu.memory_space<vmem>>, vector<1x8x32xf32>
    %220 = vector.shape_cast %219 : vector<1x8x32xf32> to vector<8x32xf32>
    %221 = arith.addf %220, %211 : vector<8x32xf32>
    %222 = arith.negf %221 : vector<8x32xf32>
    %223 = math.exp %222 : vector<8x32xf32>
    %cst_146 = arith.constant 1.000000e+00 : f32
    %224 = vector.broadcast %cst_146 : f32 to vector<8x32xf32>
    %225 = arith.addf %224, %223 : vector<8x32xf32>
    %226 = arith.divf %224, %225 : vector<8x32xf32>
    %227 = arith.index_cast %c3_i32 : i32 to index
    %c0_147 = arith.constant 0 : index
    %c0_148 = arith.constant 0 : index
    %228 = vector.load %arg22[%227, %c0_147, %c0_148] : memref<8x8x32xf32, #tpu.memory_space<vmem>>, vector<1x8x32xf32>
    %229 = vector.shape_cast %228 : vector<1x8x32xf32> to vector<8x32xf32>
    %230 = arith.addf %229, %214 : vector<8x32xf32>
    %231 = arith.negf %230 : vector<8x32xf32>
    %232 = math.exp %231 : vector<8x32xf32>
    %cst_149 = arith.constant 1.000000e+00 : f32
    %233 = vector.broadcast %cst_149 : f32 to vector<8x32xf32>
    %234 = arith.addf %233, %232 : vector<8x32xf32>
    %235 = arith.divf %233, %234 : vector<8x32xf32>
    %236 = arith.index_cast %c3_i32 : i32 to index
    %c0_150 = arith.constant 0 : index
    %c0_151 = arith.constant 0 : index
    %237 = vector.load %arg23[%236, %c0_150, %c0_151] : memref<8x8x32xf32, #tpu.memory_space<vmem>>, vector<1x8x32xf32>
    %238 = vector.shape_cast %237 : vector<1x8x32xf32> to vector<8x32xf32>
    %239 = arith.mulf %226, %217 : vector<8x32xf32>
    %240 = arith.addf %238, %239 : vector<8x32xf32>
    %241 = math.tanh %240 : vector<8x32xf32>
    %cst_152 = arith.constant 1.000000e+00 : f32
    %242 = vector.broadcast %cst_152 : f32 to vector<8x32xf32>
    %243 = arith.subf %242, %235 : vector<8x32xf32>
    %244 = arith.mulf %243, %241 : vector<8x32xf32>
    %245 = arith.mulf %235, %204 : vector<8x32xf32>
    %246 = arith.addf %244, %245 : vector<8x32xf32>
    %247 = arith.index_cast %c3_i32 : i32 to index
    %c0_153 = arith.constant 0 : index
    %c0_154 = arith.constant 0 : index
    %248 = vector.load %arg27[%247, %c0_153, %c0_154] : memref<8x8x32xf32, #tpu.memory_space<vmem>>, vector<1x8x32xf32>
    %249 = vector.shape_cast %248 : vector<1x8x32xf32> to vector<8x32xf32>
    %250 = vector.shape_cast %246 : vector<8x32xf32> to vector<1x8x32xf32>
    tpu.vector_store %arg27[%247, %c0_153, %c0_154], %250 {strides = array<i32>} : memref<8x8x32xf32, #tpu.memory_space<vmem>>, vector<1x8x32xf32>,
    %c4_i32 = arith.constant 4 : i32
    %cst_155 = arith.constant dense<0.000000e+00> : vector<8x32xf32>
    %251 = tpu.matmul %246, %59, %cst_155 {dimension_numbers = #tpu.dot_dimension_numbers<[1], [0], [0], [1], [0, 0, 1, 1], [], []>} : vector<8x32xf32>, vector<32x32xf32>, vector<8x32xf32> -> vector<8x32xf32>
    %252 = vector.broadcast %65 : vector<1x32xf32> to vector<8x32xf32>
    %253 = arith.addf %251, %252 : vector<8x32xf32>
    %cst_156 = arith.constant dense<0.000000e+00> : vector<8x32xf32>
    %254 = tpu.matmul %246, %61, %cst_156 {dimension_numbers = #tpu.dot_dimension_numbers<[1], [0], [0], [1], [0, 0, 1, 1], [], []>} : vector<8x32xf32>, vector<32x32xf32>, vector<8x32xf32> -> vector<8x32xf32>
    %255 = vector.broadcast %67 : vector<1x32xf32> to vector<8x32xf32>
    %256 = arith.addf %254, %255 : vector<8x32xf32>
    %cst_157 = arith.constant dense<0.000000e+00> : vector<8x32xf32>
    %257 = tpu.matmul %246, %63, %cst_157 {dimension_numbers = #tpu.dot_dimension_numbers<[1], [0], [0], [1], [0, 0, 1, 1], [], []>} : vector<8x32xf32>, vector<32x32xf32>, vector<8x32xf32> -> vector<8x32xf32>
    %258 = vector.broadcast %69 : vector<1x32xf32> to vector<8x32xf32>
    %259 = arith.addf %257, %258 : vector<8x32xf32>
    %260 = arith.index_cast %c4_i32 : i32 to index
    %c0_158 = arith.constant 0 : index
    %c0_159 = arith.constant 0 : index
    %261 = vector.load %arg21[%260, %c0_158, %c0_159] : memref<8x8x32xf32, #tpu.memory_space<vmem>>, vector<1x8x32xf32>
    %262 = vector.shape_cast %261 : vector<1x8x32xf32> to vector<8x32xf32>
    %263 = arith.addf %262, %253 : vector<8x32xf32>
    %264 = arith.negf %263 : vector<8x32xf32>
    %265 = math.exp %264 : vector<8x32xf32>
    %cst_160 = arith.constant 1.000000e+00 : f32
    %266 = vector.broadcast %cst_160 : f32 to vector<8x32xf32>
    %267 = arith.addf %266, %265 : vector<8x32xf32>
    %268 = arith.divf %266, %267 : vector<8x32xf32>
    %269 = arith.index_cast %c4_i32 : i32 to index
    %c0_161 = arith.constant 0 : index
    %c0_162 = arith.constant 0 : index
    %270 = vector.load %arg22[%269, %c0_161, %c0_162] : memref<8x8x32xf32, #tpu.memory_space<vmem>>, vector<1x8x32xf32>
    %271 = vector.shape_cast %270 : vector<1x8x32xf32> to vector<8x32xf32>
    %272 = arith.addf %271, %256 : vector<8x32xf32>
    %273 = arith.negf %272 : vector<8x32xf32>
    %274 = math.exp %273 : vector<8x32xf32>
    %cst_163 = arith.constant 1.000000e+00 : f32
    %275 = vector.broadcast %cst_163 : f32 to vector<8x32xf32>
    %276 = arith.addf %275, %274 : vector<8x32xf32>
    %277 = arith.divf %275, %276 : vector<8x32xf32>
    %278 = arith.index_cast %c4_i32 : i32 to index
    %c0_164 = arith.constant 0 : index
    %c0_165 = arith.constant 0 : index
    %279 = vector.load %arg23[%278, %c0_164, %c0_165] : memref<8x8x32xf32, #tpu.memory_space<vmem>>, vector<1x8x32xf32>
    %280 = vector.shape_cast %279 : vector<1x8x32xf32> to vector<8x32xf32>
    %281 = arith.mulf %268, %259 : vector<8x32xf32>
    %282 = arith.addf %280, %281 : vector<8x32xf32>
    %283 = math.tanh %282 : vector<8x32xf32>
    %cst_166 = arith.constant 1.000000e+00 : f32
    %284 = vector.broadcast %cst_166 : f32 to vector<8x32xf32>
    %285 = arith.subf %284, %277 : vector<8x32xf32>
    %286 = arith.mulf %285, %283 : vector<8x32xf32>
    %287 = arith.mulf %277, %246 : vector<8x32xf32>
    %288 = arith.addf %286, %287 : vector<8x32xf32>
    %289 = arith.index_cast %c4_i32 : i32 to index
    %c0_167 = arith.constant 0 : index
    %c0_168 = arith.constant 0 : index
    %290 = vector.load %arg27[%289, %c0_167, %c0_168] : memref<8x8x32xf32, #tpu.memory_space<vmem>>, vector<1x8x32xf32>
    %291 = vector.shape_cast %290 : vector<1x8x32xf32> to vector<8x32xf32>
    %292 = vector.shape_cast %288 : vector<8x32xf32> to vector<1x8x32xf32>
    tpu.vector_store %arg27[%289, %c0_167, %c0_168], %292 {strides = array<i32>} : memref<8x8x32xf32, #tpu.memory_space<vmem>>, vector<1x8x32xf32>,
    %c5_i32 = arith.constant 5 : i32
    %cst_169 = arith.constant dense<0.000000e+00> : vector<8x32xf32>
    %293 = tpu.matmul %288, %59, %cst_169 {dimension_numbers = #tpu.dot_dimension_numbers<[1], [0], [0], [1], [0, 0, 1, 1], [], []>} : vector<8x32xf32>, vector<32x32xf32>, vector<8x32xf32> -> vector<8x32xf32>
    %294 = vector.broadcast %65 : vector<1x32xf32> to vector<8x32xf32>
    %295 = arith.addf %293, %294 : vector<8x32xf32>
    %cst_170 = arith.constant dense<0.000000e+00> : vector<8x32xf32>
    %296 = tpu.matmul %288, %61, %cst_170 {dimension_numbers = #tpu.dot_dimension_numbers<[1], [0], [0], [1], [0, 0, 1, 1], [], []>} : vector<8x32xf32>, vector<32x32xf32>, vector<8x32xf32> -> vector<8x32xf32>
    %297 = vector.broadcast %67 : vector<1x32xf32> to vector<8x32xf32>
    %298 = arith.addf %296, %297 : vector<8x32xf32>
    %cst_171 = arith.constant dense<0.000000e+00> : vector<8x32xf32>
    %299 = tpu.matmul %288, %63, %cst_171 {dimension_numbers = #tpu.dot_dimension_numbers<[1], [0], [0], [1], [0, 0, 1, 1], [], []>} : vector<8x32xf32>, vector<32x32xf32>, vector<8x32xf32> -> vector<8x32xf32>
    %300 = vector.broadcast %69 : vector<1x32xf32> to vector<8x32xf32>
    %301 = arith.addf %299, %300 : vector<8x32xf32>
    %302 = arith.index_cast %c5_i32 : i32 to index
    %c0_172 = arith.constant 0 : index
    %c0_173 = arith.constant 0 : index
    %303 = vector.load %arg21[%302, %c0_172, %c0_173] : memref<8x8x32xf32, #tpu.memory_space<vmem>>, vector<1x8x32xf32>
    %304 = vector.shape_cast %303 : vector<1x8x32xf32> to vector<8x32xf32>
    %305 = arith.addf %304, %295 : vector<8x32xf32>
    %306 = arith.negf %305 : vector<8x32xf32>
    %307 = math.exp %306 : vector<8x32xf32>
    %cst_174 = arith.constant 1.000000e+00 : f32
    %308 = vector.broadcast %cst_174 : f32 to vector<8x32xf32>
    %309 = arith.addf %308, %307 : vector<8x32xf32>
    %310 = arith.divf %308, %309 : vector<8x32xf32>
    %311 = arith.index_cast %c5_i32 : i32 to index
    %c0_175 = arith.constant 0 : index
    %c0_176 = arith.constant 0 : index
    %312 = vector.load %arg22[%311, %c0_175, %c0_176] : memref<8x8x32xf32, #tpu.memory_space<vmem>>, vector<1x8x32xf32>
    %313 = vector.shape_cast %312 : vector<1x8x32xf32> to vector<8x32xf32>
    %314 = arith.addf %313, %298 : vector<8x32xf32>
    %315 = arith.negf %314 : vector<8x32xf32>
    %316 = math.exp %315 : vector<8x32xf32>
    %cst_177 = arith.constant 1.000000e+00 : f32
    %317 = vector.broadcast %cst_177 : f32 to vector<8x32xf32>
    %318 = arith.addf %317, %316 : vector<8x32xf32>
    %319 = arith.divf %317, %318 : vector<8x32xf32>
    %320 = arith.index_cast %c5_i32 : i32 to index
    %c0_178 = arith.constant 0 : index
    %c0_179 = arith.constant 0 : index
    %321 = vector.load %arg23[%320, %c0_178, %c0_179] : memref<8x8x32xf32, #tpu.memory_space<vmem>>, vector<1x8x32xf32>
    %322 = vector.shape_cast %321 : vector<1x8x32xf32> to vector<8x32xf32>
    %323 = arith.mulf %310, %301 : vector<8x32xf32>
    %324 = arith.addf %322, %323 : vector<8x32xf32>
    %325 = math.tanh %324 : vector<8x32xf32>
    %cst_180 = arith.constant 1.000000e+00 : f32
    %326 = vector.broadcast %cst_180 : f32 to vector<8x32xf32>
    %327 = arith.subf %326, %319 : vector<8x32xf32>
    %328 = arith.mulf %327, %325 : vector<8x32xf32>
    %329 = arith.mulf %319, %288 : vector<8x32xf32>
    %330 = arith.addf %328, %329 : vector<8x32xf32>
    %331 = arith.index_cast %c5_i32 : i32 to index
    %c0_181 = arith.constant 0 : index
    %c0_182 = arith.constant 0 : index
    %332 = vector.load %arg27[%331, %c0_181, %c0_182] : memref<8x8x32xf32, #tpu.memory_space<vmem>>, vector<1x8x32xf32>
    %333 = vector.shape_cast %332 : vector<1x8x32xf32> to vector<8x32xf32>
    %334 = vector.shape_cast %330 : vector<8x32xf32> to vector<1x8x32xf32>
    tpu.vector_store %arg27[%331, %c0_181, %c0_182], %334 {strides = array<i32>} : memref<8x8x32xf32, #tpu.memory_space<vmem>>, vector<1x8x32xf32>,
    %c6_i32 = arith.constant 6 : i32
    %cst_183 = arith.constant dense<0.000000e+00> : vector<8x32xf32>
    %335 = tpu.matmul %330, %59, %cst_183 {dimension_numbers = #tpu.dot_dimension_numbers<[1], [0], [0], [1], [0, 0, 1, 1], [], []>} : vector<8x32xf32>, vector<32x32xf32>, vector<8x32xf32> -> vector<8x32xf32>
    %336 = vector.broadcast %65 : vector<1x32xf32> to vector<8x32xf32>
    %337 = arith.addf %335, %336 : vector<8x32xf32>
    %cst_184 = arith.constant dense<0.000000e+00> : vector<8x32xf32>
    %338 = tpu.matmul %330, %61, %cst_184 {dimension_numbers = #tpu.dot_dimension_numbers<[1], [0], [0], [1], [0, 0, 1, 1], [], []>} : vector<8x32xf32>, vector<32x32xf32>, vector<8x32xf32> -> vector<8x32xf32>
    %339 = vector.broadcast %67 : vector<1x32xf32> to vector<8x32xf32>
    %340 = arith.addf %338, %339 : vector<8x32xf32>
    %cst_185 = arith.constant dense<0.000000e+00> : vector<8x32xf32>
    %341 = tpu.matmul %330, %63, %cst_185 {dimension_numbers = #tpu.dot_dimension_numbers<[1], [0], [0], [1], [0, 0, 1, 1], [], []>} : vector<8x32xf32>, vector<32x32xf32>, vector<8x32xf32> -> vector<8x32xf32>
    %342 = vector.broadcast %69 : vector<1x32xf32> to vector<8x32xf32>
    %343 = arith.addf %341, %342 : vector<8x32xf32>
    %344 = arith.index_cast %c6_i32 : i32 to index
    %c0_186 = arith.constant 0 : index
    %c0_187 = arith.constant 0 : index
    %345 = vector.load %arg21[%344, %c0_186, %c0_187] : memref<8x8x32xf32, #tpu.memory_space<vmem>>, vector<1x8x32xf32>
    %346 = vector.shape_cast %345 : vector<1x8x32xf32> to vector<8x32xf32>
    %347 = arith.addf %346, %337 : vector<8x32xf32>
    %348 = arith.negf %347 : vector<8x32xf32>
    %349 = math.exp %348 : vector<8x32xf32>
    %cst_188 = arith.constant 1.000000e+00 : f32
    %350 = vector.broadcast %cst_188 : f32 to vector<8x32xf32>
    %351 = arith.addf %350, %349 : vector<8x32xf32>
    %352 = arith.divf %350, %351 : vector<8x32xf32>
    %353 = arith.index_cast %c6_i32 : i32 to index
    %c0_189 = arith.constant 0 : index
    %c0_190 = arith.constant 0 : index
    %354 = vector.load %arg22[%353, %c0_189, %c0_190] : memref<8x8x32xf32, #tpu.memory_space<vmem>>, vector<1x8x32xf32>
    %355 = vector.shape_cast %354 : vector<1x8x32xf32> to vector<8x32xf32>
    %356 = arith.addf %355, %340 : vector<8x32xf32>
    %357 = arith.negf %356 : vector<8x32xf32>
    %358 = math.exp %357 : vector<8x32xf32>
    %cst_191 = arith.constant 1.000000e+00 : f32
    %359 = vector.broadcast %cst_191 : f32 to vector<8x32xf32>
    %360 = arith.addf %359, %358 : vector<8x32xf32>
    %361 = arith.divf %359, %360 : vector<8x32xf32>
    %362 = arith.index_cast %c6_i32 : i32 to index
    %c0_192 = arith.constant 0 : index
    %c0_193 = arith.constant 0 : index
    %363 = vector.load %arg23[%362, %c0_192, %c0_193] : memref<8x8x32xf32, #tpu.memory_space<vmem>>, vector<1x8x32xf32>
    %364 = vector.shape_cast %363 : vector<1x8x32xf32> to vector<8x32xf32>
    %365 = arith.mulf %352, %343 : vector<8x32xf32>
    %366 = arith.addf %364, %365 : vector<8x32xf32>
    %367 = math.tanh %366 : vector<8x32xf32>
    %cst_194 = arith.constant 1.000000e+00 : f32
    %368 = vector.broadcast %cst_194 : f32 to vector<8x32xf32>
    %369 = arith.subf %368, %361 : vector<8x32xf32>
    %370 = arith.mulf %369, %367 : vector<8x32xf32>
    %371 = arith.mulf %361, %330 : vector<8x32xf32>
    %372 = arith.addf %370, %371 : vector<8x32xf32>
    %373 = arith.index_cast %c6_i32 : i32 to index
    %c0_195 = arith.constant 0 : index
    %c0_196 = arith.constant 0 : index
    %374 = vector.load %arg27[%373, %c0_195, %c0_196] : memref<8x8x32xf32, #tpu.memory_space<vmem>>, vector<1x8x32xf32>
    %375 = vector.shape_cast %374 : vector<1x8x32xf32> to vector<8x32xf32>
    %376 = vector.shape_cast %372 : vector<8x32xf32> to vector<1x8x32xf32>
    tpu.vector_store %arg27[%373, %c0_195, %c0_196], %376 {strides = array<i32>} : memref<8x8x32xf32, #tpu.memory_space<vmem>>, vector<1x8x32xf32>,
    %c7_i32 = arith.constant 7 : i32
    %cst_197 = arith.constant dense<0.000000e+00> : vector<8x32xf32>
    %377 = tpu.matmul %372, %59, %cst_197 {dimension_numbers = #tpu.dot_dimension_numbers<[1], [0], [0], [1], [0, 0, 1, 1], [], []>} : vector<8x32xf32>, vector<32x32xf32>, vector<8x32xf32> -> vector<8x32xf32>
    %378 = vector.broadcast %65 : vector<1x32xf32> to vector<8x32xf32>
    %379 = arith.addf %377, %378 : vector<8x32xf32>
    %cst_198 = arith.constant dense<0.000000e+00> : vector<8x32xf32>
    %380 = tpu.matmul %372, %61, %cst_198 {dimension_numbers = #tpu.dot_dimension_numbers<[1], [0], [0], [1], [0, 0, 1, 1], [], []>} : vector<8x32xf32>, vector<32x32xf32>, vector<8x32xf32> -> vector<8x32xf32>
    %381 = vector.broadcast %67 : vector<1x32xf32> to vector<8x32xf32>
    %382 = arith.addf %380, %381 : vector<8x32xf32>
    %cst_199 = arith.constant dense<0.000000e+00> : vector<8x32xf32>
    %383 = tpu.matmul %372, %63, %cst_199 {dimension_numbers = #tpu.dot_dimension_numbers<[1], [0], [0], [1], [0, 0, 1, 1], [], []>} : vector<8x32xf32>, vector<32x32xf32>, vector<8x32xf32> -> vector<8x32xf32>
    %384 = vector.broadcast %69 : vector<1x32xf32> to vector<8x32xf32>
    %385 = arith.addf %383, %384 : vector<8x32xf32>
    %386 = arith.index_cast %c7_i32 : i32 to index
    %c0_200 = arith.constant 0 : index
    %c0_201 = arith.constant 0 : index
    %387 = vector.load %arg21[%386, %c0_200, %c0_201] : memref<8x8x32xf32, #tpu.memory_space<vmem>>, vector<1x8x32xf32>
    %388 = vector.shape_cast %387 : vector<1x8x32xf32> to vector<8x32xf32>
    %389 = arith.addf %388, %379 : vector<8x32xf32>
    %390 = arith.negf %389 : vector<8x32xf32>
    %391 = math.exp %390 : vector<8x32xf32>
    %cst_202 = arith.constant 1.000000e+00 : f32
    %392 = vector.broadcast %cst_202 : f32 to vector<8x32xf32>
    %393 = arith.addf %392, %391 : vector<8x32xf32>
    %394 = arith.divf %392, %393 : vector<8x32xf32>
    %395 = arith.index_cast %c7_i32 : i32 to index
    %c0_203 = arith.constant 0 : index
    %c0_204 = arith.constant 0 : index
    %396 = vector.load %arg22[%395, %c0_203, %c0_204] : memref<8x8x32xf32, #tpu.memory_space<vmem>>, vector<1x8x32xf32>
    %397 = vector.shape_cast %396 : vector<1x8x32xf32> to vector<8x32xf32>
    %398 = arith.addf %397, %382 : vector<8x32xf32>
    %399 = arith.negf %398 : vector<8x32xf32>
    %400 = math.exp %399 : vector<8x32xf32>
    %cst_205 = arith.constant 1.000000e+00 : f32
    %401 = vector.broadcast %cst_205 : f32 to vector<8x32xf32>
    %402 = arith.addf %401, %400 : vector<8x32xf32>
    %403 = arith.divf %401, %402 : vector<8x32xf32>
    %404 = arith.index_cast %c7_i32 : i32 to index
    %c0_206 = arith.constant 0 : index
    %c0_207 = arith.constant 0 : index
    %405 = vector.load %arg23[%404, %c0_206, %c0_207] : memref<8x8x32xf32, #tpu.memory_space<vmem>>, vector<1x8x32xf32>
    %406 = vector.shape_cast %405 : vector<1x8x32xf32> to vector<8x32xf32>
    %407 = arith.mulf %394, %385 : vector<8x32xf32>
    %408 = arith.addf %406, %407 : vector<8x32xf32>
    %409 = math.tanh %408 : vector<8x32xf32>
    %cst_208 = arith.constant 1.000000e+00 : f32
    %410 = vector.broadcast %cst_208 : f32 to vector<8x32xf32>
    %411 = arith.subf %410, %403 : vector<8x32xf32>
    %412 = arith.mulf %411, %409 : vector<8x32xf32>
    %413 = arith.mulf %403, %372 : vector<8x32xf32>
    %414 = arith.addf %412, %413 : vector<8x32xf32>
    %415 = arith.index_cast %c7_i32 : i32 to index
    %c0_209 = arith.constant 0 : index
    %c0_210 = arith.constant 0 : index
    %416 = vector.load %arg27[%415, %c0_209, %c0_210] : memref<8x8x32xf32, #tpu.memory_space<vmem>>, vector<1x8x32xf32>
    %417 = vector.shape_cast %416 : vector<1x8x32xf32> to vector<8x32xf32>
    %418 = vector.shape_cast %414 : vector<8x32xf32> to vector<1x8x32xf32>
    tpu.vector_store %arg27[%415, %c0_209, %c0_210], %418 {strides = array<i32>} : memref<8x8x32xf32, #tpu.memory_space<vmem>>, vector<1x8x32xf32>,
    %c8_i32 = arith.constant 8 : i32
    %c0_211 = arith.constant 0 : index
    %c0_212 = arith.constant 0 : index
    %419 = vector.load %arg12[%c0_211, %c0_212] : memref<32x32xf32, #tpu.memory_space<vmem>>, vector<32x32xf32>
    %cst_213 = arith.constant dense<0.000000e+00> : vector<8x32xf32>
    %420 = tpu.matmul %414, %419, %cst_213 {dimension_numbers = #tpu.dot_dimension_numbers<[1], [0], [0], [1], [0, 0, 1, 1], [], []>} : vector<8x32xf32>, vector<32x32xf32>, vector<8x32xf32> -> vector<8x32xf32>
    %c0_214 = arith.constant 0 : index
    %c0_215 = arith.constant 0 : index
    %421 = vector.load %arg13[%c0_214, %c0_215] : memref<1x32xf32, #tpu.memory_space<vmem>>, vector<1x32xf32>
    %422 = vector.broadcast %421 : vector<1x32xf32> to vector<8x32xf32>
    %423 = arith.addf %420, %422 : vector<8x32xf32>
    %424 = math.tanh %423 : vector<8x32xf32>
    %c0_i32_216 = arith.constant 0 : i32
    %cst_217 = arith.constant dense<0.000000e+00> : vector<8x32xf32>
    %425 = tpu.matmul %424, %71, %cst_217 {dimension_numbers = #tpu.dot_dimension_numbers<[1], [0], [0], [1], [0, 0, 1, 1], [], []>} : vector<8x32xf32>, vector<32x32xf32>, vector<8x32xf32> -> vector<8x32xf32>
    %426 = vector.broadcast %77 : vector<1x32xf32> to vector<8x32xf32>
    %427 = arith.addf %425, %426 : vector<8x32xf32>
    %cst_218 = arith.constant dense<0.000000e+00> : vector<8x32xf32>
    %428 = tpu.matmul %424, %73, %cst_218 {dimension_numbers = #tpu.dot_dimension_numbers<[1], [0], [0], [1], [0, 0, 1, 1], [], []>} : vector<8x32xf32>, vector<32x32xf32>, vector<8x32xf32> -> vector<8x32xf32>
    %429 = vector.broadcast %79 : vector<1x32xf32> to vector<8x32xf32>
    %430 = arith.addf %428, %429 : vector<8x32xf32>
    %cst_219 = arith.constant dense<0.000000e+00> : vector<8x32xf32>
    %431 = tpu.matmul %424, %75, %cst_219 {dimension_numbers = #tpu.dot_dimension_numbers<[1], [0], [0], [1], [0, 0, 1, 1], [], []>} : vector<8x32xf32>, vector<32x32xf32>, vector<8x32xf32> -> vector<8x32xf32>
    %432 = vector.broadcast %81 : vector<1x32xf32> to vector<8x32xf32>
    %433 = arith.addf %431, %432 : vector<8x32xf32>
    %434 = arith.index_cast %c0_i32_216 : i32 to index
    %c0_220 = arith.constant 0 : index
    %c0_221 = arith.constant 0 : index
    %435 = vector.load %arg24[%434, %c0_220, %c0_221] : memref<8x8x32xf32, #tpu.memory_space<vmem>>, vector<1x8x32xf32>
    %436 = vector.shape_cast %435 : vector<1x8x32xf32> to vector<8x32xf32>
    %437 = arith.addf %436, %427 : vector<8x32xf32>
    %438 = arith.negf %437 : vector<8x32xf32>
    %439 = math.exp %438 : vector<8x32xf32>
    %cst_222 = arith.constant 1.000000e+00 : f32
    %440 = vector.broadcast %cst_222 : f32 to vector<8x32xf32>
    %441 = arith.addf %440, %439 : vector<8x32xf32>
    %442 = arith.divf %440, %441 : vector<8x32xf32>
    %443 = arith.index_cast %c0_i32_216 : i32 to index
    %c0_223 = arith.constant 0 : index
    %c0_224 = arith.constant 0 : index
    %444 = vector.load %arg25[%443, %c0_223, %c0_224] : memref<8x8x32xf32, #tpu.memory_space<vmem>>, vector<1x8x32xf32>
    %445 = vector.shape_cast %444 : vector<1x8x32xf32> to vector<8x32xf32>
    %446 = arith.addf %445, %430 : vector<8x32xf32>
    %447 = arith.negf %446 : vector<8x32xf32>
    %448 = math.exp %447 : vector<8x32xf32>
    %cst_225 = arith.constant 1.000000e+00 : f32
    %449 = vector.broadcast %cst_225 : f32 to vector<8x32xf32>
    %450 = arith.addf %449, %448 : vector<8x32xf32>
    %451 = arith.divf %449, %450 : vector<8x32xf32>
    %452 = arith.index_cast %c0_i32_216 : i32 to index
    %c0_226 = arith.constant 0 : index
    %c0_227 = arith.constant 0 : index
    %453 = vector.load %arg26[%452, %c0_226, %c0_227] : memref<8x8x32xf32, #tpu.memory_space<vmem>>, vector<1x8x32xf32>
    %454 = vector.shape_cast %453 : vector<1x8x32xf32> to vector<8x32xf32>
    %455 = arith.mulf %442, %433 : vector<8x32xf32>
    %456 = arith.addf %454, %455 : vector<8x32xf32>
    %457 = math.tanh %456 : vector<8x32xf32>
    %cst_228 = arith.constant 1.000000e+00 : f32
    %458 = vector.broadcast %cst_228 : f32 to vector<8x32xf32>
    %459 = arith.subf %458, %451 : vector<8x32xf32>
    %460 = arith.mulf %459, %457 : vector<8x32xf32>
    %461 = arith.mulf %451, %424 : vector<8x32xf32>
    %462 = arith.addf %460, %461 : vector<8x32xf32>
    %463 = arith.index_cast %c0_i32_216 : i32 to index
    %c0_229 = arith.constant 0 : index
    %c0_230 = arith.constant 0 : index
    %464 = vector.load %arg28[%463, %c0_229, %c0_230] : memref<8x8x32xf32, #tpu.memory_space<vmem>>, vector<1x8x32xf32>
    %465 = vector.shape_cast %464 : vector<1x8x32xf32> to vector<8x32xf32>
    %466 = vector.shape_cast %462 : vector<8x32xf32> to vector<1x8x32xf32>
    tpu.vector_store %arg28[%463, %c0_229, %c0_230], %466 {strides = array<i32>} : memref<8x8x32xf32, #tpu.memory_space<vmem>>, vector<1x8x32xf32>,
    %c1_i32_231 = arith.constant 1 : i32
    %cst_232 = arith.constant dense<0.000000e+00> : vector<8x32xf32>
    %467 = tpu.matmul %462, %71, %cst_232 {dimension_numbers = #tpu.dot_dimension_numbers<[1], [0], [0], [1], [0, 0, 1, 1], [], []>} : vector<8x32xf32>, vector<32x32xf32>, vector<8x32xf32> -> vector<8x32xf32>
    %468 = vector.broadcast %77 : vector<1x32xf32> to vector<8x32xf32>
    %469 = arith.addf %467, %468 : vector<8x32xf32>
    %cst_233 = arith.constant dense<0.000000e+00> : vector<8x32xf32>
    %470 = tpu.matmul %462, %73, %cst_233 {dimension_numbers = #tpu.dot_dimension_numbers<[1], [0], [0], [1], [0, 0, 1, 1], [], []>} : vector<8x32xf32>, vector<32x32xf32>, vector<8x32xf32> -> vector<8x32xf32>
    %471 = vector.broadcast %79 : vector<1x32xf32> to vector<8x32xf32>
    %472 = arith.addf %470, %471 : vector<8x32xf32>
    %cst_234 = arith.constant dense<0.000000e+00> : vector<8x32xf32>
    %473 = tpu.matmul %462, %75, %cst_234 {dimension_numbers = #tpu.dot_dimension_numbers<[1], [0], [0], [1], [0, 0, 1, 1], [], []>} : vector<8x32xf32>, vector<32x32xf32>, vector<8x32xf32> -> vector<8x32xf32>
    %474 = vector.broadcast %81 : vector<1x32xf32> to vector<8x32xf32>
    %475 = arith.addf %473, %474 : vector<8x32xf32>
    %476 = arith.index_cast %c1_i32_231 : i32 to index
    %c0_235 = arith.constant 0 : index
    %c0_236 = arith.constant 0 : index
    %477 = vector.load %arg24[%476, %c0_235, %c0_236] : memref<8x8x32xf32, #tpu.memory_space<vmem>>, vector<1x8x32xf32>
    %478 = vector.shape_cast %477 : vector<1x8x32xf32> to vector<8x32xf32>
    %479 = arith.addf %478, %469 : vector<8x32xf32>
    %480 = arith.negf %479 : vector<8x32xf32>
    %481 = math.exp %480 : vector<8x32xf32>
    %cst_237 = arith.constant 1.000000e+00 : f32
    %482 = vector.broadcast %cst_237 : f32 to vector<8x32xf32>
    %483 = arith.addf %482, %481 : vector<8x32xf32>
    %484 = arith.divf %482, %483 : vector<8x32xf32>
    %485 = arith.index_cast %c1_i32_231 : i32 to index
    %c0_238 = arith.constant 0 : index
    %c0_239 = arith.constant 0 : index
    %486 = vector.load %arg25[%485, %c0_238, %c0_239] : memref<8x8x32xf32, #tpu.memory_space<vmem>>, vector<1x8x32xf32>
    %487 = vector.shape_cast %486 : vector<1x8x32xf32> to vector<8x32xf32>
    %488 = arith.addf %487, %472 : vector<8x32xf32>
    %489 = arith.negf %488 : vector<8x32xf32>
    %490 = math.exp %489 : vector<8x32xf32>
    %cst_240 = arith.constant 1.000000e+00 : f32
    %491 = vector.broadcast %cst_240 : f32 to vector<8x32xf32>
    %492 = arith.addf %491, %490 : vector<8x32xf32>
    %493 = arith.divf %491, %492 : vector<8x32xf32>
    %494 = arith.index_cast %c1_i32_231 : i32 to index
    %c0_241 = arith.constant 0 : index
    %c0_242 = arith.constant 0 : index
    %495 = vector.load %arg26[%494, %c0_241, %c0_242] : memref<8x8x32xf32, #tpu.memory_space<vmem>>, vector<1x8x32xf32>
    %496 = vector.shape_cast %495 : vector<1x8x32xf32> to vector<8x32xf32>
    %497 = arith.mulf %484, %475 : vector<8x32xf32>
    %498 = arith.addf %496, %497 : vector<8x32xf32>
    %499 = math.tanh %498 : vector<8x32xf32>
    %cst_243 = arith.constant 1.000000e+00 : f32
    %500 = vector.broadcast %cst_243 : f32 to vector<8x32xf32>
    %501 = arith.subf %500, %493 : vector<8x32xf32>
    %502 = arith.mulf %501, %499 : vector<8x32xf32>
    %503 = arith.mulf %493, %462 : vector<8x32xf32>
    %504 = arith.addf %502, %503 : vector<8x32xf32>
    %505 = arith.index_cast %c1_i32_231 : i32 to index
    %c0_244 = arith.constant 0 : index
    %c0_245 = arith.constant 0 : index
    %506 = vector.load %arg28[%505, %c0_244, %c0_245] : memref<8x8x32xf32, #tpu.memory_space<vmem>>, vector<1x8x32xf32>
    %507 = vector.shape_cast %506 : vector<1x8x32xf32> to vector<8x32xf32>
    %508 = vector.shape_cast %504 : vector<8x32xf32> to vector<1x8x32xf32>
    tpu.vector_store %arg28[%505, %c0_244, %c0_245], %508 {strides = array<i32>} : memref<8x8x32xf32, #tpu.memory_space<vmem>>, vector<1x8x32xf32>,
    %c2_i32_246 = arith.constant 2 : i32
    %cst_247 = arith.constant dense<0.000000e+00> : vector<8x32xf32>
    %509 = tpu.matmul %504, %71, %cst_247 {dimension_numbers = #tpu.dot_dimension_numbers<[1], [0], [0], [1], [0, 0, 1, 1], [], []>} : vector<8x32xf32>, vector<32x32xf32>, vector<8x32xf32> -> vector<8x32xf32>
    %510 = vector.broadcast %77 : vector<1x32xf32> to vector<8x32xf32>
    %511 = arith.addf %509, %510 : vector<8x32xf32>
    %cst_248 = arith.constant dense<0.000000e+00> : vector<8x32xf32>
    %512 = tpu.matmul %504, %73, %cst_248 {dimension_numbers = #tpu.dot_dimension_numbers<[1], [0], [0], [1], [0, 0, 1, 1], [], []>} : vector<8x32xf32>, vector<32x32xf32>, vector<8x32xf32> -> vector<8x32xf32>
    %513 = vector.broadcast %79 : vector<1x32xf32> to vector<8x32xf32>
    %514 = arith.addf %512, %513 : vector<8x32xf32>
    %cst_249 = arith.constant dense<0.000000e+00> : vector<8x32xf32>
    %515 = tpu.matmul %504, %75, %cst_249 {dimension_numbers = #tpu.dot_dimension_numbers<[1], [0], [0], [1], [0, 0, 1, 1], [], []>} : vector<8x32xf32>, vector<32x32xf32>, vector<8x32xf32> -> vector<8x32xf32>
    %516 = vector.broadcast %81 : vector<1x32xf32> to vector<8x32xf32>
    %517 = arith.addf %515, %516 : vector<8x32xf32>
    %518 = arith.index_cast %c2_i32_246 : i32 to index
    %c0_250 = arith.constant 0 : index
    %c0_251 = arith.constant 0 : index
    %519 = vector.load %arg24[%518, %c0_250, %c0_251] : memref<8x8x32xf32, #tpu.memory_space<vmem>>, vector<1x8x32xf32>
    %520 = vector.shape_cast %519 : vector<1x8x32xf32> to vector<8x32xf32>
    %521 = arith.addf %520, %511 : vector<8x32xf32>
    %522 = arith.negf %521 : vector<8x32xf32>
    %523 = math.exp %522 : vector<8x32xf32>
    %cst_252 = arith.constant 1.000000e+00 : f32
    %524 = vector.broadcast %cst_252 : f32 to vector<8x32xf32>
    %525 = arith.addf %524, %523 : vector<8x32xf32>
    %526 = arith.divf %524, %525 : vector<8x32xf32>
    %527 = arith.index_cast %c2_i32_246 : i32 to index
    %c0_253 = arith.constant 0 : index
    %c0_254 = arith.constant 0 : index
    %528 = vector.load %arg25[%527, %c0_253, %c0_254] : memref<8x8x32xf32, #tpu.memory_space<vmem>>, vector<1x8x32xf32>
    %529 = vector.shape_cast %528 : vector<1x8x32xf32> to vector<8x32xf32>
    %530 = arith.addf %529, %514 : vector<8x32xf32>
    %531 = arith.negf %530 : vector<8x32xf32>
    %532 = math.exp %531 : vector<8x32xf32>
    %cst_255 = arith.constant 1.000000e+00 : f32
    %533 = vector.broadcast %cst_255 : f32 to vector<8x32xf32>
    %534 = arith.addf %533, %532 : vector<8x32xf32>
    %535 = arith.divf %533, %534 : vector<8x32xf32>
    %536 = arith.index_cast %c2_i32_246 : i32 to index
    %c0_256 = arith.constant 0 : index
    %c0_257 = arith.constant 0 : index
    %537 = vector.load %arg26[%536, %c0_256, %c0_257] : memref<8x8x32xf32, #tpu.memory_space<vmem>>, vector<1x8x32xf32>
    %538 = vector.shape_cast %537 : vector<1x8x32xf32> to vector<8x32xf32>
    %539 = arith.mulf %526, %517 : vector<8x32xf32>
    %540 = arith.addf %538, %539 : vector<8x32xf32>
    %541 = math.tanh %540 : vector<8x32xf32>
    %cst_258 = arith.constant 1.000000e+00 : f32
    %542 = vector.broadcast %cst_258 : f32 to vector<8x32xf32>
    %543 = arith.subf %542, %535 : vector<8x32xf32>
    %544 = arith.mulf %543, %541 : vector<8x32xf32>
    %545 = arith.mulf %535, %504 : vector<8x32xf32>
    %546 = arith.addf %544, %545 : vector<8x32xf32>
    %547 = arith.index_cast %c2_i32_246 : i32 to index
    %c0_259 = arith.constant 0 : index
    %c0_260 = arith.constant 0 : index
    %548 = vector.load %arg28[%547, %c0_259, %c0_260] : memref<8x8x32xf32, #tpu.memory_space<vmem>>, vector<1x8x32xf32>
    %549 = vector.shape_cast %548 : vector<1x8x32xf32> to vector<8x32xf32>
    %550 = vector.shape_cast %546 : vector<8x32xf32> to vector<1x8x32xf32>
    tpu.vector_store %arg28[%547, %c0_259, %c0_260], %550 {strides = array<i32>} : memref<8x8x32xf32, #tpu.memory_space<vmem>>, vector<1x8x32xf32>,
    %c3_i32_261 = arith.constant 3 : i32
    %cst_262 = arith.constant dense<0.000000e+00> : vector<8x32xf32>
    %551 = tpu.matmul %546, %71, %cst_262 {dimension_numbers = #tpu.dot_dimension_numbers<[1], [0], [0], [1], [0, 0, 1, 1], [], []>} : vector<8x32xf32>, vector<32x32xf32>, vector<8x32xf32> -> vector<8x32xf32>
    %552 = vector.broadcast %77 : vector<1x32xf32> to vector<8x32xf32>
    %553 = arith.addf %551, %552 : vector<8x32xf32>
    %cst_263 = arith.constant dense<0.000000e+00> : vector<8x32xf32>
    %554 = tpu.matmul %546, %73, %cst_263 {dimension_numbers = #tpu.dot_dimension_numbers<[1], [0], [0], [1], [0, 0, 1, 1], [], []>} : vector<8x32xf32>, vector<32x32xf32>, vector<8x32xf32> -> vector<8x32xf32>
    %555 = vector.broadcast %79 : vector<1x32xf32> to vector<8x32xf32>
    %556 = arith.addf %554, %555 : vector<8x32xf32>
    %cst_264 = arith.constant dense<0.000000e+00> : vector<8x32xf32>
    %557 = tpu.matmul %546, %75, %cst_264 {dimension_numbers = #tpu.dot_dimension_numbers<[1], [0], [0], [1], [0, 0, 1, 1], [], []>} : vector<8x32xf32>, vector<32x32xf32>, vector<8x32xf32> -> vector<8x32xf32>
    %558 = vector.broadcast %81 : vector<1x32xf32> to vector<8x32xf32>
    %559 = arith.addf %557, %558 : vector<8x32xf32>
    %560 = arith.index_cast %c3_i32_261 : i32 to index
    %c0_265 = arith.constant 0 : index
    %c0_266 = arith.constant 0 : index
    %561 = vector.load %arg24[%560, %c0_265, %c0_266] : memref<8x8x32xf32, #tpu.memory_space<vmem>>, vector<1x8x32xf32>
    %562 = vector.shape_cast %561 : vector<1x8x32xf32> to vector<8x32xf32>
    %563 = arith.addf %562, %553 : vector<8x32xf32>
    %564 = arith.negf %563 : vector<8x32xf32>
    %565 = math.exp %564 : vector<8x32xf32>
    %cst_267 = arith.constant 1.000000e+00 : f32
    %566 = vector.broadcast %cst_267 : f32 to vector<8x32xf32>
    %567 = arith.addf %566, %565 : vector<8x32xf32>
    %568 = arith.divf %566, %567 : vector<8x32xf32>
    %569 = arith.index_cast %c3_i32_261 : i32 to index
    %c0_268 = arith.constant 0 : index
    %c0_269 = arith.constant 0 : index
    %570 = vector.load %arg25[%569, %c0_268, %c0_269] : memref<8x8x32xf32, #tpu.memory_space<vmem>>, vector<1x8x32xf32>
    %571 = vector.shape_cast %570 : vector<1x8x32xf32> to vector<8x32xf32>
    %572 = arith.addf %571, %556 : vector<8x32xf32>
    %573 = arith.negf %572 : vector<8x32xf32>
    %574 = math.exp %573 : vector<8x32xf32>
    %cst_270 = arith.constant 1.000000e+00 : f32
    %575 = vector.broadcast %cst_270 : f32 to vector<8x32xf32>
    %576 = arith.addf %575, %574 : vector<8x32xf32>
    %577 = arith.divf %575, %576 : vector<8x32xf32>
    %578 = arith.index_cast %c3_i32_261 : i32 to index
    %c0_271 = arith.constant 0 : index
    %c0_272 = arith.constant 0 : index
    %579 = vector.load %arg26[%578, %c0_271, %c0_272] : memref<8x8x32xf32, #tpu.memory_space<vmem>>, vector<1x8x32xf32>
    %580 = vector.shape_cast %579 : vector<1x8x32xf32> to vector<8x32xf32>
    %581 = arith.mulf %568, %559 : vector<8x32xf32>
    %582 = arith.addf %580, %581 : vector<8x32xf32>
    %583 = math.tanh %582 : vector<8x32xf32>
    %cst_273 = arith.constant 1.000000e+00 : f32
    %584 = vector.broadcast %cst_273 : f32 to vector<8x32xf32>
    %585 = arith.subf %584, %577 : vector<8x32xf32>
    %586 = arith.mulf %585, %583 : vector<8x32xf32>
    %587 = arith.mulf %577, %546 : vector<8x32xf32>
    %588 = arith.addf %586, %587 : vector<8x32xf32>
    %589 = arith.index_cast %c3_i32_261 : i32 to index
    %c0_274 = arith.constant 0 : index
    %c0_275 = arith.constant 0 : index
    %590 = vector.load %arg28[%589, %c0_274, %c0_275] : memref<8x8x32xf32, #tpu.memory_space<vmem>>, vector<1x8x32xf32>
    %591 = vector.shape_cast %590 : vector<1x8x32xf32> to vector<8x32xf32>
    %592 = vector.shape_cast %588 : vector<8x32xf32> to vector<1x8x32xf32>
    tpu.vector_store %arg28[%589, %c0_274, %c0_275], %592 {strides = array<i32>} : memref<8x8x32xf32, #tpu.memory_space<vmem>>, vector<1x8x32xf32>,
    %c4_i32_276 = arith.constant 4 : i32
    %cst_277 = arith.constant dense<0.000000e+00> : vector<8x32xf32>
    %593 = tpu.matmul %588, %71, %cst_277 {dimension_numbers = #tpu.dot_dimension_numbers<[1], [0], [0], [1], [0, 0, 1, 1], [], []>} : vector<8x32xf32>, vector<32x32xf32>, vector<8x32xf32> -> vector<8x32xf32>
    %594 = vector.broadcast %77 : vector<1x32xf32> to vector<8x32xf32>
    %595 = arith.addf %593, %594 : vector<8x32xf32>
    %cst_278 = arith.constant dense<0.000000e+00> : vector<8x32xf32>
    %596 = tpu.matmul %588, %73, %cst_278 {dimension_numbers = #tpu.dot_dimension_numbers<[1], [0], [0], [1], [0, 0, 1, 1], [], []>} : vector<8x32xf32>, vector<32x32xf32>, vector<8x32xf32> -> vector<8x32xf32>
    %597 = vector.broadcast %79 : vector<1x32xf32> to vector<8x32xf32>
    %598 = arith.addf %596, %597 : vector<8x32xf32>
    %cst_279 = arith.constant dense<0.000000e+00> : vector<8x32xf32>
    %599 = tpu.matmul %588, %75, %cst_279 {dimension_numbers = #tpu.dot_dimension_numbers<[1], [0], [0], [1], [0, 0, 1, 1], [], []>} : vector<8x32xf32>, vector<32x32xf32>, vector<8x32xf32> -> vector<8x32xf32>
    %600 = vector.broadcast %81 : vector<1x32xf32> to vector<8x32xf32>
    %601 = arith.addf %599, %600 : vector<8x32xf32>
    %602 = arith.index_cast %c4_i32_276 : i32 to index
    %c0_280 = arith.constant 0 : index
    %c0_281 = arith.constant 0 : index
    %603 = vector.load %arg24[%602, %c0_280, %c0_281] : memref<8x8x32xf32, #tpu.memory_space<vmem>>, vector<1x8x32xf32>
    %604 = vector.shape_cast %603 : vector<1x8x32xf32> to vector<8x32xf32>
    %605 = arith.addf %604, %595 : vector<8x32xf32>
    %606 = arith.negf %605 : vector<8x32xf32>
    %607 = math.exp %606 : vector<8x32xf32>
    %cst_282 = arith.constant 1.000000e+00 : f32
    %608 = vector.broadcast %cst_282 : f32 to vector<8x32xf32>
    %609 = arith.addf %608, %607 : vector<8x32xf32>
    %610 = arith.divf %608, %609 : vector<8x32xf32>
    %611 = arith.index_cast %c4_i32_276 : i32 to index
    %c0_283 = arith.constant 0 : index
    %c0_284 = arith.constant 0 : index
    %612 = vector.load %arg25[%611, %c0_283, %c0_284] : memref<8x8x32xf32, #tpu.memory_space<vmem>>, vector<1x8x32xf32>
    %613 = vector.shape_cast %612 : vector<1x8x32xf32> to vector<8x32xf32>
    %614 = arith.addf %613, %598 : vector<8x32xf32>
    %615 = arith.negf %614 : vector<8x32xf32>
    %616 = math.exp %615 : vector<8x32xf32>
    %cst_285 = arith.constant 1.000000e+00 : f32
    %617 = vector.broadcast %cst_285 : f32 to vector<8x32xf32>
    %618 = arith.addf %617, %616 : vector<8x32xf32>
    %619 = arith.divf %617, %618 : vector<8x32xf32>
    %620 = arith.index_cast %c4_i32_276 : i32 to index
    %c0_286 = arith.constant 0 : index
    %c0_287 = arith.constant 0 : index
    %621 = vector.load %arg26[%620, %c0_286, %c0_287] : memref<8x8x32xf32, #tpu.memory_space<vmem>>, vector<1x8x32xf32>
    %622 = vector.shape_cast %621 : vector<1x8x32xf32> to vector<8x32xf32>
    %623 = arith.mulf %610, %601 : vector<8x32xf32>
    %624 = arith.addf %622, %623 : vector<8x32xf32>
    %625 = math.tanh %624 : vector<8x32xf32>
    %cst_288 = arith.constant 1.000000e+00 : f32
    %626 = vector.broadcast %cst_288 : f32 to vector<8x32xf32>
    %627 = arith.subf %626, %619 : vector<8x32xf32>
    %628 = arith.mulf %627, %625 : vector<8x32xf32>
    %629 = arith.mulf %619, %588 : vector<8x32xf32>
    %630 = arith.addf %628, %629 : vector<8x32xf32>
    %631 = arith.index_cast %c4_i32_276 : i32 to index
    %c0_289 = arith.constant 0 : index
    %c0_290 = arith.constant 0 : index
    %632 = vector.load %arg28[%631, %c0_289, %c0_290] : memref<8x8x32xf32, #tpu.memory_space<vmem>>, vector<1x8x32xf32>
    %633 = vector.shape_cast %632 : vector<1x8x32xf32> to vector<8x32xf32>
    %634 = vector.shape_cast %630 : vector<8x32xf32> to vector<1x8x32xf32>
    tpu.vector_store %arg28[%631, %c0_289, %c0_290], %634 {strides = array<i32>} : memref<8x8x32xf32, #tpu.memory_space<vmem>>, vector<1x8x32xf32>,
    %c5_i32_291 = arith.constant 5 : i32
    %cst_292 = arith.constant dense<0.000000e+00> : vector<8x32xf32>
    %635 = tpu.matmul %630, %71, %cst_292 {dimension_numbers = #tpu.dot_dimension_numbers<[1], [0], [0], [1], [0, 0, 1, 1], [], []>} : vector<8x32xf32>, vector<32x32xf32>, vector<8x32xf32> -> vector<8x32xf32>
    %636 = vector.broadcast %77 : vector<1x32xf32> to vector<8x32xf32>
    %637 = arith.addf %635, %636 : vector<8x32xf32>
    %cst_293 = arith.constant dense<0.000000e+00> : vector<8x32xf32>
    %638 = tpu.matmul %630, %73, %cst_293 {dimension_numbers = #tpu.dot_dimension_numbers<[1], [0], [0], [1], [0, 0, 1, 1], [], []>} : vector<8x32xf32>, vector<32x32xf32>, vector<8x32xf32> -> vector<8x32xf32>
    %639 = vector.broadcast %79 : vector<1x32xf32> to vector<8x32xf32>
    %640 = arith.addf %638, %639 : vector<8x32xf32>
    %cst_294 = arith.constant dense<0.000000e+00> : vector<8x32xf32>
    %641 = tpu.matmul %630, %75, %cst_294 {dimension_numbers = #tpu.dot_dimension_numbers<[1], [0], [0], [1], [0, 0, 1, 1], [], []>} : vector<8x32xf32>, vector<32x32xf32>, vector<8x32xf32> -> vector<8x32xf32>
    %642 = vector.broadcast %81 : vector<1x32xf32> to vector<8x32xf32>
    %643 = arith.addf %641, %642 : vector<8x32xf32>
    %644 = arith.index_cast %c5_i32_291 : i32 to index
    %c0_295 = arith.constant 0 : index
    %c0_296 = arith.constant 0 : index
    %645 = vector.load %arg24[%644, %c0_295, %c0_296] : memref<8x8x32xf32, #tpu.memory_space<vmem>>, vector<1x8x32xf32>
    %646 = vector.shape_cast %645 : vector<1x8x32xf32> to vector<8x32xf32>
    %647 = arith.addf %646, %637 : vector<8x32xf32>
    %648 = arith.negf %647 : vector<8x32xf32>
    %649 = math.exp %648 : vector<8x32xf32>
    %cst_297 = arith.constant 1.000000e+00 : f32
    %650 = vector.broadcast %cst_297 : f32 to vector<8x32xf32>
    %651 = arith.addf %650, %649 : vector<8x32xf32>
    %652 = arith.divf %650, %651 : vector<8x32xf32>
    %653 = arith.index_cast %c5_i32_291 : i32 to index
    %c0_298 = arith.constant 0 : index
    %c0_299 = arith.constant 0 : index
    %654 = vector.load %arg25[%653, %c0_298, %c0_299] : memref<8x8x32xf32, #tpu.memory_space<vmem>>, vector<1x8x32xf32>
    %655 = vector.shape_cast %654 : vector<1x8x32xf32> to vector<8x32xf32>
    %656 = arith.addf %655, %640 : vector<8x32xf32>
    %657 = arith.negf %656 : vector<8x32xf32>
    %658 = math.exp %657 : vector<8x32xf32>
    %cst_300 = arith.constant 1.000000e+00 : f32
    %659 = vector.broadcast %cst_300 : f32 to vector<8x32xf32>
    %660 = arith.addf %659, %658 : vector<8x32xf32>
    %661 = arith.divf %659, %660 : vector<8x32xf32>
    %662 = arith.index_cast %c5_i32_291 : i32 to index
    %c0_301 = arith.constant 0 : index
    %c0_302 = arith.constant 0 : index
    %663 = vector.load %arg26[%662, %c0_301, %c0_302] : memref<8x8x32xf32, #tpu.memory_space<vmem>>, vector<1x8x32xf32>
    %664 = vector.shape_cast %663 : vector<1x8x32xf32> to vector<8x32xf32>
    %665 = arith.mulf %652, %643 : vector<8x32xf32>
    %666 = arith.addf %664, %665 : vector<8x32xf32>
    %667 = math.tanh %666 : vector<8x32xf32>
    %cst_303 = arith.constant 1.000000e+00 : f32
    %668 = vector.broadcast %cst_303 : f32 to vector<8x32xf32>
    %669 = arith.subf %668, %661 : vector<8x32xf32>
    %670 = arith.mulf %669, %667 : vector<8x32xf32>
    %671 = arith.mulf %661, %630 : vector<8x32xf32>
    %672 = arith.addf %670, %671 : vector<8x32xf32>
    %673 = arith.index_cast %c5_i32_291 : i32 to index
    %c0_304 = arith.constant 0 : index
    %c0_305 = arith.constant 0 : index
    %674 = vector.load %arg28[%673, %c0_304, %c0_305] : memref<8x8x32xf32, #tpu.memory_space<vmem>>, vector<1x8x32xf32>
    %675 = vector.shape_cast %674 : vector<1x8x32xf32> to vector<8x32xf32>
    %676 = vector.shape_cast %672 : vector<8x32xf32> to vector<1x8x32xf32>
    tpu.vector_store %arg28[%673, %c0_304, %c0_305], %676 {strides = array<i32>} : memref<8x8x32xf32, #tpu.memory_space<vmem>>, vector<1x8x32xf32>,
    %c6_i32_306 = arith.constant 6 : i32
    %cst_307 = arith.constant dense<0.000000e+00> : vector<8x32xf32>
    %677 = tpu.matmul %672, %71, %cst_307 {dimension_numbers = #tpu.dot_dimension_numbers<[1], [0], [0], [1], [0, 0, 1, 1], [], []>} : vector<8x32xf32>, vector<32x32xf32>, vector<8x32xf32> -> vector<8x32xf32>
    %678 = vector.broadcast %77 : vector<1x32xf32> to vector<8x32xf32>
    %679 = arith.addf %677, %678 : vector<8x32xf32>
    %cst_308 = arith.constant dense<0.000000e+00> : vector<8x32xf32>
    %680 = tpu.matmul %672, %73, %cst_308 {dimension_numbers = #tpu.dot_dimension_numbers<[1], [0], [0], [1], [0, 0, 1, 1], [], []>} : vector<8x32xf32>, vector<32x32xf32>, vector<8x32xf32> -> vector<8x32xf32>
    %681 = vector.broadcast %79 : vector<1x32xf32> to vector<8x32xf32>
    %682 = arith.addf %680, %681 : vector<8x32xf32>
    %cst_309 = arith.constant dense<0.000000e+00> : vector<8x32xf32>
    %683 = tpu.matmul %672, %75, %cst_309 {dimension_numbers = #tpu.dot_dimension_numbers<[1], [0], [0], [1], [0, 0, 1, 1], [], []>} : vector<8x32xf32>, vector<32x32xf32>, vector<8x32xf32> -> vector<8x32xf32>
    %684 = vector.broadcast %81 : vector<1x32xf32> to vector<8x32xf32>
    %685 = arith.addf %683, %684 : vector<8x32xf32>
    %686 = arith.index_cast %c6_i32_306 : i32 to index
    %c0_310 = arith.constant 0 : index
    %c0_311 = arith.constant 0 : index
    %687 = vector.load %arg24[%686, %c0_310, %c0_311] : memref<8x8x32xf32, #tpu.memory_space<vmem>>, vector<1x8x32xf32>
    %688 = vector.shape_cast %687 : vector<1x8x32xf32> to vector<8x32xf32>
    %689 = arith.addf %688, %679 : vector<8x32xf32>
    %690 = arith.negf %689 : vector<8x32xf32>
    %691 = math.exp %690 : vector<8x32xf32>
    %cst_312 = arith.constant 1.000000e+00 : f32
    %692 = vector.broadcast %cst_312 : f32 to vector<8x32xf32>
    %693 = arith.addf %692, %691 : vector<8x32xf32>
    %694 = arith.divf %692, %693 : vector<8x32xf32>
    %695 = arith.index_cast %c6_i32_306 : i32 to index
    %c0_313 = arith.constant 0 : index
    %c0_314 = arith.constant 0 : index
    %696 = vector.load %arg25[%695, %c0_313, %c0_314] : memref<8x8x32xf32, #tpu.memory_space<vmem>>, vector<1x8x32xf32>
    %697 = vector.shape_cast %696 : vector<1x8x32xf32> to vector<8x32xf32>
    %698 = arith.addf %697, %682 : vector<8x32xf32>
    %699 = arith.negf %698 : vector<8x32xf32>
    %700 = math.exp %699 : vector<8x32xf32>
    %cst_315 = arith.constant 1.000000e+00 : f32
    %701 = vector.broadcast %cst_315 : f32 to vector<8x32xf32>
    %702 = arith.addf %701, %700 : vector<8x32xf32>
    %703 = arith.divf %701, %702 : vector<8x32xf32>
    %704 = arith.index_cast %c6_i32_306 : i32 to index
    %c0_316 = arith.constant 0 : index
    %c0_317 = arith.constant 0 : index
    %705 = vector.load %arg26[%704, %c0_316, %c0_317] : memref<8x8x32xf32, #tpu.memory_space<vmem>>, vector<1x8x32xf32>
    %706 = vector.shape_cast %705 : vector<1x8x32xf32> to vector<8x32xf32>
    %707 = arith.mulf %694, %685 : vector<8x32xf32>
    %708 = arith.addf %706, %707 : vector<8x32xf32>
    %709 = math.tanh %708 : vector<8x32xf32>
    %cst_318 = arith.constant 1.000000e+00 : f32
    %710 = vector.broadcast %cst_318 : f32 to vector<8x32xf32>
    %711 = arith.subf %710, %703 : vector<8x32xf32>
    %712 = arith.mulf %711, %709 : vector<8x32xf32>
    %713 = arith.mulf %703, %672 : vector<8x32xf32>
    %714 = arith.addf %712, %713 : vector<8x32xf32>
    %715 = arith.index_cast %c6_i32_306 : i32 to index
    %c0_319 = arith.constant 0 : index
    %c0_320 = arith.constant 0 : index
    %716 = vector.load %arg28[%715, %c0_319, %c0_320] : memref<8x8x32xf32, #tpu.memory_space<vmem>>, vector<1x8x32xf32>
    %717 = vector.shape_cast %716 : vector<1x8x32xf32> to vector<8x32xf32>
    %718 = vector.shape_cast %714 : vector<8x32xf32> to vector<1x8x32xf32>
    tpu.vector_store %arg28[%715, %c0_319, %c0_320], %718 {strides = array<i32>} : memref<8x8x32xf32, #tpu.memory_space<vmem>>, vector<1x8x32xf32>,
    %c7_i32_321 = arith.constant 7 : i32
    %cst_322 = arith.constant dense<0.000000e+00> : vector<8x32xf32>
    %719 = tpu.matmul %714, %71, %cst_322 {dimension_numbers = #tpu.dot_dimension_numbers<[1], [0], [0], [1], [0, 0, 1, 1], [], []>} : vector<8x32xf32>, vector<32x32xf32>, vector<8x32xf32> -> vector<8x32xf32>
    %720 = vector.broadcast %77 : vector<1x32xf32> to vector<8x32xf32>
    %721 = arith.addf %719, %720 : vector<8x32xf32>
    %cst_323 = arith.constant dense<0.000000e+00> : vector<8x32xf32>
    %722 = tpu.matmul %714, %73, %cst_323 {dimension_numbers = #tpu.dot_dimension_numbers<[1], [0], [0], [1], [0, 0, 1, 1], [], []>} : vector<8x32xf32>, vector<32x32xf32>, vector<8x32xf32> -> vector<8x32xf32>
    %723 = vector.broadcast %79 : vector<1x32xf32> to vector<8x32xf32>
    %724 = arith.addf %722, %723 : vector<8x32xf32>
    %cst_324 = arith.constant dense<0.000000e+00> : vector<8x32xf32>
    %725 = tpu.matmul %714, %75, %cst_324 {dimension_numbers = #tpu.dot_dimension_numbers<[1], [0], [0], [1], [0, 0, 1, 1], [], []>} : vector<8x32xf32>, vector<32x32xf32>, vector<8x32xf32> -> vector<8x32xf32>
    %726 = vector.broadcast %81 : vector<1x32xf32> to vector<8x32xf32>
    %727 = arith.addf %725, %726 : vector<8x32xf32>
    %728 = arith.index_cast %c7_i32_321 : i32 to index
    %c0_325 = arith.constant 0 : index
    %c0_326 = arith.constant 0 : index
    %729 = vector.load %arg24[%728, %c0_325, %c0_326] : memref<8x8x32xf32, #tpu.memory_space<vmem>>, vector<1x8x32xf32>
    %730 = vector.shape_cast %729 : vector<1x8x32xf32> to vector<8x32xf32>
    %731 = arith.addf %730, %721 : vector<8x32xf32>
    %732 = arith.negf %731 : vector<8x32xf32>
    %733 = math.exp %732 : vector<8x32xf32>
    %cst_327 = arith.constant 1.000000e+00 : f32
    %734 = vector.broadcast %cst_327 : f32 to vector<8x32xf32>
    %735 = arith.addf %734, %733 : vector<8x32xf32>
    %736 = arith.divf %734, %735 : vector<8x32xf32>
    %737 = arith.index_cast %c7_i32_321 : i32 to index
    %c0_328 = arith.constant 0 : index
    %c0_329 = arith.constant 0 : index
    %738 = vector.load %arg25[%737, %c0_328, %c0_329] : memref<8x8x32xf32, #tpu.memory_space<vmem>>, vector<1x8x32xf32>
    %739 = vector.shape_cast %738 : vector<1x8x32xf32> to vector<8x32xf32>
    %740 = arith.addf %739, %724 : vector<8x32xf32>
    %741 = arith.negf %740 : vector<8x32xf32>
    %742 = math.exp %741 : vector<8x32xf32>
    %cst_330 = arith.constant 1.000000e+00 : f32
    %743 = vector.broadcast %cst_330 : f32 to vector<8x32xf32>
    %744 = arith.addf %743, %742 : vector<8x32xf32>
    %745 = arith.divf %743, %744 : vector<8x32xf32>
    %746 = arith.index_cast %c7_i32_321 : i32 to index
    %c0_331 = arith.constant 0 : index
    %c0_332 = arith.constant 0 : index
    %747 = vector.load %arg26[%746, %c0_331, %c0_332] : memref<8x8x32xf32, #tpu.memory_space<vmem>>, vector<1x8x32xf32>
    %748 = vector.shape_cast %747 : vector<1x8x32xf32> to vector<8x32xf32>
    %749 = arith.mulf %736, %727 : vector<8x32xf32>
    %750 = arith.addf %748, %749 : vector<8x32xf32>
    %751 = math.tanh %750 : vector<8x32xf32>
    %cst_333 = arith.constant 1.000000e+00 : f32
    %752 = vector.broadcast %cst_333 : f32 to vector<8x32xf32>
    %753 = arith.subf %752, %745 : vector<8x32xf32>
    %754 = arith.mulf %753, %751 : vector<8x32xf32>
    %755 = arith.mulf %745, %714 : vector<8x32xf32>
    %756 = arith.addf %754, %755 : vector<8x32xf32>
    %757 = arith.index_cast %c7_i32_321 : i32 to index
    %c0_334 = arith.constant 0 : index
    %c0_335 = arith.constant 0 : index
    %758 = vector.load %arg28[%757, %c0_334, %c0_335] : memref<8x8x32xf32, #tpu.memory_space<vmem>>, vector<1x8x32xf32>
    %759 = vector.shape_cast %758 : vector<1x8x32xf32> to vector<8x32xf32>
    %760 = vector.shape_cast %756 : vector<8x32xf32> to vector<1x8x32xf32>
    tpu.vector_store %arg28[%757, %c0_334, %c0_335], %760 {strides = array<i32>} : memref<8x8x32xf32, #tpu.memory_space<vmem>>, vector<1x8x32xf32>,
    %c8_i32_336 = arith.constant 8 : i32
    %c0_337 = arith.constant 0 : index
    %c0_338 = arith.constant 0 : index
    %761 = vector.load %arg20[%c0_337, %c0_338] : memref<8x32xf32, #tpu.memory_space<vmem>>, vector<8x32xf32>
    tpu.vector_store %arg20[%c0_337, %c0_338], %756 {strides = array<i32>} : memref<8x32xf32, #tpu.memory_space<vmem>>, vector<8x32xf32>,
    %c0_339 = arith.constant 0 : index
    %c0_340 = arith.constant 0 : index
    %c0_341 = arith.constant 0 : index
    %762 = vector.load %arg27[%c0_339, %c0_340, %c0_341] : memref<8x8x32xf32, #tpu.memory_space<vmem>>, vector<8x8x32xf32>
    %763 = vector.shape_cast %762 : vector<8x8x32xf32> to vector<64x32xf32>
    %c0_342 = arith.constant 0 : index
    %c0_343 = arith.constant 0 : index
    %c0_344 = arith.constant 0 : index
    %764 = vector.load %arg28[%c0_342, %c0_343, %c0_344] : memref<8x8x32xf32, #tpu.memory_space<vmem>>, vector<8x8x32xf32>
    %765 = vector.shape_cast %764 : vector<8x8x32xf32> to vector<64x32xf32>
    %c0_345 = arith.constant 0 : index
    %c0_346 = arith.constant 0 : index
    %766 = vector.load %arg2[%c0_345, %c0_346] : memref<64x64xf32, #tpu.memory_space<vmem>>, vector<64x64xf32>
    %cst_347 = arith.constant dense<0.000000e+00> : vector<64x32xf32>
    %767 = tpu.matmul %766, %763, %cst_347 {dimension_numbers = #tpu.dot_dimension_numbers<[1], [0], [0], [1], [0, 0, 1, 1], [], []>} : vector<64x64xf32>, vector<64x32xf32>, vector<64x32xf32> -> vector<64x32xf32>
    %768 = vector.shape_cast %767 : vector<64x32xf32> to vector<8x8x32xf32>
    %c0_348 = arith.constant 0 : index
    %c0_349 = arith.constant 0 : index
    %769 = vector.load %arg3[%c0_348, %c0_349] : memref<64x64xf32, #tpu.memory_space<vmem>>, vector<64x64xf32>
    %cst_350 = arith.constant dense<0.000000e+00> : vector<64x32xf32>
    %770 = tpu.matmul %769, %765, %cst_350 {dimension_numbers = #tpu.dot_dimension_numbers<[1], [0], [0], [1], [0, 0, 1, 1], [], []>} : vector<64x64xf32>, vector<64x32xf32>, vector<64x32xf32> -> vector<64x32xf32>
    %c0_351 = arith.constant 0 : index
    %c0_352 = arith.constant 0 : index
    %771 = vector.load %arg14[%c0_351, %c0_352] : memref<32x32xf32, #tpu.memory_space<vmem>>, vector<32x32xf32>
    %cst_353 = arith.constant dense<0.000000e+00> : vector<64x32xf32>
    %772 = tpu.matmul %770, %771, %cst_353 {dimension_numbers = #tpu.dot_dimension_numbers<[1], [0], [0], [1], [0, 0, 1, 1], [], []>} : vector<64x32xf32>, vector<32x32xf32>, vector<64x32xf32> -> vector<64x32xf32>
    %773 = vector.shape_cast %772 : vector<64x32xf32> to vector<8x8x32xf32>
    "tpu.trace_start"() <{level = 10 : i32, message = "bth,bsh->bts"}> : () -> ()
    %cst_354 = arith.constant dense<0.000000e+00> : vector<8x8x8xf32>
    %774 = tpu.matmul %773, %768, %cst_354 {dimension_numbers = #tpu.dot_dimension_numbers<[2], [2], [1], [1], [0, 0, 0, 1, 1, 1], [0], [0]>} : vector<8x8x32xf32>, vector<8x8x32xf32>, vector<8x8x8xf32> -> vector<8x8x8xf32>
    "tpu.trace_stop"() : () -> ()
    %cst_355 = arith.constant dense<0xFF800000> : vector<8x8xf32>
    %775 = vector.multi_reduction <maximumf>, %774, %cst_355 [2] : vector<8x8x8xf32> to vector<8x8xf32>
    %776 = vector.shape_cast %775 : vector<8x8xf32> to vector<8x8x1xf32>
    %777 = vector.broadcast %776 : vector<8x8x1xf32> to vector<8x8x8xf32>
    %778 = arith.subf %774, %777 : vector<8x8x8xf32>
    %779 = math.exp %778 : vector<8x8x8xf32>
    %cst_356 = arith.constant dense<0.000000e+00> : vector<8x8xf32>
    %780 = vector.multi_reduction <add>, %779, %cst_356 [2] : vector<8x8x8xf32> to vector<8x8xf32>
    %781 = vector.shape_cast %780 : vector<8x8xf32> to vector<8x8x1xf32>
    %782 = tpu.reciprocal %781 {approx = true} : vector<8x8x1xf32> -> vector<8x8x1xf32>
    %783 = vector.broadcast %782 : vector<8x8x1xf32> to vector<8x8x8xf32>
    %784 = arith.mulf %779, %783 : vector<8x8x8xf32>
    "tpu.trace_start"() <{level = 10 : i32, message = "bts,bsh->bth"}> : () -> ()
    %cst_357 = arith.constant dense<0.000000e+00> : vector<8x8x32xf32>
    %785 = tpu.matmul %784, %768, %cst_357 {dimension_numbers = #tpu.dot_dimension_numbers<[2], [1], [1], [2], [0, 0, 0, 1, 1, 2], [0], [0]>} : vector<8x8x8xf32>, vector<8x8x32xf32>, vector<8x8x32xf32> -> vector<8x8x32xf32>
    "tpu.trace_stop"() : () -> ()
    %786 = vector.shape_cast %785 : vector<8x8x32xf32> to vector<64x32xf32>
    %c0_358 = arith.constant 0 : index
    %c0_359 = arith.constant 0 : index
    %c0_360 = arith.constant 0 : index
    %787 = vector.load %arg15[%c0_358, %c0_359, %c0_360] : memref<2x32x32xf32, #tpu.memory_space<vmem>>, vector<1x32x32xf32>
    %788 = vector.shape_cast %787 : vector<1x32x32xf32> to vector<32x32xf32>
    %cst_361 = arith.constant dense<0.000000e+00> : vector<64x32xf32>
    %789 = tpu.matmul %786, %788, %cst_361 {dimension_numbers = #tpu.dot_dimension_numbers<[1], [0], [0], [1], [0, 0, 1, 1], [], []>} : vector<64x32xf32>, vector<32x32xf32>, vector<64x32xf32> -> vector<64x32xf32>
    %c1_362 = arith.constant 1 : index
    %c0_363 = arith.constant 0 : index
    %c0_364 = arith.constant 0 : index
    %790 = vector.load %arg15[%c1_362, %c0_363, %c0_364] : memref<2x32x32xf32, #tpu.memory_space<vmem>>, vector<1x32x32xf32>
    %791 = vector.shape_cast %790 : vector<1x32x32xf32> to vector<32x32xf32>
    %cst_365 = arith.constant dense<0.000000e+00> : vector<64x32xf32>
    %792 = tpu.matmul %770, %791, %cst_365 {dimension_numbers = #tpu.dot_dimension_numbers<[1], [0], [0], [1], [0, 0, 1, 1], [], []>} : vector<64x32xf32>, vector<32x32xf32>, vector<64x32xf32> -> vector<64x32xf32>
    %793 = arith.addf %789, %792 : vector<64x32xf32>
    %c0_366 = arith.constant 0 : index
    %c0_367 = arith.constant 0 : index
    %794 = vector.load %arg16[%c0_366, %c0_367] : memref<1x32xf32, #tpu.memory_space<vmem>>, vector<1x32xf32>
    %795 = vector.broadcast %794 : vector<1x32xf32> to vector<64x32xf32>
    %796 = arith.addf %793, %795 : vector<64x32xf32>
    %797 = math.tanh %796 : vector<64x32xf32>
    %c0_368 = arith.constant 0 : index
    %c0_369 = arith.constant 0 : index
    %798 = vector.load %arg17[%c0_368, %c0_369] : memref<32x16xf32, #tpu.memory_space<vmem>>, vector<32x16xf32>
    %cst_370 = arith.constant dense<0.000000e+00> : vector<64x16xf32>
    %799 = tpu.matmul %797, %798, %cst_370 {dimension_numbers = #tpu.dot_dimension_numbers<[1], [0], [0], [1], [0, 0, 1, 1], [], []>} : vector<64x32xf32>, vector<32x16xf32>, vector<64x16xf32> -> vector<64x16xf32>
    %c0_371 = arith.constant 0 : index
    %c0_372 = arith.constant 0 : index
    %800 = vector.load %arg18[%c0_371, %c0_372] : memref<1x16xf32, #tpu.memory_space<vmem>>, vector<1x16xf32>
    %801 = vector.broadcast %800 : vector<1x16xf32> to vector<64x16xf32>
    %802 = arith.addf %799, %801 : vector<64x16xf32>
    %cst_373 = arith.constant dense<0xFF800000> : vector<64xf32>
    %803 = vector.multi_reduction <maximumf>, %802, %cst_373 [1] : vector<64x16xf32> to vector<64xf32>
    %804 = vector.shape_cast %803 : vector<64xf32> to vector<64x1xf32>
    %805 = vector.broadcast %804 : vector<64x1xf32> to vector<64x16xf32>
    %806 = arith.subf %802, %805 : vector<64x16xf32>
    %807 = math.exp %806 : vector<64x16xf32>
    %cst_374 = arith.constant dense<0.000000e+00> : vector<64xf32>
    %808 = vector.multi_reduction <add>, %807, %cst_374 [1] : vector<64x16xf32> to vector<64xf32>
    %809 = vector.shape_cast %808 : vector<64xf32> to vector<64x1xf32>
    %810 = math.log %809 : vector<64x1xf32>
    %811 = arith.addf %804, %810 : vector<64x1xf32>
    %812 = vector.broadcast %811 : vector<64x1xf32> to vector<64x16xf32>
    %813 = arith.subf %802, %812 : vector<64x16xf32>
    %c0_375 = arith.constant 0 : index
    %c0_376 = arith.constant 0 : index
    %814 = vector.load %arg19[%c0_375, %c0_376] : memref<64x16xf32, #tpu.memory_space<vmem>>, vector<64x16xf32>
    tpu.vector_store %arg19[%c0_375, %c0_376], %813 {strides = array<i32>} : memref<64x16xf32, #tpu.memory_space<vmem>>, vector<64x16xf32>,
    return
  }
}

</mosaic_0001>

<llo_original>
// kernel: encoder_decoder_forward.1
$region0: #{encoder_decoder_forward.1}
  #allocation0 [shape = 'u32[]', space=smem, size = 0x4, offset = 0x4, fixed_abs, tag = 'smem constant byte address 0x4 - core index']
  #allocation1 [shape = 'u32[144,128]{1,0:T(1,128)}', space=vmem, size = 0x12000, scoped, tag = 'internal scratch']
  #allocation2 [shape = 'f32[8,8,32]{2,1,0:T(8,128)}', space=vmem, size = 0x8000, scoped, tag = 'scratch operand']
  #allocation3 [shape = 'f32[8,8,32]{2,1,0:T(8,128)}', space=vmem, size = 0x8000, scoped, tag = 'scratch operand']
  #allocation4 [shape = 'f32[8,8,32]{2,1,0:T(8,128)}', space=vmem, size = 0x8000, scoped, tag = 'scratch operand']
  #allocation5 [shape = 'f32[8,8,32]{2,1,0:T(8,128)}', space=vmem, size = 0x8000, scoped, tag = 'scratch operand']
  #allocation6 [shape = 'f32[8,8,32]{2,1,0:T(8,128)}', space=vmem, size = 0x8000, scoped, tag = 'scratch operand']
  #allocation7 [shape = 'f32[8,8,32]{2,1,0:T(8,128)}', space=vmem, size = 0x8000, scoped, tag = 'scratch operand']
  #allocation8 [shape = 'f32[8,8,32]{2,1,0:T(8,128)}', space=vmem, size = 0x8000, scoped, tag = 'scratch operand']
  #allocation9 [shape = 'f32[8,8,32]{2,1,0:T(8,128)}', space=vmem, size = 0x8000, scoped, tag = 'scratch operand']
  %s0 = inlined_call_operand.vmem [shape: f32[8,8,32], index: 0, kind: input, shape index: {}]
  %s1 = inlined_call_operand.vmem [shape: f32[8,8,32], index: 1, kind: input, shape index: {}]
  %s2 = inlined_call_operand.vmem [shape: f32[64,64], index: 2, kind: input, shape index: {}, may-alias: {2,3}]
  %s3 = inlined_call_operand.vmem [shape: f32[64,64], index: 3, kind: input, shape index: {}, may-alias: {2,3}]
  %s4 = inlined_call_operand.vmem [shape: f32[3,32,32], index: 4, kind: input, shape index: {}]
  %s5 = inlined_call_operand.vmem [shape: f32[3,32,32], index: 5, kind: input, shape index: {}]
  %s6 = inlined_call_operand.vmem [shape: f32[3,1,32], index: 6, kind: input, shape index: {}]
  %s7 = inlined_call_operand.vmem [shape: f32[3,1,32], index: 7, kind: input, shape index: {}]
  %s8 = inlined_call_operand.vmem [shape: f32[3,32,32], index: 8, kind: input, shape index: {}]
  %s9 = inlined_call_operand.vmem [shape: f32[3,32,32], index: 9, kind: input, shape index: {}]
  %s10 = inlined_call_operand.vmem [shape: f32[3,1,32], index: 10, kind: input, shape index: {}]
  %s11 = inlined_call_operand.vmem [shape: f32[3,1,32], index: 11, kind: input, shape index: {}]
  %s12 = inlined_call_operand.vmem [shape: f32[32,32], index: 12, kind: input, shape index: {}]
  %s13 = inlined_call_operand.vmem [shape: f32[1,32], index: 13, kind: input, shape index: {}]
  %s14 = inlined_call_operand.vmem [shape: f32[32,32], index: 14, kind: input, shape index: {}]
  %s15 = inlined_call_operand.vmem [shape: f32[2,32,32], index: 15, kind: input, shape index: {}]
  %s16 = inlined_call_operand.vmem [shape: f32[1,32], index: 16, kind: input, shape index: {}]
  %s17 = inlined_call_operand.vmem [shape: f32[32,16], index: 17, kind: input, shape index: {}]
  %s18 = inlined_call_operand.vmem [shape: f32[1,16], index: 18, kind: input, shape index: {}]
  %s19 = inlined_call_operand.vmem [shape: f32[64,16], index: 19, kind: output, shape index: {0}]
  %s20 = inlined_call_operand.vmem [shape: f32[8,32], index: 20, kind: output, shape index: {1}]
  %21 = xla_tuple %s19, %s20
  %s22 = sld [smem:[#allocation0]]
  $region94: #{encoder_decoder_forward.1} parent=0
    _
  %s24 = ssub.s32 1, %s22
  %s25 = scalar_select 0, %s24, %s22
  // Predicated region
  $region2: #{encoder_decoder_forward.1} parent=0 // pred_check
    _
  $region3: #{encoder_decoder_forward.1} parent=0 // pred_check_branch
    %27 = sbr.rel (0) target = $region5
  $region4: #{encoder_decoder_forward.1} parent=0 // pred_region
    _
  $region5: #{encoder_decoder_forward.1} parent=0 // pred_fallthru
    _
  // Predicated region
  $region6: #{encoder_decoder_forward.1} parent=0 // pred_check
    _
  $region7: #{encoder_decoder_forward.1} parent=0 // pred_check_branch
    %29 = sbr.rel (0) target = $region9
  $region8: #{encoder_decoder_forward.1} parent=0 // pred_region
    _
  $region9: #{encoder_decoder_forward.1} parent=0 // pred_fallthru
    _
  // Predicated region
  $region10: #{encoder_decoder_forward.1} parent=0 // pred_check
    _
  $region11: #{encoder_decoder_forward.1} parent=0 // pred_check_branch
    %31 = sbr.rel (0) target = $region13
  $region12: #{encoder_decoder_forward.1} parent=0 // pred_region
    _
  $region13: #{encoder_decoder_forward.1} parent=0 // pred_fallthru
    _
  // Predicated region
  $region14: #{encoder_decoder_forward.1} parent=0 // pred_check
    _
  $region15: #{encoder_decoder_forward.1} parent=0 // pred_check_branch
    %33 = sbr.rel (0) target = $region17
  $region16: #{encoder_decoder_forward.1} parent=0 // pred_region
    _
  $region17: #{encoder_decoder_forward.1} parent=0 // pred_fallthru
    _
  // Predicated region
  $region18: #{encoder_decoder_forward.1} parent=0 // pred_check
    _
  $region19: #{encoder_decoder_forward.1} parent=0 // pred_check_branch
    %35 = sbr.rel (0) target = $region21
  $region20: #{encoder_decoder_forward.1} parent=0 // pred_region
    _
  $region21: #{encoder_decoder_forward.1} parent=0 // pred_fallthru
    _
  // Predicated region
  $region22: #{encoder_decoder_forward.1} parent=0 // pred_check
    _
  $region23: #{encoder_decoder_forward.1} parent=0 // pred_check_branch
    %37 = sbr.rel (0) target = $region25
  $region24: #{encoder_decoder_forward.1} parent=0 // pred_region
    _
  $region25: #{encoder_decoder_forward.1} parent=0 // pred_fallthru
    _
  // Predicated region
  $region26: #{encoder_decoder_forward.1} parent=0 // pred_check
    _
  $region27: #{encoder_decoder_forward.1} parent=0 // pred_check_branch
    %39 = sbr.rel (0) target = $region29
  $region28: #{encoder_decoder_forward.1} parent=0 // pred_region
    _
  $region29: #{encoder_decoder_forward.1} parent=0 // pred_fallthru
    _
  // Predicated region
  $region30: #{encoder_decoder_forward.1} parent=0 // pred_check
    _
  $region31: #{encoder_decoder_forward.1} parent=0 // pred_check_branch
    %41 = sbr.rel (0) target = $region33
  $region32: #{encoder_decoder_forward.1} parent=0 // pred_region
    _
  $region33: #{encoder_decoder_forward.1} parent=0 // pred_fallthru
    _
  // Predicated region
  $region34: #{encoder_decoder_forward.1} parent=0 // pred_check
    _
  $region35: #{encoder_decoder_forward.1} parent=0 // pred_check_branch
    %43 = sbr.rel (0) target = $region37
  $region36: #{encoder_decoder_forward.1} parent=0 // pred_region
    _
  $region37: #{encoder_decoder_forward.1} parent=0 // pred_fallthru
    _
  // Predicated region
  $region38: #{encoder_decoder_forward.1} parent=0 // pred_check
    _
  $region39: #{encoder_decoder_forward.1} parent=0 // pred_check_branch
    %45 = sbr.rel (0) target = $region41
  $region40: #{encoder_decoder_forward.1} parent=0 // pred_region
    _
  $region41: #{encoder_decoder_forward.1} parent=0 // pred_fallthru
    _
  // Predicated region
  $region42: #{encoder_decoder_forward.1} parent=0 // pred_check
    _
  $region43: #{encoder_decoder_forward.1} parent=0 // pred_check_branch
    %47 = sbr.rel (0) target = $region45
  $region44: #{encoder_decoder_forward.1} parent=0 // pred_region
    _
  $region45: #{encoder_decoder_forward.1} parent=0 // pred_fallthru
    _
  // Predicated region
  $region46: #{encoder_decoder_forward.1} parent=0 // pred_check
    _
  $region47: #{encoder_decoder_forward.1} parent=0 // pred_check_branch
    %49 = sbr.rel (0) target = $region49
  $region48: #{encoder_decoder_forward.1} parent=0 // pred_region
    _
  $region49: #{encoder_decoder_forward.1} parent=0 // pred_fallthru
    _
  // Predicated region
  $region50: #{encoder_decoder_forward.1} parent=0 // pred_check
    _
  $region51: #{encoder_decoder_forward.1} parent=0 // pred_check_branch
    %51 = sbr.rel (0) target = $region53
  $region52: #{encoder_decoder_forward.1} parent=0 // pred_region
    _
  $region53: #{encoder_decoder_forward.1} parent=0 // pred_fallthru
    _
  // Predicated region
  $region54: #{encoder_decoder_forward.1} parent=0 // pred_check
    _
  $region55: #{encoder_decoder_forward.1} parent=0 // pred_check_branch
    %53 = sbr.rel (0) target = $region57
  $region56: #{encoder_decoder_forward.1} parent=0 // pred_region
    _
  $region57: #{encoder_decoder_forward.1} parent=0 // pred_fallthru
    _
  // Predicated region
  $region58: #{encoder_decoder_forward.1} parent=0 // pred_check
    _
  $region59: #{encoder_decoder_forward.1} parent=0 // pred_check_branch
    %55 = sbr.rel (0) target = $region61
  $region60: #{encoder_decoder_forward.1} parent=0 // pred_region
    _
  $region61: #{encoder_decoder_forward.1} parent=0 // pred_fallthru
    _
  // Predicated region
  $region62: #{encoder_decoder_forward.1} parent=0 // pred_check
    _
  $region63: #{encoder_decoder_forward.1} parent=0 // pred_check_branch
    %57 = sbr.rel (0) target = $region65
  $region64: #{encoder_decoder_forward.1} parent=0 // pred_region
    _
  $region65: #{encoder_decoder_forward.1} parent=0 // pred_fallthru
    _
  // Predicated region
  $region66: #{encoder_decoder_forward.1} parent=0 // pred_check
    _
  $region67: #{encoder_decoder_forward.1} parent=0 // pred_check_branch
    %59 = sbr.rel (0) target = $region69
  $region68: #{encoder_decoder_forward.1} parent=0 // pred_region
    _
  $region69: #{encoder_decoder_forward.1} parent=0 // pred_fallthru
    _
  // Predicated region
  $region70: #{encoder_decoder_forward.1} parent=0 // pred_check
    _
  $region71: #{encoder_decoder_forward.1} parent=0 // pred_check_branch
    %61 = sbr.rel (0) target = $region73
  $region72: #{encoder_decoder_forward.1} parent=0 // pred_region
    _
  $region73: #{encoder_decoder_forward.1} parent=0 // pred_fallthru
    _
  // Predicated region
  $region74: #{encoder_decoder_forward.1} parent=0 // pred_check
    _
  $region75: #{encoder_decoder_forward.1} parent=0 // pred_check_branch
    %63 = sbr.rel (0) target = $region77
  $region76: #{encoder_decoder_forward.1} parent=0 // pred_region
    _
  $region77: #{encoder_decoder_forward.1} parent=0 // pred_fallthru
    _
  %v64 = vld [vmem:[%s0] sm:$0xff]
  %v65 = vld [vmem:[%s0 + $0x8] sm:$0xff]
  %v66 = vld [vmem:[%s0 + $0x10] sm:$0xff]
  %v67 = vld [vmem:[%s0 + $0x18] sm:$0xff]
  %v68 = vld [vmem:[%s0 + $0x20] sm:$0xff]
  %v69 = vld [vmem:[%s0 + $0x28] sm:$0xff]
  %v70 = vld [vmem:[%s0 + $0x30] sm:$0xff]
  %v71 = vld [vmem:[%s0 + $0x38] sm:$0xff]
  %v72 = vld [vmem:[%s1] sm:$0xff]
  %v73 = vld [vmem:[%s1 + $0x8] sm:$0xff]
  %v74 = vld [vmem:[%s1 + $0x10] sm:$0xff]
  %v75 = vld [vmem:[%s1 + $0x18] sm:$0xff]
  %v76 = vld [vmem:[%s1 + $0x20] sm:$0xff]
  %v77 = vld [vmem:[%s1 + $0x28] sm:$0xff]
  %v78 = vld [vmem:[%s1 + $0x30] sm:$0xff]
  %v79 = vld [vmem:[%s1 + $0x38] sm:$0xff]
  %v80 = vld [vmem:[%s4] sm:$0xff]
  %v81 = vld [vmem:[%s4 + $0x8] sm:$0xff]
  %v82 = vld [vmem:[%s4 + $0x10] sm:$0xff]
  %v83 = vld [vmem:[%s4 + $0x18] sm:$0xff]
  %v84 = vld [vmem:[%s6] sm:$0x1]
  %v86 = vlaneseq
  %v87 = vshrl.u32 %v86, 7
  %v88 = vsub.s32 0, %v87
  %v89 = vrot.slane %v84, %v88
  %vm91 = vcmask 261120
  %v93 = vsel %vm91, %v64, 0
  %v96 = vsel %vm91, %v65, 0
  %v99 = vsel %vm91, %v66, 0
  %v102 = vsel %vm91, %v67, 0
  %v105 = vsel %vm91, %v68, 0
  %v108 = vsel %vm91, %v69, 0
  %v111 = vsel %vm91, %v70, 0
  %v114 = vsel %vm91, %v71, 0
  %116 = vmatprep.subr.mxu0 0.0
  %117 = vmatpush1.msra.mxu0 %v80
  %118 = vmatprep.subr.mxu0 0.0
  %119 = vmatpush1.msra.mxu0 %v81
  %120 = vmatprep.subr.mxu0 0.0
  %121 = vmatpush1.msra.mxu0 %v82
  %122 = vmatprep.subr.mxu0 0.0
  %123 = vmatpush1.msra.mxu0 %v83
  %124 = vmatprep.subr.mxu0 0.0
  %125 = vmatpush1.msra.mxu0 0.0
  %126 = vmatprep.subr.mxu0 0.0
  %127 = vmatpush1.msra.mxu0 0.0
  %128 = vmatprep.subr.mxu0 0.0
  %129 = vmatpush1.msra.mxu0 0.0
  %130 = vmatprep.subr.mxu0 0.0
  %131 = vmatpush1.msra.mxu0 0.0
  %132 = vmatprep.subr.mxu0 0.0
  %133 = vmatpush1.msra.mxu0 0.0
  %134 = vmatprep.subr.mxu0 0.0
  %135 = vmatpush1.msra.mxu0 0.0
  %136 = vmatprep.subr.mxu0 0.0
  %137 = vmatpush1.msra.mxu0 0.0
  %138 = vmatprep.subr.mxu0 0.0
  %139 = vmatpush1.msra.mxu0 0.0
  %140 = vmatprep.subr.mxu0 0.0
  %141 = vmatpush1.msra.mxu0 0.0
  %142 = vmatprep.subr.mxu0 0.0
  %143 = vmatpush1.msra.mxu0 0.0
  %144 = vmatprep.subr.mxu0 0.0
  %145 = vmatpush1.msra.mxu0 0.0
  %146 = vmatprep.subr.mxu0 0.0
  %147 = vmatpush1.msra.mxu0 0.0
  %148 = vmatprep.subr.mxu0 0.0
  %149 = vmatpush1.msra.mxu0 0.0
  %150 = vmatprep.subr.mxu0 0.0
  %151 = vmatpush1.msra.mxu0 0.0
  %152 = vmatprep.subr.mxu0 0.0
  %153 = vmatpush1.msra.mxu0 0.0
  %154 = vmatprep.subr.mxu0 0.0
  %155 = vmatpush1.msra.mxu0 0.0
  %156 = vmatprep.subr.mxu0 0.0
  %157 = vmatpush1.msra.mxu0 0.0
  %158 = vmatprep.subr.mxu0 0.0
  %159 = vmatpush1.msra.mxu0 0.0
  %160 = vmatprep.subr.mxu0 0.0
  %161 = vmatpush1.msra.mxu0 0.0
  %162 = vmatprep.subr.mxu0 0.0
  %163 = vmatpush1.msra.mxu0 0.0
  %164 = vmatprep.subr.mxu0 0.0
  %165 = vmatpush1.msra.mxu0 0.0
  %166 = vmatprep.subr.mxu0 0.0
  %167 = vmatpush1.msra.mxu0 0.0
  %168 = vmatprep.subr.mxu0 0.0
  %169 = vmatpush1.msra.mxu0 0.0
  %170 = vmatprep.subr.mxu0 0.0
  %171 = vmatpush1.msra.mxu0 0.0
  %172 = vmatprep.subr.mxu0 0.0
  %173 = vmatpush1.msra.mxu0 0.0
  %174 = vmatprep.subr.mxu0 0.0
  %175 = vmatpush1.msra.mxu0 0.0
  %176 = vmatprep.subr.mxu0 0.0
  %177 = vmatpush1.msra.mxu0 0.0
  %178 = vmatprep.subr.mxu0 0.0
  %179 = vmatpush1.msra.mxu0 0.0
  %180 = vmatprep.mubr.f32.mxu0 0.0
  %181 = vmatmul.mubr.f32.gmra.mrb[0].mxu0 %v93
  %v182 = vpop.f32.mrb[0].mxu0
  %v183 = vadd.f32 %v89, %v182
  %v184 = vpop.f32.mrb[0].mxu0
  %185 = vmatprep.mubr.f32.mxu0 0.0
  %186 = vmatmul.mubr.f32.gmra.mrb[0].mxu0 %v96
  %v187 = vpop.f32.mrb[0].mxu0
  %v188 = vadd.f32 %v89, %v187
  %v189 = vpop.f32.mrb[0].mxu0
  %190 = vmatprep.mubr.f32.mxu0 0.0
  %191 = vmatmul.mubr.f32.gmra.mrb[0].mxu0 %v99
  %v192 = vpop.f32.mrb[0].mxu0
  %v193 = vadd.f32 %v89, %v192
  %v194 = vpop.f32.mrb[0].mxu0
  %195 = vmatprep.mubr.f32.mxu0 0.0
  %196 = vmatmul.mubr.f32.gmra.mrb[0].mxu0 %v102
  %v197 = vpop.f32.mrb[0].mxu0
  %v198 = vadd.f32 %v89, %v197
  %v199 = vpop.f32.mrb[0].mxu0
  %200 = vmatprep.mubr.f32.mxu0 0.0
  %201 = vmatmul.mubr.f32.gmra.mrb[0].mxu0 %v105
  %v202 = vpop.f32.mrb[0].mxu0
  %v203 = vadd.f32 %v89, %v202
  %v204 = vpop.f32.mrb[0].mxu0
  %205 = vmatprep.mubr.f32.mxu0 0.0
  %206 = vmatmul.mubr.f32.gmra.mrb[0].mxu0 %v108
  %v207 = vpop.f32.mrb[0].mxu0
  %v208 = vadd.f32 %v89, %v207
  %v209 = vpop.f32.mrb[0].mxu0
  %210 = vmatprep.mubr.f32.mxu0 0.0
  %211 = vmatmul.mubr.f32.gmra.mrb[0].mxu0 %v111
  %v212 = vpop.f32.mrb[0].mxu0
  %v213 = vadd.f32 %v89, %v212
  %v214 = vpop.f32.mrb[0].mxu0
  %215 = vmatprep.mubr.f32.mxu0 0.0
  %216 = vmatmul.mubr.f32.gmra.mrb[0].mxu0 %v114
  %v217 = vpop.f32.mrb[0].mxu0
  %v218 = vadd.f32 %v89, %v217
  %v219 = vpop.f32.mrb[0].mxu0
  %220 = vdwg.mxu0
  %221 = vst.msk [vmem:[#allocation2] sm:$0xff] %vm91, %v183
  %222 = vst.msk [vmem:[#allocation2 + $0x8] sm:$0xff] %vm91, %v188
  %223 = vst.msk [vmem:[#allocation2 + $0x10] sm:$0xff] %vm91, %v193
  %224 = vst.msk [vmem:[#allocation2 + $0x18] sm:$0xff] %vm91, %v198
  %225 = vst.msk [vmem:[#allocation2 + $0x20] sm:$0xff] %vm91, %v203
  %226 = vst.msk [vmem:[#allocation2 + $0x28] sm:$0xff] %vm91, %v208
  %227 = vst.msk [vmem:[#allocation2 + $0x30] sm:$0xff] %vm91, %v213
  %228 = vst.msk [vmem:[#allocation2 + $0x38] sm:$0xff] %vm91, %v218
  %s229 = scalar_lea.vmem %s4, 32
  %v230 = vld [vmem:[%s229] sm:$0xff]
  %v231 = vld [vmem:[%s229 + $0x8] sm:$0xff]
  %v232 = vld [vmem:[%s229 + $0x10] sm:$0xff]
  %v233 = vld [vmem:[%s229 + $0x18] sm:$0xff]
  %s234 = scalar_lea.vmem %s6, 1
  %v235 = vld [vmem:[%s234] sm:$0x1]
  %v237 = vlaneseq
  %v238 = vshrl.u32 %v237, 7
  %v239 = vsub.s32 0, %v238
  %v240 = vrot.slane %v235, %v239
  %242 = vmatprep.subr.mxu0 0.0
  %243 = vmatpush1.msra.mxu0 %v230
  %244 = vmatprep.subr.mxu0 0.0
  %245 = vmatpush1.msra.mxu0 %v231
  %246 = vmatprep.subr.mxu0 0.0
  %247 = vmatpush1.msra.mxu0 %v232
  %248 = vmatprep.subr.mxu0 0.0
  %249 = vmatpush1.msra.mxu0 %v233
  %250 = vmatprep.subr.mxu0 0.0
  %251 = vmatpush1.msra.mxu0 0.0
  %252 = vmatprep.subr.mxu0 0.0
  %253 = vmatpush1.msra.mxu0 0.0
  %254 = vmatprep.subr.mxu0 0.0
  %255 = vmatpush1.msra.mxu0 0.0
  %256 = vmatprep.subr.mxu0 0.0
  %257 = vmatpush1.msra.mxu0 0.0
  %258 = vmatprep.subr.mxu0 0.0
  %259 = vmatpush1.msra.mxu0 0.0
  %260 = vmatprep.subr.mxu0 0.0
  %261 = vmatpush1.msra.mxu0 0.0
  %262 = vmatprep.subr.mxu0 0.0
  %263 = vmatpush1.msra.mxu0 0.0
  %264 = vmatprep.subr.mxu0 0.0
  %265 = vmatpush1.msra.mxu0 0.0
  %266 = vmatprep.subr.mxu0 0.0
  %267 = vmatpush1.msra.mxu0 0.0
  %268 = vmatprep.subr.mxu0 0.0
  %269 = vmatpush1.msra.mxu0 0.0
  %270 = vmatprep.subr.mxu0 0.0
  %271 = vmatpush1.msra.mxu0 0.0
  %272 = vmatprep.subr.mxu0 0.0
  %273 = vmatpush1.msra.mxu0 0.0
  %274 = vmatprep.subr.mxu0 0.0
  %275 = vmatpush1.msra.mxu0 0.0
  %276 = vmatprep.subr.mxu0 0.0
  %277 = vmatpush1.msra.mxu0 0.0
  %278 = vmatprep.subr.mxu0 0.0
  %279 = vmatpush1.msra.mxu0 0.0
  %280 = vmatprep.subr.mxu0 0.0
  %281 = vmatpush1.msra.mxu0 0.0
  %282 = vmatprep.subr.mxu0 0.0
  %283 = vmatpush1.msra.mxu0 0.0
  %284 = vmatprep.subr.mxu0 0.0
  %285 = vmatpush1.msra.mxu0 0.0
  %286 = vmatprep.subr.mxu0 0.0
  %287 = vmatpush1.msra.mxu0 0.0
  %288 = vmatprep.subr.mxu0 0.0
  %289 = vmatpush1.msra.mxu0 0.0
  %290 = vmatprep.subr.mxu0 0.0
  %291 = vmatpush1.msra.mxu0 0.0
  %292 = vmatprep.subr.mxu0 0.0
  %293 = vmatpush1.msra.mxu0 0.0
  %294 = vmatprep.subr.mxu0 0.0
  %295 = vmatpush1.msra.mxu0 0.0
  %296 = vmatprep.subr.mxu0 0.0
  %297 = vmatpush1.msra.mxu0 0.0
  %298 = vmatprep.subr.mxu0 0.0
  %299 = vmatpush1.msra.mxu0 0.0
  %300 = vmatprep.subr.mxu0 0.0
  %301 = vmatpush1.msra.mxu0 0.0
  %302 = vmatprep.subr.mxu0 0.0
  %303 = vmatpush1.msra.mxu0 0.0
  %304 = vmatprep.subr.mxu0 0.0
  %305 = vmatpush1.msra.mxu0 0.0
  %306 = vmatprep.mubr.f32.mxu0 0.0
  %307 = vmatmul.mubr.f32.gmra.mrb[0].mxu0 %v93
  %v308 = vpop.f32.mrb[0].mxu0
  %v309 = vadd.f32 %v240, %v308
  %v310 = vpop.f32.mrb[0].mxu0
  %311 = vmatprep.mubr.f32.mxu0 0.0
  %312 = vmatmul.mubr.f32.gmra.mrb[0].mxu0 %v96
  %v313 = vpop.f32.mrb[0].mxu0
  %v314 = vadd.f32 %v240, %v313
  %v315 = vpop.f32.mrb[0].mxu0
  %316 = vmatprep.mubr.f32.mxu0 0.0
  %317 = vmatmul.mubr.f32.gmra.mrb[0].mxu0 %v99
  %v318 = vpop.f32.mrb[0].mxu0
  %v319 = vadd.f32 %v240, %v318
  %v320 = vpop.f32.mrb[0].mxu0
  %321 = vmatprep.mubr.f32.mxu0 0.0
  %322 = vmatmul.mubr.f32.gmra.mrb[0].mxu0 %v102
  %v323 = vpop.f32.mrb[0].mxu0
  %v324 = vadd.f32 %v240, %v323
  %v325 = vpop.f32.mrb[0].mxu0
  %326 = vmatprep.mubr.f32.mxu0 0.0
  %327 = vmatmul.mubr.f32.gmra.mrb[0].mxu0 %v105
  %v328 = vpop.f32.mrb[0].mxu0
  %v329 = vadd.f32 %v240, %v328
  %v330 = vpop.f32.mrb[0].mxu0
  %331 = vmatprep.mubr.f32.mxu0 0.0
  %332 = vmatmul.mubr.f32.gmra.mrb[0].mxu0 %v108
  %v333 = vpop.f32.mrb[0].mxu0
  %v334 = vadd.f32 %v240, %v333
  %v335 = vpop.f32.mrb[0].mxu0
  %336 = vmatprep.mubr.f32.mxu0 0.0
  %337 = vmatmul.mubr.f32.gmra.mrb[0].mxu0 %v111
  %v338 = vpop.f32.mrb[0].mxu0
  %v339 = vadd.f32 %v240, %v338
  %v340 = vpop.f32.mrb[0].mxu0
  %341 = vmatprep.mubr.f32.mxu0 0.0
  %342 = vmatmul.mubr.f32.gmra.mrb[0].mxu0 %v114
  %v343 = vpop.f32.mrb[0].mxu0
  %v344 = vadd.f32 %v240, %v343
  %v345 = vpop.f32.mrb[0].mxu0
  %346 = vdwg.mxu0
  %347 = vst.msk [vmem:[#allocation3] sm:$0xff] %vm91, %v309
  %348 = vst.msk [vmem:[#allocation3 + $0x8] sm:$0xff] %vm91, %v314
  %349 = vst.msk [vmem:[#allocation3 + $0x10] sm:$0xff] %vm91, %v319
  %350 = vst.msk [vmem:[#allocation3 + $0x18] sm:$0xff] %vm91, %v324
  %351 = vst.msk [vmem:[#allocation3 + $0x20] sm:$0xff] %vm91, %v329
  %352 = vst.msk [vmem:[#allocation3 + $0x28] sm:$0xff] %vm91, %v334
  %353 = vst.msk [vmem:[#allocation3 + $0x30] sm:$0xff] %vm91, %v339
  %354 = vst.msk [vmem:[#allocation3 + $0x38] sm:$0xff] %vm91, %v344
  %s355 = scalar_lea.vmem %s4, 64
  %v356 = vld [vmem:[%s355] sm:$0xff]
  %v357 = vld [vmem:[%s355 + $0x8] sm:$0xff]
  %v358 = vld [vmem:[%s355 + $0x10] sm:$0xff]
  %v359 = vld [vmem:[%s355 + $0x18] sm:$0xff]
  %s360 = scalar_lea.vmem %s6, 2
  %v361 = vld [vmem:[%s360] sm:$0x1]
  %v363 = vlaneseq
  %v364 = vshrl.u32 %v363, 7
  %v365 = vsub.s32 0, %v364
  %v366 = vrot.slane %v361, %v365
  %368 = vmatprep.subr.mxu0 0.0
  %369 = vmatpush1.msra.mxu0 %v356
  %370 = vmatprep.subr.mxu0 0.0
  %371 = vmatpush1.msra.mxu0 %v357
  %372 = vmatprep.subr.mxu0 0.0
  %373 = vmatpush1.msra.mxu0 %v358
  %374 = vmatprep.subr.mxu0 0.0
  %375 = vmatpush1.msra.mxu0 %v359
  %376 = vmatprep.subr.mxu0 0.0
  %377 = vmatpush1.msra.mxu0 0.0
  %378 = vmatprep.subr.mxu0 0.0
  %379 = vmatpush1.msra.mxu0 0.0
  %380 = vmatprep.subr.mxu0 0.0
  %381 = vmatpush1.msra.mxu0 0.0
  %382 = vmatprep.subr.mxu0 0.0
  %383 = vmatpush1.msra.mxu0 0.0
  %384 = vmatprep.subr.mxu0 0.0
  %385 = vmatpush1.msra.mxu0 0.0
  %386 = vmatprep.subr.mxu0 0.0
  %387 = vmatpush1.msra.mxu0 0.0
  %388 = vmatprep.subr.mxu0 0.0
  %389 = vmatpush1.msra.mxu0 0.0
  %390 = vmatprep.subr.mxu0 0.0
  %391 = vmatpush1.msra.mxu0 0.0
  %392 = vmatprep.subr.mxu0 0.0
  %393 = vmatpush1.msra.mxu0 0.0
  %394 = vmatprep.subr.mxu0 0.0
  %395 = vmatpush1.msra.mxu0 0.0
  %396 = vmatprep.subr.mxu0 0.0
  %397 = vmatpush1.msra.mxu0 0.0
  %398 = vmatprep.subr.mxu0 0.0
  %399 = vmatpush1.msra.mxu0 0.0
  %400 = vmatprep.subr.mxu0 0.0
  %401 = vmatpush1.msra.mxu0 0.0
  %402 = vmatprep.subr.mxu0 0.0
  %403 = vmatpush1.msra.mxu0 0.0
  %404 = vmatprep.subr.mxu0 0.0
  %405 = vmatpush1.msra.mxu0 0.0
  %406 = vmatprep.subr.mxu0 0.0
  %407 = vmatpush1.msra.mxu0 0.0
  %408 = vmatprep.subr.mxu0 0.0
  %409 = vmatpush1.msra.mxu0 0.0
  %410 = vmatprep.subr.mxu0 0.0
  %411 = vmatpush1.msra.mxu0 0.0
  %412 = vmatprep.subr.mxu0 0.0
  %413 = vmatpush1.msra.mxu0 0.0
  %414 = vmatprep.subr.mxu0 0.0
  %415 = vmatpush1.msra.mxu0 0.0
  %416 = vmatprep.subr.mxu0 0.0
  %417 = vmatpush1.msra.mxu0 0.0
  %418 = vmatprep.subr.mxu0 0.0
  %419 = vmatpush1.msra.mxu0 0.0
  %420 = vmatprep.subr.mxu0 0.0
  %421 = vmatpush1.msra.mxu0 0.0
  %422 = vmatprep.subr.mxu0 0.0
  %423 = vmatpush1.msra.mxu0 0.0
  %424 = vmatprep.subr.mxu0 0.0
  %425 = vmatpush1.msra.mxu0 0.0
  %426 = vmatprep.subr.mxu0 0.0
  %427 = vmatpush1.msra.mxu0 0.0
  %428 = vmatprep.subr.mxu0 0.0
  %429 = vmatpush1.msra.mxu0 0.0
  %430 = vmatprep.subr.mxu0 0.0
  %431 = vmatpush1.msra.mxu0 0.0
  %432 = vmatprep.mubr.f32.mxu0 0.0
  %433 = vmatmul.mubr.f32.gmra.mrb[0].mxu0 %v93
  %v434 = vpop.f32.mrb[0].mxu0
  %v435 = vadd.f32 %v366, %v434
  %v436 = vpop.f32.mrb[0].mxu0
  %437 = vmatprep.mubr.f32.mxu0 0.0
  %438 = vmatmul.mubr.f32.gmra.mrb[0].mxu0 %v96
  %v439 = vpop.f32.mrb[0].mxu0
  %v440 = vadd.f32 %v366, %v439
  %v441 = vpop.f32.mrb[0].mxu0
  %442 = vmatprep.mubr.f32.mxu0 0.0
  %443 = vmatmul.mubr.f32.gmra.mrb[0].mxu0 %v99
  %v444 = vpop.f32.mrb[0].mxu0
  %v445 = vadd.f32 %v366, %v444
  %v446 = vpop.f32.mrb[0].mxu0
  %447 = vmatprep.mubr.f32.mxu0 0.0
  %448 = vmatmul.mubr.f32.gmra.mrb[0].mxu0 %v102
  %v449 = vpop.f32.mrb[0].mxu0
  %v450 = vadd.f32 %v366, %v449
  %v451 = vpop.f32.mrb[0].mxu0
  %452 = vmatprep.mubr.f32.mxu0 0.0
  %453 = vmatmul.mubr.f32.gmra.mrb[0].mxu0 %v105
  %v454 = vpop.f32.mrb[0].mxu0
  %v455 = vadd.f32 %v366, %v454
  %v456 = vpop.f32.mrb[0].mxu0
  %457 = vmatprep.mubr.f32.mxu0 0.0
  %458 = vmatmul.mubr.f32.gmra.mrb[0].mxu0 %v108
  %v459 = vpop.f32.mrb[0].mxu0
  %v460 = vadd.f32 %v366, %v459
  %v461 = vpop.f32.mrb[0].mxu0
  %462 = vmatprep.mubr.f32.mxu0 0.0
  %463 = vmatmul.mubr.f32.gmra.mrb[0].mxu0 %v111
  %v464 = vpop.f32.mrb[0].mxu0
  %v465 = vadd.f32 %v366, %v464
  %v466 = vpop.f32.mrb[0].mxu0
  %467 = vmatprep.mubr.f32.mxu0 0.0
  %468 = vmatmul.mubr.f32.gmra.mrb[0].mxu0 %v114
  %v469 = vpop.f32.mrb[0].mxu0
  %v470 = vadd.f32 %v366, %v469
  %v471 = vpop.f32.mrb[0].mxu0
  %472 = vdwg.mxu0
  %473 = vst.msk [vmem:[#allocation4] sm:$0xff] %vm91, %v435
  %474 = vst.msk [vmem:[#allocation4 + $0x8] sm:$0xff] %vm91, %v440
  %475 = vst.msk [vmem:[#allocation4 + $0x10] sm:$0xff] %vm91, %v445
  %476 = vst.msk [vmem:[#allocation4 + $0x18] sm:$0xff] %vm91, %v450
  %477 = vst.msk [vmem:[#allocation4 + $0x20] sm:$0xff] %vm91, %v455
  %478 = vst.msk [vmem:[#allocation4 + $0x28] sm:$0xff] %vm91, %v460
  %479 = vst.msk [vmem:[#allocation4 + $0x30] sm:$0xff] %vm91, %v465
  %480 = vst.msk [vmem:[#allocation4 + $0x38] sm:$0xff] %vm91, %v470
  %v481 = vld [vmem:[%s8] sm:$0xff]
  %v482 = vld [vmem:[%s8 + $0x8] sm:$0xff]
  %v483 = vld [vmem:[%s8 + $0x10] sm:$0xff]
  %v484 = vld [vmem:[%s8 + $0x18] sm:$0xff]
  %v485 = vld [vmem:[%s10] sm:$0x1]
  %v487 = vlaneseq
  %v488 = vshrl.u32 %v487, 7
  %v489 = vsub.s32 0, %v488
  %v490 = vrot.slane %v485, %v489
  %v493 = vsel %vm91, %v72, 0
  %v496 = vsel %vm91, %v73, 0
  %v499 = vsel %vm91, %v74, 0
  %v502 = vsel %vm91, %v75, 0
  %v505 = vsel %vm91, %v76, 0
  %v508 = vsel %vm91, %v77, 0
  %v511 = vsel %vm91, %v78, 0
  %v514 = vsel %vm91, %v79, 0
  %516 = vmatprep.subr.mxu0 0.0
  %517 = vmatpush1.msra.mxu0 %v481
  %518 = vmatprep.subr.mxu0 0.0
  %519 = vmatpush1.msra.mxu0 %v482
  %520 = vmatprep.subr.mxu0 0.0
  %521 = vmatpush1.msra.mxu0 %v483
  %522 = vmatprep.subr.mxu0 0.0
  %523 = vmatpush1.msra.mxu0 %v484
  %524 = vmatprep.subr.mxu0 0.0
  %525 = vmatpush1.msra.mxu0 0.0
  %526 = vmatprep.subr.mxu0 0.0
  %527 = vmatpush1.msra.mxu0 0.0
  %528 = vmatprep.subr.mxu0 0.0
  %529 = vmatpush1.msra.mxu0 0.0
  %530 = vmatprep.subr.mxu0 0.0
  %531 = vmatpush1.msra.mxu0 0.0
  %532 = vmatprep.subr.mxu0 0.0
  %533 = vmatpush1.msra.mxu0 0.0
  %534 = vmatprep.subr.mxu0 0.0
  %535 = vmatpush1.msra.mxu0 0.0
  %536 = vmatprep.subr.mxu0 0.0
  %537 = vmatpush1.msra.mxu0 0.0
  %538 = vmatprep.subr.mxu0 0.0
  %539 = vmatpush1.msra.mxu0 0.0
  %540 = vmatprep.subr.mxu0 0.0
  %541 = vmatpush1.msra.mxu0 0.0
  %542 = vmatprep.subr.mxu0 0.0
  %543 = vmatpush1.msra.mxu0 0.0
  %544 = vmatprep.subr.mxu0 0.0
  %545 = vmatpush1.msra.mxu0 0.0
  %546 = vmatprep.subr.mxu0 0.0
  %547 = vmatpush1.msra.mxu0 0.0
  %548 = vmatprep.subr.mxu0 0.0
  %549 = vmatpush1.msra.mxu0 0.0
  %550 = vmatprep.subr.mxu0 0.0
  %551 = vmatpush1.msra.mxu0 0.0
  %552 = vmatprep.subr.mxu0 0.0
  %553 = vmatpush1.msra.mxu0 0.0
  %554 = vmatprep.subr.mxu0 0.0
  %555 = vmatpush1.msra.mxu0 0.0
  %556 = vmatprep.subr.mxu0 0.0
  %557 = vmatpush1.msra.mxu0 0.0
  %558 = vmatprep.subr.mxu0 0.0
  %559 = vmatpush1.msra.mxu0 0.0
  %560 = vmatprep.subr.mxu0 0.0
  %561 = vmatpush1.msra.mxu0 0.0
  %562 = vmatprep.subr.mxu0 0.0
  %563 = vmatpush1.msra.mxu0 0.0
  %564 = vmatprep.subr.mxu0 0.0
  %565 = vmatpush1.msra.mxu0 0.0
  %566 = vmatprep.subr.mxu0 0.0
  %567 = vmatpush1.msra.mxu0 0.0
  %568 = vmatprep.subr.mxu0 0.0
  %569 = vmatpush1.msra.mxu0 0.0
  %570 = vmatprep.subr.mxu0 0.0
  %571 = vmatpush1.msra.mxu0 0.0
  %572 = vmatprep.subr.mxu0 0.0
  %573 = vmatpush1.msra.mxu0 0.0
  %574 = vmatprep.subr.mxu0 0.0
  %575 = vmatpush1.msra.mxu0 0.0
  %576 = vmatprep.subr.mxu0 0.0
  %577 = vmatpush1.msra.mxu0 0.0
  %578 = vmatprep.subr.mxu0 0.0
  %579 = vmatpush1.msra.mxu0 0.0
  %580 = vmatprep.mubr.f32.mxu0 0.0
  %581 = vmatmul.mubr.f32.gmra.mrb[0].mxu0 %v493
  %v582 = vpop.f32.mrb[0].mxu0
  %v583 = vadd.f32 %v490, %v582
  %v584 = vpop.f32.mrb[0].mxu0
  %585 = vmatprep.mubr.f32.mxu0 0.0
  %586 = vmatmul.mubr.f32.gmra.mrb[0].mxu0 %v496
  %v587 = vpop.f32.mrb[0].mxu0
  %v588 = vadd.f32 %v490, %v587
  %v589 = vpop.f32.mrb[0].mxu0
  %590 = vmatprep.mubr.f32.mxu0 0.0
  %591 = vmatmul.mubr.f32.gmra.mrb[0].mxu0 %v499
  %v592 = vpop.f32.mrb[0].mxu0
  %v593 = vadd.f32 %v490, %v592
  %v594 = vpop.f32.mrb[0].mxu0
  %595 = vmatprep.mubr.f32.mxu0 0.0
  %596 = vmatmul.mubr.f32.gmra.mrb[0].mxu0 %v502
  %v597 = vpop.f32.mrb[0].mxu0
  %v598 = vadd.f32 %v490, %v597
  %v599 = vpop.f32.mrb[0].mxu0
  %600 = vmatprep.mubr.f32.mxu0 0.0
  %601 = vmatmul.mubr.f32.gmra.mrb[0].mxu0 %v505
  %v602 = vpop.f32.mrb[0].mxu0
  %v603 = vadd.f32 %v490, %v602
  %v604 = vpop.f32.mrb[0].mxu0
  %605 = vmatprep.mubr.f32.mxu0 0.0
  %606 = vmatmul.mubr.f32.gmra.mrb[0].mxu0 %v508
  %v607 = vpop.f32.mrb[0].mxu0
  %v608 = vadd.f32 %v490, %v607
  %v609 = vpop.f32.mrb[0].mxu0
  %610 = vmatprep.mubr.f32.mxu0 0.0
  %611 = vmatmul.mubr.f32.gmra.mrb[0].mxu0 %v511
  %v612 = vpop.f32.mrb[0].mxu0
  %v613 = vadd.f32 %v490, %v612
  %v614 = vpop.f32.mrb[0].mxu0
  %615 = vmatprep.mubr.f32.mxu0 0.0
  %616 = vmatmul.mubr.f32.gmra.mrb[0].mxu0 %v514
  %v617 = vpop.f32.mrb[0].mxu0
  %v618 = vadd.f32 %v490, %v617
  %v619 = vpop.f32.mrb[0].mxu0
  %620 = vdwg.mxu0
  %621 = vst.msk [vmem:[#allocation5] sm:$0xff] %vm91, %v583
  %622 = vst.msk [vmem:[#allocation5 + $0x8] sm:$0xff] %vm91, %v588
  %623 = vst.msk [vmem:[#allocation5 + $0x10] sm:$0xff] %vm91, %v593
  %624 = vst.msk [vmem:[#allocation5 + $0x18] sm:$0xff] %vm91, %v598
  %625 = vst.msk [vmem:[#allocation5 + $0x20] sm:$0xff] %vm91, %v603
  %626 = vst.msk [vmem:[#allocation5 + $0x28] sm:$0xff] %vm91, %v608
  %627 = vst.msk [vmem:[#allocation5 + $0x30] sm:$0xff] %vm91, %v613
  %628 = vst.msk [vmem:[#allocation5 + $0x38] sm:$0xff] %vm91, %v618
  %s629 = scalar_lea.vmem %s8, 32
  %v630 = vld [vmem:[%s629] sm:$0xff]
  %v631 = vld [vmem:[%s629 + $0x8] sm:$0xff]
  %v632 = vld [vmem:[%s629 + $0x10] sm:$0xff]
  %v633 = vld [vmem:[%s629 + $0x18] sm:$0xff]
  %s634 = scalar_lea.vmem %s10, 1
  %v635 = vld [vmem:[%s634] sm:$0x1]
  %v637 = vlaneseq
  %v638 = vshrl.u32 %v637, 7
  %v639 = vsub.s32 0, %v638
  %v640 = vrot.slane %v635, %v639
  %642 = vmatprep.subr.mxu0 0.0
  %643 = vmatpush1.msra.mxu0 %v630
  %644 = vmatprep.subr.mxu0 0.0
  %645 = vmatpush1.msra.mxu0 %v631
  %646 = vmatprep.subr.mxu0 0.0
  %647 = vmatpush1.msra.mxu0 %v632
  %648 = vmatprep.subr.mxu0 0.0
  %649 = vmatpush1.msra.mxu0 %v633
  %650 = vmatprep.subr.mxu0 0.0
  %651 = vmatpush1.msra.mxu0 0.0
  %652 = vmatprep.subr.mxu0 0.0
  %653 = vmatpush1.msra.mxu0 0.0
  %654 = vmatprep.subr.mxu0 0.0
  %655 = vmatpush1.msra.mxu0 0.0
  %656 = vmatprep.subr.mxu0 0.0
  %657 = vmatpush1.msra.mxu0 0.0
  %658 = vmatprep.subr.mxu0 0.0
  %659 = vmatpush1.msra.mxu0 0.0
  %660 = vmatprep.subr.mxu0 0.0
  %661 = vmatpush1.msra.mxu0 0.0
  %662 = vmatprep.subr.mxu0 0.0
  %663 = vmatpush1.msra.mxu0 0.0
  %664 = vmatprep.subr.mxu0 0.0
  %665 = vmatpush1.msra.mxu0 0.0
  %666 = vmatprep.subr.mxu0 0.0
  %667 = vmatpush1.msra.mxu0 0.0
  %668 = vmatprep.subr.mxu0 0.0
  %669 = vmatpush1.msra.mxu0 0.0
  %670 = vmatprep.subr.mxu0 0.0
  %671 = vmatpush1.msra.mxu0 0.0
  %672 = vmatprep.subr.mxu0 0.0
  %673 = vmatpush1.msra.mxu0 0.0
  %674 = vmatprep.subr.mxu0 0.0
  %675 = vmatpush1.msra.mxu0 0.0
  %676 = vmatprep.subr.mxu0 0.0
  %677 = vmatpush1.msra.mxu0 0.0
  %678 = vmatprep.subr.mxu0 0.0
  %679 = vmatpush1.msra.mxu0 0.0
  %680 = vmatprep.subr.mxu0 0.0
  %681 = vmatpush1.msra.mxu0 0.0
  %682 = vmatprep.subr.mxu0 0.0
  %683 = vmatpush1.msra.mxu0 0.0
  %684 = vmatprep.subr.mxu0 0.0
  %685 = vmatpush1.msra.mxu0 0.0
  %686 = vmatprep.subr.mxu0 0.0
  %687 = vmatpush1.msra.mxu0 0.0
  %688 = vmatprep.subr.mxu0 0.0
  %689 = vmatpush1.msra.mxu0 0.0
  %690 = vmatprep.subr.mxu0 0.0
  %691 = vmatpush1.msra.mxu0 0.0
  %692 = vmatprep.subr.mxu0 0.0
  %693 = vmatpush1.msra.mxu0 0.0
  %694 = vmatprep.subr.mxu0 0.0
  %695 = vmatpush1.msra.mxu0 0.0
  %696 = vmatprep.subr.mxu0 0.0
  %697 = vmatpush1.msra.mxu0 0.0
  %698 = vmatprep.subr.mxu0 0.0
  %699 = vmatpush1.msra.mxu0 0.0
  %700 = vmatprep.subr.mxu0 0.0
  %701 = vmatpush1.msra.mxu0 0.0
  %702 = vmatprep.subr.mxu0 0.0
  %703 = vmatpush1.msra.mxu0 0.0
  %704 = vmatprep.subr.mxu0 0.0
  %705 = vmatpush1.msra.mxu0 0.0
  %706 = vmatprep.mubr.f32.mxu0 0.0
  %707 = vmatmul.mubr.f32.gmra.mrb[0].mxu0 %v493
  %v708 = vpop.f32.mrb[0].mxu0
  %v709 = vadd.f32 %v640, %v708
  %v710 = vpop.f32.mrb[0].mxu0
  %711 = vmatprep.mubr.f32.mxu0 0.0
  %712 = vmatmul.mubr.f32.gmra.mrb[0].mxu0 %v496
  %v713 = vpop.f32.mrb[0].mxu0
  %v714 = vadd.f32 %v640, %v713
  %v715 = vpop.f32.mrb[0].mxu0
  %716 = vmatprep.mubr.f32.mxu0 0.0
  %717 = vmatmul.mubr.f32.gmra.mrb[0].mxu0 %v499
  %v718 = vpop.f32.mrb[0].mxu0
  %v719 = vadd.f32 %v640, %v718
  %v720 = vpop.f32.mrb[0].mxu0
  %721 = vmatprep.mubr.f32.mxu0 0.0
  %722 = vmatmul.mubr.f32.gmra.mrb[0].mxu0 %v502
  %v723 = vpop.f32.mrb[0].mxu0
  %v724 = vadd.f32 %v640, %v723
  %v725 = vpop.f32.mrb[0].mxu0
  %726 = vmatprep.mubr.f32.mxu0 0.0
  %727 = vmatmul.mubr.f32.gmra.mrb[0].mxu0 %v505
  %v728 = vpop.f32.mrb[0].mxu0
  %v729 = vadd.f32 %v640, %v728
  %v730 = vpop.f32.mrb[0].mxu0
  %731 = vmatprep.mubr.f32.mxu0 0.0
  %732 = vmatmul.mubr.f32.gmra.mrb[0].mxu0 %v508
  %v733 = vpop.f32.mrb[0].mxu0
  %v734 = vadd.f32 %v640, %v733
  %v735 = vpop.f32.mrb[0].mxu0
  %736 = vmatprep.mubr.f32.mxu0 0.0
  %737 = vmatmul.mubr.f32.gmra.mrb[0].mxu0 %v511
  %v738 = vpop.f32.mrb[0].mxu0
  %v739 = vadd.f32 %v640, %v738
  %v740 = vpop.f32.mrb[0].mxu0
  %741 = vmatprep.mubr.f32.mxu0 0.0
  %742 = vmatmul.mubr.f32.gmra.mrb[0].mxu0 %v514
  %v743 = vpop.f32.mrb[0].mxu0
  %v744 = vadd.f32 %v640, %v743
  %v745 = vpop.f32.mrb[0].mxu0
  %746 = vdwg.mxu0
  %747 = vst.msk [vmem:[#allocation6] sm:$0xff] %vm91, %v709
  %748 = vst.msk [vmem:[#allocation6 + $0x8] sm:$0xff] %vm91, %v714
  %749 = vst.msk [vmem:[#allocation6 + $0x10] sm:$0xff] %vm91, %v719
  %750 = vst.msk [vmem:[#allocation6 + $0x18] sm:$0xff] %vm91, %v724
  %751 = vst.msk [vmem:[#allocation6 + $0x20] sm:$0xff] %vm91, %v729
  %752 = vst.msk [vmem:[#allocation6 + $0x28] sm:$0xff] %vm91, %v734
  %753 = vst.msk [vmem:[#allocation6 + $0x30] sm:$0xff] %vm91, %v739
  %754 = vst.msk [vmem:[#allocation6 + $0x38] sm:$0xff] %vm91, %v744
  %s755 = scalar_lea.vmem %s8, 64
  %v756 = vld [vmem:[%s755] sm:$0xff]
  %v757 = vld [vmem:[%s755 + $0x8] sm:$0xff]
  %v758 = vld [vmem:[%s755 + $0x10] sm:$0xff]
  %v759 = vld [vmem:[%s755 + $0x18] sm:$0xff]
  %s760 = scalar_lea.vmem %s10, 2
  %v761 = vld [vmem:[%s760] sm:$0x1]
  %v763 = vlaneseq
  %v764 = vshrl.u32 %v763, 7
  %v765 = vsub.s32 0, %v764
  %v766 = vrot.slane %v761, %v765
  %768 = vmatprep.subr.mxu0 0.0
  %769 = vmatpush1.msra.mxu0 %v756
  %770 = vmatprep.subr.mxu0 0.0
  %771 = vmatpush1.msra.mxu0 %v757
  %772 = vmatprep.subr.mxu0 0.0
  %773 = vmatpush1.msra.mxu0 %v758
  %774 = vmatprep.subr.mxu0 0.0
  %775 = vmatpush1.msra.mxu0 %v759
  %776 = vmatprep.subr.mxu0 0.0
  %777 = vmatpush1.msra.mxu0 0.0
  %778 = vmatprep.subr.mxu0 0.0
  %779 = vmatpush1.msra.mxu0 0.0
  %780 = vmatprep.subr.mxu0 0.0
  %781 = vmatpush1.msra.mxu0 0.0
  %782 = vmatprep.subr.mxu0 0.0
  %783 = vmatpush1.msra.mxu0 0.0
  %784 = vmatprep.subr.mxu0 0.0
  %785 = vmatpush1.msra.mxu0 0.0
  %786 = vmatprep.subr.mxu0 0.0
  %787 = vmatpush1.msra.mxu0 0.0
  %788 = vmatprep.subr.mxu0 0.0
  %789 = vmatpush1.msra.mxu0 0.0
  %790 = vmatprep.subr.mxu0 0.0
  %791 = vmatpush1.msra.mxu0 0.0
  %792 = vmatprep.subr.mxu0 0.0
  %793 = vmatpush1.msra.mxu0 0.0
  %794 = vmatprep.subr.mxu0 0.0
  %795 = vmatpush1.msra.mxu0 0.0
  %796 = vmatprep.subr.mxu0 0.0
  %797 = vmatpush1.msra.mxu0 0.0
  %798 = vmatprep.subr.mxu0 0.0
  %799 = vmatpush1.msra.mxu0 0.0
  %800 = vmatprep.subr.mxu0 0.0
  %801 = vmatpush1.msra.mxu0 0.0
  %802 = vmatprep.subr.mxu0 0.0
  %803 = vmatpush1.msra.mxu0 0.0
  %804 = vmatprep.subr.mxu0 0.0
  %805 = vmatpush1.msra.mxu0 0.0
  %806 = vmatprep.subr.mxu0 0.0
  %807 = vmatpush1.msra.mxu0 0.0
  %808 = vmatprep.subr.mxu0 0.0
  %809 = vmatpush1.msra.mxu0 0.0
  %810 = vmatprep.subr.mxu0 0.0
  %811 = vmatpush1.msra.mxu0 0.0
  %812 = vmatprep.subr.mxu0 0.0
  %813 = vmatpush1.msra.mxu0 0.0
  %814 = vmatprep.subr.mxu0 0.0
  %815 = vmatpush1.msra.mxu0 0.0
  %816 = vmatprep.subr.mxu0 0.0
  %817 = vmatpush1.msra.mxu0 0.0
  %818 = vmatprep.subr.mxu0 0.0
  %819 = vmatpush1.msra.mxu0 0.0
  %820 = vmatprep.subr.mxu0 0.0
  %821 = vmatpush1.msra.mxu0 0.0
  %822 = vmatprep.subr.mxu0 0.0
  %823 = vmatpush1.msra.mxu0 0.0
  %824 = vmatprep.subr.mxu0 0.0
  %825 = vmatpush1.msra.mxu0 0.0
  %826 = vmatprep.subr.mxu0 0.0
  %827 = vmatpush1.msra.mxu0 0.0
  %828 = vmatprep.subr.mxu0 0.0
  %829 = vmatpush1.msra.mxu0 0.0
  %830 = vmatprep.subr.mxu0 0.0
  %831 = vmatpush1.msra.mxu0 0.0
  %832 = vmatprep.mubr.f32.mxu0 0.0
  %833 = vmatmul.mubr.f32.gmra.mrb[0].mxu0 %v493
  %v834 = vpop.f32.mrb[0].mxu0
  %v835 = vadd.f32 %v766, %v834
  %v836 = vpop.f32.mrb[0].mxu0
  %837 = vmatprep.mubr.f32.mxu0 0.0
  %838 = vmatmul.mubr.f32.gmra.mrb[0].mxu0 %v496
  %v839 = vpop.f32.mrb[0].mxu0
  %v840 = vadd.f32 %v766, %v839
  %v841 = vpop.f32.mrb[0].mxu0
  %842 = vmatprep.mubr.f32.mxu0 0.0
  %843 = vmatmul.mubr.f32.gmra.mrb[0].mxu0 %v499
  %v844 = vpop.f32.mrb[0].mxu0
  %v845 = vadd.f32 %v766, %v844
  %v846 = vpop.f32.mrb[0].mxu0
  %847 = vmatprep.mubr.f32.mxu0 0.0
  %848 = vmatmul.mubr.f32.gmra.mrb[0].mxu0 %v502
  %v849 = vpop.f32.mrb[0].mxu0
  %v850 = vadd.f32 %v766, %v849
  %v851 = vpop.f32.mrb[0].mxu0
  %852 = vmatprep.mubr.f32.mxu0 0.0
  %853 = vmatmul.mubr.f32.gmra.mrb[0].mxu0 %v505
  %v854 = vpop.f32.mrb[0].mxu0
  %v855 = vadd.f32 %v766, %v854
  %v856 = vpop.f32.mrb[0].mxu0
  %857 = vmatprep.mubr.f32.mxu0 0.0
  %858 = vmatmul.mubr.f32.gmra.mrb[0].mxu0 %v508
  %v859 = vpop.f32.mrb[0].mxu0
  %v860 = vadd.f32 %v766, %v859
  %v861 = vpop.f32.mrb[0].mxu0
  %862 = vmatprep.mubr.f32.mxu0 0.0
  %863 = vmatmul.mubr.f32.gmra.mrb[0].mxu0 %v511
  %v864 = vpop.f32.mrb[0].mxu0
  %v865 = vadd.f32 %v766, %v864
  %v866 = vpop.f32.mrb[0].mxu0
  %867 = vmatprep.mubr.f32.mxu0 0.0
  %868 = vmatmul.mubr.f32.gmra.mrb[0].mxu0 %v514
  %v869 = vpop.f32.mrb[0].mxu0
  %v870 = vadd.f32 %v766, %v869
  %v871 = vpop.f32.mrb[0].mxu0
  %872 = vdwg.mxu0
  %873 = vst.msk [vmem:[#allocation7] sm:$0xff] %vm91, %v835
  %874 = vst.msk [vmem:[#allocation7 + $0x8] sm:$0xff] %vm91, %v840
  %875 = vst.msk [vmem:[#allocation7 + $0x10] sm:$0xff] %vm91, %v845
  %876 = vst.msk [vmem:[#allocation7 + $0x18] sm:$0xff] %vm91, %v850
  %877 = vst.msk [vmem:[#allocation7 + $0x20] sm:$0xff] %vm91, %v855
  %878 = vst.msk [vmem:[#allocation7 + $0x28] sm:$0xff] %vm91, %v860
  %879 = vst.msk [vmem:[#allocation7 + $0x30] sm:$0xff] %vm91, %v865
  %880 = vst.msk [vmem:[#allocation7 + $0x38] sm:$0xff] %vm91, %v870
  %v881 = vld [vmem:[%s5] sm:$0xff]
  %v882 = vld [vmem:[%s5 + $0x8] sm:$0xff]
  %v883 = vld [vmem:[%s5 + $0x10] sm:$0xff]
  %v884 = vld [vmem:[%s5 + $0x18] sm:$0xff]
  %s885 = scalar_lea.vmem %s5, 32
  %v886 = vld [vmem:[%s885] sm:$0xff]
  %v887 = vld [vmem:[%s885 + $0x8] sm:$0xff]
  %v888 = vld [vmem:[%s885 + $0x10] sm:$0xff]
  %v889 = vld [vmem:[%s885 + $0x18] sm:$0xff]
  %s890 = scalar_lea.vmem %s5, 64
  %v891 = vld [vmem:[%s890] sm:$0xff]
  %v892 = vld [vmem:[%s890 + $0x8] sm:$0xff]
  %v893 = vld [vmem:[%s890 + $0x10] sm:$0xff]
  %v894 = vld [vmem:[%s890 + $0x18] sm:$0xff]
  %v895 = vld [vmem:[%s7] sm:$0x1]
  %s896 = scalar_lea.vmem %s7, 1
  %v897 = vld [vmem:[%s896] sm:$0x1]
  %s898 = scalar_lea.vmem %s7, 2
  %v899 = vld [vmem:[%s898] sm:$0x1]
  %v900 = vld [vmem:[%s9] sm:$0xff]
  %v901 = vld [vmem:[%s9 + $0x8] sm:$0xff]
  %v902 = vld [vmem:[%s9 + $0x10] sm:$0xff]
  %v903 = vld [vmem:[%s9 + $0x18] sm:$0xff]
  %s904 = scalar_lea.vmem %s9, 32
  %v905 = vld [vmem:[%s904] sm:$0xff]
  %v906 = vld [vmem:[%s904 + $0x8] sm:$0xff]
  %v907 = vld [vmem:[%s904 + $0x10] sm:$0xff]
  %v908 = vld [vmem:[%s904 + $0x18] sm:$0xff]
  %s909 = scalar_lea.vmem %s9, 64
  %v910 = vld [vmem:[%s909] sm:$0xff]
  %v911 = vld [vmem:[%s909 + $0x8] sm:$0xff]
  %v912 = vld [vmem:[%s909 + $0x10] sm:$0xff]
  %v913 = vld [vmem:[%s909 + $0x18] sm:$0xff]
  %v914 = vld [vmem:[%s11] sm:$0x1]
  %s915 = scalar_lea.vmem %s11, 1
  %v916 = vld [vmem:[%s915] sm:$0x1]
  %s917 = scalar_lea.vmem %s11, 2
  %v918 = vld [vmem:[%s917] sm:$0x1]
  %v920 = vlaneseq
  %v921 = vshrl.u32 %v920, 7
  %v922 = vsub.s32 0, %v921
  %v923 = vrot.slane %v895, %v922
  %v926 = vsel %vm91, 0.0, 0
  %928 = vmatprep.subr.mxu0 0.0
  %929 = vmatpush1.msra.mxu0 %v881
  %930 = vmatprep.subr.mxu0 0.0
  %931 = vmatpush1.msra.mxu0 %v882
  %932 = vmatprep.subr.mxu0 0.0
  %933 = vmatpush1.msra.mxu0 %v883
  %934 = vmatprep.subr.mxu0 0.0
  %935 = vmatpush1.msra.mxu0 %v884
  %936 = vmatprep.subr.mxu0 0.0
  %937 = vmatpush1.msra.mxu0 0.0
  %938 = vmatprep.subr.mxu0 0.0
  %939 = vmatpush1.msra.mxu0 0.0
  %940 = vmatprep.subr.mxu0 0.0
  %941 = vmatpush1.msra.mxu0 0.0
  %942 = vmatprep.subr.mxu0 0.0
  %943 = vmatpush1.msra.mxu0 0.0
  %944 = vmatprep.subr.mxu0 0.0
  %945 = vmatpush1.msra.mxu0 0.0
  %946 = vmatprep.subr.mxu0 0.0
  %947 = vmatpush1.msra.mxu0 0.0
  %948 = vmatprep.subr.mxu0 0.0
  %949 = vmatpush1.msra.mxu0 0.0
  %950 = vmatprep.subr.mxu0 0.0
  %951 = vmatpush1.msra.mxu0 0.0
  %952 = vmatprep.subr.mxu0 0.0
  %953 = vmatpush1.msra.mxu0 0.0
  %954 = vmatprep.subr.mxu0 0.0
  %955 = vmatpush1.msra.mxu0 0.0
  %956 = vmatprep.subr.mxu0 0.0
  %957 = vmatpush1.msra.mxu0 0.0
  %958 = vmatprep.subr.mxu0 0.0
  %959 = vmatpush1.msra.mxu0 0.0
  %960 = vmatprep.subr.mxu0 0.0
  %961 = vmatpush1.msra.mxu0 0.0
  %962 = vmatprep.subr.mxu0 0.0
  %963 = vmatpush1.msra.mxu0 0.0
  %964 = vmatprep.subr.mxu0 0.0
  %965 = vmatpush1.msra.mxu0 0.0
  %966 = vmatprep.subr.mxu0 0.0
  %967 = vmatpush1.msra.mxu0 0.0
  %968 = vmatprep.subr.mxu0 0.0
  %969 = vmatpush1.msra.mxu0 0.0
  %970 = vmatprep.subr.mxu0 0.0
  %971 = vmatpush1.msra.mxu0 0.0
  %972 = vmatprep.subr.mxu0 0.0
  %973 = vmatpush1.msra.mxu0 0.0
  %974 = vmatprep.subr.mxu0 0.0
  %975 = vmatpush1.msra.mxu0 0.0
  %976 = vmatprep.subr.mxu0 0.0
  %977 = vmatpush1.msra.mxu0 0.0
  %978 = vmatprep.subr.mxu0 0.0
  %979 = vmatpush1.msra.mxu0 0.0
  %980 = vmatprep.subr.mxu0 0.0
  %981 = vmatpush1.msra.mxu0 0.0
  %982 = vmatprep.subr.mxu0 0.0
  %983 = vmatpush1.msra.mxu0 0.0
  %984 = vmatprep.subr.mxu0 0.0
  %985 = vmatpush1.msra.mxu0 0.0
  %986 = vmatprep.subr.mxu0 0.0
  %987 = vmatpush1.msra.mxu0 0.0
  %988 = vmatprep.subr.mxu0 0.0
  %989 = vmatpush1.msra.mxu0 0.0
  %990 = vmatprep.subr.mxu0 0.0
  %991 = vmatpush1.msra.mxu0 0.0
  %992 = vmatprep.mubr.f32.mxu0 0.0
  %993 = vmatmul.mubr.f32.gmra.mrb[0].mxu0 %v926
  %v994 = vpop.f32.mrb[0].mxu0
  %v995 = vadd.f32 %v923, %v994
  %v996 = vpop.f32.mrb[0].mxu0
  %997 = vdwg.mxu0
  %v999 = vlaneseq
  %v1000 = vshrl.u32 %v999, 7
  %v1001 = vsub.s32 0, %v1000
  %v1002 = vrot.slane %v897, %v1001
  %1004 = vmatprep.subr.mxu0 0.0
  %1005 = vmatpush1.msra.mxu0 %v886
  %1006 = vmatprep.subr.mxu0 0.0
  %1007 = vmatpush1.msra.mxu0 %v887
  %1008 = vmatprep.subr.mxu0 0.0
  %1009 = vmatpush1.msra.mxu0 %v888
  %1010 = vmatprep.subr.mxu0 0.0
  %1011 = vmatpush1.msra.mxu0 %v889
  %1012 = vmatprep.subr.mxu0 0.0
  %1013 = vmatpush1.msra.mxu0 0.0
  %1014 = vmatprep.subr.mxu0 0.0
  %1015 = vmatpush1.msra.mxu0 0.0
  %1016 = vmatprep.subr.mxu0 0.0
  %1017 = vmatpush1.msra.mxu0 0.0
  %1018 = vmatprep.subr.mxu0 0.0
  %1019 = vmatpush1.msra.mxu0 0.0
  %1020 = vmatprep.subr.mxu0 0.0
  %1021 = vmatpush1.msra.mxu0 0.0
  %1022 = vmatprep.subr.mxu0 0.0
  %1023 = vmatpush1.msra.mxu0 0.0
  %1024 = vmatprep.subr.mxu0 0.0
  %1025 = vmatpush1.msra.mxu0 0.0
  %1026 = vmatprep.subr.mxu0 0.0
  %1027 = vmatpush1.msra.mxu0 0.0
  %1028 = vmatprep.subr.mxu0 0.0
  %1029 = vmatpush1.msra.mxu0 0.0
  %1030 = vmatprep.subr.mxu0 0.0
  %1031 = vmatpush1.msra.mxu0 0.0
  %1032 = vmatprep.subr.mxu0 0.0
  %1033 = vmatpush1.msra.mxu0 0.0
  %1034 = vmatprep.subr.mxu0 0.0
  %1035 = vmatpush1.msra.mxu0 0.0
  %1036 = vmatprep.subr.mxu0 0.0
  %1037 = vmatpush1.msra.mxu0 0.0
  %1038 = vmatprep.subr.mxu0 0.0
  %1039 = vmatpush1.msra.mxu0 0.0
  %1040 = vmatprep.subr.mxu0 0.0
  %1041 = vmatpush1.msra.mxu0 0.0
  %1042 = vmatprep.subr.mxu0 0.0
  %1043 = vmatpush1.msra.mxu0 0.0
  %1044 = vmatprep.subr.mxu0 0.0
  %1045 = vmatpush1.msra.mxu0 0.0
  %1046 = vmatprep.subr.mxu0 0.0
  %1047 = vmatpush1.msra.mxu0 0.0
  %1048 = vmatprep.subr.mxu0 0.0
  %1049 = vmatpush1.msra.mxu0 0.0
  %1050 = vmatprep.subr.mxu0 0.0
  %1051 = vmatpush1.msra.mxu0 0.0
  %1052 = vmatprep.subr.mxu0 0.0
  %1053 = vmatpush1.msra.mxu0 0.0
  %1054 = vmatprep.subr.mxu0 0.0
  %1055 = vmatpush1.msra.mxu0 0.0
  %1056 = vmatprep.subr.mxu0 0.0
  %1057 = vmatpush1.msra.mxu0 0.0
  %1058 = vmatprep.subr.mxu0 0.0
  %1059 = vmatpush1.msra.mxu0 0.0
  %1060 = vmatprep.subr.mxu0 0.0
  %1061 = vmatpush1.msra.mxu0 0.0
  %1062 = vmatprep.subr.mxu0 0.0
  %1063 = vmatpush1.msra.mxu0 0.0
  %1064 = vmatprep.subr.mxu0 0.0
  %1065 = vmatpush1.msra.mxu0 0.0
  %1066 = vmatprep.subr.mxu0 0.0
  %1067 = vmatpush1.msra.mxu0 0.0
  %1068 = vmatprep.mubr.f32.mxu0 0.0
  %1069 = vmatmul.mubr.f32.gmra.mrb[0].mxu0 %v926
  %v1070 = vpop.f32.mrb[0].mxu0
  %v1071 = vadd.f32 %v1002, %v1070
  %v1072 = vpop.f32.mrb[0].mxu0
  %1073 = vdwg.mxu0
  %v1075 = vlaneseq
  %v1076 = vshrl.u32 %v1075, 7
  %v1077 = vsub.s32 0, %v1076
  %v1078 = vrot.slane %v899, %v1077
  %1080 = vmatprep.subr.mxu0 0.0
  %1081 = vmatpush1.msra.mxu0 %v891
  %1082 = vmatprep.subr.mxu0 0.0
  %1083 = vmatpush1.msra.mxu0 %v892
  %1084 = vmatprep.subr.mxu0 0.0
  %1085 = vmatpush1.msra.mxu0 %v893
  %1086 = vmatprep.subr.mxu0 0.0
  %1087 = vmatpush1.msra.mxu0 %v894
  %1088 = vmatprep.subr.mxu0 0.0
  %1089 = vmatpush1.msra.mxu0 0.0
  %1090 = vmatprep.subr.mxu0 0.0
  %1091 = vmatpush1.msra.mxu0 0.0
  %1092 = vmatprep.subr.mxu0 0.0
  %1093 = vmatpush1.msra.mxu0 0.0
  %1094 = vmatprep.subr.mxu0 0.0
  %1095 = vmatpush1.msra.mxu0 0.0
  %1096 = vmatprep.subr.mxu0 0.0
  %1097 = vmatpush1.msra.mxu0 0.0
  %1098 = vmatprep.subr.mxu0 0.0
  %1099 = vmatpush1.msra.mxu0 0.0
  %1100 = vmatprep.subr.mxu0 0.0
  %1101 = vmatpush1.msra.mxu0 0.0
  %1102 = vmatprep.subr.mxu0 0.0
  %1103 = vmatpush1.msra.mxu0 0.0
  %1104 = vmatprep.subr.mxu0 0.0
  %1105 = vmatpush1.msra.mxu0 0.0
  %1106 = vmatprep.subr.mxu0 0.0
  %1107 = vmatpush1.msra.mxu0 0.0
  %1108 = vmatprep.subr.mxu0 0.0
  %1109 = vmatpush1.msra.mxu0 0.0
  %1110 = vmatprep.subr.mxu0 0.0
  %1111 = vmatpush1.msra.mxu0 0.0
  %1112 = vmatprep.subr.mxu0 0.0
  %1113 = vmatpush1.msra.mxu0 0.0
  %1114 = vmatprep.subr.mxu0 0.0
  %1115 = vmatpush1.msra.mxu0 0.0
  %1116 = vmatprep.subr.mxu0 0.0
  %1117 = vmatpush1.msra.mxu0 0.0
  %1118 = vmatprep.subr.mxu0 0.0
  %1119 = vmatpush1.msra.mxu0 0.0
  %1120 = vmatprep.subr.mxu0 0.0
  %1121 = vmatpush1.msra.mxu0 0.0
  %1122 = vmatprep.subr.mxu0 0.0
  %1123 = vmatpush1.msra.mxu0 0.0
  %1124 = vmatprep.subr.mxu0 0.0
  %1125 = vmatpush1.msra.mxu0 0.0
  %1126 = vmatprep.subr.mxu0 0.0
  %1127 = vmatpush1.msra.mxu0 0.0
  %1128 = vmatprep.subr.mxu0 0.0
  %1129 = vmatpush1.msra.mxu0 0.0
  %1130 = vmatprep.subr.mxu0 0.0
  %1131 = vmatpush1.msra.mxu0 0.0
  %1132 = vmatprep.subr.mxu0 0.0
  %1133 = vmatpush1.msra.mxu0 0.0
  %1134 = vmatprep.subr.mxu0 0.0
  %1135 = vmatpush1.msra.mxu0 0.0
  %1136 = vmatprep.subr.mxu0 0.0
  %1137 = vmatpush1.msra.mxu0 0.0
  %1138 = vmatprep.subr.mxu0 0.0
  %1139 = vmatpush1.msra.mxu0 0.0
  %1140 = vmatprep.subr.mxu0 0.0
  %1141 = vmatpush1.msra.mxu0 0.0
  %1142 = vmatprep.subr.mxu0 0.0
  %1143 = vmatpush1.msra.mxu0 0.0
  %1144 = vmatprep.mubr.f32.mxu0 0.0
  %1145 = vmatmul.mubr.f32.gmra.mrb[0].mxu0 %v926
  %v1146 = vpop.f32.mrb[0].mxu0
  %v1147 = vadd.f32 %v1078, %v1146
  %v1148 = vpop.f32.mrb[0].mxu0
  %1149 = vdwg.mxu0
  %v1150 = vld [vmem:[#allocation2] sm:$0xff]
  %v1151 = vadd.f32 %v1150, %v995
  %v1152 = vxor.u32 %v1151, 2147483648
  %v1153 = vmul.f32 %v1152, 1.442695
  %v1154 = vpow.pop %v1153
  %v1155 = vadd.f32 %v1154, 1.0
  %v1156 = vrcp.pop %v1155
  %v1157 = vmul.f32 1.0, %v1156
  %v1158 = vld [vmem:[#allocation3] sm:$0xff]
  %v1159 = vadd.f32 %v1158, %v1071
  %v1160 = vxor.u32 %v1159, 2147483648
  %v1161 = vmul.f32 %v1160, 1.442695
  %v1162 = vpow.pop %v1161
  %v1163 = vadd.f32 %v1162, 1.0
  %v1164 = vrcp.pop %v1163
  %v1165 = vmul.f32 1.0, %v1164
  %v1166 = vld [vmem:[#allocation4] sm:$0xff]
  %v1167 = vmul.f32 %v1157, %v1147
  %v1168 = vadd.f32 %v1166, %v1167
  %v1169 = vtanh.pop %v1168
  %v1170 = vsub.f32 1.0, %v1165
  %v1171 = vmul.f32 %v1170, %v1169
  %v1172 = vmul.f32 %v1165, 0.0
  %v1173 = vadd.f32 %v1171, %v1172
  %1174 = vst.msk [vmem:[#allocation8] sm:$0xff] %vm91, %v1173
  %v1176 = vsel %vm91, %v1173, 0
  %1178 = vmatprep.subr.mxu0 0.0
  %1179 = vmatpush1.msra.mxu0 %v881
  %1180 = vmatprep.subr.mxu0 0.0
  %1181 = vmatpush1.msra.mxu0 %v882
  %1182 = vmatprep.subr.mxu0 0.0
  %1183 = vmatpush1.msra.mxu0 %v883
  %1184 = vmatprep.subr.mxu0 0.0
  %1185 = vmatpush1.msra.mxu0 %v884
  %1186 = vmatprep.subr.mxu0 0.0
  %1187 = vmatpush1.msra.mxu0 0.0
  %1188 = vmatprep.subr.mxu0 0.0
  %1189 = vmatpush1.msra.mxu0 0.0
  %1190 = vmatprep.subr.mxu0 0.0
  %1191 = vmatpush1.msra.mxu0 0.0
  %1192 = vmatprep.subr.mxu0 0.0
  %1193 = vmatpush1.msra.mxu0 0.0
  %1194 = vmatprep.subr.mxu0 0.0
  %1195 = vmatpush1.msra.mxu0 0.0
  %1196 = vmatprep.subr.mxu0 0.0
  %1197 = vmatpush1.msra.mxu0 0.0
  %1198 = vmatprep.subr.mxu0 0.0
  %1199 = vmatpush1.msra.mxu0 0.0
  %1200 = vmatprep.subr.mxu0 0.0
  %1201 = vmatpush1.msra.mxu0 0.0
  %1202 = vmatprep.subr.mxu0 0.0
  %1203 = vmatpush1.msra.mxu0 0.0
  %1204 = vmatprep.subr.mxu0 0.0
  %1205 = vmatpush1.msra.mxu0 0.0
  %1206 = vmatprep.subr.mxu0 0.0
  %1207 = vmatpush1.msra.mxu0 0.0
  %1208 = vmatprep.subr.mxu0 0.0
  %1209 = vmatpush1.msra.mxu0 0.0
  %1210 = vmatprep.subr.mxu0 0.0
  %1211 = vmatpush1.msra.mxu0 0.0
  %1212 = vmatprep.subr.mxu0 0.0
  %1213 = vmatpush1.msra.mxu0 0.0
  %1214 = vmatprep.subr.mxu0 0.0
  %1215 = vmatpush1.msra.mxu0 0.0
  %1216 = vmatprep.subr.mxu0 0.0
  %1217 = vmatpush1.msra.mxu0 0.0
  %1218 = vmatprep.subr.mxu0 0.0
  %1219 = vmatpush1.msra.mxu0 0.0
  %1220 = vmatprep.subr.mxu0 0.0
  %1221 = vmatpush1.msra.mxu0 0.0
  %1222 = vmatprep.subr.mxu0 0.0
  %1223 = vmatpush1.msra.mxu0 0.0
  %1224 = vmatprep.subr.mxu0 0.0
  %1225 = vmatpush1.msra.mxu0 0.0
  %1226 = vmatprep.subr.mxu0 0.0
  %1227 = vmatpush1.msra.mxu0 0.0
  %1228 = vmatprep.subr.mxu0 0.0
  %1229 = vmatpush1.msra.mxu0 0.0
  %1230 = vmatprep.subr.mxu0 0.0
  %1231 = vmatpush1.msra.mxu0 0.0
  %1232 = vmatprep.subr.mxu0 0.0
  %1233 = vmatpush1.msra.mxu0 0.0
  %1234 = vmatprep.subr.mxu0 0.0
  %1235 = vmatpush1.msra.mxu0 0.0
  %1236 = vmatprep.subr.mxu0 0.0
  %1237 = vmatpush1.msra.mxu0 0.0
  %1238 = vmatprep.subr.mxu0 0.0
  %1239 = vmatpush1.msra.mxu0 0.0
  %1240 = vmatprep.subr.mxu0 0.0
  %1241 = vmatpush1.msra.mxu0 0.0
  %1242 = vmatprep.mubr.f32.mxu0 0.0
  %1243 = vmatmul.mubr.f32.gmra.mrb[0].mxu0 %v1176
  %v1244 = vpop.f32.mrb[0].mxu0
  %v1245 = vadd.f32 %v923, %v1244
  %v1246 = vpop.f32.mrb[0].mxu0
  %1247 = vdwg.mxu0
  %1248 = vmatprep.subr.mxu0 0.0
  %1249 = vmatpush1.msra.mxu0 %v886
  %1250 = vmatprep.subr.mxu0 0.0
  %1251 = vmatpush1.msra.mxu0 %v887
  %1252 = vmatprep.subr.mxu0 0.0
  %1253 = vmatpush1.msra.mxu0 %v888
  %1254 = vmatprep.subr.mxu0 0.0
  %1255 = vmatpush1.msra.mxu0 %v889
  %1256 = vmatprep.subr.mxu0 0.0
  %1257 = vmatpush1.msra.mxu0 0.0
  %1258 = vmatprep.subr.mxu0 0.0
  %1259 = vmatpush1.msra.mxu0 0.0
  %1260 = vmatprep.subr.mxu0 0.0
  %1261 = vmatpush1.msra.mxu0 0.0
  %1262 = vmatprep.subr.mxu0 0.0
  %1263 = vmatpush1.msra.mxu0 0.0
  %1264 = vmatprep.subr.mxu0 0.0
  %1265 = vmatpush1.msra.mxu0 0.0
  %1266 = vmatprep.subr.mxu0 0.0
  %1267 = vmatpush1.msra.mxu0 0.0
  %1268 = vmatprep.subr.mxu0 0.0
  %1269 = vmatpush1.msra.mxu0 0.0
  %1270 = vmatprep.subr.mxu0 0.0
  %1271 = vmatpush1.msra.mxu0 0.0
  %1272 = vmatprep.subr.mxu0 0.0
  %1273 = vmatpush1.msra.mxu0 0.0
  %1274 = vmatprep.subr.mxu0 0.0
  %1275 = vmatpush1.msra.mxu0 0.0
  %1276 = vmatprep.subr.mxu0 0.0
  %1277 = vmatpush1.msra.mxu0 0.0
  %1278 = vmatprep.subr.mxu0 0.0
  %1279 = vmatpush1.msra.mxu0 0.0
  %1280 = vmatprep.subr.mxu0 0.0
  %1281 = vmatpush1.msra.mxu0 0.0
  %1282 = vmatprep.subr.mxu0 0.0
  %1283 = vmatpush1.msra.mxu0 0.0
  %1284 = vmatprep.subr.mxu0 0.0
  %1285 = vmatpush1.msra.mxu0 0.0
  %1286 = vmatprep.subr.mxu0 0.0
  %1287 = vmatpush1.msra.mxu0 0.0
  %1288 = vmatprep.subr.mxu0 0.0
  %1289 = vmatpush1.msra.mxu0 0.0
  %1290 = vmatprep.subr.mxu0 0.0
  %1291 = vmatpush1.msra.mxu0 0.0
  %1292 = vmatprep.subr.mxu0 0.0
  %1293 = vmatpush1.msra.mxu0 0.0
  %1294 = vmatprep.subr.mxu0 0.0
  %1295 = vmatpush1.msra.mxu0 0.0
  %1296 = vmatprep.subr.mxu0 0.0
  %1297 = vmatpush1.msra.mxu0 0.0
  %1298 = vmatprep.subr.mxu0 0.0
  %1299 = vmatpush1.msra.mxu0 0.0
  %1300 = vmatprep.subr.mxu0 0.0
  %1301 = vmatpush1.msra.mxu0 0.0
  %1302 = vmatprep.subr.mxu0 0.0
  %1303 = vmatpush1.msra.mxu0 0.0
  %1304 = vmatprep.subr.mxu0 0.0
  %1305 = vmatpush1.msra.mxu0 0.0
  %1306 = vmatprep.subr.mxu0 0.0
  %1307 = vmatpush1.msra.mxu0 0.0
  %1308 = vmatprep.subr.mxu0 0.0
  %1309 = vmatpush1.msra.mxu0 0.0
  %1310 = vmatprep.subr.mxu0 0.0
  %1311 = vmatpush1.msra.mxu0 0.0
  %1312 = vmatprep.mubr.f32.mxu0 0.0
  %1313 = vmatmul.mubr.f32.gmra.mrb[0].mxu0 %v1176
  %v1314 = vpop.f32.mrb[0].mxu0
  %v1315 = vadd.f32 %v1002, %v1314
  %v1316 = vpop.f32.mrb[0].mxu0
  %1317 = vdwg.mxu0
  %1318 = vmatprep.subr.mxu0 0.0
  %1319 = vmatpush1.msra.mxu0 %v891
  %1320 = vmatprep.subr.mxu0 0.0
  %1321 = vmatpush1.msra.mxu0 %v892
  %1322 = vmatprep.subr.mxu0 0.0
  %1323 = vmatpush1.msra.mxu0 %v893
  %1324 = vmatprep.subr.mxu0 0.0
  %1325 = vmatpush1.msra.mxu0 %v894
  %1326 = vmatprep.subr.mxu0 0.0
  %1327 = vmatpush1.msra.mxu0 0.0
  %1328 = vmatprep.subr.mxu0 0.0
  %1329 = vmatpush1.msra.mxu0 0.0
  %1330 = vmatprep.subr.mxu0 0.0
  %1331 = vmatpush1.msra.mxu0 0.0
  %1332 = vmatprep.subr.mxu0 0.0
  %1333 = vmatpush1.msra.mxu0 0.0
  %1334 = vmatprep.subr.mxu0 0.0
  %1335 = vmatpush1.msra.mxu0 0.0
  %1336 = vmatprep.subr.mxu0 0.0
  %1337 = vmatpush1.msra.mxu0 0.0
  %1338 = vmatprep.subr.mxu0 0.0
  %1339 = vmatpush1.msra.mxu0 0.0
  %1340 = vmatprep.subr.mxu0 0.0
  %1341 = vmatpush1.msra.mxu0 0.0
  %1342 = vmatprep.subr.mxu0 0.0
  %1343 = vmatpush1.msra.mxu0 0.0
  %1344 = vmatprep.subr.mxu0 0.0
  %1345 = vmatpush1.msra.mxu0 0.0
  %1346 = vmatprep.subr.mxu0 0.0
  %1347 = vmatpush1.msra.mxu0 0.0
  %1348 = vmatprep.subr.mxu0 0.0
  %1349 = vmatpush1.msra.mxu0 0.0
  %1350 = vmatprep.subr.mxu0 0.0
  %1351 = vmatpush1.msra.mxu0 0.0
  %1352 = vmatprep.subr.mxu0 0.0
  %1353 = vmatpush1.msra.mxu0 0.0
  %1354 = vmatprep.subr.mxu0 0.0
  %1355 = vmatpush1.msra.mxu0 0.0
  %1356 = vmatprep.subr.mxu0 0.0
  %1357 = vmatpush1.msra.mxu0 0.0
  %1358 = vmatprep.subr.mxu0 0.0
  %1359 = vmatpush1.msra.mxu0 0.0
  %1360 = vmatprep.subr.mxu0 0.0
  %1361 = vmatpush1.msra.mxu0 0.0
  %1362 = vmatprep.subr.mxu0 0.0
  %1363 = vmatpush1.msra.mxu0 0.0
  %1364 = vmatprep.subr.mxu0 0.0
  %1365 = vmatpush1.msra.mxu0 0.0
  %1366 = vmatprep.subr.mxu0 0.0
  %1367 = vmatpush1.msra.mxu0 0.0
  %1368 = vmatprep.subr.mxu0 0.0
  %1369 = vmatpush1.msra.mxu0 0.0
  %1370 = vmatprep.subr.mxu0 0.0
  %1371 = vmatpush1.msra.mxu0 0.0
  %1372 = vmatprep.subr.mxu0 0.0
  %1373 = vmatpush1.msra.mxu0 0.0
  %1374 = vmatprep.subr.mxu0 0.0
  %1375 = vmatpush1.msra.mxu0 0.0
  %1376 = vmatprep.subr.mxu0 0.0
  %1377 = vmatpush1.msra.mxu0 0.0
  %1378 = vmatprep.subr.mxu0 0.0
  %1379 = vmatpush1.msra.mxu0 0.0
  %1380 = vmatprep.subr.mxu0 0.0
  %1381 = vmatpush1.msra.mxu0 0.0
  %1382 = vmatprep.mubr.f32.mxu0 0.0
  %1383 = vmatmul.mubr.f32.gmra.mrb[0].mxu0 %v1176
  %v1384 = vpop.f32.mrb[0].mxu0
  %v1385 = vadd.f32 %v1078, %v1384
  %v1386 = vpop.f32.mrb[0].mxu0
  %1387 = vdwg.mxu0
  %s1388 = scalar_lea.vmem [#allocation2], 8
  %v1389 = vld [vmem:[%s1388] sm:$0xff]
  %v1390 = vadd.f32 %v1389, %v1245
  %v1391 = vxor.u32 %v1390, 2147483648
  %v1392 = vmul.f32 %v1391, 1.442695
  %v1393 = vpow.pop %v1392
  %v1394 = vadd.f32 %v1393, 1.0
  %v1395 = vrcp.pop %v1394
  %v1396 = vmul.f32 1.0, %v1395
  %s1397 = scalar_lea.vmem [#allocation3], 8
  %v1398 = vld [vmem:[%s1397] sm:$0xff]
  %v1399 = vadd.f32 %v1398, %v1315
  %v1400 = vxor.u32 %v1399, 2147483648
  %v1401 = vmul.f32 %v1400, 1.442695
  %v1402 = vpow.pop %v1401
  %v1403 = vadd.f32 %v1402, 1.0
  %v1404 = vrcp.pop %v1403
  %v1405 = vmul.f32 1.0, %v1404
  %s1406 = scalar_lea.vmem [#allocation4], 8
  %v1407 = vld [vmem:[%s1406] sm:$0xff]
  %v1408 = vmul.f32 %v1396, %v1385
  %v1409 = vadd.f32 %v1407, %v1408
  %v1410 = vtanh.pop %v1409
  %v1411 = vsub.f32 1.0, %v1405
  %v1412 = vmul.f32 %v1411, %v1410
  %v1413 = vmul.f32 %v1405, %v1173
  %v1414 = vadd.f32 %v1412, %v1413
  %s1415 = scalar_lea.vmem [#allocation8], 8
  %1416 = vst.msk [vmem:[%s1415] sm:$0xff] %vm91, %v1414
  %v1418 = vsel %vm91, %v1414, 0
  %1420 = vmatprep.subr.mxu0 0.0
  %1421 = vmatpush1.msra.mxu0 %v881
  %1422 = vmatprep.subr.mxu0 0.0
  %1423 = vmatpush1.msra.mxu0 %v882
  %1424 = vmatprep.subr.mxu0 0.0
  %1425 = vmatpush1.msra.mxu0 %v883
  %1426 = vmatprep.subr.mxu0 0.0
  %1427 = vmatpush1.msra.mxu0 %v884
  %1428 = vmatprep.subr.mxu0 0.0
  %1429 = vmatpush1.msra.mxu0 0.0
  %1430 = vmatprep.subr.mxu0 0.0
  %1431 = vmatpush1.msra.mxu0 0.0
  %1432 = vmatprep.subr.mxu0 0.0
  %1433 = vmatpush1.msra.mxu0 0.0
  %1434 = vmatprep.subr.mxu0 0.0
  %1435 = vmatpush1.msra.mxu0 0.0
  %1436 = vmatprep.subr.mxu0 0.0
  %1437 = vmatpush1.msra.mxu0 0.0
  %1438 = vmatprep.subr.mxu0 0.0
  %1439 = vmatpush1.msra.mxu0 0.0
  %1440 = vmatprep.subr.mxu0 0.0
  %1441 = vmatpush1.msra.mxu0 0.0
  %1442 = vmatprep.subr.mxu0 0.0
  %1443 = vmatpush1.msra.mxu0 0.0
  %1444 = vmatprep.subr.mxu0 0.0
  %1445 = vmatpush1.msra.mxu0 0.0
  %1446 = vmatprep.subr.mxu0 0.0
  %1447 = vmatpush1.msra.mxu0 0.0
  %1448 = vmatprep.subr.mxu0 0.0
  %1449 = vmatpush1.msra.mxu0 0.0
  %1450 = vmatprep.subr.mxu0 0.0
  %1451 = vmatpush1.msra.mxu0 0.0
  %1452 = vmatprep.subr.mxu0 0.0
  %1453 = vmatpush1.msra.mxu0 0.0
  %1454 = vmatprep.subr.mxu0 0.0
  %1455 = vmatpush1.msra.mxu0 0.0
  %1456 = vmatprep.subr.mxu0 0.0
  %1457 = vmatpush1.msra.mxu0 0.0
  %1458 = vmatprep.subr.mxu0 0.0
  %1459 = vmatpush1.msra.mxu0 0.0
  %1460 = vmatprep.subr.mxu0 0.0
  %1461 = vmatpush1.msra.mxu0 0.0
  %1462 = vmatprep.subr.mxu0 0.0
  %1463 = vmatpush1.msra.mxu0 0.0
  %1464 = vmatprep.subr.mxu0 0.0
  %1465 = vmatpush1.msra.mxu0 0.0
  %1466 = vmatprep.subr.mxu0 0.0
  %1467 = vmatpush1.msra.mxu0 0.0
  %1468 = vmatprep.subr.mxu0 0.0
  %1469 = vmatpush1.msra.mxu0 0.0
  %1470 = vmatprep.subr.mxu0 0.0
  %1471 = vmatpush1.msra.mxu0 0.0
  %1472 = vmatprep.subr.mxu0 0.0
  %1473 = vmatpush1.msra.mxu0 0.0
  %1474 = vmatprep.subr.mxu0 0.0
  %1475 = vmatpush1.msra.mxu0 0.0
  %1476 = vmatprep.subr.mxu0 0.0
  %1477 = vmatpush1.msra.mxu0 0.0
  %1478 = vmatprep.subr.mxu0 0.0
  %1479 = vmatpush1.msra.mxu0 0.0
  %1480 = vmatprep.subr.mxu0 0.0
  %1481 = vmatpush1.msra.mxu0 0.0
  %1482 = vmatprep.subr.mxu0 0.0
  %1483 = vmatpush1.msra.mxu0 0.0
  %1484 = vmatprep.mubr.f32.mxu0 0.0
  %1485 = vmatmul.mubr.f32.gmra.mrb[0].mxu0 %v1418
  %v1486 = vpop.f32.mrb[0].mxu0
  %v1487 = vadd.f32 %v923, %v1486
  %v1488 = vpop.f32.mrb[0].mxu0
  %1489 = vdwg.mxu0
  %1490 = vmatprep.subr.mxu0 0.0
  %1491 = vmatpush1.msra.mxu0 %v886
  %1492 = vmatprep.subr.mxu0 0.0
  %1493 = vmatpush1.msra.mxu0 %v887
  %1494 = vmatprep.subr.mxu0 0.0
  %1495 = vmatpush1.msra.mxu0 %v888
  %1496 = vmatprep.subr.mxu0 0.0
  %1497 = vmatpush1.msra.mxu0 %v889
  %1498 = vmatprep.subr.mxu0 0.0
  %1499 = vmatpush1.msra.mxu0 0.0
  %1500 = vmatprep.subr.mxu0 0.0
  %1501 = vmatpush1.msra.mxu0 0.0
  %1502 = vmatprep.subr.mxu0 0.0
  %1503 = vmatpush1.msra.mxu0 0.0
  %1504 = vmatprep.subr.mxu0 0.0
  %1505 = vmatpush1.msra.mxu0 0.0
  %1506 = vmatprep.subr.mxu0 0.0
  %1507 = vmatpush1.msra.mxu0 0.0
  %1508 = vmatprep.subr.mxu0 0.0
  %1509 = vmatpush1.msra.mxu0 0.0
  %1510 = vmatprep.subr.mxu0 0.0
  %1511 = vmatpush1.msra.mxu0 0.0
  %1512 = vmatprep.subr.mxu0 0.0
  %1513 = vmatpush1.msra.mxu0 0.0
  %1514 = vmatprep.subr.mxu0 0.0
  %1515 = vmatpush1.msra.mxu0 0.0
  %1516 = vmatprep.subr.mxu0 0.0
  %1517 = vmatpush1.msra.mxu0 0.0
  %1518 = vmatprep.subr.mxu0 0.0
  %1519 = vmatpush1.msra.mxu0 0.0
  %1520 = vmatprep.subr.mxu0 0.0
  %1521 = vmatpush1.msra.mxu0 0.0
  %1522 = vmatprep.subr.mxu0 0.0
  %1523 = vmatpush1.msra.mxu0 0.0
  %1524 = vmatprep.subr.mxu0 0.0
  %1525 = vmatpush1.msra.mxu0 0.0
  %1526 = vmatprep.subr.mxu0 0.0
  %1527 = vmatpush1.msra.mxu0 0.0
  %1528 = vmatprep.subr.mxu0 0.0
  %1529 = vmatpush1.msra.mxu0 0.0
  %1530 = vmatprep.subr.mxu0 0.0
  %1531 = vmatpush1.msra.mxu0 0.0
  %1532 = vmatprep.subr.mxu0 0.0
  %1533 = vmatpush1.msra.mxu0 0.0
  %1534 = vmatprep.subr.mxu0 0.0
  %1535 = vmatpush1.msra.mxu0 0.0
  %1536 = vmatprep.subr.mxu0 0.0
  %1537 = vmatpush1.msra.mxu0 0.0
  %1538 = vmatprep.subr.mxu0 0.0
  %1539 = vmatpush1.msra.mxu0 0.0
  %1540 = vmatprep.subr.mxu0 0.0
  %1541 = vmatpush1.msra.mxu0 0.0
  %1542 = vmatprep.subr.mxu0 0.0
  %1543 = vmatpush1.msra.mxu0 0.0
  %1544 = vmatprep.subr.mxu0 0.0
  %1545 = vmatpush1.msra.mxu0 0.0
  %1546 = vmatprep.subr.mxu0 0.0
  %1547 = vmatpush1.msra.mxu0 0.0
  %1548 = vmatprep.subr.mxu0 0.0
  %1549 = vmatpush1.msra.mxu0 0.0
  %1550 = vmatprep.subr.mxu0 0.0
  %1551 = vmatpush1.msra.mxu0 0.0
  %1552 = vmatprep.subr.mxu0 0.0
  %1553 = vmatpush1.msra.mxu0 0.0
  %1554 = vmatprep.mubr.f32.mxu0 0.0
  %1555 = vmatmul.mubr.f32.gmra.mrb[0].mxu0 %v1418
  %v1556 = vpop.f32.mrb[0].mxu0
  %v1557 = vadd.f32 %v1002, %v1556
  %v1558 = vpop.f32.mrb[0].mxu0
  %1559 = vdwg.mxu0
  %1560 = vmatprep.subr.mxu0 0.0
  %1561 = vmatpush1.msra.mxu0 %v891
  %1562 = vmatprep.subr.mxu0 0.0
  %1563 = vmatpush1.msra.mxu0 %v892
  %1564 = vmatprep.subr.mxu0 0.0
  %1565 = vmatpush1.msra.mxu0 %v893
  %1566 = vmatprep.subr.mxu0 0.0
  %1567 = vmatpush1.msra.mxu0 %v894
  %1568 = vmatprep.subr.mxu0 0.0
  %1569 = vmatpush1.msra.mxu0 0.0
  %1570 = vmatprep.subr.mxu0 0.0
  %1571 = vmatpush1.msra.mxu0 0.0
  %1572 = vmatprep.subr.mxu0 0.0
  %1573 = vmatpush1.msra.mxu0 0.0
  %1574 = vmatprep.subr.mxu0 0.0
  %1575 = vmatpush1.msra.mxu0 0.0
  %1576 = vmatprep.subr.mxu0 0.0
  %1577 = vmatpush1.msra.mxu0 0.0
  %1578 = vmatprep.subr.mxu0 0.0
  %1579 = vmatpush1.msra.mxu0 0.0
  %1580 = vmatprep.subr.mxu0 0.0
  %1581 = vmatpush1.msra.mxu0 0.0
  %1582 = vmatprep.subr.mxu0 0.0
  %1583 = vmatpush1.msra.mxu0 0.0
  %1584 = vmatprep.subr.mxu0 0.0
  %1585 = vmatpush1.msra.mxu0 0.0
  %1586 = vmatprep.subr.mxu0 0.0
  %1587 = vmatpush1.msra.mxu0 0.0
  %1588 = vmatprep.subr.mxu0 0.0
  %1589 = vmatpush1.msra.mxu0 0.0
  %1590 = vmatprep.subr.mxu0 0.0
  %1591 = vmatpush1.msra.mxu0 0.0
  %1592 = vmatprep.subr.mxu0 0.0
  %1593 = vmatpush1.msra.mxu0 0.0
  %1594 = vmatprep.subr.mxu0 0.0
  %1595 = vmatpush1.msra.mxu0 0.0
  %1596 = vmatprep.subr.mxu0 0.0
  %1597 = vmatpush1.msra.mxu0 0.0
  %1598 = vmatprep.subr.mxu0 0.0
  %1599 = vmatpush1.msra.mxu0 0.0
  %1600 = vmatprep.subr.mxu0 0.0
  %1601 = vmatpush1.msra.mxu0 0.0
  %1602 = vmatprep.subr.mxu0 0.0
  %1603 = vmatpush1.msra.mxu0 0.0
  %1604 = vmatprep.subr.mxu0 0.0
  %1605 = vmatpush1.msra.mxu0 0.0
  %1606 = vmatprep.subr.mxu0 0.0
  %1607 = vmatpush1.msra.mxu0 0.0
  %1608 = vmatprep.subr.mxu0 0.0
  %1609 = vmatpush1.msra.mxu0 0.0
  %1610 = vmatprep.subr.mxu0 0.0
  %1611 = vmatpush1.msra.mxu0 0.0
  %1612 = vmatprep.subr.mxu0 0.0
  %1613 = vmatpush1.msra.mxu0 0.0
  %1614 = vmatprep.subr.mxu0 0.0
  %1615 = vmatpush1.msra.mxu0 0.0
  %1616 = vmatprep.subr.mxu0 0.0
  %1617 = vmatpush1.msra.mxu0 0.0
  %1618 = vmatprep.subr.mxu0 0.0
  %1619 = vmatpush1.msra.mxu0 0.0
  %1620 = vmatprep.subr.mxu0 0.0
  %1621 = vmatpush1.msra.mxu0 0.0
  %1622 = vmatprep.subr.mxu0 0.0
  %1623 = vmatpush1.msra.mxu0 0.0
  %1624 = vmatprep.mubr.f32.mxu0 0.0
  %1625 = vmatmul.mubr.f32.gmra.mrb[0].mxu0 %v1418
  %v1626 = vpop.f32.mrb[0].mxu0
  %v1627 = vadd.f32 %v1078, %v1626
  %v1628 = vpop.f32.mrb[0].mxu0
  %1629 = vdwg.mxu0
  %s1630 = scalar_lea.vmem [#allocation2], 16
  %v1631 = vld [vmem:[%s1630] sm:$0xff]
  %v1632 = vadd.f32 %v1631, %v1487
  %v1633 = vxor.u32 %v1632, 2147483648
  %v1634 = vmul.f32 %v1633, 1.442695
  %v1635 = vpow.pop %v1634
  %v1636 = vadd.f32 %v1635, 1.0
  %v1637 = vrcp.pop %v1636
  %v1638 = vmul.f32 1.0, %v1637
  %s1639 = scalar_lea.vmem [#allocation3], 16
  %v1640 = vld [vmem:[%s1639] sm:$0xff]
  %v1641 = vadd.f32 %v1640, %v1557
  %v1642 = vxor.u32 %v1641, 2147483648
  %v1643 = vmul.f32 %v1642, 1.442695
  %v1644 = vpow.pop %v1643
  %v1645 = vadd.f32 %v1644, 1.0
  %v1646 = vrcp.pop %v1645
  %v1647 = vmul.f32 1.0, %v1646
  %s1648 = scalar_lea.vmem [#allocation4], 16
  %v1649 = vld [vmem:[%s1648] sm:$0xff]
  %v1650 = vmul.f32 %v1638, %v1627
  %v1651 = vadd.f32 %v1649, %v1650
  %v1652 = vtanh.pop %v1651
  %v1653 = vsub.f32 1.0, %v1647
  %v1654 = vmul.f32 %v1653, %v1652
  %v1655 = vmul.f32 %v1647, %v1414
  %v1656 = vadd.f32 %v1654, %v1655
  %s1657 = scalar_lea.vmem [#allocation8], 16
  %1658 = vst.msk [vmem:[%s1657] sm:$0xff] %vm91, %v1656
  %v1660 = vsel %vm91, %v1656, 0
  %1662 = vmatprep.subr.mxu0 0.0
  %1663 = vmatpush1.msra.mxu0 %v881
  %1664 = vmatprep.subr.mxu0 0.0
  %1665 = vmatpush1.msra.mxu0 %v882
  %1666 = vmatprep.subr.mxu0 0.0
  %1667 = vmatpush1.msra.mxu0 %v883
  %1668 = vmatprep.subr.mxu0 0.0
  %1669 = vmatpush1.msra.mxu0 %v884
  %1670 = vmatprep.subr.mxu0 0.0
  %1671 = vmatpush1.msra.mxu0 0.0
  %1672 = vmatprep.subr.mxu0 0.0
  %1673 = vmatpush1.msra.mxu0 0.0
  %1674 = vmatprep.subr.mxu0 0.0
  %1675 = vmatpush1.msra.mxu0 0.0
  %1676 = vmatprep.subr.mxu0 0.0
  %1677 = vmatpush1.msra.mxu0 0.0
  %1678 = vmatprep.subr.mxu0 0.0
  %1679 = vmatpush1.msra.mxu0 0.0
  %1680 = vmatprep.subr.mxu0 0.0
  %1681 = vmatpush1.msra.mxu0 0.0
  %1682 = vmatprep.subr.mxu0 0.0
  %1683 = vmatpush1.msra.mxu0 0.0
  %1684 = vmatprep.subr.mxu0 0.0
  %1685 = vmatpush1.msra.mxu0 0.0
  %1686 = vmatprep.subr.mxu0 0.0
  %1687 = vmatpush1.msra.mxu0 0.0
  %1688 = vmatprep.subr.mxu0 0.0
  %1689 = vmatpush1.msra.mxu0 0.0
  %1690 = vmatprep.subr.mxu0 0.0
  %1691 = vmatpush1.msra.mxu0 0.0
  %1692 = vmatprep.subr.mxu0 0.0
  %1693 = vmatpush1.msra.mxu0 0.0
  %1694 = vmatprep.subr.mxu0 0.0
  %1695 = vmatpush1.msra.mxu0 0.0
  %1696 = vmatprep.subr.mxu0 0.0
  %1697 = vmatpush1.msra.mxu0 0.0
  %1698 = vmatprep.subr.mxu0 0.0
  %1699 = vmatpush1.msra.mxu0 0.0
  %1700 = vmatprep.subr.mxu0 0.0
  %1701 = vmatpush1.msra.mxu0 0.0
  %1702 = vmatprep.subr.mxu0 0.0
  %1703 = vmatpush1.msra.mxu0 0.0
  %1704 = vmatprep.subr.mxu0 0.0
  %1705 = vmatpush1.msra.mxu0 0.0
  %1706 = vmatprep.subr.mxu0 0.0
  %1707 = vmatpush1.msra.mxu0 0.0
  %1708 = vmatprep.subr.mxu0 0.0
  %1709 = vmatpush1.msra.mxu0 0.0
  %1710 = vmatprep.subr.mxu0 0.0
  %1711 = vmatpush1.msra.mxu0 0.0
  %1712 = vmatprep.subr.mxu0 0.0
  %1713 = vmatpush1.msra.mxu0 0.0
  %1714 = vmatprep.subr.mxu0 0.0
  %1715 = vmatpush1.msra.mxu0 0.0
  %1716 = vmatprep.subr.mxu0 0.0
  %1717 = vmatpush1.msra.mxu0 0.0
  %1718 = vmatprep.subr.mxu0 0.0
  %1719 = vmatpush1.msra.mxu0 0.0
  %1720 = vmatprep.subr.mxu0 0.0
  %1721 = vmatpush1.msra.mxu0 0.0
  %1722 = vmatprep.subr.mxu0 0.0
  %1723 = vmatpush1.msra.mxu0 0.0
  %1724 = vmatprep.subr.mxu0 0.0
  %1725 = vmatpush1.msra.mxu0 0.0
  %1726 = vmatprep.mubr.f32.mxu0 0.0
  %1727 = vmatmul.mubr.f32.gmra.mrb[0].mxu0 %v1660
  %v1728 = vpop.f32.mrb[0].mxu0
  %v1729 = vadd.f32 %v923, %v1728
  %v1730 = vpop.f32.mrb[0].mxu0
  %1731 = vdwg.mxu0
  %1732 = vmatprep.subr.mxu0 0.0
  %1733 = vmatpush1.msra.mxu0 %v886
  %1734 = vmatprep.subr.mxu0 0.0
  %1735 = vmatpush1.msra.mxu0 %v887
  %1736 = vmatprep.subr.mxu0 0.0
  %1737 = vmatpush1.msra.mxu0 %v888
  %1738 = vmatprep.subr.mxu0 0.0
  %1739 = vmatpush1.msra.mxu0 %v889
  %1740 = vmatprep.subr.mxu0 0.0
  %1741 = vmatpush1.msra.mxu0 0.0
  %1742 = vmatprep.subr.mxu0 0.0
  %1743 = vmatpush1.msra.mxu0 0.0
  %1744 = vmatprep.subr.mxu0 0.0
  %1745 = vmatpush1.msra.mxu0 0.0
  %1746 = vmatprep.subr.mxu0 0.0
  %1747 = vmatpush1.msra.mxu0 0.0
  %1748 = vmatprep.subr.mxu0 0.0
  %1749 = vmatpush1.msra.mxu0 0.0
  %1750 = vmatprep.subr.mxu0 0.0
  %1751 = vmatpush1.msra.mxu0 0.0
  %1752 = vmatprep.subr.mxu0 0.0
  %1753 = vmatpush1.msra.mxu0 0.0
  %1754 = vmatprep.subr.mxu0 0.0
  %1755 = vmatpush1.msra.mxu0 0.0
  %1756 = vmatprep.subr.mxu0 0.0
  %1757 = vmatpush1.msra.mxu0 0.0
  %1758 = vmatprep.subr.mxu0 0.0
  %1759 = vmatpush1.msra.mxu0 0.0
  %1760 = vmatprep.subr.mxu0 0.0
  %1761 = vmatpush1.msra.mxu0 0.0
  %1762 = vmatprep.subr.mxu0 0.0
  %1763 = vmatpush1.msra.mxu0 0.0
  %1764 = vmatprep.subr.mxu0 0.0
  %1765 = vmatpush1.msra.mxu0 0.0
  %1766 = vmatprep.subr.mxu0 0.0
  %1767 = vmatpush1.msra.mxu0 0.0
  %1768 = vmatprep.subr.mxu0 0.0
  %1769 = vmatpush1.msra.mxu0 0.0
  %1770 = vmatprep.subr.mxu0 0.0
  %1771 = vmatpush1.msra.mxu0 0.0
  %1772 = vmatprep.subr.mxu0 0.0
  %1773 = vmatpush1.msra.mxu0 0.0
  %1774 = vmatprep.subr.mxu0 0.0
  %1775 = vmatpush1.msra.mxu0 0.0
  %1776 = vmatprep.subr.mxu0 0.0
  %1777 = vmatpush1.msra.mxu0 0.0
  %1778 = vmatprep.subr.mxu0 0.0
  %1779 = vmatpush1.msra.mxu0 0.0
  %1780 = vmatprep.subr.mxu0 0.0
  %1781 = vmatpush1.msra.mxu0 0.0
  %1782 = vmatprep.subr.mxu0 0.0
  %1783 = vmatpush1.msra.mxu0 0.0
  %1784 = vmatprep.subr.mxu0 0.0
  %1785 = vmatpush1.msra.mxu0 0.0
  %1786 = vmatprep.subr.mxu0 0.0
  %1787 = vmatpush1.msra.mxu0 0.0
  %1788 = vmatprep.subr.mxu0 0.0
  %1789 = vmatpush1.msra.mxu0 0.0
  %1790 = vmatprep.subr.mxu0 0.0
  %1791 = vmatpush1.msra.mxu0 0.0
  %1792 = vmatprep.subr.mxu0 0.0
  %1793 = vmatpush1.msra.mxu0 0.0
  %1794 = vmatprep.subr.mxu0 0.0
  %1795 = vmatpush1.msra.mxu0 0.0
  %1796 = vmatprep.mubr.f32.mxu0 0.0
  %1797 = vmatmul.mubr.f32.gmra.mrb[0].mxu0 %v1660
  %v1798 = vpop.f32.mrb[0].mxu0
  %v1799 = vadd.f32 %v1002, %v1798
  %v1800 = vpop.f32.mrb[0].mxu0
  %1801 = vdwg.mxu0
  %1802 = vmatprep.subr.mxu0 0.0
  %1803 = vmatpush1.msra.mxu0 %v891
  %1804 = vmatprep.subr.mxu0 0.0
  %1805 = vmatpush1.msra.mxu0 %v892
  %1806 = vmatprep.subr.mxu0 0.0
  %1807 = vmatpush1.msra.mxu0 %v893
  %1808 = vmatprep.subr.mxu0 0.0
  %1809 = vmatpush1.msra.mxu0 %v894
  %1810 = vmatprep.subr.mxu0 0.0
  %1811 = vmatpush1.msra.mxu0 0.0
  %1812 = vmatprep.subr.mxu0 0.0
  %1813 = vmatpush1.msra.mxu0 0.0
  %1814 = vmatprep.subr.mxu0 0.0
  %1815 = vmatpush1.msra.mxu0 0.0
  %1816 = vmatprep.subr.mxu0 0.0
  %1817 = vmatpush1.msra.mxu0 0.0
  %1818 = vmatprep.subr.mxu0 0.0
  %1819 = vmatpush1.msra.mxu0 0.0
  %1820 = vmatprep.subr.mxu0 0.0
  %1821 = vmatpush1.msra.mxu0 0.0
  %1822 = vmatprep.subr.mxu0 0.0
  %1823 = vmatpush1.msra.mxu0 0.0
  %1824 = vmatprep.subr.mxu0 0.0
  %1825 = vmatpush1.msra.mxu0 0.0
  %1826 = vmatprep.subr.mxu0 0.0
  %1827 = vmatpush1.msra.mxu0 0.0
  %1828 = vmatprep.subr.mxu0 0.0
  %1829 = vmatpush1.msra.mxu0 0.0
  %1830 = vmatprep.subr.mxu0 0.0
  %1831 = vmatpush1.msra.mxu0 0.0
  %1832 = vmatprep.subr.mxu0 0.0
  %1833 = vmatpush1.msra.mxu0 0.0
  %1834 = vmatprep.subr.mxu0 0.0
  %1835 = vmatpush1.msra.mxu0 0.0
  %1836 = vmatprep.subr.mxu0 0.0
  %1837 = vmatpush1.msra.mxu0 0.0
  %1838 = vmatprep.subr.mxu0 0.0
  %1839 = vmatpush1.msra.mxu0 0.0
  %1840 = vmatprep.subr.mxu0 0.0
  %1841 = vmatpush1.msra.mxu0 0.0
  %1842 = vmatprep.subr.mxu0 0.0
  %1843 = vmatpush1.msra.mxu0 0.0
  %1844 = vmatprep.subr.mxu0 0.0
  %1845 = vmatpush1.msra.mxu0 0.0
  %1846 = vmatprep.subr.mxu0 0.0
  %1847 = vmatpush1.msra.mxu0 0.0
  %1848 = vmatprep.subr.mxu0 0.0
  %1849 = vmatpush1.msra.mxu0 0.0
  %1850 = vmatprep.subr.mxu0 0.0
  %1851 = vmatpush1.msra.mxu0 0.0
  %1852 = vmatprep.subr.mxu0 0.0
  %1853 = vmatpush1.msra.mxu0 0.0
  %1854 = vmatprep.subr.mxu0 0.0
  %1855 = vmatpush1.msra.mxu0 0.0
  %1856 = vmatprep.subr.mxu0 0.0
  %1857 = vmatpush1.msra.mxu0 0.0
  %1858 = vmatprep.subr.mxu0 0.0
  %1859 = vmatpush1.msra.mxu0 0.0
  %1860 = vmatprep.subr.mxu0 0.0
  %1861 = vmatpush1.msra.mxu0 0.0
  %1862 = vmatprep.subr.mxu0 0.0
  %1863 = vmatpush1.msra.mxu0 0.0
  %1864 = vmatprep.subr.mxu0 0.0
  %1865 = vmatpush1.msra.mxu0 0.0
  %1866 = vmatprep.mubr.f32.mxu0 0.0
  %1867 = vmatmul.mubr.f32.gmra.mrb[0].mxu0 %v1660
  %v1868 = vpop.f32.mrb[0].mxu0
  %v1869 = vadd.f32 %v1078, %v1868
  %v1870 = vpop.f32.mrb[0].mxu0
  %1871 = vdwg.mxu0
  %s1872 = scalar_lea.vmem [#allocation2], 24
  %v1873 = vld [vmem:[%s1872] sm:$0xff]
  %v1874 = vadd.f32 %v1873, %v1729
  %v1875 = vxor.u32 %v1874, 2147483648
  %v1876 = vmul.f32 %v1875, 1.442695
  %v1877 = vpow.pop %v1876
  %v1878 = vadd.f32 %v1877, 1.0
  %v1879 = vrcp.pop %v1878
  %v1880 = vmul.f32 1.0, %v1879
  %s1881 = scalar_lea.vmem [#allocation3], 24
  %v1882 = vld [vmem:[%s1881] sm:$0xff]
  %v1883 = vadd.f32 %v1882, %v1799
  %v1884 = vxor.u32 %v1883, 2147483648
  %v1885 = vmul.f32 %v1884, 1.442695
  %v1886 = vpow.pop %v1885
  %v1887 = vadd.f32 %v1886, 1.0
  %v1888 = vrcp.pop %v1887
  %v1889 = vmul.f32 1.0, %v1888
  %s1890 = scalar_lea.vmem [#allocation4], 24
  %v1891 = vld [vmem:[%s1890] sm:$0xff]
  %v1892 = vmul.f32 %v1880, %v1869
  %v1893 = vadd.f32 %v1891, %v1892
  %v1894 = vtanh.pop %v1893
  %v1895 = vsub.f32 1.0, %v1889
  %v1896 = vmul.f32 %v1895, %v1894
  %v1897 = vmul.f32 %v1889, %v1656
  %v1898 = vadd.f32 %v1896, %v1897
  %s1899 = scalar_lea.vmem [#allocation8], 24
  %1900 = vst.msk [vmem:[%s1899] sm:$0xff] %vm91, %v1898
  %v1902 = vsel %vm91, %v1898, 0
  %1904 = vmatprep.subr.mxu0 0.0
  %1905 = vmatpush1.msra.mxu0 %v881
  %1906 = vmatprep.subr.mxu0 0.0
  %1907 = vmatpush1.msra.mxu0 %v882
  %1908 = vmatprep.subr.mxu0 0.0
  %1909 = vmatpush1.msra.mxu0 %v883
  %1910 = vmatprep.subr.mxu0 0.0
  %1911 = vmatpush1.msra.mxu0 %v884
  %1912 = vmatprep.subr.mxu0 0.0
  %1913 = vmatpush1.msra.mxu0 0.0
  %1914 = vmatprep.subr.mxu0 0.0
  %1915 = vmatpush1.msra.mxu0 0.0
  %1916 = vmatprep.subr.mxu0 0.0
  %1917 = vmatpush1.msra.mxu0 0.0
  %1918 = vmatprep.subr.mxu0 0.0
  %1919 = vmatpush1.msra.mxu0 0.0
  %1920 = vmatprep.subr.mxu0 0.0
  %1921 = vmatpush1.msra.mxu0 0.0
  %1922 = vmatprep.subr.mxu0 0.0
  %1923 = vmatpush1.msra.mxu0 0.0
  %1924 = vmatprep.subr.mxu0 0.0
  %1925 = vmatpush1.msra.mxu0 0.0
  %1926 = vmatprep.subr.mxu0 0.0
  %1927 = vmatpush1.msra.mxu0 0.0
  %1928 = vmatprep.subr.mxu0 0.0
  %1929 = vmatpush1.msra.mxu0 0.0
  %1930 = vmatprep.subr.mxu0 0.0
  %1931 = vmatpush1.msra.mxu0 0.0
  %1932 = vmatprep.subr.mxu0 0.0
  %1933 = vmatpush1.msra.mxu0 0.0
  %1934 = vmatprep.subr.mxu0 0.0
  %1935 = vmatpush1.msra.mxu0 0.0
  %1936 = vmatprep.subr.mxu0 0.0
  %1937 = vmatpush1.msra.mxu0 0.0
  %1938 = vmatprep.subr.mxu0 0.0
  %1939 = vmatpush1.msra.mxu0 0.0
  %1940 = vmatprep.subr.mxu0 0.0
  %1941 = vmatpush1.msra.mxu0 0.0
  %1942 = vmatprep.subr.mxu0 0.0
  %1943 = vmatpush1.msra.mxu0 0.0
  %1944 = vmatprep.subr.mxu0 0.0
  %1945 = vmatpush1.msra.mxu0 0.0
  %1946 = vmatprep.subr.mxu0 0.0
  %1947 = vmatpush1.msra.mxu0 0.0
  %1948 = vmatprep.subr.mxu0 0.0
  %1949 = vmatpush1.msra.mxu0 0.0
  %1950 = vmatprep.subr.mxu0 0.0
  %1951 = vmatpush1.msra.mxu0 0.0
  %1952 = vmatprep.subr.mxu0 0.0
  %1953 = vmatpush1.msra.mxu0 0.0
  %1954 = vmatprep.subr.mxu0 0.0
  %1955 = vmatpush1.msra.mxu0 0.0
  %1956 = vmatprep.subr.mxu0 0.0
  %1957 = vmatpush1.msra.mxu0 0.0
  %1958 = vmatprep.subr.mxu0 0.0
  %1959 = vmatpush1.msra.mxu0 0.0
  %1960 = vmatprep.subr.mxu0 0.0
  %1961 = vmatpush1.msra.mxu0 0.0
  %1962 = vmatprep.subr.mxu0 0.0
  %1963 = vmatpush1.msra.mxu0 0.0
  %1964 = vmatprep.subr.mxu0 0.0
  %1965 = vmatpush1.msra.mxu0 0.0
  %1966 = vmatprep.subr.mxu0 0.0
  %1967 = vmatpush1.msra.mxu0 0.0
  %1968 = vmatprep.mubr.f32.mxu0 0.0
  %1969 = vmatmul.mubr.f32.gmra.mrb[0].mxu0 %v1902
  %v1970 = vpop.f32.mrb[0].mxu0
  %v1971 = vadd.f32 %v923, %v1970
  %v1972 = vpop.f32.mrb[0].mxu0
  %1973 = vdwg.mxu0
  %1974 = vmatprep.subr.mxu0 0.0
  %1975 = vmatpush1.msra.mxu0 %v886
  %1976 = vmatprep.subr.mxu0 0.0
  %1977 = vmatpush1.msra.mxu0 %v887
  %1978 = vmatprep.subr.mxu0 0.0
  %1979 = vmatpush1.msra.mxu0 %v888
  %1980 = vmatprep.subr.mxu0 0.0
  %1981 = vmatpush1.msra.mxu0 %v889
  %1982 = vmatprep.subr.mxu0 0.0
  %1983 = vmatpush1.msra.mxu0 0.0
  %1984 = vmatprep.subr.mxu0 0.0
  %1985 = vmatpush1.msra.mxu0 0.0
  %1986 = vmatprep.subr.mxu0 0.0
  %1987 = vmatpush1.msra.mxu0 0.0
  %1988 = vmatprep.subr.mxu0 0.0
  %1989 = vmatpush1.msra.mxu0 0.0
  %1990 = vmatprep.subr.mxu0 0.0
  %1991 = vmatpush1.msra.mxu0 0.0
  %1992 = vmatprep.subr.mxu0 0.0
  %1993 = vmatpush1.msra.mxu0 0.0
  %1994 = vmatprep.subr.mxu0 0.0
  %1995 = vmatpush1.msra.mxu0 0.0
  %1996 = vmatprep.subr.mxu0 0.0
  %1997 = vmatpush1.msra.mxu0 0.0
  %1998 = vmatprep.subr.mxu0 0.0
  %1999 = vmatpush1.msra.mxu0 0.0
  %2000 = vmatprep.subr.mxu0 0.0
  %2001 = vmatpush1.msra.mxu0 0.0
  %2002 = vmatprep.subr.mxu0 0.0
  %2003 = vmatpush1.msra.mxu0 0.0
  %2004 = vmatprep.subr.mxu0 0.0
  %2005 = vmatpush1.msra.mxu0 0.0
  %2006 = vmatprep.subr.mxu0 0.0
  %2007 = vmatpush1.msra.mxu0 0.0
  %2008 = vmatprep.subr.mxu0 0.0
  %2009 = vmatpush1.msra.mxu0 0.0
  %2010 = vmatprep.subr.mxu0 0.0
  %2011 = vmatpush1.msra.mxu0 0.0
  %2012 = vmatprep.subr.mxu0 0.0
  %2013 = vmatpush1.msra.mxu0 0.0
  %2014 = vmatprep.subr.mxu0 0.0
  %2015 = vmatpush1.msra.mxu0 0.0
  %2016 = vmatprep.subr.mxu0 0.0
  %2017 = vmatpush1.msra.mxu0 0.0
  %2018 = vmatprep.subr.mxu0 0.0
  %2019 = vmatpush1.msra.mxu0 0.0
  %2020 = vmatprep.subr.mxu0 0.0
  %2021 = vmatpush1.msra.mxu0 0.0
  %2022 = vmatprep.subr.mxu0 0.0
  %2023 = vmatpush1.msra.mxu0 0.0
  %2024 = vmatprep.subr.mxu0 0.0
  %2025 = vmatpush1.msra.mxu0 0.0
  %2026 = vmatprep.subr.mxu0 0.0
  %2027 = vmatpush1.msra.mxu0 0.0
  %2028 = vmatprep.subr.mxu0 0.0
  %2029 = vmatpush1.msra.mxu0 0.0
  %2030 = vmatprep.subr.mxu0 0.0
  %2031 = vmatpush1.msra.mxu0 0.0
  %2032 = vmatprep.subr.mxu0 0.0
  %2033 = vmatpush1.msra.mxu0 0.0
  %2034 = vmatprep.subr.mxu0 0.0
  %2035 = vmatpush1.msra.mxu0 0.0
  %2036 = vmatprep.subr.mxu0 0.0
  %2037 = vmatpush1.msra.mxu0 0.0
  %2038 = vmatprep.mubr.f32.mxu0 0.0
  %2039 = vmatmul.mubr.f32.gmra.mrb[0].mxu0 %v1902
  %v2040 = vpop.f32.mrb[0].mxu0
  %v2041 = vadd.f32 %v1002, %v2040
  %v2042 = vpop.f32.mrb[0].mxu0
  %2043 = vdwg.mxu0
  %2044 = vmatprep.subr.mxu0 0.0
  %2045 = vmatpush1.msra.mxu0 %v891
  %2046 = vmatprep.subr.mxu0 0.0
  %2047 = vmatpush1.msra.mxu0 %v892
  %2048 = vmatprep.subr.mxu0 0.0
  %2049 = vmatpush1.msra.mxu0 %v893
  %2050 = vmatprep.subr.mxu0 0.0
  %2051 = vmatpush1.msra.mxu0 %v894
  %2052 = vmatprep.subr.mxu0 0.0
  %2053 = vmatpush1.msra.mxu0 0.0
  %2054 = vmatprep.subr.mxu0 0.0
  %2055 = vmatpush1.msra.mxu0 0.0
  %2056 = vmatprep.subr.mxu0 0.0
  %2057 = vmatpush1.msra.mxu0 0.0
  %2058 = vmatprep.subr.mxu0 0.0
  %2059 = vmatpush1.msra.mxu0 0.0
  %2060 = vmatprep.subr.mxu0 0.0
  %2061 = vmatpush1.msra.mxu0 0.0
  %2062 = vmatprep.subr.mxu0 0.0
  %2063 = vmatpush1.msra.mxu0 0.0
  %2064 = vmatprep.subr.mxu0 0.0
  %2065 = vmatpush1.msra.mxu0 0.0
  %2066 = vmatprep.subr.mxu0 0.0
  %2067 = vmatpush1.msra.mxu0 0.0
  %2068 = vmatprep.subr.mxu0 0.0
  %2069 = vmatpush1.msra.mxu0 0.0
  %2070 = vmatprep.subr.mxu0 0.0
  %2071 = vmatpush1.msra.mxu0 0.0
  %2072 = vmatprep.subr.mxu0 0.0
  %2073 = vmatpush1.msra.mxu0 0.0
  %2074 = vmatprep.subr.mxu0 0.0
  %2075 = vmatpush1.msra.mxu0 0.0
  %2076 = vmatprep.subr.mxu0 0.0
  %2077 = vmatpush1.msra.mxu0 0.0
  %2078 = vmatprep.subr.mxu0 0.0
  %2079 = vmatpush1.msra.mxu0 0.0
  %2080 = vmatprep.subr.mxu0 0.0
  %2081 = vmatpush1.msra.mxu0 0.0
  %2082 = vmatprep.subr.mxu0 0.0
  %2083 = vmatpush1.msra.mxu0 0.0
  %2084 = vmatprep.subr.mxu0 0.0
  %2085 = vmatpush1.msra.mxu0 0.0
  %2086 = vmatprep.subr.mxu0 0.0
  %2087 = vmatpush1.msra.mxu0 0.0
  %2088 = vmatprep.subr.mxu0 0.0
  %2089 = vmatpush1.msra.mxu0 0.0
  %2090 = vmatprep.subr.mxu0 0.0
  %2091 = vmatpush1.msra.mxu0 0.0
  %2092 = vmatprep.subr.mxu0 0.0
  %2093 = vmatpush1.msra.mxu0 0.0
  %2094 = vmatprep.subr.mxu0 0.0
  %2095 = vmatpush1.msra.mxu0 0.0
  %2096 = vmatprep.subr.mxu0 0.0
  %2097 = vmatpush1.msra.mxu0 0.0
  %2098 = vmatprep.subr.mxu0 0.0
  %2099 = vmatpush1.msra.mxu0 0.0
  %2100 = vmatprep.subr.mxu0 0.0
  %2101 = vmatpush1.msra.mxu0 0.0
  %2102 = vmatprep.subr.mxu0 0.0
  %2103 = vmatpush1.msra.mxu0 0.0
  %2104 = vmatprep.subr.mxu0 0.0
  %2105 = vmatpush1.msra.mxu0 0.0
  %2106 = vmatprep.subr.mxu0 0.0
  %2107 = vmatpush1.msra.mxu0 0.0
  %2108 = vmatprep.mubr.f32.mxu0 0.0
  %2109 = vmatmul.mubr.f32.gmra.mrb[0].mxu0 %v1902
  %v2110 = vpop.f32.mrb[0].mxu0
  %v2111 = vadd.f32 %v1078, %v2110
  %v2112 = vpop.f32.mrb[0].mxu0
  %2113 = vdwg.mxu0
  %s2114 = scalar_lea.vmem [#allocation2], 32
  %v2115 = vld [vmem:[%s2114] sm:$0xff]
  %v2116 = vadd.f32 %v2115, %v1971
  %v2117 = vxor.u32 %v2116, 2147483648
  %v2118 = vmul.f32 %v2117, 1.442695
  %v2119 = vpow.pop %v2118
  %v2120 = vadd.f32 %v2119, 1.0
  %v2121 = vrcp.pop %v2120
  %v2122 = vmul.f32 1.0, %v2121
  %s2123 = scalar_lea.vmem [#allocation3], 32
  %v2124 = vld [vmem:[%s2123] sm:$0xff]
  %v2125 = vadd.f32 %v2124, %v2041
  %v2126 = vxor.u32 %v2125, 2147483648
  %v2127 = vmul.f32 %v2126, 1.442695
  %v2128 = vpow.pop %v2127
  %v2129 = vadd.f32 %v2128, 1.0
  %v2130 = vrcp.pop %v2129
  %v2131 = vmul.f32 1.0, %v2130
  %s2132 = scalar_lea.vmem [#allocation4], 32
  %v2133 = vld [vmem:[%s2132] sm:$0xff]
  %v2134 = vmul.f32 %v2122, %v2111
  %v2135 = vadd.f32 %v2133, %v2134
  %v2136 = vtanh.pop %v2135
  %v2137 = vsub.f32 1.0, %v2131
  %v2138 = vmul.f32 %v2137, %v2136
  %v2139 = vmul.f32 %v2131, %v1898
  %v2140 = vadd.f32 %v2138, %v2139
  %s2141 = scalar_lea.vmem [#allocation8], 32
  %2142 = vst.msk [vmem:[%s2141] sm:$0xff] %vm91, %v2140
  %v2144 = vsel %vm91, %v2140, 0
  %2146 = vmatprep.subr.mxu0 0.0
  %2147 = vmatpush1.msra.mxu0 %v881
  %2148 = vmatprep.subr.mxu0 0.0
  %2149 = vmatpush1.msra.mxu0 %v882
  %2150 = vmatprep.subr.mxu0 0.0
  %2151 = vmatpush1.msra.mxu0 %v883
  %2152 = vmatprep.subr.mxu0 0.0
  %2153 = vmatpush1.msra.mxu0 %v884
  %2154 = vmatprep.subr.mxu0 0.0
  %2155 = vmatpush1.msra.mxu0 0.0
  %2156 = vmatprep.subr.mxu0 0.0
  %2157 = vmatpush1.msra.mxu0 0.0
  %2158 = vmatprep.subr.mxu0 0.0
  %2159 = vmatpush1.msra.mxu0 0.0
  %2160 = vmatprep.subr.mxu0 0.0
  %2161 = vmatpush1.msra.mxu0 0.0
  %2162 = vmatprep.subr.mxu0 0.0
  %2163 = vmatpush1.msra.mxu0 0.0
  %2164 = vmatprep.subr.mxu0 0.0
  %2165 = vmatpush1.msra.mxu0 0.0
  %2166 = vmatprep.subr.mxu0 0.0
  %2167 = vmatpush1.msra.mxu0 0.0
  %2168 = vmatprep.subr.mxu0 0.0
  %2169 = vmatpush1.msra.mxu0 0.0
  %2170 = vmatprep.subr.mxu0 0.0
  %2171 = vmatpush1.msra.mxu0 0.0
  %2172 = vmatprep.subr.mxu0 0.0
  %2173 = vmatpush1.msra.mxu0 0.0
  %2174 = vmatprep.subr.mxu0 0.0
  %2175 = vmatpush1.msra.mxu0 0.0
  %2176 = vmatprep.subr.mxu0 0.0
  %2177 = vmatpush1.msra.mxu0 0.0
  %2178 = vmatprep.subr.mxu0 0.0
  %2179 = vmatpush1.msra.mxu0 0.0
  %2180 = vmatprep.subr.mxu0 0.0
  %2181 = vmatpush1.msra.mxu0 0.0
  %2182 = vmatprep.subr.mxu0 0.0
  %2183 = vmatpush1.msra.mxu0 0.0
  %2184 = vmatprep.subr.mxu0 0.0
  %2185 = vmatpush1.msra.mxu0 0.0
  %2186 = vmatprep.subr.mxu0 0.0
  %2187 = vmatpush1.msra.mxu0 0.0
  %2188 = vmatprep.subr.mxu0 0.0
  %2189 = vmatpush1.msra.mxu0 0.0
  %2190 = vmatprep.subr.mxu0 0.0
  %2191 = vmatpush1.msra.mxu0 0.0
  %2192 = vmatprep.subr.mxu0 0.0
  %2193 = vmatpush1.msra.mxu0 0.0
  %2194 = vmatprep.subr.mxu0 0.0
  %2195 = vmatpush1.msra.mxu0 0.0
  %2196 = vmatprep.subr.mxu0 0.0
  %2197 = vmatpush1.msra.mxu0 0.0
  %2198 = vmatprep.subr.mxu0 0.0
  %2199 = vmatpush1.msra.mxu0 0.0
  %2200 = vmatprep.subr.mxu0 0.0
  %2201 = vmatpush1.msra.mxu0 0.0
  %2202 = vmatprep.subr.mxu0 0.0
  %2203 = vmatpush1.msra.mxu0 0.0
  %2204 = vmatprep.subr.mxu0 0.0
  %2205 = vmatpush1.msra.mxu0 0.0
  %2206 = vmatprep.subr.mxu0 0.0
  %2207 = vmatpush1.msra.mxu0 0.0
  %2208 = vmatprep.subr.mxu0 0.0
  %2209 = vmatpush1.msra.mxu0 0.0
  %2210 = vmatprep.mubr.f32.mxu0 0.0
  %2211 = vmatmul.mubr.f32.gmra.mrb[0].mxu0 %v2144
  %v2212 = vpop.f32.mrb[0].mxu0
  %v2213 = vadd.f32 %v923, %v2212
  %v2214 = vpop.f32.mrb[0].mxu0
  %2215 = vdwg.mxu0
  %2216 = vmatprep.subr.mxu0 0.0
  %2217 = vmatpush1.msra.mxu0 %v886
  %2218 = vmatprep.subr.mxu0 0.0
  %2219 = vmatpush1.msra.mxu0 %v887
  %2220 = vmatprep.subr.mxu0 0.0
  %2221 = vmatpush1.msra.mxu0 %v888
  %2222 = vmatprep.subr.mxu0 0.0
  %2223 = vmatpush1.msra.mxu0 %v889
  %2224 = vmatprep.subr.mxu0 0.0
  %2225 = vmatpush1.msra.mxu0 0.0
  %2226 = vmatprep.subr.mxu0 0.0
  %2227 = vmatpush1.msra.mxu0 0.0
  %2228 = vmatprep.subr.mxu0 0.0
  %2229 = vmatpush1.msra.mxu0 0.0
  %2230 = vmatprep.subr.mxu0 0.0
  %2231 = vmatpush1.msra.mxu0 0.0
  %2232 = vmatprep.subr.mxu0 0.0
  %2233 = vmatpush1.msra.mxu0 0.0
  %2234 = vmatprep.subr.mxu0 0.0
  %2235 = vmatpush1.msra.mxu0 0.0
  %2236 = vmatprep.subr.mxu0 0.0
  %2237 = vmatpush1.msra.mxu0 0.0
  %2238 = vmatprep.subr.mxu0 0.0
  %2239 = vmatpush1.msra.mxu0 0.0
  %2240 = vmatprep.subr.mxu0 0.0
  %2241 = vmatpush1.msra.mxu0 0.0
  %2242 = vmatprep.subr.mxu0 0.0
  %2243 = vmatpush1.msra.mxu0 0.0
  %2244 = vmatprep.subr.mxu0 0.0
  %2245 = vmatpush1.msra.mxu0 0.0
  %2246 = vmatprep.subr.mxu0 0.0
  %2247 = vmatpush1.msra.mxu0 0.0
  %2248 = vmatprep.subr.mxu0 0.0
  %2249 = vmatpush1.msra.mxu0 0.0
  %2250 = vmatprep.subr.mxu0 0.0
  %2251 = vmatpush1.msra.mxu0 0.0
  %2252 = vmatprep.subr.mxu0 0.0
  %2253 = vmatpush1.msra.mxu0 0.0
  %2254 = vmatprep.subr.mxu0 0.0
  %2255 = vmatpush1.msra.mxu0 0.0
  %2256 = vmatprep.subr.mxu0 0.0
  %2257 = vmatpush1.msra.mxu0 0.0
  %2258 = vmatprep.subr.mxu0 0.0
  %2259 = vmatpush1.msra.mxu0 0.0
  %2260 = vmatprep.subr.mxu0 0.0
  %2261 = vmatpush1.msra.mxu0 0.0
  %2262 = vmatprep.subr.mxu0 0.0
  %2263 = vmatpush1.msra.mxu0 0.0
  %2264 = vmatprep.subr.mxu0 0.0
  %2265 = vmatpush1.msra.mxu0 0.0
  %2266 = vmatprep.subr.mxu0 0.0
  %2267 = vmatpush1.msra.mxu0 0.0
  %2268 = vmatprep.subr.mxu0 0.0
  %2269 = vmatpush1.msra.mxu0 0.0
  %2270 = vmatprep.subr.mxu0 0.0
  %2271 = vmatpush1.msra.mxu0 0.0
  %2272 = vmatprep.subr.mxu0 0.0
  %2273 = vmatpush1.msra.mxu0 0.0
  %2274 = vmatprep.subr.mxu0 0.0
  %2275 = vmatpush1.msra.mxu0 0.0
  %2276 = vmatprep.subr.mxu0 0.0
  %2277 = vmatpush1.msra.mxu0 0.0
  %2278 = vmatprep.subr.mxu0 0.0
  %2279 = vmatpush1.msra.mxu0 0.0
  %2280 = vmatprep.mubr.f32.mxu0 0.0
  %2281 = vmatmul.mubr.f32.gmra.mrb[0].mxu0 %v2144
  %v2282 = vpop.f32.mrb[0].mxu0
  %v2283 = vadd.f32 %v1002, %v2282
  %v2284 = vpop.f32.mrb[0].mxu0
  %2285 = vdwg.mxu0
  %2286 = vmatprep.subr.mxu0 0.0
  %2287 = vmatpush1.msra.mxu0 %v891
  %2288 = vmatprep.subr.mxu0 0.0
  %2289 = vmatpush1.msra.mxu0 %v892
  %2290 = vmatprep.subr.mxu0 0.0
  %2291 = vmatpush1.msra.mxu0 %v893
  %2292 = vmatprep.subr.mxu0 0.0
  %2293 = vmatpush1.msra.mxu0 %v894
  %2294 = vmatprep.subr.mxu0 0.0
  %2295 = vmatpush1.msra.mxu0 0.0
  %2296 = vmatprep.subr.mxu0 0.0
  %2297 = vmatpush1.msra.mxu0 0.0
  %2298 = vmatprep.subr.mxu0 0.0
  %2299 = vmatpush1.msra.mxu0 0.0
  %2300 = vmatprep.subr.mxu0 0.0
  %2301 = vmatpush1.msra.mxu0 0.0
  %2302 = vmatprep.subr.mxu0 0.0
  %2303 = vmatpush1.msra.mxu0 0.0
  %2304 = vmatprep.subr.mxu0 0.0
  %2305 = vmatpush1.msra.mxu0 0.0
  %2306 = vmatprep.subr.mxu0 0.0
  %2307 = vmatpush1.msra.mxu0 0.0
  %2308 = vmatprep.subr.mxu0 0.0
  %2309 = vmatpush1.msra.mxu0 0.0
  %2310 = vmatprep.subr.mxu0 0.0
  %2311 = vmatpush1.msra.mxu0 0.0
  %2312 = vmatprep.subr.mxu0 0.0
  %2313 = vmatpush1.msra.mxu0 0.0
  %2314 = vmatprep.subr.mxu0 0.0
  %2315 = vmatpush1.msra.mxu0 0.0
  %2316 = vmatprep.subr.mxu0 0.0
  %2317 = vmatpush1.msra.mxu0 0.0
  %2318 = vmatprep.subr.mxu0 0.0
  %2319 = vmatpush1.msra.mxu0 0.0
  %2320 = vmatprep.subr.mxu0 0.0
  %2321 = vmatpush1.msra.mxu0 0.0
  %2322 = vmatprep.subr.mxu0 0.0
  %2323 = vmatpush1.msra.mxu0 0.0
  %2324 = vmatprep.subr.mxu0 0.0
  %2325 = vmatpush1.msra.mxu0 0.0
  %2326 = vmatprep.subr.mxu0 0.0
  %2327 = vmatpush1.msra.mxu0 0.0
  %2328 = vmatprep.subr.mxu0 0.0
  %2329 = vmatpush1.msra.mxu0 0.0
  %2330 = vmatprep.subr.mxu0 0.0
  %2331 = vmatpush1.msra.mxu0 0.0
  %2332 = vmatprep.subr.mxu0 0.0
  %2333 = vmatpush1.msra.mxu0 0.0
  %2334 = vmatprep.subr.mxu0 0.0
  %2335 = vmatpush1.msra.mxu0 0.0
  %2336 = vmatprep.subr.mxu0 0.0
  %2337 = vmatpush1.msra.mxu0 0.0
  %2338 = vmatprep.subr.mxu0 0.0
  %2339 = vmatpush1.msra.mxu0 0.0
  %2340 = vmatprep.subr.mxu0 0.0
  %2341 = vmatpush1.msra.mxu0 0.0
  %2342 = vmatprep.subr.mxu0 0.0
  %2343 = vmatpush1.msra.mxu0 0.0
  %2344 = vmatprep.subr.mxu0 0.0
  %2345 = vmatpush1.msra.mxu0 0.0
  %2346 = vmatprep.subr.mxu0 0.0
  %2347 = vmatpush1.msra.mxu0 0.0
  %2348 = vmatprep.subr.mxu0 0.0
  %2349 = vmatpush1.msra.mxu0 0.0
  %2350 = vmatprep.mubr.f32.mxu0 0.0
  %2351 = vmatmul.mubr.f32.gmra.mrb[0].mxu0 %v2144
  %v2352 = vpop.f32.mrb[0].mxu0
  %v2353 = vadd.f32 %v1078, %v2352
  %v2354 = vpop.f32.mrb[0].mxu0
  %2355 = vdwg.mxu0
  %s2356 = scalar_lea.vmem [#allocation2], 40
  %v2357 = vld [vmem:[%s2356] sm:$0xff]
  %v2358 = vadd.f32 %v2357, %v2213
  %v2359 = vxor.u32 %v2358, 2147483648
  %v2360 = vmul.f32 %v2359, 1.442695
  %v2361 = vpow.pop %v2360
  %v2362 = vadd.f32 %v2361, 1.0
  %v2363 = vrcp.pop %v2362
  %v2364 = vmul.f32 1.0, %v2363
  %s2365 = scalar_lea.vmem [#allocation3], 40
  %v2366 = vld [vmem:[%s2365] sm:$0xff]
  %v2367 = vadd.f32 %v2366, %v2283
  %v2368 = vxor.u32 %v2367, 2147483648
  %v2369 = vmul.f32 %v2368, 1.442695
  %v2370 = vpow.pop %v2369
  %v2371 = vadd.f32 %v2370, 1.0
  %v2372 = vrcp.pop %v2371
  %v2373 = vmul.f32 1.0, %v2372
  %s2374 = scalar_lea.vmem [#allocation4], 40
  %v2375 = vld [vmem:[%s2374] sm:$0xff]
  %v2376 = vmul.f32 %v2364, %v2353
  %v2377 = vadd.f32 %v2375, %v2376
  %v2378 = vtanh.pop %v2377
  %v2379 = vsub.f32 1.0, %v2373
  %v2380 = vmul.f32 %v2379, %v2378
  %v2381 = vmul.f32 %v2373, %v2140
  %v2382 = vadd.f32 %v2380, %v2381
  %s2383 = scalar_lea.vmem [#allocation8], 40
  %2384 = vst.msk [vmem:[%s2383] sm:$0xff] %vm91, %v2382
  %v2386 = vsel %vm91, %v2382, 0
  %2388 = vmatprep.subr.mxu0 0.0
  %2389 = vmatpush1.msra.mxu0 %v881
  %2390 = vmatprep.subr.mxu0 0.0
  %2391 = vmatpush1.msra.mxu0 %v882
  %2392 = vmatprep.subr.mxu0 0.0
  %2393 = vmatpush1.msra.mxu0 %v883
  %2394 = vmatprep.subr.mxu0 0.0
  %2395 = vmatpush1.msra.mxu0 %v884
  %2396 = vmatprep.subr.mxu0 0.0
  %2397 = vmatpush1.msra.mxu0 0.0
  %2398 = vmatprep.subr.mxu0 0.0
  %2399 = vmatpush1.msra.mxu0 0.0
  %2400 = vmatprep.subr.mxu0 0.0
  %2401 = vmatpush1.msra.mxu0 0.0
  %2402 = vmatprep.subr.mxu0 0.0
  %2403 = vmatpush1.msra.mxu0 0.0
  %2404 = vmatprep.subr.mxu0 0.0
  %2405 = vmatpush1.msra.mxu0 0.0
  %2406 = vmatprep.subr.mxu0 0.0
  %2407 = vmatpush1.msra.mxu0 0.0
  %2408 = vmatprep.subr.mxu0 0.0
  %2409 = vmatpush1.msra.mxu0 0.0
  %2410 = vmatprep.subr.mxu0 0.0
  %2411 = vmatpush1.msra.mxu0 0.0
  %2412 = vmatprep.subr.mxu0 0.0
  %2413 = vmatpush1.msra.mxu0 0.0
  %2414 = vmatprep.subr.mxu0 0.0
  %2415 = vmatpush1.msra.mxu0 0.0
  %2416 = vmatprep.subr.mxu0 0.0
  %2417 = vmatpush1.msra.mxu0 0.0
  %2418 = vmatprep.subr.mxu0 0.0
  %2419 = vmatpush1.msra.mxu0 0.0
  %2420 = vmatprep.subr.mxu0 0.0
  %2421 = vmatpush1.msra.mxu0 0.0
  %2422 = vmatprep.subr.mxu0 0.0
  %2423 = vmatpush1.msra.mxu0 0.0
  %2424 = vmatprep.subr.mxu0 0.0
  %2425 = vmatpush1.msra.mxu0 0.0
  %2426 = vmatprep.subr.mxu0 0.0
  %2427 = vmatpush1.msra.mxu0 0.0
  %2428 = vmatprep.subr.mxu0 0.0
  %2429 = vmatpush1.msra.mxu0 0.0
  %2430 = vmatprep.subr.mxu0 0.0
  %2431 = vmatpush1.msra.mxu0 0.0
  %2432 = vmatprep.subr.mxu0 0.0
  %2433 = vmatpush1.msra.mxu0 0.0
  %2434 = vmatprep.subr.mxu0 0.0
  %2435 = vmatpush1.msra.mxu0 0.0
  %2436 = vmatprep.subr.mxu0 0.0
  %2437 = vmatpush1.msra.mxu0 0.0
  %2438 = vmatprep.subr.mxu0 0.0
  %2439 = vmatpush1.msra.mxu0 0.0
  %2440 = vmatprep.subr.mxu0 0.0
  %2441 = vmatpush1.msra.mxu0 0.0
  %2442 = vmatprep.subr.mxu0 0.0
  %2443 = vmatpush1.msra.mxu0 0.0
  %2444 = vmatprep.subr.mxu0 0.0
  %2445 = vmatpush1.msra.mxu0 0.0
  %2446 = vmatprep.subr.mxu0 0.0
  %2447 = vmatpush1.msra.mxu0 0.0
  %2448 = vmatprep.subr.mxu0 0.0
  %2449 = vmatpush1.msra.mxu0 0.0
  %2450 = vmatprep.subr.mxu0 0.0
  %2451 = vmatpush1.msra.mxu0 0.0
  %2452 = vmatprep.mubr.f32.mxu0 0.0
  %2453 = vmatmul.mubr.f32.gmra.mrb[0].mxu0 %v2386
  %v2454 = vpop.f32.mrb[0].mxu0
  %v2455 = vadd.f32 %v923, %v2454
  %v2456 = vpop.f32.mrb[0].mxu0
  %2457 = vdwg.mxu0
  %2458 = vmatprep.subr.mxu0 0.0
  %2459 = vmatpush1.msra.mxu0 %v886
  %2460 = vmatprep.subr.mxu0 0.0
  %2461 = vmatpush1.msra.mxu0 %v887
  %2462 = vmatprep.subr.mxu0 0.0
  %2463 = vmatpush1.msra.mxu0 %v888
  %2464 = vmatprep.subr.mxu0 0.0
  %2465 = vmatpush1.msra.mxu0 %v889
  %2466 = vmatprep.subr.mxu0 0.0
  %2467 = vmatpush1.msra.mxu0 0.0
  %2468 = vmatprep.subr.mxu0 0.0
  %2469 = vmatpush1.msra.mxu0 0.0
  %2470 = vmatprep.subr.mxu0 0.0
  %2471 = vmatpush1.msra.mxu0 0.0
  %2472 = vmatprep.subr.mxu0 0.0
  %2473 = vmatpush1.msra.mxu0 0.0
  %2474 = vmatprep.subr.mxu0 0.0
  %2475 = vmatpush1.msra.mxu0 0.0
  %2476 = vmatprep.subr.mxu0 0.0
  %2477 = vmatpush1.msra.mxu0 0.0
  %2478 = vmatprep.subr.mxu0 0.0
  %2479 = vmatpush1.msra.mxu0 0.0
  %2480 = vmatprep.subr.mxu0 0.0
  %2481 = vmatpush1.msra.mxu0 0.0
  %2482 = vmatprep.subr.mxu0 0.0
  %2483 = vmatpush1.msra.mxu0 0.0
  %2484 = vmatprep.subr.mxu0 0.0
  %2485 = vmatpush1.msra.mxu0 0.0
  %2486 = vmatprep.subr.mxu0 0.0
  %2487 = vmatpush1.msra.mxu0 0.0
  %2488 = vmatprep.subr.mxu0 0.0
  %2489 = vmatpush1.msra.mxu0 0.0
  %2490 = vmatprep.subr.mxu0 0.0
  %2491 = vmatpush1.msra.mxu0 0.0
  %2492 = vmatprep.subr.mxu0 0.0
  %2493 = vmatpush1.msra.mxu0 0.0
  %2494 = vmatprep.subr.mxu0 0.0
  %2495 = vmatpush1.msra.mxu0 0.0
  %2496 = vmatprep.subr.mxu0 0.0
  %2497 = vmatpush1.msra.mxu0 0.0
  %2498 = vmatprep.subr.mxu0 0.0
  %2499 = vmatpush1.msra.mxu0 0.0
  %2500 = vmatprep.subr.mxu0 0.0
  %2501 = vmatpush1.msra.mxu0 0.0
  %2502 = vmatprep.subr.mxu0 0.0
  %2503 = vmatpush1.msra.mxu0 0.0
  %2504 = vmatprep.subr.mxu0 0.0
  %2505 = vmatpush1.msra.mxu0 0.0
  %2506 = vmatprep.subr.mxu0 0.0
  %2507 = vmatpush1.msra.mxu0 0.0
  %2508 = vmatprep.subr.mxu0 0.0
  %2509 = vmatpush1.msra.mxu0 0.0
  %2510 = vmatprep.subr.mxu0 0.0
  %2511 = vmatpush1.msra.mxu0 0.0
  %2512 = vmatprep.subr.mxu0 0.0
  %2513 = vmatpush1.msra.mxu0 0.0
  %2514 = vmatprep.subr.mxu0 0.0
  %2515 = vmatpush1.msra.mxu0 0.0
  %2516 = vmatprep.subr.mxu0 0.0
  %2517 = vmatpush1.msra.mxu0 0.0
  %2518 = vmatprep.subr.mxu0 0.0
  %2519 = vmatpush1.msra.mxu0 0.0
  %2520 = vmatprep.subr.mxu0 0.0
  %2521 = vmatpush1.msra.mxu0 0.0
  %2522 = vmatprep.mubr.f32.mxu0 0.0
  %2523 = vmatmul.mubr.f32.gmra.mrb[0].mxu0 %v2386
  %v2524 = vpop.f32.mrb[0].mxu0
  %v2525 = vadd.f32 %v1002, %v2524
  %v2526 = vpop.f32.mrb[0].mxu0
  %2527 = vdwg.mxu0
  %2528 = vmatprep.subr.mxu0 0.0
  %2529 = vmatpush1.msra.mxu0 %v891
  %2530 = vmatprep.subr.mxu0 0.0
  %2531 = vmatpush1.msra.mxu0 %v892
  %2532 = vmatprep.subr.mxu0 0.0
  %2533 = vmatpush1.msra.mxu0 %v893
  %2534 = vmatprep.subr.mxu0 0.0
  %2535 = vmatpush1.msra.mxu0 %v894
  %2536 = vmatprep.subr.mxu0 0.0
  %2537 = vmatpush1.msra.mxu0 0.0
  %2538 = vmatprep.subr.mxu0 0.0
  %2539 = vmatpush1.msra.mxu0 0.0
  %2540 = vmatprep.subr.mxu0 0.0
  %2541 = vmatpush1.msra.mxu0 0.0
  %2542 = vmatprep.subr.mxu0 0.0
  %2543 = vmatpush1.msra.mxu0 0.0
  %2544 = vmatprep.subr.mxu0 0.0
  %2545 = vmatpush1.msra.mxu0 0.0
  %2546 = vmatprep.subr.mxu0 0.0
  %2547 = vmatpush1.msra.mxu0 0.0
  %2548 = vmatprep.subr.mxu0 0.0
  %2549 = vmatpush1.msra.mxu0 0.0
  %2550 = vmatprep.subr.mxu0 0.0
  %2551 = vmatpush1.msra.mxu0 0.0
  %2552 = vmatprep.subr.mxu0 0.0
  %2553 = vmatpush1.msra.mxu0 0.0
  %2554 = vmatprep.subr.mxu0 0.0
  %2555 = vmatpush1.msra.mxu0 0.0
  %2556 = vmatprep.subr.mxu0 0.0
  %2557 = vmatpush1.msra.mxu0 0.0
  %2558 = vmatprep.subr.mxu0 0.0
  %2559 = vmatpush1.msra.mxu0 0.0
  %2560 = vmatprep.subr.mxu0 0.0
  %2561 = vmatpush1.msra.mxu0 0.0
  %2562 = vmatprep.subr.mxu0 0.0
  %2563 = vmatpush1.msra.mxu0 0.0
  %2564 = vmatprep.subr.mxu0 0.0
  %2565 = vmatpush1.msra.mxu0 0.0
  %2566 = vmatprep.subr.mxu0 0.0
  %2567 = vmatpush1.msra.mxu0 0.0
  %2568 = vmatprep.subr.mxu0 0.0
  %2569 = vmatpush1.msra.mxu0 0.0
  %2570 = vmatprep.subr.mxu0 0.0
  %2571 = vmatpush1.msra.mxu0 0.0
  %2572 = vmatprep.subr.mxu0 0.0
  %2573 = vmatpush1.msra.mxu0 0.0
  %2574 = vmatprep.subr.mxu0 0.0
  %2575 = vmatpush1.msra.mxu0 0.0
  %2576 = vmatprep.subr.mxu0 0.0
  %2577 = vmatpush1.msra.mxu0 0.0
  %2578 = vmatprep.subr.mxu0 0.0
  %2579 = vmatpush1.msra.mxu0 0.0
  %2580 = vmatprep.subr.mxu0 0.0
  %2581 = vmatpush1.msra.mxu0 0.0
  %2582 = vmatprep.subr.mxu0 0.0
  %2583 = vmatpush1.msra.mxu0 0.0
  %2584 = vmatprep.subr.mxu0 0.0
  %2585 = vmatpush1.msra.mxu0 0.0
  %2586 = vmatprep.subr.mxu0 0.0
  %2587 = vmatpush1.msra.mxu0 0.0
  %2588 = vmatprep.subr.mxu0 0.0
  %2589 = vmatpush1.msra.mxu0 0.0
  %2590 = vmatprep.subr.mxu0 0.0
  %2591 = vmatpush1.msra.mxu0 0.0
  %2592 = vmatprep.mubr.f32.mxu0 0.0
  %2593 = vmatmul.mubr.f32.gmra.mrb[0].mxu0 %v2386
  %v2594 = vpop.f32.mrb[0].mxu0
  %v2595 = vadd.f32 %v1078, %v2594
  %v2596 = vpop.f32.mrb[0].mxu0
  %2597 = vdwg.mxu0
  %s2598 = scalar_lea.vmem [#allocation2], 48
  %v2599 = vld [vmem:[%s2598] sm:$0xff]
  %v2600 = vadd.f32 %v2599, %v2455
  %v2601 = vxor.u32 %v2600, 2147483648
  %v2602 = vmul.f32 %v2601, 1.442695
  %v2603 = vpow.pop %v2602
  %v2604 = vadd.f32 %v2603, 1.0
  %v2605 = vrcp.pop %v2604
  %v2606 = vmul.f32 1.0, %v2605
  %s2607 = scalar_lea.vmem [#allocation3], 48
  %v2608 = vld [vmem:[%s2607] sm:$0xff]
  %v2609 = vadd.f32 %v2608, %v2525
  %v2610 = vxor.u32 %v2609, 2147483648
  %v2611 = vmul.f32 %v2610, 1.442695
  %v2612 = vpow.pop %v2611
  %v2613 = vadd.f32 %v2612, 1.0
  %v2614 = vrcp.pop %v2613
  %v2615 = vmul.f32 1.0, %v2614
  %s2616 = scalar_lea.vmem [#allocation4], 48
  %v2617 = vld [vmem:[%s2616] sm:$0xff]
  %v2618 = vmul.f32 %v2606, %v2595
  %v2619 = vadd.f32 %v2617, %v2618
  %v2620 = vtanh.pop %v2619
  %v2621 = vsub.f32 1.0, %v2615
  %v2622 = vmul.f32 %v2621, %v2620
  %v2623 = vmul.f32 %v2615, %v2382
  %v2624 = vadd.f32 %v2622, %v2623
  %s2625 = scalar_lea.vmem [#allocation8], 48
  %2626 = vst.msk [vmem:[%s2625] sm:$0xff] %vm91, %v2624
  %v2628 = vsel %vm91, %v2624, 0
  %2630 = vmatprep.subr.mxu0 0.0
  %2631 = vmatpush1.msra.mxu0 %v881
  %2632 = vmatprep.subr.mxu0 0.0
  %2633 = vmatpush1.msra.mxu0 %v882
  %2634 = vmatprep.subr.mxu0 0.0
  %2635 = vmatpush1.msra.mxu0 %v883
  %2636 = vmatprep.subr.mxu0 0.0
  %2637 = vmatpush1.msra.mxu0 %v884
  %2638 = vmatprep.subr.mxu0 0.0
  %2639 = vmatpush1.msra.mxu0 0.0
  %2640 = vmatprep.subr.mxu0 0.0
  %2641 = vmatpush1.msra.mxu0 0.0
  %2642 = vmatprep.subr.mxu0 0.0
  %2643 = vmatpush1.msra.mxu0 0.0
  %2644 = vmatprep.subr.mxu0 0.0
  %2645 = vmatpush1.msra.mxu0 0.0
  %2646 = vmatprep.subr.mxu0 0.0
  %2647 = vmatpush1.msra.mxu0 0.0
  %2648 = vmatprep.subr.mxu0 0.0
  %2649 = vmatpush1.msra.mxu0 0.0
  %2650 = vmatprep.subr.mxu0 0.0
  %2651 = vmatpush1.msra.mxu0 0.0
  %2652 = vmatprep.subr.mxu0 0.0
  %2653 = vmatpush1.msra.mxu0 0.0
  %2654 = vmatprep.subr.mxu0 0.0
  %2655 = vmatpush1.msra.mxu0 0.0
  %2656 = vmatprep.subr.mxu0 0.0
  %2657 = vmatpush1.msra.mxu0 0.0
  %2658 = vmatprep.subr.mxu0 0.0
  %2659 = vmatpush1.msra.mxu0 0.0
  %2660 = vmatprep.subr.mxu0 0.0
  %2661 = vmatpush1.msra.mxu0 0.0
  %2662 = vmatprep.subr.mxu0 0.0
  %2663 = vmatpush1.msra.mxu0 0.0
  %2664 = vmatprep.subr.mxu0 0.0
  %2665 = vmatpush1.msra.mxu0 0.0
  %2666 = vmatprep.subr.mxu0 0.0
  %2667 = vmatpush1.msra.mxu0 0.0
  %2668 = vmatprep.subr.mxu0 0.0
  %2669 = vmatpush1.msra.mxu0 0.0
  %2670 = vmatprep.subr.mxu0 0.0
  %2671 = vmatpush1.msra.mxu0 0.0
  %2672 = vmatprep.subr.mxu0 0.0
  %2673 = vmatpush1.msra.mxu0 0.0
  %2674 = vmatprep.subr.mxu0 0.0
  %2675 = vmatpush1.msra.mxu0 0.0
  %2676 = vmatprep.subr.mxu0 0.0
  %2677 = vmatpush1.msra.mxu0 0.0
  %2678 = vmatprep.subr.mxu0 0.0
  %2679 = vmatpush1.msra.mxu0 0.0
  %2680 = vmatprep.subr.mxu0 0.0
  %2681 = vmatpush1.msra.mxu0 0.0
  %2682 = vmatprep.subr.mxu0 0.0
  %2683 = vmatpush1.msra.mxu0 0.0
  %2684 = vmatprep.subr.mxu0 0.0
  %2685 = vmatpush1.msra.mxu0 0.0
  %2686 = vmatprep.subr.mxu0 0.0
  %2687 = vmatpush1.msra.mxu0 0.0
  %2688 = vmatprep.subr.mxu0 0.0
  %2689 = vmatpush1.msra.mxu0 0.0
  %2690 = vmatprep.subr.mxu0 0.0
  %2691 = vmatpush1.msra.mxu0 0.0
  %2692 = vmatprep.subr.mxu0 0.0
  %2693 = vmatpush1.msra.mxu0 0.0
  %2694 = vmatprep.mubr.f32.mxu0 0.0
  %2695 = vmatmul.mubr.f32.gmra.mrb[0].mxu0 %v2628
  %v2696 = vpop.f32.mrb[0].mxu0
  %v2697 = vadd.f32 %v923, %v2696
  %v2698 = vpop.f32.mrb[0].mxu0
  %2699 = vdwg.mxu0
  %2700 = vmatprep.subr.mxu0 0.0
  %2701 = vmatpush1.msra.mxu0 %v886
  %2702 = vmatprep.subr.mxu0 0.0
  %2703 = vmatpush1.msra.mxu0 %v887
  %2704 = vmatprep.subr.mxu0 0.0
  %2705 = vmatpush1.msra.mxu0 %v888
  %2706 = vmatprep.subr.mxu0 0.0
  %2707 = vmatpush1.msra.mxu0 %v889
  %2708 = vmatprep.subr.mxu0 0.0
  %2709 = vmatpush1.msra.mxu0 0.0
  %2710 = vmatprep.subr.mxu0 0.0
  %2711 = vmatpush1.msra.mxu0 0.0
  %2712 = vmatprep.subr.mxu0 0.0
  %2713 = vmatpush1.msra.mxu0 0.0
  %2714 = vmatprep.subr.mxu0 0.0
  %2715 = vmatpush1.msra.mxu0 0.0
  %2716 = vmatprep.subr.mxu0 0.0
  %2717 = vmatpush1.msra.mxu0 0.0
  %2718 = vmatprep.subr.mxu0 0.0
  %2719 = vmatpush1.msra.mxu0 0.0
  %2720 = vmatprep.subr.mxu0 0.0
  %2721 = vmatpush1.msra.mxu0 0.0
  %2722 = vmatprep.subr.mxu0 0.0
  %2723 = vmatpush1.msra.mxu0 0.0
  %2724 = vmatprep.subr.mxu0 0.0
  %2725 = vmatpush1.msra.mxu0 0.0
  %2726 = vmatprep.subr.mxu0 0.0
  %2727 = vmatpush1.msra.mxu0 0.0
  %2728 = vmatprep.subr.mxu0 0.0
  %2729 = vmatpush1.msra.mxu0 0.0
  %2730 = vmatprep.subr.mxu0 0.0
  %2731 = vmatpush1.msra.mxu0 0.0
  %2732 = vmatprep.subr.mxu0 0.0
  %2733 = vmatpush1.msra.mxu0 0.0
  %2734 = vmatprep.subr.mxu0 0.0
  %2735 = vmatpush1.msra.mxu0 0.0
  %2736 = vmatprep.subr.mxu0 0.0
  %2737 = vmatpush1.msra.mxu0 0.0
  %2738 = vmatprep.subr.mxu0 0.0
  %2739 = vmatpush1.msra.mxu0 0.0
  %2740 = vmatprep.subr.mxu0 0.0
  %2741 = vmatpush1.msra.mxu0 0.0
  %2742 = vmatprep.subr.mxu0 0.0
  %2743 = vmatpush1.msra.mxu0 0.0
  %2744 = vmatprep.subr.mxu0 0.0
  %2745 = vmatpush1.msra.mxu0 0.0
  %2746 = vmatprep.subr.mxu0 0.0
  %2747 = vmatpush1.msra.mxu0 0.0
  %2748 = vmatprep.subr.mxu0 0.0
  %2749 = vmatpush1.msra.mxu0 0.0
  %2750 = vmatprep.subr.mxu0 0.0
  %2751 = vmatpush1.msra.mxu0 0.0
  %2752 = vmatprep.subr.mxu0 0.0
  %2753 = vmatpush1.msra.mxu0 0.0
  %2754 = vmatprep.subr.mxu0 0.0
  %2755 = vmatpush1.msra.mxu0 0.0
  %2756 = vmatprep.subr.mxu0 0.0
  %2757 = vmatpush1.msra.mxu0 0.0
  %2758 = vmatprep.subr.mxu0 0.0
  %2759 = vmatpush1.msra.mxu0 0.0
  %2760 = vmatprep.subr.mxu0 0.0
  %2761 = vmatpush1.msra.mxu0 0.0
  %2762 = vmatprep.subr.mxu0 0.0
  %2763 = vmatpush1.msra.mxu0 0.0
  %2764 = vmatprep.mubr.f32.mxu0 0.0
  %2765 = vmatmul.mubr.f32.gmra.mrb[0].mxu0 %v2628
  %v2766 = vpop.f32.mrb[0].mxu0
  %v2767 = vadd.f32 %v1002, %v2766
  %v2768 = vpop.f32.mrb[0].mxu0
  %2769 = vdwg.mxu0
  %2770 = vmatprep.subr.mxu0 0.0
  %2771 = vmatpush1.msra.mxu0 %v891
  %2772 = vmatprep.subr.mxu0 0.0
  %2773 = vmatpush1.msra.mxu0 %v892
  %2774 = vmatprep.subr.mxu0 0.0
  %2775 = vmatpush1.msra.mxu0 %v893
  %2776 = vmatprep.subr.mxu0 0.0
  %2777 = vmatpush1.msra.mxu0 %v894
  %2778 = vmatprep.subr.mxu0 0.0
  %2779 = vmatpush1.msra.mxu0 0.0
  %2780 = vmatprep.subr.mxu0 0.0
  %2781 = vmatpush1.msra.mxu0 0.0
  %2782 = vmatprep.subr.mxu0 0.0
  %2783 = vmatpush1.msra.mxu0 0.0
  %2784 = vmatprep.subr.mxu0 0.0
  %2785 = vmatpush1.msra.mxu0 0.0
  %2786 = vmatprep.subr.mxu0 0.0
  %2787 = vmatpush1.msra.mxu0 0.0
  %2788 = vmatprep.subr.mxu0 0.0
  %2789 = vmatpush1.msra.mxu0 0.0
  %2790 = vmatprep.subr.mxu0 0.0
  %2791 = vmatpush1.msra.mxu0 0.0
  %2792 = vmatprep.subr.mxu0 0.0
  %2793 = vmatpush1.msra.mxu0 0.0
  %2794 = vmatprep.subr.mxu0 0.0
  %2795 = vmatpush1.msra.mxu0 0.0
  %2796 = vmatprep.subr.mxu0 0.0
  %2797 = vmatpush1.msra.mxu0 0.0
  %2798 = vmatprep.subr.mxu0 0.0
  %2799 = vmatpush1.msra.mxu0 0.0
  %2800 = vmatprep.subr.mxu0 0.0
  %2801 = vmatpush1.msra.mxu0 0.0
  %2802 = vmatprep.subr.mxu0 0.0
  %2803 = vmatpush1.msra.mxu0 0.0
  %2804 = vmatprep.subr.mxu0 0.0
  %2805 = vmatpush1.msra.mxu0 0.0
  %2806 = vmatprep.subr.mxu0 0.0
  %2807 = vmatpush1.msra.mxu0 0.0
  %2808 = vmatprep.subr.mxu0 0.0
  %2809 = vmatpush1.msra.mxu0 0.0
  %2810 = vmatprep.subr.mxu0 0.0
  %2811 = vmatpush1.msra.mxu0 0.0
  %2812 = vmatprep.subr.mxu0 0.0
  %2813 = vmatpush1.msra.mxu0 0.0
  %2814 = vmatprep.subr.mxu0 0.0
  %2815 = vmatpush1.msra.mxu0 0.0
  %2816 = vmatprep.subr.mxu0 0.0
  %2817 = vmatpush1.msra.mxu0 0.0
  %2818 = vmatprep.subr.mxu0 0.0
  %2819 = vmatpush1.msra.mxu0 0.0
  %2820 = vmatprep.subr.mxu0 0.0
  %2821 = vmatpush1.msra.mxu0 0.0
  %2822 = vmatprep.subr.mxu0 0.0
  %2823 = vmatpush1.msra.mxu0 0.0
  %2824 = vmatprep.subr.mxu0 0.0
  %2825 = vmatpush1.msra.mxu0 0.0
  %2826 = vmatprep.subr.mxu0 0.0
  %2827 = vmatpush1.msra.mxu0 0.0
  %2828 = vmatprep.subr.mxu0 0.0
  %2829 = vmatpush1.msra.mxu0 0.0
  %2830 = vmatprep.subr.mxu0 0.0
  %2831 = vmatpush1.msra.mxu0 0.0
  %2832 = vmatprep.subr.mxu0 0.0
  %2833 = vmatpush1.msra.mxu0 0.0
  %2834 = vmatprep.mubr.f32.mxu0 0.0
  %2835 = vmatmul.mubr.f32.gmra.mrb[0].mxu0 %v2628
  %v2836 = vpop.f32.mrb[0].mxu0
  %v2837 = vadd.f32 %v1078, %v2836
  %v2838 = vpop.f32.mrb[0].mxu0
  %2839 = vdwg.mxu0
  %s2840 = scalar_lea.vmem [#allocation2], 56
  %v2841 = vld [vmem:[%s2840] sm:$0xff]
  %v2842 = vadd.f32 %v2841, %v2697
  %v2843 = vxor.u32 %v2842, 2147483648
  %v2844 = vmul.f32 %v2843, 1.442695
  %v2845 = vpow.pop %v2844
  %v2846 = vadd.f32 %v2845, 1.0
  %v2847 = vrcp.pop %v2846
  %v2848 = vmul.f32 1.0, %v2847
  %s2849 = scalar_lea.vmem [#allocation3], 56
  %v2850 = vld [vmem:[%s2849] sm:$0xff]
  %v2851 = vadd.f32 %v2850, %v2767
  %v2852 = vxor.u32 %v2851, 2147483648
  %v2853 = vmul.f32 %v2852, 1.442695
  %v2854 = vpow.pop %v2853
  %v2855 = vadd.f32 %v2854, 1.0
  %v2856 = vrcp.pop %v2855
  %v2857 = vmul.f32 1.0, %v2856
  %s2858 = scalar_lea.vmem [#allocation4], 56
  %v2859 = vld [vmem:[%s2858] sm:$0xff]
  %v2860 = vmul.f32 %v2848, %v2837
  %v2861 = vadd.f32 %v2859, %v2860
  %v2862 = vtanh.pop %v2861
  %v2863 = vsub.f32 1.0, %v2857
  %v2864 = vmul.f32 %v2863, %v2862
  %v2865 = vmul.f32 %v2857, %v2624
  %v2866 = vadd.f32 %v2864, %v2865
  %s2867 = scalar_lea.vmem [#allocation8], 56
  %2868 = vst.msk [vmem:[%s2867] sm:$0xff] %vm91, %v2866
  %v2869 = vld [vmem:[%s12] sm:$0xff]
  %v2870 = vld [vmem:[%s12 + $0x8] sm:$0xff]
  %v2871 = vld [vmem:[%s12 + $0x10] sm:$0xff]
  %v2872 = vld [vmem:[%s12 + $0x18] sm:$0xff]
  %v2873 = vld [vmem:[%s13] sm:$0x1]
  %v2875 = vlaneseq
  %v2876 = vshrl.u32 %v2875, 7
  %v2877 = vsub.s32 0, %v2876
  %v2878 = vrot.slane %v2873, %v2877
  %v2881 = vsel %vm91, %v2866, 0
  %2883 = vmatprep.subr.mxu0 0.0
  %2884 = vmatpush1.msra.mxu0 %v2869
  %2885 = vmatprep.subr.mxu0 0.0
  %2886 = vmatpush1.msra.mxu0 %v2870
  %2887 = vmatprep.subr.mxu0 0.0
  %2888 = vmatpush1.msra.mxu0 %v2871
  %2889 = vmatprep.subr.mxu0 0.0
  %2890 = vmatpush1.msra.mxu0 %v2872
  %2891 = vmatprep.subr.mxu0 0.0
  %2892 = vmatpush1.msra.mxu0 0.0
  %2893 = vmatprep.subr.mxu0 0.0
  %2894 = vmatpush1.msra.mxu0 0.0
  %2895 = vmatprep.subr.mxu0 0.0
  %2896 = vmatpush1.msra.mxu0 0.0
  %2897 = vmatprep.subr.mxu0 0.0
  %2898 = vmatpush1.msra.mxu0 0.0
  %2899 = vmatprep.subr.mxu0 0.0
  %2900 = vmatpush1.msra.mxu0 0.0
  %2901 = vmatprep.subr.mxu0 0.0
  %2902 = vmatpush1.msra.mxu0 0.0
  %2903 = vmatprep.subr.mxu0 0.0
  %2904 = vmatpush1.msra.mxu0 0.0
  %2905 = vmatprep.subr.mxu0 0.0
  %2906 = vmatpush1.msra.mxu0 0.0
  %2907 = vmatprep.subr.mxu0 0.0
  %2908 = vmatpush1.msra.mxu0 0.0
  %2909 = vmatprep.subr.mxu0 0.0
  %2910 = vmatpush1.msra.mxu0 0.0
  %2911 = vmatprep.subr.mxu0 0.0
  %2912 = vmatpush1.msra.mxu0 0.0
  %2913 = vmatprep.subr.mxu0 0.0
  %2914 = vmatpush1.msra.mxu0 0.0
  %2915 = vmatprep.subr.mxu0 0.0
  %2916 = vmatpush1.msra.mxu0 0.0
  %2917 = vmatprep.subr.mxu0 0.0
  %2918 = vmatpush1.msra.mxu0 0.0
  %2919 = vmatprep.subr.mxu0 0.0
  %2920 = vmatpush1.msra.mxu0 0.0
  %2921 = vmatprep.subr.mxu0 0.0
  %2922 = vmatpush1.msra.mxu0 0.0
  %2923 = vmatprep.subr.mxu0 0.0
  %2924 = vmatpush1.msra.mxu0 0.0
  %2925 = vmatprep.subr.mxu0 0.0
  %2926 = vmatpush1.msra.mxu0 0.0
  %2927 = vmatprep.subr.mxu0 0.0
  %2928 = vmatpush1.msra.mxu0 0.0
  %2929 = vmatprep.subr.mxu0 0.0
  %2930 = vmatpush1.msra.mxu0 0.0
  %2931 = vmatprep.subr.mxu0 0.0
  %2932 = vmatpush1.msra.mxu0 0.0
  %2933 = vmatprep.subr.mxu0 0.0
  %2934 = vmatpush1.msra.mxu0 0.0
  %2935 = vmatprep.subr.mxu0 0.0
  %2936 = vmatpush1.msra.mxu0 0.0
  %2937 = vmatprep.subr.mxu0 0.0
  %2938 = vmatpush1.msra.mxu0 0.0
  %2939 = vmatprep.subr.mxu0 0.0
  %2940 = vmatpush1.msra.mxu0 0.0
  %2941 = vmatprep.subr.mxu0 0.0
  %2942 = vmatpush1.msra.mxu0 0.0
  %2943 = vmatprep.subr.mxu0 0.0
  %2944 = vmatpush1.msra.mxu0 0.0
  %2945 = vmatprep.subr.mxu0 0.0
  %2946 = vmatpush1.msra.mxu0 0.0
  %2947 = vmatprep.mubr.f32.mxu0 0.0
  %2948 = vmatmul.mubr.f32.gmra.mrb[0].mxu0 %v2881
  %v2949 = vpop.f32.mrb[0].mxu0
  %v2950 = vadd.f32 %v2878, %v2949
  %v2951 = vpop.f32.mrb[0].mxu0
  %2952 = vdwg.mxu0
  %v2953 = vtanh.pop %v2950
  %v2955 = vlaneseq
  %v2956 = vshrl.u32 %v2955, 7
  %v2957 = vsub.s32 0, %v2956
  %v2958 = vrot.slane %v914, %v2957
  %v2961 = vsel %vm91, %v2953, 0
  %2963 = vmatprep.subr.mxu0 0.0
  %2964 = vmatpush1.msra.mxu0 %v900
  %2965 = vmatprep.subr.mxu0 0.0
  %2966 = vmatpush1.msra.mxu0 %v901
  %2967 = vmatprep.subr.mxu0 0.0
  %2968 = vmatpush1.msra.mxu0 %v902
  %2969 = vmatprep.subr.mxu0 0.0
  %2970 = vmatpush1.msra.mxu0 %v903
  %2971 = vmatprep.subr.mxu0 0.0
  %2972 = vmatpush1.msra.mxu0 0.0
  %2973 = vmatprep.subr.mxu0 0.0
  %2974 = vmatpush1.msra.mxu0 0.0
  %2975 = vmatprep.subr.mxu0 0.0
  %2976 = vmatpush1.msra.mxu0 0.0
  %2977 = vmatprep.subr.mxu0 0.0
  %2978 = vmatpush1.msra.mxu0 0.0
  %2979 = vmatprep.subr.mxu0 0.0
  %2980 = vmatpush1.msra.mxu0 0.0
  %2981 = vmatprep.subr.mxu0 0.0
  %2982 = vmatpush1.msra.mxu0 0.0
  %2983 = vmatprep.subr.mxu0 0.0
  %2984 = vmatpush1.msra.mxu0 0.0
  %2985 = vmatprep.subr.mxu0 0.0
  %2986 = vmatpush1.msra.mxu0 0.0
  %2987 = vmatprep.subr.mxu0 0.0
  %2988 = vmatpush1.msra.mxu0 0.0
  %2989 = vmatprep.subr.mxu0 0.0
  %2990 = vmatpush1.msra.mxu0 0.0
  %2991 = vmatprep.subr.mxu0 0.0
  %2992 = vmatpush1.msra.mxu0 0.0
  %2993 = vmatprep.subr.mxu0 0.0
  %2994 = vmatpush1.msra.mxu0 0.0
  %2995 = vmatprep.subr.mxu0 0.0
  %2996 = vmatpush1.msra.mxu0 0.0
  %2997 = vmatprep.subr.mxu0 0.0
  %2998 = vmatpush1.msra.mxu0 0.0
  %2999 = vmatprep.subr.mxu0 0.0
  %3000 = vmatpush1.msra.mxu0 0.0
  %3001 = vmatprep.subr.mxu0 0.0
  %3002 = vmatpush1.msra.mxu0 0.0
  %3003 = vmatprep.subr.mxu0 0.0
  %3004 = vmatpush1.msra.mxu0 0.0
  %3005 = vmatprep.subr.mxu0 0.0
  %3006 = vmatpush1.msra.mxu0 0.0
  %3007 = vmatprep.subr.mxu0 0.0
  %3008 = vmatpush1.msra.mxu0 0.0
  %3009 = vmatprep.subr.mxu0 0.0
  %3010 = vmatpush1.msra.mxu0 0.0
  %3011 = vmatprep.subr.mxu0 0.0
  %3012 = vmatpush1.msra.mxu0 0.0
  %3013 = vmatprep.subr.mxu0 0.0
  %3014 = vmatpush1.msra.mxu0 0.0
  %3015 = vmatprep.subr.mxu0 0.0
  %3016 = vmatpush1.msra.mxu0 0.0
  %3017 = vmatprep.subr.mxu0 0.0
  %3018 = vmatpush1.msra.mxu0 0.0
  %3019 = vmatprep.subr.mxu0 0.0
  %3020 = vmatpush1.msra.mxu0 0.0
  %3021 = vmatprep.subr.mxu0 0.0
  %3022 = vmatpush1.msra.mxu0 0.0
  %3023 = vmatprep.subr.mxu0 0.0
  %3024 = vmatpush1.msra.mxu0 0.0
  %3025 = vmatprep.subr.mxu0 0.0
  %3026 = vmatpush1.msra.mxu0 0.0
  %3027 = vmatprep.mubr.f32.mxu0 0.0
  %3028 = vmatmul.mubr.f32.gmra.mrb[0].mxu0 %v2961
  %v3029 = vpop.f32.mrb[0].mxu0
  %v3030 = vadd.f32 %v2958, %v3029
  %v3031 = vpop.f32.mrb[0].mxu0
  %3032 = vdwg.mxu0
  %v3034 = vlaneseq
  %v3035 = vshrl.u32 %v3034, 7
  %v3036 = vsub.s32 0, %v3035
  %v3037 = vrot.slane %v916, %v3036
  %3039 = vmatprep.subr.mxu0 0.0
  %3040 = vmatpush1.msra.mxu0 %v905
  %3041 = vmatprep.subr.mxu0 0.0
  %3042 = vmatpush1.msra.mxu0 %v906
  %3043 = vmatprep.subr.mxu0 0.0
  %3044 = vmatpush1.msra.mxu0 %v907
  %3045 = vmatprep.subr.mxu0 0.0
  %3046 = vmatpush1.msra.mxu0 %v908
  %3047 = vmatprep.subr.mxu0 0.0
  %3048 = vmatpush1.msra.mxu0 0.0
  %3049 = vmatprep.subr.mxu0 0.0
  %3050 = vmatpush1.msra.mxu0 0.0
  %3051 = vmatprep.subr.mxu0 0.0
  %3052 = vmatpush1.msra.mxu0 0.0
  %3053 = vmatprep.subr.mxu0 0.0
  %3054 = vmatpush1.msra.mxu0 0.0
  %3055 = vmatprep.subr.mxu0 0.0
  %3056 = vmatpush1.msra.mxu0 0.0
  %3057 = vmatprep.subr.mxu0 0.0
  %3058 = vmatpush1.msra.mxu0 0.0
  %3059 = vmatprep.subr.mxu0 0.0
  %3060 = vmatpush1.msra.mxu0 0.0
  %3061 = vmatprep.subr.mxu0 0.0
  %3062 = vmatpush1.msra.mxu0 0.0
  %3063 = vmatprep.subr.mxu0 0.0
  %3064 = vmatpush1.msra.mxu0 0.0
  %3065 = vmatprep.subr.mxu0 0.0
  %3066 = vmatpush1.msra.mxu0 0.0
  %3067 = vmatprep.subr.mxu0 0.0
  %3068 = vmatpush1.msra.mxu0 0.0
  %3069 = vmatprep.subr.mxu0 0.0
  %3070 = vmatpush1.msra.mxu0 0.0
  %3071 = vmatprep.subr.mxu0 0.0
  %3072 = vmatpush1.msra.mxu0 0.0
  %3073 = vmatprep.subr.mxu0 0.0
  %3074 = vmatpush1.msra.mxu0 0.0
  %3075 = vmatprep.subr.mxu0 0.0
  %3076 = vmatpush1.msra.mxu0 0.0
  %3077 = vmatprep.subr.mxu0 0.0
  %3078 = vmatpush1.msra.mxu0 0.0
  %3079 = vmatprep.subr.mxu0 0.0
  %3080 = vmatpush1.msra.mxu0 0.0
  %3081 = vmatprep.subr.mxu0 0.0
  %3082 = vmatpush1.msra.mxu0 0.0
  %3083 = vmatprep.subr.mxu0 0.0
  %3084 = vmatpush1.msra.mxu0 0.0
  %3085 = vmatprep.subr.mxu0 0.0
  %3086 = vmatpush1.msra.mxu0 0.0
  %3087 = vmatprep.subr.mxu0 0.0
  %3088 = vmatpush1.msra.mxu0 0.0
  %3089 = vmatprep.subr.mxu0 0.0
  %3090 = vmatpush1.msra.mxu0 0.0
  %3091 = vmatprep.subr.mxu0 0.0
  %3092 = vmatpush1.msra.mxu0 0.0
  %3093 = vmatprep.subr.mxu0 0.0
  %3094 = vmatpush1.msra.mxu0 0.0
  %3095 = vmatprep.subr.mxu0 0.0
  %3096 = vmatpush1.msra.mxu0 0.0
  %3097 = vmatprep.subr.mxu0 0.0
  %3098 = vmatpush1.msra.mxu0 0.0
  %3099 = vmatprep.subr.mxu0 0.0
  %3100 = vmatpush1.msra.mxu0 0.0
  %3101 = vmatprep.subr.mxu0 0.0
  %3102 = vmatpush1.msra.mxu0 0.0
  %3103 = vmatprep.mubr.f32.mxu0 0.0
  %3104 = vmatmul.mubr.f32.gmra.mrb[0].mxu0 %v2961
  %v3105 = vpop.f32.mrb[0].mxu0
  %v3106 = vadd.f32 %v3037, %v3105
  %v3107 = vpop.f32.mrb[0].mxu0
  %3108 = vdwg.mxu0
  %v3110 = vlaneseq
  %v3111 = vshrl.u32 %v3110, 7
  %v3112 = vsub.s32 0, %v3111
  %v3113 = vrot.slane %v918, %v3112
  %3115 = vmatprep.subr.mxu0 0.0
  %3116 = vmatpush1.msra.mxu0 %v910
  %3117 = vmatprep.subr.mxu0 0.0
  %3118 = vmatpush1.msra.mxu0 %v911
  %3119 = vmatprep.subr.mxu0 0.0
  %3120 = vmatpush1.msra.mxu0 %v912
  %3121 = vmatprep.subr.mxu0 0.0
  %3122 = vmatpush1.msra.mxu0 %v913
  %3123 = vmatprep.subr.mxu0 0.0
  %3124 = vmatpush1.msra.mxu0 0.0
  %3125 = vmatprep.subr.mxu0 0.0
  %3126 = vmatpush1.msra.mxu0 0.0
  %3127 = vmatprep.subr.mxu0 0.0
  %3128 = vmatpush1.msra.mxu0 0.0
  %3129 = vmatprep.subr.mxu0 0.0
  %3130 = vmatpush1.msra.mxu0 0.0
  %3131 = vmatprep.subr.mxu0 0.0
  %3132 = vmatpush1.msra.mxu0 0.0
  %3133 = vmatprep.subr.mxu0 0.0
  %3134 = vmatpush1.msra.mxu0 0.0
  %3135 = vmatprep.subr.mxu0 0.0
  %3136 = vmatpush1.msra.mxu0 0.0
  %3137 = vmatprep.subr.mxu0 0.0
  %3138 = vmatpush1.msra.mxu0 0.0
  %3139 = vmatprep.subr.mxu0 0.0
  %3140 = vmatpush1.msra.mxu0 0.0
  %3141 = vmatprep.subr.mxu0 0.0
  %3142 = vmatpush1.msra.mxu0 0.0
  %3143 = vmatprep.subr.mxu0 0.0
  %3144 = vmatpush1.msra.mxu0 0.0
  %3145 = vmatprep.subr.mxu0 0.0
  %3146 = vmatpush1.msra.mxu0 0.0
  %3147 = vmatprep.subr.mxu0 0.0
  %3148 = vmatpush1.msra.mxu0 0.0
  %3149 = vmatprep.subr.mxu0 0.0
  %3150 = vmatpush1.msra.mxu0 0.0
  %3151 = vmatprep.subr.mxu0 0.0
  %3152 = vmatpush1.msra.mxu0 0.0
  %3153 = vmatprep.subr.mxu0 0.0
  %3154 = vmatpush1.msra.mxu0 0.0
  %3155 = vmatprep.subr.mxu0 0.0
  %3156 = vmatpush1.msra.mxu0 0.0
  %3157 = vmatprep.subr.mxu0 0.0
  %3158 = vmatpush1.msra.mxu0 0.0
  %3159 = vmatprep.subr.mxu0 0.0
  %3160 = vmatpush1.msra.mxu0 0.0
  %3161 = vmatprep.subr.mxu0 0.0
  %3162 = vmatpush1.msra.mxu0 0.0
  %3163 = vmatprep.subr.mxu0 0.0
  %3164 = vmatpush1.msra.mxu0 0.0
  %3165 = vmatprep.subr.mxu0 0.0
  %3166 = vmatpush1.msra.mxu0 0.0
  %3167 = vmatprep.subr.mxu0 0.0
  %3168 = vmatpush1.msra.mxu0 0.0
  %3169 = vmatprep.subr.mxu0 0.0
  %3170 = vmatpush1.msra.mxu0 0.0
  %3171 = vmatprep.subr.mxu0 0.0
  %3172 = vmatpush1.msra.mxu0 0.0
  %3173 = vmatprep.subr.mxu0 0.0
  %3174 = vmatpush1.msra.mxu0 0.0
  %3175 = vmatprep.subr.mxu0 0.0
  %3176 = vmatpush1.msra.mxu0 0.0
  %3177 = vmatprep.subr.mxu0 0.0
  %3178 = vmatpush1.msra.mxu0 0.0
  %3179 = vmatprep.mubr.f32.mxu0 0.0
  %3180 = vmatmul.mubr.f32.gmra.mrb[0].mxu0 %v2961
  %v3181 = vpop.f32.mrb[0].mxu0
  %v3182 = vadd.f32 %v3113, %v3181
  %v3183 = vpop.f32.mrb[0].mxu0
  %3184 = vdwg.mxu0
  %v3185 = vld [vmem:[#allocation5] sm:$0xff]
  %v3186 = vadd.f32 %v3185, %v3030
  %v3187 = vxor.u32 %v3186, 2147483648
  %v3188 = vmul.f32 %v3187, 1.442695
  %v3189 = vpow.pop %v3188
  %v3190 = vadd.f32 %v3189, 1.0
  %v3191 = vrcp.pop %v3190
  %v3192 = vmul.f32 1.0, %v3191
  %v3193 = vld [vmem:[#allocation6] sm:$0xff]
  %v3194 = vadd.f32 %v3193, %v3106
  %v3195 = vxor.u32 %v3194, 2147483648
  %v3196 = vmul.f32 %v3195, 1.442695
  %v3197 = vpow.pop %v3196
  %v3198 = vadd.f32 %v3197, 1.0
  %v3199 = vrcp.pop %v3198
  %v3200 = vmul.f32 1.0, %v3199
  %v3201 = vld [vmem:[#allocation7] sm:$0xff]
  %v3202 = vmul.f32 %v3192, %v3182
  %v3203 = vadd.f32 %v3201, %v3202
  %v3204 = vtanh.pop %v3203
  %v3205 = vsub.f32 1.0, %v3200
  %v3206 = vmul.f32 %v3205, %v3204
  %v3207 = vmul.f32 %v3200, %v2953
  %v3208 = vadd.f32 %v3206, %v3207
  %3209 = vst.msk [vmem:[#allocation9] sm:$0xff] %vm91, %v3208
  %v3211 = vsel %vm91, %v3208, 0
  %3213 = vmatprep.subr.mxu0 0.0
  %3214 = vmatpush1.msra.mxu0 %v900
  %3215 = vmatprep.subr.mxu0 0.0
  %3216 = vmatpush1.msra.mxu0 %v901
  %3217 = vmatprep.subr.mxu0 0.0
  %3218 = vmatpush1.msra.mxu0 %v902
  %3219 = vmatprep.subr.mxu0 0.0
  %3220 = vmatpush1.msra.mxu0 %v903
  %3221 = vmatprep.subr.mxu0 0.0
  %3222 = vmatpush1.msra.mxu0 0.0
  %3223 = vmatprep.subr.mxu0 0.0
  %3224 = vmatpush1.msra.mxu0 0.0
  %3225 = vmatprep.subr.mxu0 0.0
  %3226 = vmatpush1.msra.mxu0 0.0
  %3227 = vmatprep.subr.mxu0 0.0
  %3228 = vmatpush1.msra.mxu0 0.0
  %3229 = vmatprep.subr.mxu0 0.0
  %3230 = vmatpush1.msra.mxu0 0.0
  %3231 = vmatprep.subr.mxu0 0.0
  %3232 = vmatpush1.msra.mxu0 0.0
  %3233 = vmatprep.subr.mxu0 0.0
  %3234 = vmatpush1.msra.mxu0 0.0
  %3235 = vmatprep.subr.mxu0 0.0
  %3236 = vmatpush1.msra.mxu0 0.0
  %3237 = vmatprep.subr.mxu0 0.0
  %3238 = vmatpush1.msra.mxu0 0.0
  %3239 = vmatprep.subr.mxu0 0.0
  %3240 = vmatpush1.msra.mxu0 0.0
  %3241 = vmatprep.subr.mxu0 0.0
  %3242 = vmatpush1.msra.mxu0 0.0
  %3243 = vmatprep.subr.mxu0 0.0
  %3244 = vmatpush1.msra.mxu0 0.0
  %3245 = vmatprep.subr.mxu0 0.0
  %3246 = vmatpush1.msra.mxu0 0.0
  %3247 = vmatprep.subr.mxu0 0.0
  %3248 = vmatpush1.msra.mxu0 0.0
  %3249 = vmatprep.subr.mxu0 0.0
  %3250 = vmatpush1.msra.mxu0 0.0
  %3251 = vmatprep.subr.mxu0 0.0
  %3252 = vmatpush1.msra.mxu0 0.0
  %3253 = vmatprep.subr.mxu0 0.0
  %3254 = vmatpush1.msra.mxu0 0.0
  %3255 = vmatprep.subr.mxu0 0.0
  %3256 = vmatpush1.msra.mxu0 0.0
  %3257 = vmatprep.subr.mxu0 0.0
  %3258 = vmatpush1.msra.mxu0 0.0
  %3259 = vmatprep.subr.mxu0 0.0
  %3260 = vmatpush1.msra.mxu0 0.0
  %3261 = vmatprep.subr.mxu0 0.0
  %3262 = vmatpush1.msra.mxu0 0.0
  %3263 = vmatprep.subr.mxu0 0.0
  %3264 = vmatpush1.msra.mxu0 0.0
  %3265 = vmatprep.subr.mxu0 0.0
  %3266 = vmatpush1.msra.mxu0 0.0
  %3267 = vmatprep.subr.mxu0 0.0
  %3268 = vmatpush1.msra.mxu0 0.0
  %3269 = vmatprep.subr.mxu0 0.0
  %3270 = vmatpush1.msra.mxu0 0.0
  %3271 = vmatprep.subr.mxu0 0.0
  %3272 = vmatpush1.msra.mxu0 0.0
  %3273 = vmatprep.subr.mxu0 0.0
  %3274 = vmatpush1.msra.mxu0 0.0
  %3275 = vmatprep.subr.mxu0 0.0
  %3276 = vmatpush1.msra.mxu0 0.0
  %3277 = vmatprep.mubr.f32.mxu0 0.0
  %3278 = vmatmul.mubr.f32.gmra.mrb[0].mxu0 %v3211
  %v3279 = vpop.f32.mrb[0].mxu0
  %v3280 = vadd.f32 %v2958, %v3279
  %v3281 = vpop.f32.mrb[0].mxu0
  %3282 = vdwg.mxu0
  %3283 = vmatprep.subr.mxu0 0.0
  %3284 = vmatpush1.msra.mxu0 %v905
  %3285 = vmatprep.subr.mxu0 0.0
  %3286 = vmatpush1.msra.mxu0 %v906
  %3287 = vmatprep.subr.mxu0 0.0
  %3288 = vmatpush1.msra.mxu0 %v907
  %3289 = vmatprep.subr.mxu0 0.0
  %3290 = vmatpush1.msra.mxu0 %v908
  %3291 = vmatprep.subr.mxu0 0.0
  %3292 = vmatpush1.msra.mxu0 0.0
  %3293 = vmatprep.subr.mxu0 0.0
  %3294 = vmatpush1.msra.mxu0 0.0
  %3295 = vmatprep.subr.mxu0 0.0
  %3296 = vmatpush1.msra.mxu0 0.0
  %3297 = vmatprep.subr.mxu0 0.0
  %3298 = vmatpush1.msra.mxu0 0.0
  %3299 = vmatprep.subr.mxu0 0.0
  %3300 = vmatpush1.msra.mxu0 0.0
  %3301 = vmatprep.subr.mxu0 0.0
  %3302 = vmatpush1.msra.mxu0 0.0
  %3303 = vmatprep.subr.mxu0 0.0
  %3304 = vmatpush1.msra.mxu0 0.0
  %3305 = vmatprep.subr.mxu0 0.0
  %3306 = vmatpush1.msra.mxu0 0.0
  %3307 = vmatprep.subr.mxu0 0.0
  %3308 = vmatpush1.msra.mxu0 0.0
  %3309 = vmatprep.subr.mxu0 0.0
  %3310 = vmatpush1.msra.mxu0 0.0
  %3311 = vmatprep.subr.mxu0 0.0
  %3312 = vmatpush1.msra.mxu0 0.0
  %3313 = vmatprep.subr.mxu0 0.0
  %3314 = vmatpush1.msra.mxu0 0.0
  %3315 = vmatprep.subr.mxu0 0.0
  %3316 = vmatpush1.msra.mxu0 0.0
  %3317 = vmatprep.subr.mxu0 0.0
  %3318 = vmatpush1.msra.mxu0 0.0
  %3319 = vmatprep.subr.mxu0 0.0
  %3320 = vmatpush1.msra.mxu0 0.0
  %3321 = vmatprep.subr.mxu0 0.0
  %3322 = vmatpush1.msra.mxu0 0.0
  %3323 = vmatprep.subr.mxu0 0.0
  %3324 = vmatpush1.msra.mxu0 0.0
  %3325 = vmatprep.subr.mxu0 0.0
  %3326 = vmatpush1.msra.mxu0 0.0
  %3327 = vmatprep.subr.mxu0 0.0
  %3328 = vmatpush1.msra.mxu0 0.0
  %3329 = vmatprep.subr.mxu0 0.0
  %3330 = vmatpush1.msra.mxu0 0.0
  %3331 = vmatprep.subr.mxu0 0.0
  %3332 = vmatpush1.msra.mxu0 0.0
  %3333 = vmatprep.subr.mxu0 0.0
  %3334 = vmatpush1.msra.mxu0 0.0
  %3335 = vmatprep.subr.mxu0 0.0
  %3336 = vmatpush1.msra.mxu0 0.0
  %3337 = vmatprep.subr.mxu0 0.0
  %3338 = vmatpush1.msra.mxu0 0.0
  %3339 = vmatprep.subr.mxu0 0.0
  %3340 = vmatpush1.msra.mxu0 0.0
  %3341 = vmatprep.subr.mxu0 0.0
  %3342 = vmatpush1.msra.mxu0 0.0
  %3343 = vmatprep.subr.mxu0 0.0
  %3344 = vmatpush1.msra.mxu0 0.0
  %3345 = vmatprep.subr.mxu0 0.0
  %3346 = vmatpush1.msra.mxu0 0.0
  %3347 = vmatprep.mubr.f32.mxu0 0.0
  %3348 = vmatmul.mubr.f32.gmra.mrb[0].mxu0 %v3211
  %v3349 = vpop.f32.mrb[0].mxu0
  %v3350 = vadd.f32 %v3037, %v3349
  %v3351 = vpop.f32.mrb[0].mxu0
  %3352 = vdwg.mxu0
  %3353 = vmatprep.subr.mxu0 0.0
  %3354 = vmatpush1.msra.mxu0 %v910
  %3355 = vmatprep.subr.mxu0 0.0
  %3356 = vmatpush1.msra.mxu0 %v911
  %3357 = vmatprep.subr.mxu0 0.0
  %3358 = vmatpush1.msra.mxu0 %v912
  %3359 = vmatprep.subr.mxu0 0.0
  %3360 = vmatpush1.msra.mxu0 %v913
  %3361 = vmatprep.subr.mxu0 0.0
  %3362 = vmatpush1.msra.mxu0 0.0
  %3363 = vmatprep.subr.mxu0 0.0
  %3364 = vmatpush1.msra.mxu0 0.0
  %3365 = vmatprep.subr.mxu0 0.0
  %3366 = vmatpush1.msra.mxu0 0.0
  %3367 = vmatprep.subr.mxu0 0.0
  %3368 = vmatpush1.msra.mxu0 0.0
  %3369 = vmatprep.subr.mxu0 0.0
  %3370 = vmatpush1.msra.mxu0 0.0
  %3371 = vmatprep.subr.mxu0 0.0
  %3372 = vmatpush1.msra.mxu0 0.0
  %3373 = vmatprep.subr.mxu0 0.0
  %3374 = vmatpush1.msra.mxu0 0.0
  %3375 = vmatprep.subr.mxu0 0.0
  %3376 = vmatpush1.msra.mxu0 0.0
  %3377 = vmatprep.subr.mxu0 0.0
  %3378 = vmatpush1.msra.mxu0 0.0
  %3379 = vmatprep.subr.mxu0 0.0
  %3380 = vmatpush1.msra.mxu0 0.0
  %3381 = vmatprep.subr.mxu0 0.0
  %3382 = vmatpush1.msra.mxu0 0.0
  %3383 = vmatprep.subr.mxu0 0.0
  %3384 = vmatpush1.msra.mxu0 0.0
  %3385 = vmatprep.subr.mxu0 0.0
  %3386 = vmatpush1.msra.mxu0 0.0
  %3387 = vmatprep.subr.mxu0 0.0
  %3388 = vmatpush1.msra.mxu0 0.0
  %3389 = vmatprep.subr.mxu0 0.0
  %3390 = vmatpush1.msra.mxu0 0.0
  %3391 = vmatprep.subr.mxu0 0.0
  %3392 = vmatpush1.msra.mxu0 0.0
  %3393 = vmatprep.subr.mxu0 0.0
  %3394 = vmatpush1.msra.mxu0 0.0
  %3395 = vmatprep.subr.mxu0 0.0
  %3396 = vmatpush1.msra.mxu0 0.0
  %3397 = vmatprep.subr.mxu0 0.0
  %3398 = vmatpush1.msra.mxu0 0.0
  %3399 = vmatprep.subr.mxu0 0.0
  %3400 = vmatpush1.msra.mxu0 0.0
  %3401 = vmatprep.subr.mxu0 0.0
  %3402 = vmatpush1.msra.mxu0 0.0
  %3403 = vmatprep.subr.mxu0 0.0
  %3404 = vmatpush1.msra.mxu0 0.0
  %3405 = vmatprep.subr.mxu0 0.0
  %3406 = vmatpush1.msra.mxu0 0.0
  %3407 = vmatprep.subr.mxu0 0.0
  %3408 = vmatpush1.msra.mxu0 0.0
  %3409 = vmatprep.subr.mxu0 0.0
  %3410 = vmatpush1.msra.mxu0 0.0
  %3411 = vmatprep.subr.mxu0 0.0
  %3412 = vmatpush1.msra.mxu0 0.0
  %3413 = vmatprep.subr.mxu0 0.0
  %3414 = vmatpush1.msra.mxu0 0.0
  %3415 = vmatprep.subr.mxu0 0.0
  %3416 = vmatpush1.msra.mxu0 0.0
  %3417 = vmatprep.mubr.f32.mxu0 0.0
  %3418 = vmatmul.mubr.f32.gmra.mrb[0].mxu0 %v3211
  %v3419 = vpop.f32.mrb[0].mxu0
  %v3420 = vadd.f32 %v3113, %v3419
  %v3421 = vpop.f32.mrb[0].mxu0
  %3422 = vdwg.mxu0
  %s3423 = scalar_lea.vmem [#allocation5], 8
  %v3424 = vld [vmem:[%s3423] sm:$0xff]
  %v3425 = vadd.f32 %v3424, %v3280
  %v3426 = vxor.u32 %v3425, 2147483648
  %v3427 = vmul.f32 %v3426, 1.442695
  %v3428 = vpow.pop %v3427
  %v3429 = vadd.f32 %v3428, 1.0
  %v3430 = vrcp.pop %v3429
  %v3431 = vmul.f32 1.0, %v3430
  %s3432 = scalar_lea.vmem [#allocation6], 8
  %v3433 = vld [vmem:[%s3432] sm:$0xff]
  %v3434 = vadd.f32 %v3433, %v3350
  %v3435 = vxor.u32 %v3434, 2147483648
  %v3436 = vmul.f32 %v3435, 1.442695
  %v3437 = vpow.pop %v3436
  %v3438 = vadd.f32 %v3437, 1.0
  %v3439 = vrcp.pop %v3438
  %v3440 = vmul.f32 1.0, %v3439
  %s3441 = scalar_lea.vmem [#allocation7], 8
  %v3442 = vld [vmem:[%s3441] sm:$0xff]
  %v3443 = vmul.f32 %v3431, %v3420
  %v3444 = vadd.f32 %v3442, %v3443
  %v3445 = vtanh.pop %v3444
  %v3446 = vsub.f32 1.0, %v3440
  %v3447 = vmul.f32 %v3446, %v3445
  %v3448 = vmul.f32 %v3440, %v3208
  %v3449 = vadd.f32 %v3447, %v3448
  %s3450 = scalar_lea.vmem [#allocation9], 8
  %3451 = vst.msk [vmem:[%s3450] sm:$0xff] %vm91, %v3449
  %v3453 = vsel %vm91, %v3449, 0
  %3455 = vmatprep.subr.mxu0 0.0
  %3456 = vmatpush1.msra.mxu0 %v900
  %3457 = vmatprep.subr.mxu0 0.0
  %3458 = vmatpush1.msra.mxu0 %v901
  %3459 = vmatprep.subr.mxu0 0.0
  %3460 = vmatpush1.msra.mxu0 %v902
  %3461 = vmatprep.subr.mxu0 0.0
  %3462 = vmatpush1.msra.mxu0 %v903
  %3463 = vmatprep.subr.mxu0 0.0
  %3464 = vmatpush1.msra.mxu0 0.0
  %3465 = vmatprep.subr.mxu0 0.0
  %3466 = vmatpush1.msra.mxu0 0.0
  %3467 = vmatprep.subr.mxu0 0.0
  %3468 = vmatpush1.msra.mxu0 0.0
  %3469 = vmatprep.subr.mxu0 0.0
  %3470 = vmatpush1.msra.mxu0 0.0
  %3471 = vmatprep.subr.mxu0 0.0
  %3472 = vmatpush1.msra.mxu0 0.0
  %3473 = vmatprep.subr.mxu0 0.0
  %3474 = vmatpush1.msra.mxu0 0.0
  %3475 = vmatprep.subr.mxu0 0.0
  %3476 = vmatpush1.msra.mxu0 0.0
  %3477 = vmatprep.subr.mxu0 0.0
  %3478 = vmatpush1.msra.mxu0 0.0
  %3479 = vmatprep.subr.mxu0 0.0
  %3480 = vmatpush1.msra.mxu0 0.0
  %3481 = vmatprep.subr.mxu0 0.0
  %3482 = vmatpush1.msra.mxu0 0.0
  %3483 = vmatprep.subr.mxu0 0.0
  %3484 = vmatpush1.msra.mxu0 0.0
  %3485 = vmatprep.subr.mxu0 0.0
  %3486 = vmatpush1.msra.mxu0 0.0
  %3487 = vmatprep.subr.mxu0 0.0
  %3488 = vmatpush1.msra.mxu0 0.0
  %3489 = vmatprep.subr.mxu0 0.0
  %3490 = vmatpush1.msra.mxu0 0.0
  %3491 = vmatprep.subr.mxu0 0.0
  %3492 = vmatpush1.msra.mxu0 0.0
  %3493 = vmatprep.subr.mxu0 0.0
  %3494 = vmatpush1.msra.mxu0 0.0
  %3495 = vmatprep.subr.mxu0 0.0
  %3496 = vmatpush1.msra.mxu0 0.0
  %3497 = vmatprep.subr.mxu0 0.0
  %3498 = vmatpush1.msra.mxu0 0.0
  %3499 = vmatprep.subr.mxu0 0.0
  %3500 = vmatpush1.msra.mxu0 0.0
  %3501 = vmatprep.subr.mxu0 0.0
  %3502 = vmatpush1.msra.mxu0 0.0
  %3503 = vmatprep.subr.mxu0 0.0
  %3504 = vmatpush1.msra.mxu0 0.0
  %3505 = vmatprep.subr.mxu0 0.0
  %3506 = vmatpush1.msra.mxu0 0.0
  %3507 = vmatprep.subr.mxu0 0.0
  %3508 = vmatpush1.msra.mxu0 0.0
  %3509 = vmatprep.subr.mxu0 0.0
  %3510 = vmatpush1.msra.mxu0 0.0
  %3511 = vmatprep.subr.mxu0 0.0
  %3512 = vmatpush1.msra.mxu0 0.0
  %3513 = vmatprep.subr.mxu0 0.0
  %3514 = vmatpush1.msra.mxu0 0.0
  %3515 = vmatprep.subr.mxu0 0.0
  %3516 = vmatpush1.msra.mxu0 0.0
  %3517 = vmatprep.subr.mxu0 0.0
  %3518 = vmatpush1.msra.mxu0 0.0
  %3519 = vmatprep.mubr.f32.mxu0 0.0
  %3520 = vmatmul.mubr.f32.gmra.mrb[0].mxu0 %v3453
  %v3521 = vpop.f32.mrb[0].mxu0
  %v3522 = vadd.f32 %v2958, %v3521
  %v3523 = vpop.f32.mrb[0].mxu0
  %3524 = vdwg.mxu0
  %3525 = vmatprep.subr.mxu0 0.0
  %3526 = vmatpush1.msra.mxu0 %v905
  %3527 = vmatprep.subr.mxu0 0.0
  %3528 = vmatpush1.msra.mxu0 %v906
  %3529 = vmatprep.subr.mxu0 0.0
  %3530 = vmatpush1.msra.mxu0 %v907
  %3531 = vmatprep.subr.mxu0 0.0
  %3532 = vmatpush1.msra.mxu0 %v908
  %3533 = vmatprep.subr.mxu0 0.0
  %3534 = vmatpush1.msra.mxu0 0.0
  %3535 = vmatprep.subr.mxu0 0.0
  %3536 = vmatpush1.msra.mxu0 0.0
  %3537 = vmatprep.subr.mxu0 0.0
  %3538 = vmatpush1.msra.mxu0 0.0
  %3539 = vmatprep.subr.mxu0 0.0
  %3540 = vmatpush1.msra.mxu0 0.0
  %3541 = vmatprep.subr.mxu0 0.0
  %3542 = vmatpush1.msra.mxu0 0.0
  %3543 = vmatprep.subr.mxu0 0.0
  %3544 = vmatpush1.msra.mxu0 0.0
  %3545 = vmatprep.subr.mxu0 0.0
  %3546 = vmatpush1.msra.mxu0 0.0
  %3547 = vmatprep.subr.mxu0 0.0
  %3548 = vmatpush1.msra.mxu0 0.0
  %3549 = vmatprep.subr.mxu0 0.0
  %3550 = vmatpush1.msra.mxu0 0.0
  %3551 = vmatprep.subr.mxu0 0.0
  %3552 = vmatpush1.msra.mxu0 0.0
  %3553 = vmatprep.subr.mxu0 0.0
  %3554 = vmatpush1.msra.mxu0 0.0
  %3555 = vmatprep.subr.mxu0 0.0
  %3556 = vmatpush1.msra.mxu0 0.0
  %3557 = vmatprep.subr.mxu0 0.0
  %3558 = vmatpush1.msra.mxu0 0.0
  %3559 = vmatprep.subr.mxu0 0.0
  %3560 = vmatpush1.msra.mxu0 0.0
  %3561 = vmatprep.subr.mxu0 0.0
  %3562 = vmatpush1.msra.mxu0 0.0
  %3563 = vmatprep.subr.mxu0 0.0
  %3564 = vmatpush1.msra.mxu0 0.0
  %3565 = vmatprep.subr.mxu0 0.0
  %3566 = vmatpush1.msra.mxu0 0.0
  %3567 = vmatprep.subr.mxu0 0.0
  %3568 = vmatpush1.msra.mxu0 0.0
  %3569 = vmatprep.subr.mxu0 0.0
  %3570 = vmatpush1.msra.mxu0 0.0
  %3571 = vmatprep.subr.mxu0 0.0
  %3572 = vmatpush1.msra.mxu0 0.0
  %3573 = vmatprep.subr.mxu0 0.0
  %3574 = vmatpush1.msra.mxu0 0.0
  %3575 = vmatprep.subr.mxu0 0.0
  %3576 = vmatpush1.msra.mxu0 0.0
  %3577 = vmatprep.subr.mxu0 0.0
  %3578 = vmatpush1.msra.mxu0 0.0
  %3579 = vmatprep.subr.mxu0 0.0
  %3580 = vmatpush1.msra.mxu0 0.0
  %3581 = vmatprep.subr.mxu0 0.0
  %3582 = vmatpush1.msra.mxu0 0.0
  %3583 = vmatprep.subr.mxu0 0.0
  %3584 = vmatpush1.msra.mxu0 0.0
  %3585 = vmatprep.subr.mxu0 0.0
  %3586 = vmatpush1.msra.mxu0 0.0
  %3587 = vmatprep.subr.mxu0 0.0
  %3588 = vmatpush1.msra.mxu0 0.0
  %3589 = vmatprep.mubr.f32.mxu0 0.0
  %3590 = vmatmul.mubr.f32.gmra.mrb[0].mxu0 %v3453
  %v3591 = vpop.f32.mrb[0].mxu0
  %v3592 = vadd.f32 %v3037, %v3591
  %v3593 = vpop.f32.mrb[0].mxu0
  %3594 = vdwg.mxu0
  %3595 = vmatprep.subr.mxu0 0.0
  %3596 = vmatpush1.msra.mxu0 %v910
  %3597 = vmatprep.subr.mxu0 0.0
  %3598 = vmatpush1.msra.mxu0 %v911
  %3599 = vmatprep.subr.mxu0 0.0
  %3600 = vmatpush1.msra.mxu0 %v912
  %3601 = vmatprep.subr.mxu0 0.0
  %3602 = vmatpush1.msra.mxu0 %v913
  %3603 = vmatprep.subr.mxu0 0.0
  %3604 = vmatpush1.msra.mxu0 0.0
  %3605 = vmatprep.subr.mxu0 0.0
  %3606 = vmatpush1.msra.mxu0 0.0
  %3607 = vmatprep.subr.mxu0 0.0
  %3608 = vmatpush1.msra.mxu0 0.0
  %3609 = vmatprep.subr.mxu0 0.0
  %3610 = vmatpush1.msra.mxu0 0.0
  %3611 = vmatprep.subr.mxu0 0.0
  %3612 = vmatpush1.msra.mxu0 0.0
  %3613 = vmatprep.subr.mxu0 0.0
  %3614 = vmatpush1.msra.mxu0 0.0
  %3615 = vmatprep.subr.mxu0 0.0
  %3616 = vmatpush1.msra.mxu0 0.0
  %3617 = vmatprep.subr.mxu0 0.0
  %3618 = vmatpush1.msra.mxu0 0.0
  %3619 = vmatprep.subr.mxu0 0.0
  %3620 = vmatpush1.msra.mxu0 0.0
  %3621 = vmatprep.subr.mxu0 0.0
  %3622 = vmatpush1.msra.mxu0 0.0
  %3623 = vmatprep.subr.mxu0 0.0
  %3624 = vmatpush1.msra.mxu0 0.0
  %3625 = vmatprep.subr.mxu0 0.0
  %3626 = vmatpush1.msra.mxu0 0.0
  %3627 = vmatprep.subr.mxu0 0.0
  %3628 = vmatpush1.msra.mxu0 0.0
  %3629 = vmatprep.subr.mxu0 0.0
  %3630 = vmatpush1.msra.mxu0 0.0
  %3631 = vmatprep.subr.mxu0 0.0
  %3632 = vmatpush1.msra.mxu0 0.0
  %3633 = vmatprep.subr.mxu0 0.0
  %3634 = vmatpush1.msra.mxu0 0.0
  %3635 = vmatprep.subr.mxu0 0.0
  %3636 = vmatpush1.msra.mxu0 0.0
  %3637 = vmatprep.subr.mxu0 0.0
  %3638 = vmatpush1.msra.mxu0 0.0
  %3639 = vmatprep.subr.mxu0 0.0
  %3640 = vmatpush1.msra.mxu0 0.0
  %3641 = vmatprep.subr.mxu0 0.0
  %3642 = vmatpush1.msra.mxu0 0.0
  %3643 = vmatprep.subr.mxu0 0.0
  %3644 = vmatpush1.msra.mxu0 0.0
  %3645 = vmatprep.subr.mxu0 0.0
  %3646 = vmatpush1.msra.mxu0 0.0
  %3647 = vmatprep.subr.mxu0 0.0
  %3648 = vmatpush1.msra.mxu0 0.0
  %3649 = vmatprep.subr.mxu0 0.0
  %3650 = vmatpush1.msra.mxu0 0.0
  %3651 = vmatprep.subr.mxu0 0.0
  %3652 = vmatpush1.msra.mxu0 0.0
  %3653 = vmatprep.subr.mxu0 0.0
  %3654 = vmatpush1.msra.mxu0 0.0
  %3655 = vmatprep.subr.mxu0 0.0
  %3656 = vmatpush1.msra.mxu0 0.0
  %3657 = vmatprep.subr.mxu0 0.0
  %3658 = vmatpush1.msra.mxu0 0.0
  %3659 = vmatprep.mubr.f32.mxu0 0.0
  %3660 = vmatmul.mubr.f32.gmra.mrb[0].mxu0 %v3453
  %v3661 = vpop.f32.mrb[0].mxu0
  %v3662 = vadd.f32 %v3113, %v3661
  %v3663 = vpop.f32.mrb[0].mxu0
  %3664 = vdwg.mxu0
  %s3665 = scalar_lea.vmem [#allocation5], 16
  %v3666 = vld [vmem:[%s3665] sm:$0xff]
  %v3667 = vadd.f32 %v3666, %v3522
  %v3668 = vxor.u32 %v3667, 2147483648
  %v3669 = vmul.f32 %v3668, 1.442695
  %v3670 = vpow.pop %v3669
  %v3671 = vadd.f32 %v3670, 1.0
  %v3672 = vrcp.pop %v3671
  %v3673 = vmul.f32 1.0, %v3672
  %s3674 = scalar_lea.vmem [#allocation6], 16
  %v3675 = vld [vmem:[%s3674] sm:$0xff]
  %v3676 = vadd.f32 %v3675, %v3592
  %v3677 = vxor.u32 %v3676, 2147483648
  %v3678 = vmul.f32 %v3677, 1.442695
  %v3679 = vpow.pop %v3678
  %v3680 = vadd.f32 %v3679, 1.0
  %v3681 = vrcp.pop %v3680
  %v3682 = vmul.f32 1.0, %v3681
  %s3683 = scalar_lea.vmem [#allocation7], 16
  %v3684 = vld [vmem:[%s3683] sm:$0xff]
  %v3685 = vmul.f32 %v3673, %v3662
  %v3686 = vadd.f32 %v3684, %v3685
  %v3687 = vtanh.pop %v3686
  %v3688 = vsub.f32 1.0, %v3682
  %v3689 = vmul.f32 %v3688, %v3687
  %v3690 = vmul.f32 %v3682, %v3449
  %v3691 = vadd.f32 %v3689, %v3690
  %s3692 = scalar_lea.vmem [#allocation9], 16
  %3693 = vst.msk [vmem:[%s3692] sm:$0xff] %vm91, %v3691
  %v3695 = vsel %vm91, %v3691, 0
  %3697 = vmatprep.subr.mxu0 0.0
  %3698 = vmatpush1.msra.mxu0 %v900
  %3699 = vmatprep.subr.mxu0 0.0
  %3700 = vmatpush1.msra.mxu0 %v901
  %3701 = vmatprep.subr.mxu0 0.0
  %3702 = vmatpush1.msra.mxu0 %v902
  %3703 = vmatprep.subr.mxu0 0.0
  %3704 = vmatpush1.msra.mxu0 %v903
  %3705 = vmatprep.subr.mxu0 0.0
  %3706 = vmatpush1.msra.mxu0 0.0
  %3707 = vmatprep.subr.mxu0 0.0
  %3708 = vmatpush1.msra.mxu0 0.0
  %3709 = vmatprep.subr.mxu0 0.0
  %3710 = vmatpush1.msra.mxu0 0.0
  %3711 = vmatprep.subr.mxu0 0.0
  %3712 = vmatpush1.msra.mxu0 0.0
  %3713 = vmatprep.subr.mxu0 0.0
  %3714 = vmatpush1.msra.mxu0 0.0
  %3715 = vmatprep.subr.mxu0 0.0
  %3716 = vmatpush1.msra.mxu0 0.0
  %3717 = vmatprep.subr.mxu0 0.0
  %3718 = vmatpush1.msra.mxu0 0.0
  %3719 = vmatprep.subr.mxu0 0.0
  %3720 = vmatpush1.msra.mxu0 0.0
  %3721 = vmatprep.subr.mxu0 0.0
  %3722 = vmatpush1.msra.mxu0 0.0
  %3723 = vmatprep.subr.mxu0 0.0
  %3724 = vmatpush1.msra.mxu0 0.0
  %3725 = vmatprep.subr.mxu0 0.0
  %3726 = vmatpush1.msra.mxu0 0.0
  %3727 = vmatprep.subr.mxu0 0.0
  %3728 = vmatpush1.msra.mxu0 0.0
  %3729 = vmatprep.subr.mxu0 0.0
  %3730 = vmatpush1.msra.mxu0 0.0
  %3731 = vmatprep.subr.mxu0 0.0
  %3732 = vmatpush1.msra.mxu0 0.0
  %3733 = vmatprep.subr.mxu0 0.0
  %3734 = vmatpush1.msra.mxu0 0.0
  %3735 = vmatprep.subr.mxu0 0.0
  %3736 = vmatpush1.msra.mxu0 0.0
  %3737 = vmatprep.subr.mxu0 0.0
  %3738 = vmatpush1.msra.mxu0 0.0
  %3739 = vmatprep.subr.mxu0 0.0
  %3740 = vmatpush1.msra.mxu0 0.0
  %3741 = vmatprep.subr.mxu0 0.0
  %3742 = vmatpush1.msra.mxu0 0.0
  %3743 = vmatprep.subr.mxu0 0.0
  %3744 = vmatpush1.msra.mxu0 0.0
  %3745 = vmatprep.subr.mxu0 0.0
  %3746 = vmatpush1.msra.mxu0 0.0
  %3747 = vmatprep.subr.mxu0 0.0
  %3748 = vmatpush1.msra.mxu0 0.0
  %3749 = vmatprep.subr.mxu0 0.0
  %3750 = vmatpush1.msra.mxu0 0.0
  %3751 = vmatprep.subr.mxu0 0.0
  %3752 = vmatpush1.msra.mxu0 0.0
  %3753 = vmatprep.subr.mxu0 0.0
  %3754 = vmatpush1.msra.mxu0 0.0
  %3755 = vmatprep.subr.mxu0 0.0
  %3756 = vmatpush1.msra.mxu0 0.0
  %3757 = vmatprep.subr.mxu0 0.0
  %3758 = vmatpush1.msra.mxu0 0.0
  %3759 = vmatprep.subr.mxu0 0.0
  %3760 = vmatpush1.msra.mxu0 0.0
  %3761 = vmatprep.mubr.f32.mxu0 0.0
  %3762 = vmatmul.mubr.f32.gmra.mrb[0].mxu0 %v3695
  %v3763 = vpop.f32.mrb[0].mxu0
  %v3764 = vadd.f32 %v2958, %v3763
  %v3765 = vpop.f32.mrb[0].mxu0
  %3766 = vdwg.mxu0
  %3767 = vmatprep.subr.mxu0 0.0
  %3768 = vmatpush1.msra.mxu0 %v905
  %3769 = vmatprep.subr.mxu0 0.0
  %3770 = vmatpush1.msra.mxu0 %v906
  %3771 = vmatprep.subr.mxu0 0.0
  %3772 = vmatpush1.msra.mxu0 %v907
  %3773 = vmatprep.subr.mxu0 0.0
  %3774 = vmatpush1.msra.mxu0 %v908
  %3775 = vmatprep.subr.mxu0 0.0
  %3776 = vmatpush1.msra.mxu0 0.0
  %3777 = vmatprep.subr.mxu0 0.0
  %3778 = vmatpush1.msra.mxu0 0.0
  %3779 = vmatprep.subr.mxu0 0.0
  %3780 = vmatpush1.msra.mxu0 0.0
  %3781 = vmatprep.subr.mxu0 0.0
  %3782 = vmatpush1.msra.mxu0 0.0
  %3783 = vmatprep.subr.mxu0 0.0
  %3784 = vmatpush1.msra.mxu0 0.0
  %3785 = vmatprep.subr.mxu0 0.0
  %3786 = vmatpush1.msra.mxu0 0.0
  %3787 = vmatprep.subr.mxu0 0.0
  %3788 = vmatpush1.msra.mxu0 0.0
  %3789 = vmatprep.subr.mxu0 0.0
  %3790 = vmatpush1.msra.mxu0 0.0
  %3791 = vmatprep.subr.mxu0 0.0
  %3792 = vmatpush1.msra.mxu0 0.0
  %3793 = vmatprep.subr.mxu0 0.0
  %3794 = vmatpush1.msra.mxu0 0.0
  %3795 = vmatprep.subr.mxu0 0.0
  %3796 = vmatpush1.msra.mxu0 0.0
  %3797 = vmatprep.subr.mxu0 0.0
  %3798 = vmatpush1.msra.mxu0 0.0
  %3799 = vmatprep.subr.mxu0 0.0
  %3800 = vmatpush1.msra.mxu0 0.0
  %3801 = vmatprep.subr.mxu0 0.0
  %3802 = vmatpush1.msra.mxu0 0.0
  %3803 = vmatprep.subr.mxu0 0.0
  %3804 = vmatpush1.msra.mxu0 0.0
  %3805 = vmatprep.subr.mxu0 0.0
  %3806 = vmatpush1.msra.mxu0 0.0
  %3807 = vmatprep.subr.mxu0 0.0
  %3808 = vmatpush1.msra.mxu0 0.0
  %3809 = vmatprep.subr.mxu0 0.0
  %3810 = vmatpush1.msra.mxu0 0.0
  %3811 = vmatprep.subr.mxu0 0.0
  %3812 = vmatpush1.msra.mxu0 0.0
  %3813 = vmatprep.subr.mxu0 0.0
  %3814 = vmatpush1.msra.mxu0 0.0
  %3815 = vmatprep.subr.mxu0 0.0
  %3816 = vmatpush1.msra.mxu0 0.0
  %3817 = vmatprep.subr.mxu0 0.0
  %3818 = vmatpush1.msra.mxu0 0.0
  %3819 = vmatprep.subr.mxu0 0.0
  %3820 = vmatpush1.msra.mxu0 0.0
  %3821 = vmatprep.subr.mxu0 0.0
  %3822 = vmatpush1.msra.mxu0 0.0
  %3823 = vmatprep.subr.mxu0 0.0
  %3824 = vmatpush1.msra.mxu0 0.0
  %3825 = vmatprep.subr.mxu0 0.0
  %3826 = vmatpush1.msra.mxu0 0.0
  %3827 = vmatprep.subr.mxu0 0.0
  %3828 = vmatpush1.msra.mxu0 0.0
  %3829 = vmatprep.subr.mxu0 0.0
  %3830 = vmatpush1.msra.mxu0 0.0
  %3831 = vmatprep.mubr.f32.mxu0 0.0
  %3832 = vmatmul.mubr.f32.gmra.mrb[0].mxu0 %v3695
  %v3833 = vpop.f32.mrb[0].mxu0
  %v3834 = vadd.f32 %v3037, %v3833
  %v3835 = vpop.f32.mrb[0].mxu0
  %3836 = vdwg.mxu0
  %3837 = vmatprep.subr.mxu0 0.0
  %3838 = vmatpush1.msra.mxu0 %v910
  %3839 = vmatprep.subr.mxu0 0.0
  %3840 = vmatpush1.msra.mxu0 %v911
  %3841 = vmatprep.subr.mxu0 0.0
  %3842 = vmatpush1.msra.mxu0 %v912
  %3843 = vmatprep.subr.mxu0 0.0
  %3844 = vmatpush1.msra.mxu0 %v913
  %3845 = vmatprep.subr.mxu0 0.0
  %3846 = vmatpush1.msra.mxu0 0.0
  %3847 = vmatprep.subr.mxu0 0.0
  %3848 = vmatpush1.msra.mxu0 0.0
  %3849 = vmatprep.subr.mxu0 0.0
  %3850 = vmatpush1.msra.mxu0 0.0
  %3851 = vmatprep.subr.mxu0 0.0
  %3852 = vmatpush1.msra.mxu0 0.0
  %3853 = vmatprep.subr.mxu0 0.0
  %3854 = vmatpush1.msra.mxu0 0.0
  %3855 = vmatprep.subr.mxu0 0.0
  %3856 = vmatpush1.msra.mxu0 0.0
  %3857 = vmatprep.subr.mxu0 0.0
  %3858 = vmatpush1.msra.mxu0 0.0
  %3859 = vmatprep.subr.mxu0 0.0
  %3860 = vmatpush1.msra.mxu0 0.0
  %3861 = vmatprep.subr.mxu0 0.0
  %3862 = vmatpush1.msra.mxu0 0.0
  %3863 = vmatprep.subr.mxu0 0.0
  %3864 = vmatpush1.msra.mxu0 0.0
  %3865 = vmatprep.subr.mxu0 0.0
  %3866 = vmatpush1.msra.mxu0 0.0
  %3867 = vmatprep.subr.mxu0 0.0
  %3868 = vmatpush1.msra.mxu0 0.0
  %3869 = vmatprep.subr.mxu0 0.0
  %3870 = vmatpush1.msra.mxu0 0.0
  %3871 = vmatprep.subr.mxu0 0.0
  %3872 = vmatpush1.msra.mxu0 0.0
  %3873 = vmatprep.subr.mxu0 0.0
  %3874 = vmatpush1.msra.mxu0 0.0
  %3875 = vmatprep.subr.mxu0 0.0
  %3876 = vmatpush1.msra.mxu0 0.0
  %3877 = vmatprep.subr.mxu0 0.0
  %3878 = vmatpush1.msra.mxu0 0.0
  %3879 = vmatprep.subr.mxu0 0.0
  %3880 = vmatpush1.msra.mxu0 0.0
  %3881 = vmatprep.subr.mxu0 0.0
  %3882 = vmatpush1.msra.mxu0 0.0
  %3883 = vmatprep.subr.mxu0 0.0
  %3884 = vmatpush1.msra.mxu0 0.0
  %3885 = vmatprep.subr.mxu0 0.0
  %3886 = vmatpush1.msra.mxu0 0.0
  %3887 = vmatprep.subr.mxu0 0.0
  %3888 = vmatpush1.msra.mxu0 0.0
  %3889 = vmatprep.subr.mxu0 0.0
  %3890 = vmatpush1.msra.mxu0 0.0
  %3891 = vmatprep.subr.mxu0 0.0
  %3892 = vmatpush1.msra.mxu0 0.0
  %3893 = vmatprep.subr.mxu0 0.0
  %3894 = vmatpush1.msra.mxu0 0.0
  %3895 = vmatprep.subr.mxu0 0.0
  %3896 = vmatpush1.msra.mxu0 0.0
  %3897 = vmatprep.subr.mxu0 0.0
  %3898 = vmatpush1.msra.mxu0 0.0
  %3899 = vmatprep.subr.mxu0 0.0
  %3900 = vmatpush1.msra.mxu0 0.0
  %3901 = vmatprep.mubr.f32.mxu0 0.0
  %3902 = vmatmul.mubr.f32.gmra.mrb[0].mxu0 %v3695
  %v3903 = vpop.f32.mrb[0].mxu0
  %v3904 = vadd.f32 %v3113, %v3903
  %v3905 = vpop.f32.mrb[0].mxu0
  %3906 = vdwg.mxu0
  %s3907 = scalar_lea.vmem [#allocation5], 24
  %v3908 = vld [vmem:[%s3907] sm:$0xff]
  %v3909 = vadd.f32 %v3908, %v3764
  %v3910 = vxor.u32 %v3909, 2147483648
  %v3911 = vmul.f32 %v3910, 1.442695
  %v3912 = vpow.pop %v3911
  %v3913 = vadd.f32 %v3912, 1.0
  %v3914 = vrcp.pop %v3913
  %v3915 = vmul.f32 1.0, %v3914
  %s3916 = scalar_lea.vmem [#allocation6], 24
  %v3917 = vld [vmem:[%s3916] sm:$0xff]
  %v3918 = vadd.f32 %v3917, %v3834
  %v3919 = vxor.u32 %v3918, 2147483648
  %v3920 = vmul.f32 %v3919, 1.442695
  %v3921 = vpow.pop %v3920
  %v3922 = vadd.f32 %v3921, 1.0
  %v3923 = vrcp.pop %v3922
  %v3924 = vmul.f32 1.0, %v3923
  %s3925 = scalar_lea.vmem [#allocation7], 24
  %v3926 = vld [vmem:[%s3925] sm:$0xff]
  %v3927 = vmul.f32 %v3915, %v3904
  %v3928 = vadd.f32 %v3926, %v3927
  %v3929 = vtanh.pop %v3928
  %v3930 = vsub.f32 1.0, %v3924
  %v3931 = vmul.f32 %v3930, %v3929
  %v3932 = vmul.f32 %v3924, %v3691
  %v3933 = vadd.f32 %v3931, %v3932
  %s3934 = scalar_lea.vmem [#allocation9], 24
  %3935 = vst.msk [vmem:[%s3934] sm:$0xff] %vm91, %v3933
  %v3937 = vsel %vm91, %v3933, 0
  %3939 = vmatprep.subr.mxu0 0.0
  %3940 = vmatpush1.msra.mxu0 %v900
  %3941 = vmatprep.subr.mxu0 0.0
  %3942 = vmatpush1.msra.mxu0 %v901
  %3943 = vmatprep.subr.mxu0 0.0
  %3944 = vmatpush1.msra.mxu0 %v902
  %3945 = vmatprep.subr.mxu0 0.0
  %3946 = vmatpush1.msra.mxu0 %v903
  %3947 = vmatprep.subr.mxu0 0.0
  %3948 = vmatpush1.msra.mxu0 0.0
  %3949 = vmatprep.subr.mxu0 0.0
  %3950 = vmatpush1.msra.mxu0 0.0
  %3951 = vmatprep.subr.mxu0 0.0
  %3952 = vmatpush1.msra.mxu0 0.0
  %3953 = vmatprep.subr.mxu0 0.0
  %3954 = vmatpush1.msra.mxu0 0.0
  %3955 = vmatprep.subr.mxu0 0.0
  %3956 = vmatpush1.msra.mxu0 0.0
  %3957 = vmatprep.subr.mxu0 0.0
  %3958 = vmatpush1.msra.mxu0 0.0
  %3959 = vmatprep.subr.mxu0 0.0
  %3960 = vmatpush1.msra.mxu0 0.0
  %3961 = vmatprep.subr.mxu0 0.0
  %3962 = vmatpush1.msra.mxu0 0.0
  %3963 = vmatprep.subr.mxu0 0.0
  %3964 = vmatpush1.msra.mxu0 0.0
  %3965 = vmatprep.subr.mxu0 0.0
  %3966 = vmatpush1.msra.mxu0 0.0
  %3967 = vmatprep.subr.mxu0 0.0
  %3968 = vmatpush1.msra.mxu0 0.0
  %3969 = vmatprep.subr.mxu0 0.0
  %3970 = vmatpush1.msra.mxu0 0.0
  %3971 = vmatprep.subr.mxu0 0.0
  %3972 = vmatpush1.msra.mxu0 0.0
  %3973 = vmatprep.subr.mxu0 0.0
  %3974 = vmatpush1.msra.mxu0 0.0
  %3975 = vmatprep.subr.mxu0 0.0
  %3976 = vmatpush1.msra.mxu0 0.0
  %3977 = vmatprep.subr.mxu0 0.0
  %3978 = vmatpush1.msra.mxu0 0.0
  %3979 = vmatprep.subr.mxu0 0.0
  %3980 = vmatpush1.msra.mxu0 0.0
  %3981 = vmatprep.subr.mxu0 0.0
  %3982 = vmatpush1.msra.mxu0 0.0
  %3983 = vmatprep.subr.mxu0 0.0
  %3984 = vmatpush1.msra.mxu0 0.0
  %3985 = vmatprep.subr.mxu0 0.0
  %3986 = vmatpush1.msra.mxu0 0.0
  %3987 = vmatprep.subr.mxu0 0.0
  %3988 = vmatpush1.msra.mxu0 0.0
  %3989 = vmatprep.subr.mxu0 0.0
  %3990 = vmatpush1.msra.mxu0 0.0
  %3991 = vmatprep.subr.mxu0 0.0
  %3992 = vmatpush1.msra.mxu0 0.0
  %3993 = vmatprep.subr.mxu0 0.0
  %3994 = vmatpush1.msra.mxu0 0.0
  %3995 = vmatprep.subr.mxu0 0.0
  %3996 = vmatpush1.msra.mxu0 0.0
  %3997 = vmatprep.subr.mxu0 0.0
  %3998 = vmatpush1.msra.mxu0 0.0
  %3999 = vmatprep.subr.mxu0 0.0
  %4000 = vmatpush1.msra.mxu0 0.0
  %4001 = vmatprep.subr.mxu0 0.0
  %4002 = vmatpush1.msra.mxu0 0.0
  %4003 = vmatprep.mubr.f32.mxu0 0.0
  %4004 = vmatmul.mubr.f32.gmra.mrb[0].mxu0 %v3937
  %v4005 = vpop.f32.mrb[0].mxu0
  %v4006 = vadd.f32 %v2958, %v4005
  %v4007 = vpop.f32.mrb[0].mxu0
  %4008 = vdwg.mxu0
  %4009 = vmatprep.subr.mxu0 0.0
  %4010 = vmatpush1.msra.mxu0 %v905
  %4011 = vmatprep.subr.mxu0 0.0
  %4012 = vmatpush1.msra.mxu0 %v906
  %4013 = vmatprep.subr.mxu0 0.0
  %4014 = vmatpush1.msra.mxu0 %v907
  %4015 = vmatprep.subr.mxu0 0.0
  %4016 = vmatpush1.msra.mxu0 %v908
  %4017 = vmatprep.subr.mxu0 0.0
  %4018 = vmatpush1.msra.mxu0 0.0
  %4019 = vmatprep.subr.mxu0 0.0
  %4020 = vmatpush1.msra.mxu0 0.0
  %4021 = vmatprep.subr.mxu0 0.0
  %4022 = vmatpush1.msra.mxu0 0.0
  %4023 = vmatprep.subr.mxu0 0.0
  %4024 = vmatpush1.msra.mxu0 0.0
  %4025 = vmatprep.subr.mxu0 0.0
  %4026 = vmatpush1.msra.mxu0 0.0
  %4027 = vmatprep.subr.mxu0 0.0
  %4028 = vmatpush1.msra.mxu0 0.0
  %4029 = vmatprep.subr.mxu0 0.0
  %4030 = vmatpush1.msra.mxu0 0.0
  %4031 = vmatprep.subr.mxu0 0.0
  %4032 = vmatpush1.msra.mxu0 0.0
  %4033 = vmatprep.subr.mxu0 0.0
  %4034 = vmatpush1.msra.mxu0 0.0
  %4035 = vmatprep.subr.mxu0 0.0
  %4036 = vmatpush1.msra.mxu0 0.0
  %4037 = vmatprep.subr.mxu0 0.0
  %4038 = vmatpush1.msra.mxu0 0.0
  %4039 = vmatprep.subr.mxu0 0.0
  %4040 = vmatpush1.msra.mxu0 0.0
  %4041 = vmatprep.subr.mxu0 0.0
  %4042 = vmatpush1.msra.mxu0 0.0
  %4043 = vmatprep.subr.mxu0 0.0
  %4044 = vmatpush1.msra.mxu0 0.0
  %4045 = vmatprep.subr.mxu0 0.0
  %4046 = vmatpush1.msra.mxu0 0.0
  %4047 = vmatprep.subr.mxu0 0.0
  %4048 = vmatpush1.msra.mxu0 0.0
  %4049 = vmatprep.subr.mxu0 0.0
  %4050 = vmatpush1.msra.mxu0 0.0
  %4051 = vmatprep.subr.mxu0 0.0
  %4052 = vmatpush1.msra.mxu0 0.0
  %4053 = vmatprep.subr.mxu0 0.0
  %4054 = vmatpush1.msra.mxu0 0.0
  %4055 = vmatprep.subr.mxu0 0.0
  %4056 = vmatpush1.msra.mxu0 0.0
  %4057 = vmatprep.subr.mxu0 0.0
  %4058 = vmatpush1.msra.mxu0 0.0
  %4059 = vmatprep.subr.mxu0 0.0
  %4060 = vmatpush1.msra.mxu0 0.0
  %4061 = vmatprep.subr.mxu0 0.0
  %4062 = vmatpush1.msra.mxu0 0.0
  %4063 = vmatprep.subr.mxu0 0.0
  %4064 = vmatpush1.msra.mxu0 0.0
  %4065 = vmatprep.subr.mxu0 0.0
  %4066 = vmatpush1.msra.mxu0 0.0
  %4067 = vmatprep.subr.mxu0 0.0
  %4068 = vmatpush1.msra.mxu0 0.0
  %4069 = vmatprep.subr.mxu0 0.0
  %4070 = vmatpush1.msra.mxu0 0.0
  %4071 = vmatprep.subr.mxu0 0.0
  %4072 = vmatpush1.msra.mxu0 0.0
  %4073 = vmatprep.mubr.f32.mxu0 0.0
  %4074 = vmatmul.mubr.f32.gmra.mrb[0].mxu0 %v3937
  %v4075 = vpop.f32.mrb[0].mxu0
  %v4076 = vadd.f32 %v3037, %v4075
  %v4077 = vpop.f32.mrb[0].mxu0
  %4078 = vdwg.mxu0
  %4079 = vmatprep.subr.mxu0 0.0
  %4080 = vmatpush1.msra.mxu0 %v910
  %4081 = vmatprep.subr.mxu0 0.0
  %4082 = vmatpush1.msra.mxu0 %v911
  %4083 = vmatprep.subr.mxu0 0.0
  %4084 = vmatpush1.msra.mxu0 %v912
  %4085 = vmatprep.subr.mxu0 0.0
  %4086 = vmatpush1.msra.mxu0 %v913
  %4087 = vmatprep.subr.mxu0 0.0
  %4088 = vmatpush1.msra.mxu0 0.0
  %4089 = vmatprep.subr.mxu0 0.0
  %4090 = vmatpush1.msra.mxu0 0.0
  %4091 = vmatprep.subr.mxu0 0.0
  %4092 = vmatpush1.msra.mxu0 0.0
  %4093 = vmatprep.subr.mxu0 0.0
  %4094 = vmatpush1.msra.mxu0 0.0
  %4095 = vmatprep.subr.mxu0 0.0
  %4096 = vmatpush1.msra.mxu0 0.0
  %4097 = vmatprep.subr.mxu0 0.0
  %4098 = vmatpush1.msra.mxu0 0.0
  %4099 = vmatprep.subr.mxu0 0.0
  %4100 = vmatpush1.msra.mxu0 0.0
  %4101 = vmatprep.subr.mxu0 0.0
  %4102 = vmatpush1.msra.mxu0 0.0
  %4103 = vmatprep.subr.mxu0 0.0
  %4104 = vmatpush1.msra.mxu0 0.0
  %4105 = vmatprep.subr.mxu0 0.0
  %4106 = vmatpush1.msra.mxu0 0.0
  %4107 = vmatprep.subr.mxu0 0.0
  %4108 = vmatpush1.msra.mxu0 0.0
  %4109 = vmatprep.subr.mxu0 0.0
  %4110 = vmatpush1.msra.mxu0 0.0
  %4111 = vmatprep.subr.mxu0 0.0
  %4112 = vmatpush1.msra.mxu0 0.0
  %4113 = vmatprep.subr.mxu0 0.0
  %4114 = vmatpush1.msra.mxu0 0.0
  %4115 = vmatprep.subr.mxu0 0.0
  %4116 = vmatpush1.msra.mxu0 0.0
  %4117 = vmatprep.subr.mxu0 0.0
  %4118 = vmatpush1.msra.mxu0 0.0
  %4119 = vmatprep.subr.mxu0 0.0
  %4120 = vmatpush1.msra.mxu0 0.0
  %4121 = vmatprep.subr.mxu0 0.0
  %4122 = vmatpush1.msra.mxu0 0.0
  %4123 = vmatprep.subr.mxu0 0.0
  %4124 = vmatpush1.msra.mxu0 0.0
  %4125 = vmatprep.subr.mxu0 0.0
  %4126 = vmatpush1.msra.mxu0 0.0
  %4127 = vmatprep.subr.mxu0 0.0
  %4128 = vmatpush1.msra.mxu0 0.0
  %4129 = vmatprep.subr.mxu0 0.0
  %4130 = vmatpush1.msra.mxu0 0.0
  %4131 = vmatprep.subr.mxu0 0.0
  %4132 = vmatpush1.msra.mxu0 0.0
  %4133 = vmatprep.subr.mxu0 0.0
  %4134 = vmatpush1.msra.mxu0 0.0
  %4135 = vmatprep.subr.mxu0 0.0
  %4136 = vmatpush1.msra.mxu0 0.0
  %4137 = vmatprep.subr.mxu0 0.0
  %4138 = vmatpush1.msra.mxu0 0.0
  %4139 = vmatprep.subr.mxu0 0.0
  %4140 = vmatpush1.msra.mxu0 0.0
  %4141 = vmatprep.subr.mxu0 0.0
  %4142 = vmatpush1.msra.mxu0 0.0
  %4143 = vmatprep.mubr.f32.mxu0 0.0
  %4144 = vmatmul.mubr.f32.gmra.mrb[0].mxu0 %v3937
  %v4145 = vpop.f32.mrb[0].mxu0
  %v4146 = vadd.f32 %v3113, %v4145
  %v4147 = vpop.f32.mrb[0].mxu0
  %4148 = vdwg.mxu0
  %s4149 = scalar_lea.vmem [#allocation5], 32
  %v4150 = vld [vmem:[%s4149] sm:$0xff]
  %v4151 = vadd.f32 %v4150, %v4006
  %v4152 = vxor.u32 %v4151, 2147483648
  %v4153 = vmul.f32 %v4152, 1.442695
  %v4154 = vpow.pop %v4153
  %v4155 = vadd.f32 %v4154, 1.0
  %v4156 = vrcp.pop %v4155
  %v4157 = vmul.f32 1.0, %v4156
  %s4158 = scalar_lea.vmem [#allocation6], 32
  %v4159 = vld [vmem:[%s4158] sm:$0xff]
  %v4160 = vadd.f32 %v4159, %v4076
  %v4161 = vxor.u32 %v4160, 2147483648
  %v4162 = vmul.f32 %v4161, 1.442695
  %v4163 = vpow.pop %v4162
  %v4164 = vadd.f32 %v4163, 1.0
  %v4165 = vrcp.pop %v4164
  %v4166 = vmul.f32 1.0, %v4165
  %s4167 = scalar_lea.vmem [#allocation7], 32
  %v4168 = vld [vmem:[%s4167] sm:$0xff]
  %v4169 = vmul.f32 %v4157, %v4146
  %v4170 = vadd.f32 %v4168, %v4169
  %v4171 = vtanh.pop %v4170
  %v4172 = vsub.f32 1.0, %v4166
  %v4173 = vmul.f32 %v4172, %v4171
  %v4174 = vmul.f32 %v4166, %v3933
  %v4175 = vadd.f32 %v4173, %v4174
  %s4176 = scalar_lea.vmem [#allocation9], 32
  %4177 = vst.msk [vmem:[%s4176] sm:$0xff] %vm91, %v4175
  %v4179 = vsel %vm91, %v4175, 0
  %4181 = vmatprep.subr.mxu0 0.0
  %4182 = vmatpush1.msra.mxu0 %v900
  %4183 = vmatprep.subr.mxu0 0.0
  %4184 = vmatpush1.msra.mxu0 %v901
  %4185 = vmatprep.subr.mxu0 0.0
  %4186 = vmatpush1.msra.mxu0 %v902
  %4187 = vmatprep.subr.mxu0 0.0
  %4188 = vmatpush1.msra.mxu0 %v903
  %4189 = vmatprep.subr.mxu0 0.0
  %4190 = vmatpush1.msra.mxu0 0.0
  %4191 = vmatprep.subr.mxu0 0.0
  %4192 = vmatpush1.msra.mxu0 0.0
  %4193 = vmatprep.subr.mxu0 0.0
  %4194 = vmatpush1.msra.mxu0 0.0
  %4195 = vmatprep.subr.mxu0 0.0
  %4196 = vmatpush1.msra.mxu0 0.0
  %4197 = vmatprep.subr.mxu0 0.0
  %4198 = vmatpush1.msra.mxu0 0.0
  %4199 = vmatprep.subr.mxu0 0.0
  %4200 = vmatpush1.msra.mxu0 0.0
  %4201 = vmatprep.subr.mxu0 0.0
  %4202 = vmatpush1.msra.mxu0 0.0
  %4203 = vmatprep.subr.mxu0 0.0
  %4204 = vmatpush1.msra.mxu0 0.0
  %4205 = vmatprep.subr.mxu0 0.0
  %4206 = vmatpush1.msra.mxu0 0.0
  %4207 = vmatprep.subr.mxu0 0.0
  %4208 = vmatpush1.msra.mxu0 0.0
  %4209 = vmatprep.subr.mxu0 0.0
  %4210 = vmatpush1.msra.mxu0 0.0
  %4211 = vmatprep.subr.mxu0 0.0
  %4212 = vmatpush1.msra.mxu0 0.0
  %4213 = vmatprep.subr.mxu0 0.0
  %4214 = vmatpush1.msra.mxu0 0.0
  %4215 = vmatprep.subr.mxu0 0.0
  %4216 = vmatpush1.msra.mxu0 0.0
  %4217 = vmatprep.subr.mxu0 0.0
  %4218 = vmatpush1.msra.mxu0 0.0
  %4219 = vmatprep.subr.mxu0 0.0
  %4220 = vmatpush1.msra.mxu0 0.0
  %4221 = vmatprep.subr.mxu0 0.0
  %4222 = vmatpush1.msra.mxu0 0.0
  %4223 = vmatprep.subr.mxu0 0.0
  %4224 = vmatpush1.msra.mxu0 0.0
  %4225 = vmatprep.subr.mxu0 0.0
  %4226 = vmatpush1.msra.mxu0 0.0
  %4227 = vmatprep.subr.mxu0 0.0
  %4228 = vmatpush1.msra.mxu0 0.0
  %4229 = vmatprep.subr.mxu0 0.0
  %4230 = vmatpush1.msra.mxu0 0.0
  %4231 = vmatprep.subr.mxu0 0.0
  %4232 = vmatpush1.msra.mxu0 0.0
  %4233 = vmatprep.subr.mxu0 0.0
  %4234 = vmatpush1.msra.mxu0 0.0
  %4235 = vmatprep.subr.mxu0 0.0
  %4236 = vmatpush1.msra.mxu0 0.0
  %4237 = vmatprep.subr.mxu0 0.0
  %4238 = vmatpush1.msra.mxu0 0.0
  %4239 = vmatprep.subr.mxu0 0.0
  %4240 = vmatpush1.msra.mxu0 0.0
  %4241 = vmatprep.subr.mxu0 0.0
  %4242 = vmatpush1.msra.mxu0 0.0
  %4243 = vmatprep.subr.mxu0 0.0
  %4244 = vmatpush1.msra.mxu0 0.0
  %4245 = vmatprep.mubr.f32.mxu0 0.0
  %4246 = vmatmul.mubr.f32.gmra.mrb[0].mxu0 %v4179
  %v4247 = vpop.f32.mrb[0].mxu0
  %v4248 = vadd.f32 %v2958, %v4247
  %v4249 = vpop.f32.mrb[0].mxu0
  %4250 = vdwg.mxu0
  %4251 = vmatprep.subr.mxu0 0.0
  %4252 = vmatpush1.msra.mxu0 %v905
  %4253 = vmatprep.subr.mxu0 0.0
  %4254 = vmatpush1.msra.mxu0 %v906
  %4255 = vmatprep.subr.mxu0 0.0
  %4256 = vmatpush1.msra.mxu0 %v907
  %4257 = vmatprep.subr.mxu0 0.0
  %4258 = vmatpush1.msra.mxu0 %v908
  %4259 = vmatprep.subr.mxu0 0.0
  %4260 = vmatpush1.msra.mxu0 0.0
  %4261 = vmatprep.subr.mxu0 0.0
  %4262 = vmatpush1.msra.mxu0 0.0
  %4263 = vmatprep.subr.mxu0 0.0
  %4264 = vmatpush1.msra.mxu0 0.0
  %4265 = vmatprep.subr.mxu0 0.0
  %4266 = vmatpush1.msra.mxu0 0.0
  %4267 = vmatprep.subr.mxu0 0.0
  %4268 = vmatpush1.msra.mxu0 0.0
  %4269 = vmatprep.subr.mxu0 0.0
  %4270 = vmatpush1.msra.mxu0 0.0
  %4271 = vmatprep.subr.mxu0 0.0
  %4272 = vmatpush1.msra.mxu0 0.0
  %4273 = vmatprep.subr.mxu0 0.0
  %4274 = vmatpush1.msra.mxu0 0.0
  %4275 = vmatprep.subr.mxu0 0.0
  %4276 = vmatpush1.msra.mxu0 0.0
  %4277 = vmatprep.subr.mxu0 0.0
  %4278 = vmatpush1.msra.mxu0 0.0
  %4279 = vmatprep.subr.mxu0 0.0
  %4280 = vmatpush1.msra.mxu0 0.0
  %4281 = vmatprep.subr.mxu0 0.0
  %4282 = vmatpush1.msra.mxu0 0.0
  %4283 = vmatprep.subr.mxu0 0.0
  %4284 = vmatpush1.msra.mxu0 0.0
  %4285 = vmatprep.subr.mxu0 0.0
  %4286 = vmatpush1.msra.mxu0 0.0
  %4287 = vmatprep.subr.mxu0 0.0
  %4288 = vmatpush1.msra.mxu0 0.0
  %4289 = vmatprep.subr.mxu0 0.0
  %4290 = vmatpush1.msra.mxu0 0.0
  %4291 = vmatprep.subr.mxu0 0.0
  %4292 = vmatpush1.msra.mxu0 0.0
  %4293 = vmatprep.subr.mxu0 0.0
  %4294 = vmatpush1.msra.mxu0 0.0
  %4295 = vmatprep.subr.mxu0 0.0
  %4296 = vmatpush1.msra.mxu0 0.0
  %4297 = vmatprep.subr.mxu0 0.0
  %4298 = vmatpush1.msra.mxu0 0.0
  %4299 = vmatprep.subr.mxu0 0.0
  %4300 = vmatpush1.msra.mxu0 0.0
  %4301 = vmatprep.subr.mxu0 0.0
  %4302 = vmatpush1.msra.mxu0 0.0
  %4303 = vmatprep.subr.mxu0 0.0
  %4304 = vmatpush1.msra.mxu0 0.0
  %4305 = vmatprep.subr.mxu0 0.0
  %4306 = vmatpush1.msra.mxu0 0.0
  %4307 = vmatprep.subr.mxu0 0.0
  %4308 = vmatpush1.msra.mxu0 0.0
  %4309 = vmatprep.subr.mxu0 0.0
  %4310 = vmatpush1.msra.mxu0 0.0
  %4311 = vmatprep.subr.mxu0 0.0
  %4312 = vmatpush1.msra.mxu0 0.0
  %4313 = vmatprep.subr.mxu0 0.0
  %4314 = vmatpush1.msra.mxu0 0.0
  %4315 = vmatprep.mubr.f32.mxu0 0.0
  %4316 = vmatmul.mubr.f32.gmra.mrb[0].mxu0 %v4179
  %v4317 = vpop.f32.mrb[0].mxu0
  %v4318 = vadd.f32 %v3037, %v4317
  %v4319 = vpop.f32.mrb[0].mxu0
  %4320 = vdwg.mxu0
  %4321 = vmatprep.subr.mxu0 0.0
  %4322 = vmatpush1.msra.mxu0 %v910
  %4323 = vmatprep.subr.mxu0 0.0
  %4324 = vmatpush1.msra.mxu0 %v911
  %4325 = vmatprep.subr.mxu0 0.0
  %4326 = vmatpush1.msra.mxu0 %v912
  %4327 = vmatprep.subr.mxu0 0.0
  %4328 = vmatpush1.msra.mxu0 %v913
  %4329 = vmatprep.subr.mxu0 0.0
  %4330 = vmatpush1.msra.mxu0 0.0
  %4331 = vmatprep.subr.mxu0 0.0
  %4332 = vmatpush1.msra.mxu0 0.0
  %4333 = vmatprep.subr.mxu0 0.0
  %4334 = vmatpush1.msra.mxu0 0.0
  %4335 = vmatprep.subr.mxu0 0.0
  %4336 = vmatpush1.msra.mxu0 0.0
  %4337 = vmatprep.subr.mxu0 0.0
  %4338 = vmatpush1.msra.mxu0 0.0
  %4339 = vmatprep.subr.mxu0 0.0
  %4340 = vmatpush1.msra.mxu0 0.0
  %4341 = vmatprep.subr.mxu0 0.0
  %4342 = vmatpush1.msra.mxu0 0.0
  %4343 = vmatprep.subr.mxu0 0.0
  %4344 = vmatpush1.msra.mxu0 0.0
  %4345 = vmatprep.subr.mxu0 0.0
  %4346 = vmatpush1.msra.mxu0 0.0
  %4347 = vmatprep.subr.mxu0 0.0
  %4348 = vmatpush1.msra.mxu0 0.0
  %4349 = vmatprep.subr.mxu0 0.0
  %4350 = vmatpush1.msra.mxu0 0.0
  %4351 = vmatprep.subr.mxu0 0.0
  %4352 = vmatpush1.msra.mxu0 0.0
  %4353 = vmatprep.subr.mxu0 0.0
  %4354 = vmatpush1.msra.mxu0 0.0
  %4355 = vmatprep.subr.mxu0 0.0
  %4356 = vmatpush1.msra.mxu0 0.0
  %4357 = vmatprep.subr.mxu0 0.0
  %4358 = vmatpush1.msra.mxu0 0.0
  %4359 = vmatprep.subr.mxu0 0.0
  %4360 = vmatpush1.msra.mxu0 0.0
  %4361 = vmatprep.subr.mxu0 0.0
  %4362 = vmatpush1.msra.mxu0 0.0
  %4363 = vmatprep.subr.mxu0 0.0
  %4364 = vmatpush1.msra.mxu0 0.0
  %4365 = vmatprep.subr.mxu0 0.0
  %4366 = vmatpush1.msra.mxu0 0.0
  %4367 = vmatprep.subr.mxu0 0.0
  %4368 = vmatpush1.msra.mxu0 0.0
  %4369 = vmatprep.subr.mxu0 0.0
  %4370 = vmatpush1.msra.mxu0 0.0
  %4371 = vmatprep.subr.mxu0 0.0
  %4372 = vmatpush1.msra.mxu0 0.0
  %4373 = vmatprep.subr.mxu0 0.0
  %4374 = vmatpush1.msra.mxu0 0.0
  %4375 = vmatprep.subr.mxu0 0.0
  %4376 = vmatpush1.msra.mxu0 0.0
  %4377 = vmatprep.subr.mxu0 0.0
  %4378 = vmatpush1.msra.mxu0 0.0
  %4379 = vmatprep.subr.mxu0 0.0
  %4380 = vmatpush1.msra.mxu0 0.0
  %4381 = vmatprep.subr.mxu0 0.0
  %4382 = vmatpush1.msra.mxu0 0.0
  %4383 = vmatprep.subr.mxu0 0.0
  %4384 = vmatpush1.msra.mxu0 0.0
  %4385 = vmatprep.mubr.f32.mxu0 0.0
  %4386 = vmatmul.mubr.f32.gmra.mrb[0].mxu0 %v4179
  %v4387 = vpop.f32.mrb[0].mxu0
  %v4388 = vadd.f32 %v3113, %v4387
  %v4389 = vpop.f32.mrb[0].mxu0
  %4390 = vdwg.mxu0
  %s4391 = scalar_lea.vmem [#allocation5], 40
  %v4392 = vld [vmem:[%s4391] sm:$0xff]
  %v4393 = vadd.f32 %v4392, %v4248
  %v4394 = vxor.u32 %v4393, 2147483648
  %v4395 = vmul.f32 %v4394, 1.442695
  %v4396 = vpow.pop %v4395
  %v4397 = vadd.f32 %v4396, 1.0
  %v4398 = vrcp.pop %v4397
  %v4399 = vmul.f32 1.0, %v4398
  %s4400 = scalar_lea.vmem [#allocation6], 40
  %v4401 = vld [vmem:[%s4400] sm:$0xff]
  %v4402 = vadd.f32 %v4401, %v4318
  %v4403 = vxor.u32 %v4402, 2147483648
  %v4404 = vmul.f32 %v4403, 1.442695
  %v4405 = vpow.pop %v4404
  %v4406 = vadd.f32 %v4405, 1.0
  %v4407 = vrcp.pop %v4406
  %v4408 = vmul.f32 1.0, %v4407
  %s4409 = scalar_lea.vmem [#allocation7], 40
  %v4410 = vld [vmem:[%s4409] sm:$0xff]
  %v4411 = vmul.f32 %v4399, %v4388
  %v4412 = vadd.f32 %v4410, %v4411
  %v4413 = vtanh.pop %v4412
  %v4414 = vsub.f32 1.0, %v4408
  %v4415 = vmul.f32 %v4414, %v4413
  %v4416 = vmul.f32 %v4408, %v4175
  %v4417 = vadd.f32 %v4415, %v4416
  %s4418 = scalar_lea.vmem [#allocation9], 40
  %4419 = vst.msk [vmem:[%s4418] sm:$0xff] %vm91, %v4417
  %v4421 = vsel %vm91, %v4417, 0
  %4423 = vmatprep.subr.mxu0 0.0
  %4424 = vmatpush1.msra.mxu0 %v900
  %4425 = vmatprep.subr.mxu0 0.0
  %4426 = vmatpush1.msra.mxu0 %v901
  %4427 = vmatprep.subr.mxu0 0.0
  %4428 = vmatpush1.msra.mxu0 %v902
  %4429 = vmatprep.subr.mxu0 0.0
  %4430 = vmatpush1.msra.mxu0 %v903
  %4431 = vmatprep.subr.mxu0 0.0
  %4432 = vmatpush1.msra.mxu0 0.0
  %4433 = vmatprep.subr.mxu0 0.0
  %4434 = vmatpush1.msra.mxu0 0.0
  %4435 = vmatprep.subr.mxu0 0.0
  %4436 = vmatpush1.msra.mxu0 0.0
  %4437 = vmatprep.subr.mxu0 0.0
  %4438 = vmatpush1.msra.mxu0 0.0
  %4439 = vmatprep.subr.mxu0 0.0
  %4440 = vmatpush1.msra.mxu0 0.0
  %4441 = vmatprep.subr.mxu0 0.0
  %4442 = vmatpush1.msra.mxu0 0.0
  %4443 = vmatprep.subr.mxu0 0.0
  %4444 = vmatpush1.msra.mxu0 0.0
  %4445 = vmatprep.subr.mxu0 0.0
  %4446 = vmatpush1.msra.mxu0 0.0
  %4447 = vmatprep.subr.mxu0 0.0
  %4448 = vmatpush1.msra.mxu0 0.0
  %4449 = vmatprep.subr.mxu0 0.0
  %4450 = vmatpush1.msra.mxu0 0.0
  %4451 = vmatprep.subr.mxu0 0.0
  %4452 = vmatpush1.msra.mxu0 0.0
  %4453 = vmatprep.subr.mxu0 0.0
  %4454 = vmatpush1.msra.mxu0 0.0
  %4455 = vmatprep.subr.mxu0 0.0
  %4456 = vmatpush1.msra.mxu0 0.0
  %4457 = vmatprep.subr.mxu0 0.0
  %4458 = vmatpush1.msra.mxu0 0.0
  %4459 = vmatprep.subr.mxu0 0.0
  %4460 = vmatpush1.msra.mxu0 0.0
  %4461 = vmatprep.subr.mxu0 0.0
  %4462 = vmatpush1.msra.mxu0 0.0
  %4463 = vmatprep.subr.mxu0 0.0
  %4464 = vmatpush1.msra.mxu0 0.0
  %4465 = vmatprep.subr.mxu0 0.0
  %4466 = vmatpush1.msra.mxu0 0.0
  %4467 = vmatprep.subr.mxu0 0.0
  %4468 = vmatpush1.msra.mxu0 0.0
  %4469 = vmatprep.subr.mxu0 0.0
  %4470 = vmatpush1.msra.mxu0 0.0
  %4471 = vmatprep.subr.mxu0 0.0
  %4472 = vmatpush1.msra.mxu0 0.0
  %4473 = vmatprep.subr.mxu0 0.0
  %4474 = vmatpush1.msra.mxu0 0.0
  %4475 = vmatprep.subr.mxu0 0.0
  %4476 = vmatpush1.msra.mxu0 0.0
  %4477 = vmatprep.subr.mxu0 0.0
  %4478 = vmatpush1.msra.mxu0 0.0
  %4479 = vmatprep.subr.mxu0 0.0
  %4480 = vmatpush1.msra.mxu0 0.0
  %4481 = vmatprep.subr.mxu0 0.0
  %4482 = vmatpush1.msra.mxu0 0.0
  %4483 = vmatprep.subr.mxu0 0.0
  %4484 = vmatpush1.msra.mxu0 0.0
  %4485 = vmatprep.subr.mxu0 0.0
  %4486 = vmatpush1.msra.mxu0 0.0
  %4487 = vmatprep.mubr.f32.mxu0 0.0
  %4488 = vmatmul.mubr.f32.gmra.mrb[0].mxu0 %v4421
  %v4489 = vpop.f32.mrb[0].mxu0
  %v4490 = vadd.f32 %v2958, %v4489
  %v4491 = vpop.f32.mrb[0].mxu0
  %4492 = vdwg.mxu0
  %4493 = vmatprep.subr.mxu0 0.0
  %4494 = vmatpush1.msra.mxu0 %v905
  %4495 = vmatprep.subr.mxu0 0.0
  %4496 = vmatpush1.msra.mxu0 %v906
  %4497 = vmatprep.subr.mxu0 0.0
  %4498 = vmatpush1.msra.mxu0 %v907
  %4499 = vmatprep.subr.mxu0 0.0
  %4500 = vmatpush1.msra.mxu0 %v908
  %4501 = vmatprep.subr.mxu0 0.0
  %4502 = vmatpush1.msra.mxu0 0.0
  %4503 = vmatprep.subr.mxu0 0.0
  %4504 = vmatpush1.msra.mxu0 0.0
  %4505 = vmatprep.subr.mxu0 0.0
  %4506 = vmatpush1.msra.mxu0 0.0
  %4507 = vmatprep.subr.mxu0 0.0
  %4508 = vmatpush1.msra.mxu0 0.0
  %4509 = vmatprep.subr.mxu0 0.0
  %4510 = vmatpush1.msra.mxu0 0.0
  %4511 = vmatprep.subr.mxu0 0.0
  %4512 = vmatpush1.msra.mxu0 0.0
  %4513 = vmatprep.subr.mxu0 0.0
  %4514 = vmatpush1.msra.mxu0 0.0
  %4515 = vmatprep.subr.mxu0 0.0
  %4516 = vmatpush1.msra.mxu0 0.0
  %4517 = vmatprep.subr.mxu0 0.0
  %4518 = vmatpush1.msra.mxu0 0.0
  %4519 = vmatprep.subr.mxu0 0.0
  %4520 = vmatpush1.msra.mxu0 0.0
  %4521 = vmatprep.subr.mxu0 0.0
  %4522 = vmatpush1.msra.mxu0 0.0
  %4523 = vmatprep.subr.mxu0 0.0
  %4524 = vmatpush1.msra.mxu0 0.0
  %4525 = vmatprep.subr.mxu0 0.0
  %4526 = vmatpush1.msra.mxu0 0.0
  %4527 = vmatprep.subr.mxu0 0.0
  %4528 = vmatpush1.msra.mxu0 0.0
  %4529 = vmatprep.subr.mxu0 0.0
  %4530 = vmatpush1.msra.mxu0 0.0
  %4531 = vmatprep.subr.mxu0 0.0
  %4532 = vmatpush1.msra.mxu0 0.0
  %4533 = vmatprep.subr.mxu0 0.0
  %4534 = vmatpush1.msra.mxu0 0.0
  %4535 = vmatprep.subr.mxu0 0.0
  %4536 = vmatpush1.msra.mxu0 0.0
  %4537 = vmatprep.subr.mxu0 0.0
  %4538 = vmatpush1.msra.mxu0 0.0
  %4539 = vmatprep.subr.mxu0 0.0
  %4540 = vmatpush1.msra.mxu0 0.0
  %4541 = vmatprep.subr.mxu0 0.0
  %4542 = vmatpush1.msra.mxu0 0.0
  %4543 = vmatprep.subr.mxu0 0.0
  %4544 = vmatpush1.msra.mxu0 0.0
  %4545 = vmatprep.subr.mxu0 0.0
  %4546 = vmatpush1.msra.mxu0 0.0
  %4547 = vmatprep.subr.mxu0 0.0
  %4548 = vmatpush1.msra.mxu0 0.0
  %4549 = vmatprep.subr.mxu0 0.0
  %4550 = vmatpush1.msra.mxu0 0.0
  %4551 = vmatprep.subr.mxu0 0.0
  %4552 = vmatpush1.msra.mxu0 0.0
  %4553 = vmatprep.subr.mxu0 0.0
  %4554 = vmatpush1.msra.mxu0 0.0
  %4555 = vmatprep.subr.mxu0 0.0
  %4556 = vmatpush1.msra.mxu0 0.0
  %4557 = vmatprep.mubr.f32.mxu0 0.0
  %4558 = vmatmul.mubr.f32.gmra.mrb[0].mxu0 %v4421
  %v4559 = vpop.f32.mrb[0].mxu0
  %v4560 = vadd.f32 %v3037, %v4559
  %v4561 = vpop.f32.mrb[0].mxu0
  %4562 = vdwg.mxu0
  %4563 = vmatprep.subr.mxu0 0.0
  %4564 = vmatpush1.msra.mxu0 %v910
  %4565 = vmatprep.subr.mxu0 0.0
  %4566 = vmatpush1.msra.mxu0 %v911
  %4567 = vmatprep.subr.mxu0 0.0
  %4568 = vmatpush1.msra.mxu0 %v912
  %4569 = vmatprep.subr.mxu0 0.0
  %4570 = vmatpush1.msra.mxu0 %v913
  %4571 = vmatprep.subr.mxu0 0.0
  %4572 = vmatpush1.msra.mxu0 0.0
  %4573 = vmatprep.subr.mxu0 0.0
  %4574 = vmatpush1.msra.mxu0 0.0
  %4575 = vmatprep.subr.mxu0 0.0
  %4576 = vmatpush1.msra.mxu0 0.0
  %4577 = vmatprep.subr.mxu0 0.0
  %4578 = vmatpush1.msra.mxu0 0.0
  %4579 = vmatprep.subr.mxu0 0.0
  %4580 = vmatpush1.msra.mxu0 0.0
  %4581 = vmatprep.subr.mxu0 0.0
  %4582 = vmatpush1.msra.mxu0 0.0
  %4583 = vmatprep.subr.mxu0 0.0
  %4584 = vmatpush1.msra.mxu0 0.0
  %4585 = vmatprep.subr.mxu0 0.0
  %4586 = vmatpush1.msra.mxu0 0.0
  %4587 = vmatprep.subr.mxu0 0.0
  %4588 = vmatpush1.msra.mxu0 0.0
  %4589 = vmatprep.subr.mxu0 0.0
  %4590 = vmatpush1.msra.mxu0 0.0
  %4591 = vmatprep.subr.mxu0 0.0
  %4592 = vmatpush1.msra.mxu0 0.0
  %4593 = vmatprep.subr.mxu0 0.0
  %4594 = vmatpush1.msra.mxu0 0.0
  %4595 = vmatprep.subr.mxu0 0.0
  %4596 = vmatpush1.msra.mxu0 0.0
  %4597 = vmatprep.subr.mxu0 0.0
  %4598 = vmatpush1.msra.mxu0 0.0
  %4599 = vmatprep.subr.mxu0 0.0
  %4600 = vmatpush1.msra.mxu0 0.0
  %4601 = vmatprep.subr.mxu0 0.0
  %4602 = vmatpush1.msra.mxu0 0.0
  %4603 = vmatprep.subr.mxu0 0.0
  %4604 = vmatpush1.msra.mxu0 0.0
  %4605 = vmatprep.subr.mxu0 0.0
  %4606 = vmatpush1.msra.mxu0 0.0
  %4607 = vmatprep.subr.mxu0 0.0
  %4608 = vmatpush1.msra.mxu0 0.0
  %4609 = vmatprep.subr.mxu0 0.0
  %4610 = vmatpush1.msra.mxu0 0.0
  %4611 = vmatprep.subr.mxu0 0.0
  %4612 = vmatpush1.msra.mxu0 0.0
  %4613 = vmatprep.subr.mxu0 0.0
  %4614 = vmatpush1.msra.mxu0 0.0
  %4615 = vmatprep.subr.mxu0 0.0
  %4616 = vmatpush1.msra.mxu0 0.0
  %4617 = vmatprep.subr.mxu0 0.0
  %4618 = vmatpush1.msra.mxu0 0.0
  %4619 = vmatprep.subr.mxu0 0.0
  %4620 = vmatpush1.msra.mxu0 0.0
  %4621 = vmatprep.subr.mxu0 0.0
  %4622 = vmatpush1.msra.mxu0 0.0
  %4623 = vmatprep.subr.mxu0 0.0
  %4624 = vmatpush1.msra.mxu0 0.0
  %4625 = vmatprep.subr.mxu0 0.0
  %4626 = vmatpush1.msra.mxu0 0.0
  %4627 = vmatprep.mubr.f32.mxu0 0.0
  %4628 = vmatmul.mubr.f32.gmra.mrb[0].mxu0 %v4421
  %v4629 = vpop.f32.mrb[0].mxu0
  %v4630 = vadd.f32 %v3113, %v4629
  %v4631 = vpop.f32.mrb[0].mxu0
  %4632 = vdwg.mxu0
  %s4633 = scalar_lea.vmem [#allocation5], 48
  %v4634 = vld [vmem:[%s4633] sm:$0xff]
  %v4635 = vadd.f32 %v4634, %v4490
  %v4636 = vxor.u32 %v4635, 2147483648
  %v4637 = vmul.f32 %v4636, 1.442695
  %v4638 = vpow.pop %v4637
  %v4639 = vadd.f32 %v4638, 1.0
  %v4640 = vrcp.pop %v4639
  %v4641 = vmul.f32 1.0, %v4640
  %s4642 = scalar_lea.vmem [#allocation6], 48
  %v4643 = vld [vmem:[%s4642] sm:$0xff]
  %v4644 = vadd.f32 %v4643, %v4560
  %v4645 = vxor.u32 %v4644, 2147483648
  %v4646 = vmul.f32 %v4645, 1.442695
  %v4647 = vpow.pop %v4646
  %v4648 = vadd.f32 %v4647, 1.0
  %v4649 = vrcp.pop %v4648
  %v4650 = vmul.f32 1.0, %v4649
  %s4651 = scalar_lea.vmem [#allocation7], 48
  %v4652 = vld [vmem:[%s4651] sm:$0xff]
  %v4653 = vmul.f32 %v4641, %v4630
  %v4654 = vadd.f32 %v4652, %v4653
  %v4655 = vtanh.pop %v4654
  %v4656 = vsub.f32 1.0, %v4650
  %v4657 = vmul.f32 %v4656, %v4655
  %v4658 = vmul.f32 %v4650, %v4417
  %v4659 = vadd.f32 %v4657, %v4658
  %s4660 = scalar_lea.vmem [#allocation9], 48
  %4661 = vst.msk [vmem:[%s4660] sm:$0xff] %vm91, %v4659
  %v4663 = vsel %vm91, %v4659, 0
  %4665 = vmatprep.subr.mxu0 0.0
  %4666 = vmatpush1.msra.mxu0 %v900
  %4667 = vmatprep.subr.mxu0 0.0
  %4668 = vmatpush1.msra.mxu0 %v901
  %4669 = vmatprep.subr.mxu0 0.0
  %4670 = vmatpush1.msra.mxu0 %v902
  %4671 = vmatprep.subr.mxu0 0.0
  %4672 = vmatpush1.msra.mxu0 %v903
  %4673 = vmatprep.subr.mxu0 0.0
  %4674 = vmatpush1.msra.mxu0 0.0
  %4675 = vmatprep.subr.mxu0 0.0
  %4676 = vmatpush1.msra.mxu0 0.0
  %4677 = vmatprep.subr.mxu0 0.0
  %4678 = vmatpush1.msra.mxu0 0.0
  %4679 = vmatprep.subr.mxu0 0.0
  %4680 = vmatpush1.msra.mxu0 0.0
  %4681 = vmatprep.subr.mxu0 0.0
  %4682 = vmatpush1.msra.mxu0 0.0
  %4683 = vmatprep.subr.mxu0 0.0
  %4684 = vmatpush1.msra.mxu0 0.0
  %4685 = vmatprep.subr.mxu0 0.0
  %4686 = vmatpush1.msra.mxu0 0.0
  %4687 = vmatprep.subr.mxu0 0.0
  %4688 = vmatpush1.msra.mxu0 0.0
  %4689 = vmatprep.subr.mxu0 0.0
  %4690 = vmatpush1.msra.mxu0 0.0
  %4691 = vmatprep.subr.mxu0 0.0
  %4692 = vmatpush1.msra.mxu0 0.0
  %4693 = vmatprep.subr.mxu0 0.0
  %4694 = vmatpush1.msra.mxu0 0.0
  %4695 = vmatprep.subr.mxu0 0.0
  %4696 = vmatpush1.msra.mxu0 0.0
  %4697 = vmatprep.subr.mxu0 0.0
  %4698 = vmatpush1.msra.mxu0 0.0
  %4699 = vmatprep.subr.mxu0 0.0
  %4700 = vmatpush1.msra.mxu0 0.0
  %4701 = vmatprep.subr.mxu0 0.0
  %4702 = vmatpush1.msra.mxu0 0.0
  %4703 = vmatprep.subr.mxu0 0.0
  %4704 = vmatpush1.msra.mxu0 0.0
  %4705 = vmatprep.subr.mxu0 0.0
  %4706 = vmatpush1.msra.mxu0 0.0
  %4707 = vmatprep.subr.mxu0 0.0
  %4708 = vmatpush1.msra.mxu0 0.0
  %4709 = vmatprep.subr.mxu0 0.0
  %4710 = vmatpush1.msra.mxu0 0.0
  %4711 = vmatprep.subr.mxu0 0.0
  %4712 = vmatpush1.msra.mxu0 0.0
  %4713 = vmatprep.subr.mxu0 0.0
  %4714 = vmatpush1.msra.mxu0 0.0
  %4715 = vmatprep.subr.mxu0 0.0
  %4716 = vmatpush1.msra.mxu0 0.0
  %4717 = vmatprep.subr.mxu0 0.0
  %4718 = vmatpush1.msra.mxu0 0.0
  %4719 = vmatprep.subr.mxu0 0.0
  %4720 = vmatpush1.msra.mxu0 0.0
  %4721 = vmatprep.subr.mxu0 0.0
  %4722 = vmatpush1.msra.mxu0 0.0
  %4723 = vmatprep.subr.mxu0 0.0
  %4724 = vmatpush1.msra.mxu0 0.0
  %4725 = vmatprep.subr.mxu0 0.0
  %4726 = vmatpush1.msra.mxu0 0.0
  %4727 = vmatprep.subr.mxu0 0.0
  %4728 = vmatpush1.msra.mxu0 0.0
  %4729 = vmatprep.mubr.f32.mxu0 0.0
  %4730 = vmatmul.mubr.f32.gmra.mrb[0].mxu0 %v4663
  %v4731 = vpop.f32.mrb[0].mxu0
  %v4732 = vadd.f32 %v2958, %v4731
  %v4733 = vpop.f32.mrb[0].mxu0
  %4734 = vdwg.mxu0
  %4735 = vmatprep.subr.mxu0 0.0
  %4736 = vmatpush1.msra.mxu0 %v905
  %4737 = vmatprep.subr.mxu0 0.0
  %4738 = vmatpush1.msra.mxu0 %v906
  %4739 = vmatprep.subr.mxu0 0.0
  %4740 = vmatpush1.msra.mxu0 %v907
  %4741 = vmatprep.subr.mxu0 0.0
  %4742 = vmatpush1.msra.mxu0 %v908
  %4743 = vmatprep.subr.mxu0 0.0
  %4744 = vmatpush1.msra.mxu0 0.0
  %4745 = vmatprep.subr.mxu0 0.0
  %4746 = vmatpush1.msra.mxu0 0.0
  %4747 = vmatprep.subr.mxu0 0.0
  %4748 = vmatpush1.msra.mxu0 0.0
  %4749 = vmatprep.subr.mxu0 0.0
  %4750 = vmatpush1.msra.mxu0 0.0
  %4751 = vmatprep.subr.mxu0 0.0
  %4752 = vmatpush1.msra.mxu0 0.0
  %4753 = vmatprep.subr.mxu0 0.0
  %4754 = vmatpush1.msra.mxu0 0.0
  %4755 = vmatprep.subr.mxu0 0.0
  %4756 = vmatpush1.msra.mxu0 0.0
  %4757 = vmatprep.subr.mxu0 0.0
  %4758 = vmatpush1.msra.mxu0 0.0
  %4759 = vmatprep.subr.mxu0 0.0
  %4760 = vmatpush1.msra.mxu0 0.0
  %4761 = vmatprep.subr.mxu0 0.0
  %4762 = vmatpush1.msra.mxu0 0.0
  %4763 = vmatprep.subr.mxu0 0.0
  %4764 = vmatpush1.msra.mxu0 0.0
  %4765 = vmatprep.subr.mxu0 0.0
  %4766 = vmatpush1.msra.mxu0 0.0
  %4767 = vmatprep.subr.mxu0 0.0
  %4768 = vmatpush1.msra.mxu0 0.0
  %4769 = vmatprep.subr.mxu0 0.0
  %4770 = vmatpush1.msra.mxu0 0.0
  %4771 = vmatprep.subr.mxu0 0.0
  %4772 = vmatpush1.msra.mxu0 0.0
  %4773 = vmatprep.subr.mxu0 0.0
  %4774 = vmatpush1.msra.mxu0 0.0
  %4775 = vmatprep.subr.mxu0 0.0
  %4776 = vmatpush1.msra.mxu0 0.0
  %4777 = vmatprep.subr.mxu0 0.0
  %4778 = vmatpush1.msra.mxu0 0.0
  %4779 = vmatprep.subr.mxu0 0.0
  %4780 = vmatpush1.msra.mxu0 0.0
  %4781 = vmatprep.subr.mxu0 0.0
  %4782 = vmatpush1.msra.mxu0 0.0
  %4783 = vmatprep.subr.mxu0 0.0
  %4784 = vmatpush1.msra.mxu0 0.0
  %4785 = vmatprep.subr.mxu0 0.0
  %4786 = vmatpush1.msra.mxu0 0.0
  %4787 = vmatprep.subr.mxu0 0.0
  %4788 = vmatpush1.msra.mxu0 0.0
  %4789 = vmatprep.subr.mxu0 0.0
  %4790 = vmatpush1.msra.mxu0 0.0
  %4791 = vmatprep.subr.mxu0 0.0
  %4792 = vmatpush1.msra.mxu0 0.0
  %4793 = vmatprep.subr.mxu0 0.0
  %4794 = vmatpush1.msra.mxu0 0.0
  %4795 = vmatprep.subr.mxu0 0.0
  %4796 = vmatpush1.msra.mxu0 0.0
  %4797 = vmatprep.subr.mxu0 0.0
  %4798 = vmatpush1.msra.mxu0 0.0
  %4799 = vmatprep.mubr.f32.mxu0 0.0
  %4800 = vmatmul.mubr.f32.gmra.mrb[0].mxu0 %v4663
  %v4801 = vpop.f32.mrb[0].mxu0
  %v4802 = vadd.f32 %v3037, %v4801
  %v4803 = vpop.f32.mrb[0].mxu0
  %4804 = vdwg.mxu0
  %4805 = vmatprep.subr.mxu0 0.0
  %4806 = vmatpush1.msra.mxu0 %v910
  %4807 = vmatprep.subr.mxu0 0.0
  %4808 = vmatpush1.msra.mxu0 %v911
  %4809 = vmatprep.subr.mxu0 0.0
  %4810 = vmatpush1.msra.mxu0 %v912
  %4811 = vmatprep.subr.mxu0 0.0
  %4812 = vmatpush1.msra.mxu0 %v913
  %4813 = vmatprep.subr.mxu0 0.0
  %4814 = vmatpush1.msra.mxu0 0.0
  %4815 = vmatprep.subr.mxu0 0.0
  %4816 = vmatpush1.msra.mxu0 0.0
  %4817 = vmatprep.subr.mxu0 0.0
  %4818 = vmatpush1.msra.mxu0 0.0
  %4819 = vmatprep.subr.mxu0 0.0
  %4820 = vmatpush1.msra.mxu0 0.0
  %4821 = vmatprep.subr.mxu0 0.0
  %4822 = vmatpush1.msra.mxu0 0.0
  %4823 = vmatprep.subr.mxu0 0.0
  %4824 = vmatpush1.msra.mxu0 0.0
  %4825 = vmatprep.subr.mxu0 0.0
  %4826 = vmatpush1.msra.mxu0 0.0
  %4827 = vmatprep.subr.mxu0 0.0
  %4828 = vmatpush1.msra.mxu0 0.0
  %4829 = vmatprep.subr.mxu0 0.0
  %4830 = vmatpush1.msra.mxu0 0.0
  %4831 = vmatprep.subr.mxu0 0.0
  %4832 = vmatpush1.msra.mxu0 0.0
  %4833 = vmatprep.subr.mxu0 0.0
  %4834 = vmatpush1.msra.mxu0 0.0
  %4835 = vmatprep.subr.mxu0 0.0
  %4836 = vmatpush1.msra.mxu0 0.0
  %4837 = vmatprep.subr.mxu0 0.0
  %4838 = vmatpush1.msra.mxu0 0.0
  %4839 = vmatprep.subr.mxu0 0.0
  %4840 = vmatpush1.msra.mxu0 0.0
  %4841 = vmatprep.subr.mxu0 0.0
  %4842 = vmatpush1.msra.mxu0 0.0
  %4843 = vmatprep.subr.mxu0 0.0
  %4844 = vmatpush1.msra.mxu0 0.0
  %4845 = vmatprep.subr.mxu0 0.0
  %4846 = vmatpush1.msra.mxu0 0.0
  %4847 = vmatprep.subr.mxu0 0.0
  %4848 = vmatpush1.msra.mxu0 0.0
  %4849 = vmatprep.subr.mxu0 0.0
  %4850 = vmatpush1.msra.mxu0 0.0
  %4851 = vmatprep.subr.mxu0 0.0
  %4852 = vmatpush1.msra.mxu0 0.0
  %4853 = vmatprep.subr.mxu0 0.0
  %4854 = vmatpush1.msra.mxu0 0.0
  %4855 = vmatprep.subr.mxu0 0.0
  %4856 = vmatpush1.msra.mxu0 0.0
  %4857 = vmatprep.subr.mxu0 0.0
  %4858 = vmatpush1.msra.mxu0 0.0
  %4859 = vmatprep.subr.mxu0 0.0
  %4860 = vmatpush1.msra.mxu0 0.0
  %4861 = vmatprep.subr.mxu0 0.0
  %4862 = vmatpush1.msra.mxu0 0.0
  %4863 = vmatprep.subr.mxu0 0.0
  %4864 = vmatpush1.msra.mxu0 0.0
  %4865 = vmatprep.subr.mxu0 0.0
  %4866 = vmatpush1.msra.mxu0 0.0
  %4867 = vmatprep.subr.mxu0 0.0
  %4868 = vmatpush1.msra.mxu0 0.0
  %4869 = vmatprep.mubr.f32.mxu0 0.0
  %4870 = vmatmul.mubr.f32.gmra.mrb[0].mxu0 %v4663
  %v4871 = vpop.f32.mrb[0].mxu0
  %v4872 = vadd.f32 %v3113, %v4871
  %v4873 = vpop.f32.mrb[0].mxu0
  %4874 = vdwg.mxu0
  %s4875 = scalar_lea.vmem [#allocation5], 56
  %v4876 = vld [vmem:[%s4875] sm:$0xff]
  %v4877 = vadd.f32 %v4876, %v4732
  %v4878 = vxor.u32 %v4877, 2147483648
  %v4879 = vmul.f32 %v4878, 1.442695
  %v4880 = vpow.pop %v4879
  %v4881 = vadd.f32 %v4880, 1.0
  %v4882 = vrcp.pop %v4881
  %v4883 = vmul.f32 1.0, %v4882
  %s4884 = scalar_lea.vmem [#allocation6], 56
  %v4885 = vld [vmem:[%s4884] sm:$0xff]
  %v4886 = vadd.f32 %v4885, %v4802
  %v4887 = vxor.u32 %v4886, 2147483648
  %v4888 = vmul.f32 %v4887, 1.442695
  %v4889 = vpow.pop %v4888
  %v4890 = vadd.f32 %v4889, 1.0
  %v4891 = vrcp.pop %v4890
  %v4892 = vmul.f32 1.0, %v4891
  %s4893 = scalar_lea.vmem [#allocation7], 56
  %v4894 = vld [vmem:[%s4893] sm:$0xff]
  %v4895 = vmul.f32 %v4883, %v4872
  %v4896 = vadd.f32 %v4894, %v4895
  %v4897 = vtanh.pop %v4896
  %v4898 = vsub.f32 1.0, %v4892
  %v4899 = vmul.f32 %v4898, %v4897
  %v4900 = vmul.f32 %v4892, %v4659
  %v4901 = vadd.f32 %v4899, %v4900
  %s4902 = scalar_lea.vmem [#allocation9], 56
  %4903 = vst.msk [vmem:[%s4902] sm:$0xff] %vm91, %v4901
  %4904 = vst.msk [vmem:[%s20] sm:$0xff] %vm91, %v4901
  %v4905 = vld [vmem:[#allocation8] sm:$0xff]
  %v4906 = vld [vmem:[#allocation8 + $0x8] sm:$0xff]
  %v4907 = vld [vmem:[#allocation8 + $0x10] sm:$0xff]
  %v4908 = vld [vmem:[#allocation8 + $0x18] sm:$0xff]
  %v4909 = vld [vmem:[#allocation8 + $0x20] sm:$0xff]
  %v4910 = vld [vmem:[#allocation8 + $0x28] sm:$0xff]
  %v4911 = vld [vmem:[#allocation8 + $0x30] sm:$0xff]
  %v4912 = vld [vmem:[#allocation8 + $0x38] sm:$0xff]
  %v4913 = vld [vmem:[#allocation9] sm:$0xff]
  %v4914 = vld [vmem:[#allocation9 + $0x8] sm:$0xff]
  %v4915 = vld [vmem:[#allocation9 + $0x10] sm:$0xff]
  %v4916 = vld [vmem:[#allocation9 + $0x18] sm:$0xff]
  %v4917 = vld [vmem:[#allocation9 + $0x20] sm:$0xff]
  %v4918 = vld [vmem:[#allocation9 + $0x28] sm:$0xff]
  %v4919 = vld [vmem:[#allocation9 + $0x30] sm:$0xff]
  %v4920 = vld [vmem:[#allocation9 + $0x38] sm:$0xff]
  %v4921 = vld [vmem:[%s2] sm:$0xff]
  %v4922 = vld [vmem:[%s2 + $0x8] sm:$0xff]
  %v4923 = vld [vmem:[%s2 + $0x10] sm:$0xff]
  %v4924 = vld [vmem:[%s2 + $0x18] sm:$0xff]
  %v4925 = vld [vmem:[%s2 + $0x20] sm:$0xff]
  %v4926 = vld [vmem:[%s2 + $0x28] sm:$0xff]
  %v4927 = vld [vmem:[%s2 + $0x30] sm:$0xff]
  %v4928 = vld [vmem:[%s2 + $0x38] sm:$0xff]
  %vm4929 = vcmask 523264
  %v4931 = vsel %vm4929, %v4921, 0
  %v4934 = vsel %vm4929, %v4922, 0
  %v4937 = vsel %vm4929, %v4923, 0
  %v4940 = vsel %vm4929, %v4924, 0
  %v4943 = vsel %vm4929, %v4925, 0
  %v4946 = vsel %vm4929, %v4926, 0
  %v4949 = vsel %vm4929, %v4927, 0
  %v4952 = vsel %vm4929, %v4928, 0
  %4954 = vmatprep.subr.mxu0 0.0
  %4955 = vmatpush1.msra.mxu0 %v4905
  %4956 = vmatprep.subr.mxu0 0.0
  %4957 = vmatpush1.msra.mxu0 %v4906
  %4958 = vmatprep.subr.mxu0 0.0
  %4959 = vmatpush1.msra.mxu0 %v4907
  %4960 = vmatprep.subr.mxu0 0.0
  %4961 = vmatpush1.msra.mxu0 %v4908
  %4962 = vmatprep.subr.mxu0 0.0
  %4963 = vmatpush1.msra.mxu0 %v4909
  %4964 = vmatprep.subr.mxu0 0.0
  %4965 = vmatpush1.msra.mxu0 %v4910
  %4966 = vmatprep.subr.mxu0 0.0
  %4967 = vmatpush1.msra.mxu0 %v4911
  %4968 = vmatprep.subr.mxu0 0.0
  %4969 = vmatpush1.msra.mxu0 %v4912
  %4970 = vmatprep.subr.mxu0 0.0
  %4971 = vmatpush1.msra.mxu0 0.0
  %4972 = vmatprep.subr.mxu0 0.0
  %4973 = vmatpush1.msra.mxu0 0.0
  %4974 = vmatprep.subr.mxu0 0.0
  %4975 = vmatpush1.msra.mxu0 0.0
  %4976 = vmatprep.subr.mxu0 0.0
  %4977 = vmatpush1.msra.mxu0 0.0
  %4978 = vmatprep.subr.mxu0 0.0
  %4979 = vmatpush1.msra.mxu0 0.0
  %4980 = vmatprep.subr.mxu0 0.0
  %4981 = vmatpush1.msra.mxu0 0.0
  %4982 = vmatprep.subr.mxu0 0.0
  %4983 = vmatpush1.msra.mxu0 0.0
  %4984 = vmatprep.subr.mxu0 0.0
  %4985 = vmatpush1.msra.mxu0 0.0
  %4986 = vmatprep.subr.mxu0 0.0
  %4987 = vmatpush1.msra.mxu0 0.0
  %4988 = vmatprep.subr.mxu0 0.0
  %4989 = vmatpush1.msra.mxu0 0.0
  %4990 = vmatprep.subr.mxu0 0.0
  %4991 = vmatpush1.msra.mxu0 0.0
  %4992 = vmatprep.subr.mxu0 0.0
  %4993 = vmatpush1.msra.mxu0 0.0
  %4994 = vmatprep.subr.mxu0 0.0
  %4995 = vmatpush1.msra.mxu0 0.0
  %4996 = vmatprep.subr.mxu0 0.0
  %4997 = vmatpush1.msra.mxu0 0.0
  %4998 = vmatprep.subr.mxu0 0.0
  %4999 = vmatpush1.msra.mxu0 0.0
  %5000 = vmatprep.subr.mxu0 0.0
  %5001 = vmatpush1.msra.mxu0 0.0
  %5002 = vmatprep.subr.mxu0 0.0
  %5003 = vmatpush1.msra.mxu0 0.0
  %5004 = vmatprep.subr.mxu0 0.0
  %5005 = vmatpush1.msra.mxu0 0.0
  %5006 = vmatprep.subr.mxu0 0.0
  %5007 = vmatpush1.msra.mxu0 0.0
  %5008 = vmatprep.subr.mxu0 0.0
  %5009 = vmatpush1.msra.mxu0 0.0
  %5010 = vmatprep.subr.mxu0 0.0
  %5011 = vmatpush1.msra.mxu0 0.0
  %5012 = vmatprep.subr.mxu0 0.0
  %5013 = vmatpush1.msra.mxu0 0.0
  %5014 = vmatprep.subr.mxu0 0.0
  %5015 = vmatpush1.msra.mxu0 0.0
  %5016 = vmatprep.subr.mxu0 0.0
  %5017 = vmatpush1.msra.mxu0 0.0
  %5018 = vmatprep.mubr.f32.mxu0 0.0
  %5019 = vmatmul.mubr.f32.gmra.mrb[0].mxu0 %v4931
  %v5020 = vpop.f32.mrb[0].mxu0
  %v5021 = vadd.f32 0.0, %v5020
  %v5022 = vpop.f32.mrb[0].mxu0
  %5023 = vmatprep.mubr.f32.mxu0 0.0
  %5024 = vmatmul.mubr.f32.gmra.mrb[0].mxu0 %v4934
  %v5025 = vpop.f32.mrb[0].mxu0
  %v5026 = vadd.f32 0.0, %v5025
  %v5027 = vpop.f32.mrb[0].mxu0
  %5028 = vmatprep.mubr.f32.mxu0 0.0
  %5029 = vmatmul.mubr.f32.gmra.mrb[0].mxu0 %v4937
  %v5030 = vpop.f32.mrb[0].mxu0
  %v5031 = vadd.f32 0.0, %v5030
  %v5032 = vpop.f32.mrb[0].mxu0
  %5033 = vmatprep.mubr.f32.mxu0 0.0
  %5034 = vmatmul.mubr.f32.gmra.mrb[0].mxu0 %v4940
  %v5035 = vpop.f32.mrb[0].mxu0
  %v5036 = vadd.f32 0.0, %v5035
  %v5037 = vpop.f32.mrb[0].mxu0
  %5038 = vmatprep.mubr.f32.mxu0 0.0
  %5039 = vmatmul.mubr.f32.gmra.mrb[0].mxu0 %v4943
  %v5040 = vpop.f32.mrb[0].mxu0
  %v5041 = vadd.f32 0.0, %v5040
  %v5042 = vpop.f32.mrb[0].mxu0
  %5043 = vmatprep.mubr.f32.mxu0 0.0
  %5044 = vmatmul.mubr.f32.gmra.mrb[0].mxu0 %v4946
  %v5045 = vpop.f32.mrb[0].mxu0
  %v5046 = vadd.f32 0.0, %v5045
  %v5047 = vpop.f32.mrb[0].mxu0
  %5048 = vmatprep.mubr.f32.mxu0 0.0
  %5049 = vmatmul.mubr.f32.gmra.mrb[0].mxu0 %v4949
  %v5050 = vpop.f32.mrb[0].mxu0
  %v5051 = vadd.f32 0.0, %v5050
  %v5052 = vpop.f32.mrb[0].mxu0
  %5053 = vmatprep.mubr.f32.mxu0 0.0
  %5054 = vmatmul.mubr.f32.gmra.mrb[0].mxu0 %v4952
  %v5055 = vpop.f32.mrb[0].mxu0
  %v5056 = vadd.f32 0.0, %v5055
  %v5057 = vpop.f32.mrb[0].mxu0
  %5058 = vdwg.mxu0
  %v5059 = vld [vmem:[%s3] sm:$0xff]
  %v5060 = vld [vmem:[%s3 + $0x8] sm:$0xff]
  %v5061 = vld [vmem:[%s3 + $0x10] sm:$0xff]
  %v5062 = vld [vmem:[%s3 + $0x18] sm:$0xff]
  %v5063 = vld [vmem:[%s3 + $0x20] sm:$0xff]
  %v5064 = vld [vmem:[%s3 + $0x28] sm:$0xff]
  %v5065 = vld [vmem:[%s3 + $0x30] sm:$0xff]
  %v5066 = vld [vmem:[%s3 + $0x38] sm:$0xff]
  %v5068 = vsel %vm4929, %v5059, 0
  %v5071 = vsel %vm4929, %v5060, 0
  %v5074 = vsel %vm4929, %v5061, 0
  %v5077 = vsel %vm4929, %v5062, 0
  %v5080 = vsel %vm4929, %v5063, 0
  %v5083 = vsel %vm4929, %v5064, 0
  %v5086 = vsel %vm4929, %v5065, 0
  %v5089 = vsel %vm4929, %v5066, 0
  %5091 = vmatprep.subr.mxu0 0.0
  %5092 = vmatpush1.msra.mxu0 %v4913
  %5093 = vmatprep.subr.mxu0 0.0
  %5094 = vmatpush1.msra.mxu0 %v4914
  %5095 = vmatprep.subr.mxu0 0.0
  %5096 = vmatpush1.msra.mxu0 %v4915
  %5097 = vmatprep.subr.mxu0 0.0
  %5098 = vmatpush1.msra.mxu0 %v4916
  %5099 = vmatprep.subr.mxu0 0.0
  %5100 = vmatpush1.msra.mxu0 %v4917
  %5101 = vmatprep.subr.mxu0 0.0
  %5102 = vmatpush1.msra.mxu0 %v4918
  %5103 = vmatprep.subr.mxu0 0.0
  %5104 = vmatpush1.msra.mxu0 %v4919
  %5105 = vmatprep.subr.mxu0 0.0
  %5106 = vmatpush1.msra.mxu0 %v4920
  %5107 = vmatprep.subr.mxu0 0.0
  %5108 = vmatpush1.msra.mxu0 0.0
  %5109 = vmatprep.subr.mxu0 0.0
  %5110 = vmatpush1.msra.mxu0 0.0
  %5111 = vmatprep.subr.mxu0 0.0
  %5112 = vmatpush1.msra.mxu0 0.0
  %5113 = vmatprep.subr.mxu0 0.0
  %5114 = vmatpush1.msra.mxu0 0.0
  %5115 = vmatprep.subr.mxu0 0.0
  %5116 = vmatpush1.msra.mxu0 0.0
  %5117 = vmatprep.subr.mxu0 0.0
  %5118 = vmatpush1.msra.mxu0 0.0
  %5119 = vmatprep.subr.mxu0 0.0
  %5120 = vmatpush1.msra.mxu0 0.0
  %5121 = vmatprep.subr.mxu0 0.0
  %5122 = vmatpush1.msra.mxu0 0.0
  %5123 = vmatprep.subr.mxu0 0.0
  %5124 = vmatpush1.msra.mxu0 0.0
  %5125 = vmatprep.subr.mxu0 0.0
  %5126 = vmatpush1.msra.mxu0 0.0
  %5127 = vmatprep.subr.mxu0 0.0
  %5128 = vmatpush1.msra.mxu0 0.0
  %5129 = vmatprep.subr.mxu0 0.0
  %5130 = vmatpush1.msra.mxu0 0.0
  %5131 = vmatprep.subr.mxu0 0.0
  %5132 = vmatpush1.msra.mxu0 0.0
  %5133 = vmatprep.subr.mxu0 0.0
  %5134 = vmatpush1.msra.mxu0 0.0
  %5135 = vmatprep.subr.mxu0 0.0
  %5136 = vmatpush1.msra.mxu0 0.0
  %5137 = vmatprep.subr.mxu0 0.0
  %5138 = vmatpush1.msra.mxu0 0.0
  %5139 = vmatprep.subr.mxu0 0.0
  %5140 = vmatpush1.msra.mxu0 0.0
  %5141 = vmatprep.subr.mxu0 0.0
  %5142 = vmatpush1.msra.mxu0 0.0
  %5143 = vmatprep.subr.mxu0 0.0
  %5144 = vmatpush1.msra.mxu0 0.0
  %5145 = vmatprep.subr.mxu0 0.0
  %5146 = vmatpush1.msra.mxu0 0.0
  %5147 = vmatprep.subr.mxu0 0.0
  %5148 = vmatpush1.msra.mxu0 0.0
  %5149 = vmatprep.subr.mxu0 0.0
  %5150 = vmatpush1.msra.mxu0 0.0
  %5151 = vmatprep.subr.mxu0 0.0
  %5152 = vmatpush1.msra.mxu0 0.0
  %5153 = vmatprep.subr.mxu0 0.0
  %5154 = vmatpush1.msra.mxu0 0.0
  %5155 = vmatprep.mubr.f32.mxu0 0.0
  %5156 = vmatmul.mubr.f32.gmra.mrb[0].mxu0 %v5068
  %v5157 = vpop.f32.mrb[0].mxu0
  %v5158 = vadd.f32 0.0, %v5157
  %v5159 = vpop.f32.mrb[0].mxu0
  %5160 = vmatprep.mubr.f32.mxu0 0.0
  %5161 = vmatmul.mubr.f32.gmra.mrb[0].mxu0 %v5071
  %v5162 = vpop.f32.mrb[0].mxu0
  %v5163 = vadd.f32 0.0, %v5162
  %v5164 = vpop.f32.mrb[0].mxu0
  %5165 = vmatprep.mubr.f32.mxu0 0.0
  %5166 = vmatmul.mubr.f32.gmra.mrb[0].mxu0 %v5074
  %v5167 = vpop.f32.mrb[0].mxu0
  %v5168 = vadd.f32 0.0, %v5167
  %v5169 = vpop.f32.mrb[0].mxu0
  %5170 = vmatprep.mubr.f32.mxu0 0.0
  %5171 = vmatmul.mubr.f32.gmra.mrb[0].mxu0 %v5077
  %v5172 = vpop.f32.mrb[0].mxu0
  %v5173 = vadd.f32 0.0, %v5172
  %v5174 = vpop.f32.mrb[0].mxu0
  %5175 = vmatprep.mubr.f32.mxu0 0.0
  %5176 = vmatmul.mubr.f32.gmra.mrb[0].mxu0 %v5080
  %v5177 = vpop.f32.mrb[0].mxu0
  %v5178 = vadd.f32 0.0, %v5177
  %v5179 = vpop.f32.mrb[0].mxu0
  %5180 = vmatprep.mubr.f32.mxu0 0.0
  %5181 = vmatmul.mubr.f32.gmra.mrb[0].mxu0 %v5083
  %v5182 = vpop.f32.mrb[0].mxu0
  %v5183 = vadd.f32 0.0, %v5182
  %v5184 = vpop.f32.mrb[0].mxu0
  %5185 = vmatprep.mubr.f32.mxu0 0.0
  %5186 = vmatmul.mubr.f32.gmra.mrb[0].mxu0 %v5086
  %v5187 = vpop.f32.mrb[0].mxu0
  %v5188 = vadd.f32 0.0, %v5187
  %v5189 = vpop.f32.mrb[0].mxu0
  %5190 = vmatprep.mubr.f32.mxu0 0.0
  %5191 = vmatmul.mubr.f32.gmra.mrb[0].mxu0 %v5089
  %v5192 = vpop.f32.mrb[0].mxu0
  %v5193 = vadd.f32 0.0, %v5192
  %v5194 = vpop.f32.mrb[0].mxu0
  %5195 = vdwg.mxu0
  %v5196 = vld [vmem:[%s14] sm:$0xff]
  %v5197 = vld [vmem:[%s14 + $0x8] sm:$0xff]
  %v5198 = vld [vmem:[%s14 + $0x10] sm:$0xff]
  %v5199 = vld [vmem:[%s14 + $0x18] sm:$0xff]
  %v5201 = vsel %vm91, %v5158, 0
  %v5204 = vsel %vm91, %v5163, 0
  %v5207 = vsel %vm91, %v5168, 0
  %v5210 = vsel %vm91, %v5173, 0
  %v5213 = vsel %vm91, %v5178, 0
  %v5216 = vsel %vm91, %v5183, 0
  %v5219 = vsel %vm91, %v5188, 0
  %v5222 = vsel %vm91, %v5193, 0
  %5224 = vmatprep.subr.mxu0 0.0
  %5225 = vmatpush1.msra.mxu0 %v5196
  %5226 = vmatprep.subr.mxu0 0.0
  %5227 = vmatpush1.msra.mxu0 %v5197
  %5228 = vmatprep.subr.mxu0 0.0
  %5229 = vmatpush1.msra.mxu0 %v5198
  %5230 = vmatprep.subr.mxu0 0.0
  %5231 = vmatpush1.msra.mxu0 %v5199
  %5232 = vmatprep.subr.mxu0 0.0
  %5233 = vmatpush1.msra.mxu0 0.0
  %5234 = vmatprep.subr.mxu0 0.0
  %5235 = vmatpush1.msra.mxu0 0.0
  %5236 = vmatprep.subr.mxu0 0.0
  %5237 = vmatpush1.msra.mxu0 0.0
  %5238 = vmatprep.subr.mxu0 0.0
  %5239 = vmatpush1.msra.mxu0 0.0
  %5240 = vmatprep.subr.mxu0 0.0
  %5241 = vmatpush1.msra.mxu0 0.0
  %5242 = vmatprep.subr.mxu0 0.0
  %5243 = vmatpush1.msra.mxu0 0.0
  %5244 = vmatprep.subr.mxu0 0.0
  %5245 = vmatpush1.msra.mxu0 0.0
  %5246 = vmatprep.subr.mxu0 0.0
  %5247 = vmatpush1.msra.mxu0 0.0
  %5248 = vmatprep.subr.mxu0 0.0
  %5249 = vmatpush1.msra.mxu0 0.0
  %5250 = vmatprep.subr.mxu0 0.0
  %5251 = vmatpush1.msra.mxu0 0.0
  %5252 = vmatprep.subr.mxu0 0.0
  %5253 = vmatpush1.msra.mxu0 0.0
  %5254 = vmatprep.subr.mxu0 0.0
  %5255 = vmatpush1.msra.mxu0 0.0
  %5256 = vmatprep.subr.mxu0 0.0
  %5257 = vmatpush1.msra.mxu0 0.0
  %5258 = vmatprep.subr.mxu0 0.0
  %5259 = vmatpush1.msra.mxu0 0.0
  %5260 = vmatprep.subr.mxu0 0.0
  %5261 = vmatpush1.msra.mxu0 0.0
  %5262 = vmatprep.subr.mxu0 0.0
  %5263 = vmatpush1.msra.mxu0 0.0
  %5264 = vmatprep.subr.mxu0 0.0
  %5265 = vmatpush1.msra.mxu0 0.0
  %5266 = vmatprep.subr.mxu0 0.0
  %5267 = vmatpush1.msra.mxu0 0.0
  %5268 = vmatprep.subr.mxu0 0.0
  %5269 = vmatpush1.msra.mxu0 0.0
  %5270 = vmatprep.subr.mxu0 0.0
  %5271 = vmatpush1.msra.mxu0 0.0
  %5272 = vmatprep.subr.mxu0 0.0
  %5273 = vmatpush1.msra.mxu0 0.0
  %5274 = vmatprep.subr.mxu0 0.0
  %5275 = vmatpush1.msra.mxu0 0.0
  %5276 = vmatprep.subr.mxu0 0.0
  %5277 = vmatpush1.msra.mxu0 0.0
  %5278 = vmatprep.subr.mxu0 0.0
  %5279 = vmatpush1.msra.mxu0 0.0
  %5280 = vmatprep.subr.mxu0 0.0
  %5281 = vmatpush1.msra.mxu0 0.0
  %5282 = vmatprep.subr.mxu0 0.0
  %5283 = vmatpush1.msra.mxu0 0.0
  %5284 = vmatprep.subr.mxu0 0.0
  %5285 = vmatpush1.msra.mxu0 0.0
  %5286 = vmatprep.subr.mxu0 0.0
  %5287 = vmatpush1.msra.mxu0 0.0
  %5288 = vmatprep.mubr.f32.mxu0 0.0
  %5289 = vmatmul.mubr.f32.gmra.mrb[0].mxu0 %v5201
  %v5290 = vpop.f32.mrb[0].mxu0
  %v5291 = vadd.f32 0.0, %v5290
  %v5292 = vpop.f32.mrb[0].mxu0
  %5293 = vmatprep.mubr.f32.mxu0 0.0
  %5294 = vmatmul.mubr.f32.gmra.mrb[0].mxu0 %v5204
  %v5295 = vpop.f32.mrb[0].mxu0
  %v5296 = vadd.f32 0.0, %v5295
  %v5297 = vpop.f32.mrb[0].mxu0
  %5298 = vmatprep.mubr.f32.mxu0 0.0
  %5299 = vmatmul.mubr.f32.gmra.mrb[0].mxu0 %v5207
  %v5300 = vpop.f32.mrb[0].mxu0
  %v5301 = vadd.f32 0.0, %v5300
  %v5302 = vpop.f32.mrb[0].mxu0
  %5303 = vmatprep.mubr.f32.mxu0 0.0
  %5304 = vmatmul.mubr.f32.gmra.mrb[0].mxu0 %v5210
  %v5305 = vpop.f32.mrb[0].mxu0
  %v5306 = vadd.f32 0.0, %v5305
  %v5307 = vpop.f32.mrb[0].mxu0
  %5308 = vmatprep.mubr.f32.mxu0 0.0
  %5309 = vmatmul.mubr.f32.gmra.mrb[0].mxu0 %v5213
  %v5310 = vpop.f32.mrb[0].mxu0
  %v5311 = vadd.f32 0.0, %v5310
  %v5312 = vpop.f32.mrb[0].mxu0
  %5313 = vmatprep.mubr.f32.mxu0 0.0
  %5314 = vmatmul.mubr.f32.gmra.mrb[0].mxu0 %v5216
  %v5315 = vpop.f32.mrb[0].mxu0
  %v5316 = vadd.f32 0.0, %v5315
  %v5317 = vpop.f32.mrb[0].mxu0
  %5318 = vmatprep.mubr.f32.mxu0 0.0
  %5319 = vmatmul.mubr.f32.gmra.mrb[0].mxu0 %v5219
  %v5320 = vpop.f32.mrb[0].mxu0
  %v5321 = vadd.f32 0.0, %v5320
  %v5322 = vpop.f32.mrb[0].mxu0
  %5323 = vmatprep.mubr.f32.mxu0 0.0
  %5324 = vmatmul.mubr.f32.gmra.mrb[0].mxu0 %v5222
  %v5325 = vpop.f32.mrb[0].mxu0
  %v5326 = vadd.f32 0.0, %v5325
  %v5327 = vpop.f32.mrb[0].mxu0
  %5328 = vdwg.mxu0
  %v5330 = vsel %vm91, %v5291, 0
  %v5333 = vsel %vm91, %v5021, 0
  %5335 = vmatprep.subr.mxu0 0.0
  %5336 = vmatpush1.xpose.msra.mxu0 %v5333
  %5337 = vmatprep.subr.mxu0 0.0
  %5338 = vmatpush1.xpose.msra.mxu0 0.0
  %5339 = vmatprep.subr.mxu0 0.0
  %5340 = vmatpush1.xpose.msra.mxu0 0.0
  %5341 = vmatprep.subr.mxu0 0.0
  %5342 = vmatpush1.xpose.msra.mxu0 0.0
  %5343 = vmatprep.subr.mxu0 0.0
  %5344 = vmatpush1.xpose.msra.mxu0 0.0
  %5345 = vmatprep.subr.mxu0 0.0
  %5346 = vmatpush1.xpose.msra.mxu0 0.0
  %5347 = vmatprep.subr.mxu0 0.0
  %5348 = vmatpush1.xpose.msra.mxu0 0.0
  %5349 = vmatprep.subr.mxu0 0.0
  %5350 = vmatpush1.xpose.msra.mxu0 0.0
  %5351 = vmatprep.subr.mxu0 0.0
  %5352 = vmatpush1.xpose.msra.mxu0 0.0
  %5353 = vmatprep.subr.mxu0 0.0
  %5354 = vmatpush1.xpose.msra.mxu0 0.0
  %5355 = vmatprep.subr.mxu0 0.0
  %5356 = vmatpush1.xpose.msra.mxu0 0.0
  %5357 = vmatprep.subr.mxu0 0.0
  %5358 = vmatpush1.xpose.msra.mxu0 0.0
  %5359 = vmatprep.subr.mxu0 0.0
  %5360 = vmatpush1.xpose.msra.mxu0 0.0
  %5361 = vmatprep.subr.mxu0 0.0
  %5362 = vmatpush1.xpose.msra.mxu0 0.0
  %5363 = vmatprep.subr.mxu0 0.0
  %5364 = vmatpush1.xpose.msra.mxu0 0.0
  %5365 = vmatprep.subr.mxu0 0.0
  %5366 = vmatpush1.xpose.msra.mxu0 0.0
  %5367 = vmatprep.subr.mxu0 0.0
  %5368 = vmatpush1.xpose.msra.mxu0 0.0
  %5369 = vmatprep.subr.mxu0 0.0
  %5370 = vmatpush1.xpose.msra.mxu0 0.0
  %5371 = vmatprep.subr.mxu0 0.0
  %5372 = vmatpush1.xpose.msra.mxu0 0.0
  %5373 = vmatprep.subr.mxu0 0.0
  %5374 = vmatpush1.xpose.msra.mxu0 0.0
  %5375 = vmatprep.subr.mxu0 0.0
  %5376 = vmatpush1.xpose.msra.mxu0 0.0
  %5377 = vmatprep.subr.mxu0 0.0
  %5378 = vmatpush1.xpose.msra.mxu0 0.0
  %5379 = vmatprep.subr.mxu0 0.0
  %5380 = vmatpush1.xpose.msra.mxu0 0.0
  %5381 = vmatprep.subr.mxu0 0.0
  %5382 = vmatpush1.xpose.msra.mxu0 0.0
  %5383 = vmatprep.subr.mxu0 0.0
  %5384 = vmatpush1.xpose.msra.mxu0 0.0
  %5385 = vmatprep.subr.mxu0 0.0
  %5386 = vmatpush1.xpose.msra.mxu0 0.0
  %5387 = vmatprep.subr.mxu0 0.0
  %5388 = vmatpush1.xpose.msra.mxu0 0.0
  %5389 = vmatprep.subr.mxu0 0.0
  %5390 = vmatpush1.xpose.msra.mxu0 0.0
  %5391 = vmatprep.subr.mxu0 0.0
  %5392 = vmatpush1.xpose.msra.mxu0 0.0
  %5393 = vmatprep.subr.mxu0 0.0
  %5394 = vmatpush1.xpose.msra.mxu0 0.0
  %5395 = vmatprep.subr.mxu0 0.0
  %5396 = vmatpush1.xpose.msra.mxu0 0.0
  %5397 = vmatprep.subr.mxu0 0.0
  %5398 = vmatpush1.xpose.msra.mxu0 0.0
  %5399 = vmatprep.mubr.f32.mxu0 0.0
  %5400 = vmatmul.mubr.f32.gmra.mrb[0].mxu0 %v5330
  %v5401 = vpop.f32.mrb[0].mxu0
  %v5402 = vadd.f32 0.0, %v5401
  %v5403 = vpop.f32.mrb[0].mxu0
  %5404 = vdwg.mxu0
  %v5406 = vsel %vm91, %v5296, 0
  %v5409 = vsel %vm91, %v5026, 0
  %5411 = vmatprep.subr.mxu0 0.0
  %5412 = vmatpush1.xpose.msra.mxu0 %v5409
  %5413 = vmatprep.subr.mxu0 0.0
  %5414 = vmatpush1.xpose.msra.mxu0 0.0
  %5415 = vmatprep.subr.mxu0 0.0
  %5416 = vmatpush1.xpose.msra.mxu0 0.0
  %5417 = vmatprep.subr.mxu0 0.0
  %5418 = vmatpush1.xpose.msra.mxu0 0.0
  %5419 = vmatprep.subr.mxu0 0.0
  %5420 = vmatpush1.xpose.msra.mxu0 0.0
  %5421 = vmatprep.subr.mxu0 0.0
  %5422 = vmatpush1.xpose.msra.mxu0 0.0
  %5423 = vmatprep.subr.mxu0 0.0
  %5424 = vmatpush1.xpose.msra.mxu0 0.0
  %5425 = vmatprep.subr.mxu0 0.0
  %5426 = vmatpush1.xpose.msra.mxu0 0.0
  %5427 = vmatprep.subr.mxu0 0.0
  %5428 = vmatpush1.xpose.msra.mxu0 0.0
  %5429 = vmatprep.subr.mxu0 0.0
  %5430 = vmatpush1.xpose.msra.mxu0 0.0
  %5431 = vmatprep.subr.mxu0 0.0
  %5432 = vmatpush1.xpose.msra.mxu0 0.0
  %5433 = vmatprep.subr.mxu0 0.0
  %5434 = vmatpush1.xpose.msra.mxu0 0.0
  %5435 = vmatprep.subr.mxu0 0.0
  %5436 = vmatpush1.xpose.msra.mxu0 0.0
  %5437 = vmatprep.subr.mxu0 0.0
  %5438 = vmatpush1.xpose.msra.mxu0 0.0
  %5439 = vmatprep.subr.mxu0 0.0
  %5440 = vmatpush1.xpose.msra.mxu0 0.0
  %5441 = vmatprep.subr.mxu0 0.0
  %5442 = vmatpush1.xpose.msra.mxu0 0.0
  %5443 = vmatprep.subr.mxu0 0.0
  %5444 = vmatpush1.xpose.msra.mxu0 0.0
  %5445 = vmatprep.subr.mxu0 0.0
  %5446 = vmatpush1.xpose.msra.mxu0 0.0
  %5447 = vmatprep.subr.mxu0 0.0
  %5448 = vmatpush1.xpose.msra.mxu0 0.0
  %5449 = vmatprep.subr.mxu0 0.0
  %5450 = vmatpush1.xpose.msra.mxu0 0.0
  %5451 = vmatprep.subr.mxu0 0.0
  %5452 = vmatpush1.xpose.msra.mxu0 0.0
  %5453 = vmatprep.subr.mxu0 0.0
  %5454 = vmatpush1.xpose.msra.mxu0 0.0
  %5455 = vmatprep.subr.mxu0 0.0
  %5456 = vmatpush1.xpose.msra.mxu0 0.0
  %5457 = vmatprep.subr.mxu0 0.0
  %5458 = vmatpush1.xpose.msra.mxu0 0.0
  %5459 = vmatprep.subr.mxu0 0.0
  %5460 = vmatpush1.xpose.msra.mxu0 0.0
  %5461 = vmatprep.subr.mxu0 0.0
  %5462 = vmatpush1.xpose.msra.mxu0 0.0
  %5463 = vmatprep.subr.mxu0 0.0
  %5464 = vmatpush1.xpose.msra.mxu0 0.0
  %5465 = vmatprep.subr.mxu0 0.0
  %5466 = vmatpush1.xpose.msra.mxu0 0.0
  %5467 = vmatprep.subr.mxu0 0.0
  %5468 = vmatpush1.xpose.msra.mxu0 0.0
  %5469 = vmatprep.subr.mxu0 0.0
  %5470 = vmatpush1.xpose.msra.mxu0 0.0
  %5471 = vmatprep.subr.mxu0 0.0
  %5472 = vmatpush1.xpose.msra.mxu0 0.0
  %5473 = vmatprep.subr.mxu0 0.0
  %5474 = vmatpush1.xpose.msra.mxu0 0.0
  %5475 = vmatprep.mubr.f32.mxu0 0.0
  %5476 = vmatmul.mubr.f32.gmra.mrb[0].mxu0 %v5406
  %v5477 = vpop.f32.mrb[0].mxu0
  %v5478 = vadd.f32 0.0, %v5477
  %v5479 = vpop.f32.mrb[0].mxu0
  %5480 = vdwg.mxu0
  %v5482 = vsel %vm91, %v5301, 0
  %v5485 = vsel %vm91, %v5031, 0
  %5487 = vmatprep.subr.mxu0 0.0
  %5488 = vmatpush1.xpose.msra.mxu0 %v5485
  %5489 = vmatprep.subr.mxu0 0.0
  %5490 = vmatpush1.xpose.msra.mxu0 0.0
  %5491 = vmatprep.subr.mxu0 0.0
  %5492 = vmatpush1.xpose.msra.mxu0 0.0
  %5493 = vmatprep.subr.mxu0 0.0
  %5494 = vmatpush1.xpose.msra.mxu0 0.0
  %5495 = vmatprep.subr.mxu0 0.0
  %5496 = vmatpush1.xpose.msra.mxu0 0.0
  %5497 = vmatprep.subr.mxu0 0.0
  %5498 = vmatpush1.xpose.msra.mxu0 0.0
  %5499 = vmatprep.subr.mxu0 0.0
  %5500 = vmatpush1.xpose.msra.mxu0 0.0
  %5501 = vmatprep.subr.mxu0 0.0
  %5502 = vmatpush1.xpose.msra.mxu0 0.0
  %5503 = vmatprep.subr.mxu0 0.0
  %5504 = vmatpush1.xpose.msra.mxu0 0.0
  %5505 = vmatprep.subr.mxu0 0.0
  %5506 = vmatpush1.xpose.msra.mxu0 0.0
  %5507 = vmatprep.subr.mxu0 0.0
  %5508 = vmatpush1.xpose.msra.mxu0 0.0
  %5509 = vmatprep.subr.mxu0 0.0
  %5510 = vmatpush1.xpose.msra.mxu0 0.0
  %5511 = vmatprep.subr.mxu0 0.0
  %5512 = vmatpush1.xpose.msra.mxu0 0.0
  %5513 = vmatprep.subr.mxu0 0.0
  %5514 = vmatpush1.xpose.msra.mxu0 0.0
  %5515 = vmatprep.subr.mxu0 0.0
  %5516 = vmatpush1.xpose.msra.mxu0 0.0
  %5517 = vmatprep.subr.mxu0 0.0
  %5518 = vmatpush1.xpose.msra.mxu0 0.0
  %5519 = vmatprep.subr.mxu0 0.0
  %5520 = vmatpush1.xpose.msra.mxu0 0.0
  %5521 = vmatprep.subr.mxu0 0.0
  %5522 = vmatpush1.xpose.msra.mxu0 0.0
  %5523 = vmatprep.subr.mxu0 0.0
  %5524 = vmatpush1.xpose.msra.mxu0 0.0
  %5525 = vmatprep.subr.mxu0 0.0
  %5526 = vmatpush1.xpose.msra.mxu0 0.0
  %5527 = vmatprep.subr.mxu0 0.0
  %5528 = vmatpush1.xpose.msra.mxu0 0.0
  %5529 = vmatprep.subr.mxu0 0.0
  %5530 = vmatpush1.xpose.msra.mxu0 0.0
  %5531 = vmatprep.subr.mxu0 0.0
  %5532 = vmatpush1.xpose.msra.mxu0 0.0
  %5533 = vmatprep.subr.mxu0 0.0
  %5534 = vmatpush1.xpose.msra.mxu0 0.0
  %5535 = vmatprep.subr.mxu0 0.0
  %5536 = vmatpush1.xpose.msra.mxu0 0.0
  %5537 = vmatprep.subr.mxu0 0.0
  %5538 = vmatpush1.xpose.msra.mxu0 0.0
  %5539 = vmatprep.subr.mxu0 0.0
  %5540 = vmatpush1.xpose.msra.mxu0 0.0
  %5541 = vmatprep.subr.mxu0 0.0
  %5542 = vmatpush1.xpose.msra.mxu0 0.0
  %5543 = vmatprep.subr.mxu0 0.0
  %5544 = vmatpush1.xpose.msra.mxu0 0.0
  %5545 = vmatprep.subr.mxu0 0.0
  %5546 = vmatpush1.xpose.msra.mxu0 0.0
  %5547 = vmatprep.subr.mxu0 0.0
  %5548 = vmatpush1.xpose.msra.mxu0 0.0
  %5549 = vmatprep.subr.mxu0 0.0
  %5550 = vmatpush1.xpose.msra.mxu0 0.0
  %5551 = vmatprep.mubr.f32.mxu0 0.0
  %5552 = vmatmul.mubr.f32.gmra.mrb[0].mxu0 %v5482
  %v5553 = vpop.f32.mrb[0].mxu0
  %v5554 = vadd.f32 0.0, %v5553
  %v5555 = vpop.f32.mrb[0].mxu0
  %5556 = vdwg.mxu0
  %v5558 = vsel %vm91, %v5306, 0
  %v5561 = vsel %vm91, %v5036, 0
  %5563 = vmatprep.subr.mxu0 0.0
  %5564 = vmatpush1.xpose.msra.mxu0 %v5561
  %5565 = vmatprep.subr.mxu0 0.0
  %5566 = vmatpush1.xpose.msra.mxu0 0.0
  %5567 = vmatprep.subr.mxu0 0.0
  %5568 = vmatpush1.xpose.msra.mxu0 0.0
  %5569 = vmatprep.subr.mxu0 0.0
  %5570 = vmatpush1.xpose.msra.mxu0 0.0
  %5571 = vmatprep.subr.mxu0 0.0
  %5572 = vmatpush1.xpose.msra.mxu0 0.0
  %5573 = vmatprep.subr.mxu0 0.0
  %5574 = vmatpush1.xpose.msra.mxu0 0.0
  %5575 = vmatprep.subr.mxu0 0.0
  %5576 = vmatpush1.xpose.msra.mxu0 0.0
  %5577 = vmatprep.subr.mxu0 0.0
  %5578 = vmatpush1.xpose.msra.mxu0 0.0
  %5579 = vmatprep.subr.mxu0 0.0
  %5580 = vmatpush1.xpose.msra.mxu0 0.0
  %5581 = vmatprep.subr.mxu0 0.0
  %5582 = vmatpush1.xpose.msra.mxu0 0.0
  %5583 = vmatprep.subr.mxu0 0.0
  %5584 = vmatpush1.xpose.msra.mxu0 0.0
  %5585 = vmatprep.subr.mxu0 0.0
  %5586 = vmatpush1.xpose.msra.mxu0 0.0
  %5587 = vmatprep.subr.mxu0 0.0
  %5588 = vmatpush1.xpose.msra.mxu0 0.0
  %5589 = vmatprep.subr.mxu0 0.0
  %5590 = vmatpush1.xpose.msra.mxu0 0.0
  %5591 = vmatprep.subr.mxu0 0.0
  %5592 = vmatpush1.xpose.msra.mxu0 0.0
  %5593 = vmatprep.subr.mxu0 0.0
  %5594 = vmatpush1.xpose.msra.mxu0 0.0
  %5595 = vmatprep.subr.mxu0 0.0
  %5596 = vmatpush1.xpose.msra.mxu0 0.0
  %5597 = vmatprep.subr.mxu0 0.0
  %5598 = vmatpush1.xpose.msra.mxu0 0.0
  %5599 = vmatprep.subr.mxu0 0.0
  %5600 = vmatpush1.xpose.msra.mxu0 0.0
  %5601 = vmatprep.subr.mxu0 0.0
  %5602 = vmatpush1.xpose.msra.mxu0 0.0
  %5603 = vmatprep.subr.mxu0 0.0
  %5604 = vmatpush1.xpose.msra.mxu0 0.0
  %5605 = vmatprep.subr.mxu0 0.0
  %5606 = vmatpush1.xpose.msra.mxu0 0.0
  %5607 = vmatprep.subr.mxu0 0.0
  %5608 = vmatpush1.xpose.msra.mxu0 0.0
  %5609 = vmatprep.subr.mxu0 0.0
  %5610 = vmatpush1.xpose.msra.mxu0 0.0
  %5611 = vmatprep.subr.mxu0 0.0
  %5612 = vmatpush1.xpose.msra.mxu0 0.0
  %5613 = vmatprep.subr.mxu0 0.0
  %5614 = vmatpush1.xpose.msra.mxu0 0.0
  %5615 = vmatprep.subr.mxu0 0.0
  %5616 = vmatpush1.xpose.msra.mxu0 0.0
  %5617 = vmatprep.subr.mxu0 0.0
  %5618 = vmatpush1.xpose.msra.mxu0 0.0
  %5619 = vmatprep.subr.mxu0 0.0
  %5620 = vmatpush1.xpose.msra.mxu0 0.0
  %5621 = vmatprep.subr.mxu0 0.0
  %5622 = vmatpush1.xpose.msra.mxu0 0.0
  %5623 = vmatprep.subr.mxu0 0.0
  %5624 = vmatpush1.xpose.msra.mxu0 0.0
  %5625 = vmatprep.subr.mxu0 0.0
  %5626 = vmatpush1.xpose.msra.mxu0 0.0
  %5627 = vmatprep.mubr.f32.mxu0 0.0
  %5628 = vmatmul.mubr.f32.gmra.mrb[0].mxu0 %v5558
  %v5629 = vpop.f32.mrb[0].mxu0
  %v5630 = vadd.f32 0.0, %v5629
  %v5631 = vpop.f32.mrb[0].mxu0
  %5632 = vdwg.mxu0
  %v5634 = vsel %vm91, %v5311, 0
  %v5637 = vsel %vm91, %v5041, 0
  %5639 = vmatprep.subr.mxu0 0.0
  %5640 = vmatpush1.xpose.msra.mxu0 %v5637
  %5641 = vmatprep.subr.mxu0 0.0
  %5642 = vmatpush1.xpose.msra.mxu0 0.0
  %5643 = vmatprep.subr.mxu0 0.0
  %5644 = vmatpush1.xpose.msra.mxu0 0.0
  %5645 = vmatprep.subr.mxu0 0.0
  %5646 = vmatpush1.xpose.msra.mxu0 0.0
  %5647 = vmatprep.subr.mxu0 0.0
  %5648 = vmatpush1.xpose.msra.mxu0 0.0
  %5649 = vmatprep.subr.mxu0 0.0
  %5650 = vmatpush1.xpose.msra.mxu0 0.0
  %5651 = vmatprep.subr.mxu0 0.0
  %5652 = vmatpush1.xpose.msra.mxu0 0.0
  %5653 = vmatprep.subr.mxu0 0.0
  %5654 = vmatpush1.xpose.msra.mxu0 0.0
  %5655 = vmatprep.subr.mxu0 0.0
  %5656 = vmatpush1.xpose.msra.mxu0 0.0
  %5657 = vmatprep.subr.mxu0 0.0
  %5658 = vmatpush1.xpose.msra.mxu0 0.0
  %5659 = vmatprep.subr.mxu0 0.0
  %5660 = vmatpush1.xpose.msra.mxu0 0.0
  %5661 = vmatprep.subr.mxu0 0.0
  %5662 = vmatpush1.xpose.msra.mxu0 0.0
  %5663 = vmatprep.subr.mxu0 0.0
  %5664 = vmatpush1.xpose.msra.mxu0 0.0
  %5665 = vmatprep.subr.mxu0 0.0
  %5666 = vmatpush1.xpose.msra.mxu0 0.0
  %5667 = vmatprep.subr.mxu0 0.0
  %5668 = vmatpush1.xpose.msra.mxu0 0.0
  %5669 = vmatprep.subr.mxu0 0.0
  %5670 = vmatpush1.xpose.msra.mxu0 0.0
  %5671 = vmatprep.subr.mxu0 0.0
  %5672 = vmatpush1.xpose.msra.mxu0 0.0
  %5673 = vmatprep.subr.mxu0 0.0
  %5674 = vmatpush1.xpose.msra.mxu0 0.0
  %5675 = vmatprep.subr.mxu0 0.0
  %5676 = vmatpush1.xpose.msra.mxu0 0.0
  %5677 = vmatprep.subr.mxu0 0.0
  %5678 = vmatpush1.xpose.msra.mxu0 0.0
  %5679 = vmatprep.subr.mxu0 0.0
  %5680 = vmatpush1.xpose.msra.mxu0 0.0
  %5681 = vmatprep.subr.mxu0 0.0
  %5682 = vmatpush1.xpose.msra.mxu0 0.0
  %5683 = vmatprep.subr.mxu0 0.0
  %5684 = vmatpush1.xpose.msra.mxu0 0.0
  %5685 = vmatprep.subr.mxu0 0.0
  %5686 = vmatpush1.xpose.msra.mxu0 0.0
  %5687 = vmatprep.subr.mxu0 0.0
  %5688 = vmatpush1.xpose.msra.mxu0 0.0
  %5689 = vmatprep.subr.mxu0 0.0
  %5690 = vmatpush1.xpose.msra.mxu0 0.0
  %5691 = vmatprep.subr.mxu0 0.0
  %5692 = vmatpush1.xpose.msra.mxu0 0.0
  %5693 = vmatprep.subr.mxu0 0.0
  %5694 = vmatpush1.xpose.msra.mxu0 0.0
  %5695 = vmatprep.subr.mxu0 0.0
  %5696 = vmatpush1.xpose.msra.mxu0 0.0
  %5697 = vmatprep.subr.mxu0 0.0
  %5698 = vmatpush1.xpose.msra.mxu0 0.0
  %5699 = vmatprep.subr.mxu0 0.0
  %5700 = vmatpush1.xpose.msra.mxu0 0.0
  %5701 = vmatprep.subr.mxu0 0.0
  %5702 = vmatpush1.xpose.msra.mxu0 0.0
  %5703 = vmatprep.mubr.f32.mxu0 0.0
  %5704 = vmatmul.mubr.f32.gmra.mrb[0].mxu0 %v5634
  %v5705 = vpop.f32.mrb[0].mxu0
  %v5706 = vadd.f32 0.0, %v5705
  %v5707 = vpop.f32.mrb[0].mxu0
  %5708 = vdwg.mxu0
  %v5710 = vsel %vm91, %v5316, 0
  %v5713 = vsel %vm91, %v5046, 0
  %5715 = vmatprep.subr.mxu0 0.0
  %5716 = vmatpush1.xpose.msra.mxu0 %v5713
  %5717 = vmatprep.subr.mxu0 0.0
  %5718 = vmatpush1.xpose.msra.mxu0 0.0
  %5719 = vmatprep.subr.mxu0 0.0
  %5720 = vmatpush1.xpose.msra.mxu0 0.0
  %5721 = vmatprep.subr.mxu0 0.0
  %5722 = vmatpush1.xpose.msra.mxu0 0.0
  %5723 = vmatprep.subr.mxu0 0.0
  %5724 = vmatpush1.xpose.msra.mxu0 0.0
  %5725 = vmatprep.subr.mxu0 0.0
  %5726 = vmatpush1.xpose.msra.mxu0 0.0
  %5727 = vmatprep.subr.mxu0 0.0
  %5728 = vmatpush1.xpose.msra.mxu0 0.0
  %5729 = vmatprep.subr.mxu0 0.0
  %5730 = vmatpush1.xpose.msra.mxu0 0.0
  %5731 = vmatprep.subr.mxu0 0.0
  %5732 = vmatpush1.xpose.msra.mxu0 0.0
  %5733 = vmatprep.subr.mxu0 0.0
  %5734 = vmatpush1.xpose.msra.mxu0 0.0
  %5735 = vmatprep.subr.mxu0 0.0
  %5736 = vmatpush1.xpose.msra.mxu0 0.0
  %5737 = vmatprep.subr.mxu0 0.0
  %5738 = vmatpush1.xpose.msra.mxu0 0.0
  %5739 = vmatprep.subr.mxu0 0.0
  %5740 = vmatpush1.xpose.msra.mxu0 0.0
  %5741 = vmatprep.subr.mxu0 0.0
  %5742 = vmatpush1.xpose.msra.mxu0 0.0
  %5743 = vmatprep.subr.mxu0 0.0
  %5744 = vmatpush1.xpose.msra.mxu0 0.0
  %5745 = vmatprep.subr.mxu0 0.0
  %5746 = vmatpush1.xpose.msra.mxu0 0.0
  %5747 = vmatprep.subr.mxu0 0.0
  %5748 = vmatpush1.xpose.msra.mxu0 0.0
  %5749 = vmatprep.subr.mxu0 0.0
  %5750 = vmatpush1.xpose.msra.mxu0 0.0
  %5751 = vmatprep.subr.mxu0 0.0
  %5752 = vmatpush1.xpose.msra.mxu0 0.0
  %5753 = vmatprep.subr.mxu0 0.0
  %5754 = vmatpush1.xpose.msra.mxu0 0.0
  %5755 = vmatprep.subr.mxu0 0.0
  %5756 = vmatpush1.xpose.msra.mxu0 0.0
  %5757 = vmatprep.subr.mxu0 0.0
  %5758 = vmatpush1.xpose.msra.mxu0 0.0
  %5759 = vmatprep.subr.mxu0 0.0
  %5760 = vmatpush1.xpose.msra.mxu0 0.0
  %5761 = vmatprep.subr.mxu0 0.0
  %5762 = vmatpush1.xpose.msra.mxu0 0.0
  %5763 = vmatprep.subr.mxu0 0.0
  %5764 = vmatpush1.xpose.msra.mxu0 0.0
  %5765 = vmatprep.subr.mxu0 0.0
  %5766 = vmatpush1.xpose.msra.mxu0 0.0
  %5767 = vmatprep.subr.mxu0 0.0
  %5768 = vmatpush1.xpose.msra.mxu0 0.0
  %5769 = vmatprep.subr.mxu0 0.0
  %5770 = vmatpush1.xpose.msra.mxu0 0.0
  %5771 = vmatprep.subr.mxu0 0.0
  %5772 = vmatpush1.xpose.msra.mxu0 0.0
  %5773 = vmatprep.subr.mxu0 0.0
  %5774 = vmatpush1.xpose.msra.mxu0 0.0
  %5775 = vmatprep.subr.mxu0 0.0
  %5776 = vmatpush1.xpose.msra.mxu0 0.0
  %5777 = vmatprep.subr.mxu0 0.0
  %5778 = vmatpush1.xpose.msra.mxu0 0.0
  %5779 = vmatprep.mubr.f32.mxu0 0.0
  %5780 = vmatmul.mubr.f32.gmra.mrb[0].mxu0 %v5710
  %v5781 = vpop.f32.mrb[0].mxu0
  %v5782 = vadd.f32 0.0, %v5781
  %v5783 = vpop.f32.mrb[0].mxu0
  %5784 = vdwg.mxu0
  %v5786 = vsel %vm91, %v5321, 0
  %v5789 = vsel %vm91, %v5051, 0
  %5791 = vmatprep.subr.mxu0 0.0
  %5792 = vmatpush1.xpose.msra.mxu0 %v5789
  %5793 = vmatprep.subr.mxu0 0.0
  %5794 = vmatpush1.xpose.msra.mxu0 0.0
  %5795 = vmatprep.subr.mxu0 0.0
  %5796 = vmatpush1.xpose.msra.mxu0 0.0
  %5797 = vmatprep.subr.mxu0 0.0
  %5798 = vmatpush1.xpose.msra.mxu0 0.0
  %5799 = vmatprep.subr.mxu0 0.0
  %5800 = vmatpush1.xpose.msra.mxu0 0.0
  %5801 = vmatprep.subr.mxu0 0.0
  %5802 = vmatpush1.xpose.msra.mxu0 0.0
  %5803 = vmatprep.subr.mxu0 0.0
  %5804 = vmatpush1.xpose.msra.mxu0 0.0
  %5805 = vmatprep.subr.mxu0 0.0
  %5806 = vmatpush1.xpose.msra.mxu0 0.0
  %5807 = vmatprep.subr.mxu0 0.0
  %5808 = vmatpush1.xpose.msra.mxu0 0.0
  %5809 = vmatprep.subr.mxu0 0.0
  %5810 = vmatpush1.xpose.msra.mxu0 0.0
  %5811 = vmatprep.subr.mxu0 0.0
  %5812 = vmatpush1.xpose.msra.mxu0 0.0
  %5813 = vmatprep.subr.mxu0 0.0
  %5814 = vmatpush1.xpose.msra.mxu0 0.0
  %5815 = vmatprep.subr.mxu0 0.0
  %5816 = vmatpush1.xpose.msra.mxu0 0.0
  %5817 = vmatprep.subr.mxu0 0.0
  %5818 = vmatpush1.xpose.msra.mxu0 0.0
  %5819 = vmatprep.subr.mxu0 0.0
  %5820 = vmatpush1.xpose.msra.mxu0 0.0
  %5821 = vmatprep.subr.mxu0 0.0
  %5822 = vmatpush1.xpose.msra.mxu0 0.0
  %5823 = vmatprep.subr.mxu0 0.0
  %5824 = vmatpush1.xpose.msra.mxu0 0.0
  %5825 = vmatprep.subr.mxu0 0.0
  %5826 = vmatpush1.xpose.msra.mxu0 0.0
  %5827 = vmatprep.subr.mxu0 0.0
  %5828 = vmatpush1.xpose.msra.mxu0 0.0
  %5829 = vmatprep.subr.mxu0 0.0
  %5830 = vmatpush1.xpose.msra.mxu0 0.0
  %5831 = vmatprep.subr.mxu0 0.0
  %5832 = vmatpush1.xpose.msra.mxu0 0.0
  %5833 = vmatprep.subr.mxu0 0.0
  %5834 = vmatpush1.xpose.msra.mxu0 0.0
  %5835 = vmatprep.subr.mxu0 0.0
  %5836 = vmatpush1.xpose.msra.mxu0 0.0
  %5837 = vmatprep.subr.mxu0 0.0
  %5838 = vmatpush1.xpose.msra.mxu0 0.0
  %5839 = vmatprep.subr.mxu0 0.0
  %5840 = vmatpush1.xpose.msra.mxu0 0.0
  %5841 = vmatprep.subr.mxu0 0.0
  %5842 = vmatpush1.xpose.msra.mxu0 0.0
  %5843 = vmatprep.subr.mxu0 0.0
  %5844 = vmatpush1.xpose.msra.mxu0 0.0
  %5845 = vmatprep.subr.mxu0 0.0
  %5846 = vmatpush1.xpose.msra.mxu0 0.0
  %5847 = vmatprep.subr.mxu0 0.0
  %5848 = vmatpush1.xpose.msra.mxu0 0.0
  %5849 = vmatprep.subr.mxu0 0.0
  %5850 = vmatpush1.xpose.msra.mxu0 0.0
  %5851 = vmatprep.subr.mxu0 0.0
  %5852 = vmatpush1.xpose.msra.mxu0 0.0
  %5853 = vmatprep.subr.mxu0 0.0
  %5854 = vmatpush1.xpose.msra.mxu0 0.0
  %5855 = vmatprep.mubr.f32.mxu0 0.0
  %5856 = vmatmul.mubr.f32.gmra.mrb[0].mxu0 %v5786
  %v5857 = vpop.f32.mrb[0].mxu0
  %v5858 = vadd.f32 0.0, %v5857
  %v5859 = vpop.f32.mrb[0].mxu0
  %5860 = vdwg.mxu0
  %v5862 = vsel %vm91, %v5326, 0
  %v5865 = vsel %vm91, %v5056, 0
  %5867 = vmatprep.subr.mxu0 0.0
  %5868 = vmatpush1.xpose.msra.mxu0 %v5865
  %5869 = vmatprep.subr.mxu0 0.0
  %5870 = vmatpush1.xpose.msra.mxu0 0.0
  %5871 = vmatprep.subr.mxu0 0.0
  %5872 = vmatpush1.xpose.msra.mxu0 0.0
  %5873 = vmatprep.subr.mxu0 0.0
  %5874 = vmatpush1.xpose.msra.mxu0 0.0
  %5875 = vmatprep.subr.mxu0 0.0
  %5876 = vmatpush1.xpose.msra.mxu0 0.0
  %5877 = vmatprep.subr.mxu0 0.0
  %5878 = vmatpush1.xpose.msra.mxu0 0.0
  %5879 = vmatprep.subr.mxu0 0.0
  %5880 = vmatpush1.xpose.msra.mxu0 0.0
  %5881 = vmatprep.subr.mxu0 0.0
  %5882 = vmatpush1.xpose.msra.mxu0 0.0
  %5883 = vmatprep.subr.mxu0 0.0
  %5884 = vmatpush1.xpose.msra.mxu0 0.0
  %5885 = vmatprep.subr.mxu0 0.0
  %5886 = vmatpush1.xpose.msra.mxu0 0.0
  %5887 = vmatprep.subr.mxu0 0.0
  %5888 = vmatpush1.xpose.msra.mxu0 0.0
  %5889 = vmatprep.subr.mxu0 0.0
  %5890 = vmatpush1.xpose.msra.mxu0 0.0
  %5891 = vmatprep.subr.mxu0 0.0
  %5892 = vmatpush1.xpose.msra.mxu0 0.0
  %5893 = vmatprep.subr.mxu0 0.0
  %5894 = vmatpush1.xpose.msra.mxu0 0.0
  %5895 = vmatprep.subr.mxu0 0.0
  %5896 = vmatpush1.xpose.msra.mxu0 0.0
  %5897 = vmatprep.subr.mxu0 0.0
  %5898 = vmatpush1.xpose.msra.mxu0 0.0
  %5899 = vmatprep.subr.mxu0 0.0
  %5900 = vmatpush1.xpose.msra.mxu0 0.0
  %5901 = vmatprep.subr.mxu0 0.0
  %5902 = vmatpush1.xpose.msra.mxu0 0.0
  %5903 = vmatprep.subr.mxu0 0.0
  %5904 = vmatpush1.xpose.msra.mxu0 0.0
  %5905 = vmatprep.subr.mxu0 0.0
  %5906 = vmatpush1.xpose.msra.mxu0 0.0
  %5907 = vmatprep.subr.mxu0 0.0
  %5908 = vmatpush1.xpose.msra.mxu0 0.0
  %5909 = vmatprep.subr.mxu0 0.0
  %5910 = vmatpush1.xpose.msra.mxu0 0.0
  %5911 = vmatprep.subr.mxu0 0.0
  %5912 = vmatpush1.xpose.msra.mxu0 0.0
  %5913 = vmatprep.subr.mxu0 0.0
  %5914 = vmatpush1.xpose.msra.mxu0 0.0
  %5915 = vmatprep.subr.mxu0 0.0
  %5916 = vmatpush1.xpose.msra.mxu0 0.0
  %5917 = vmatprep.subr.mxu0 0.0
  %5918 = vmatpush1.xpose.msra.mxu0 0.0
  %5919 = vmatprep.subr.mxu0 0.0
  %5920 = vmatpush1.xpose.msra.mxu0 0.0
  %5921 = vmatprep.subr.mxu0 0.0
  %5922 = vmatpush1.xpose.msra.mxu0 0.0
  %5923 = vmatprep.subr.mxu0 0.0
  %5924 = vmatpush1.xpose.msra.mxu0 0.0
  %5925 = vmatprep.subr.mxu0 0.0
  %5926 = vmatpush1.xpose.msra.mxu0 0.0
  %5927 = vmatprep.subr.mxu0 0.0
  %5928 = vmatpush1.xpose.msra.mxu0 0.0
  %5929 = vmatprep.subr.mxu0 0.0
  %5930 = vmatpush1.xpose.msra.mxu0 0.0
  %5931 = vmatprep.mubr.f32.mxu0 0.0
  %5932 = vmatmul.mubr.f32.gmra.mrb[0].mxu0 %v5862
  %v5933 = vpop.f32.mrb[0].mxu0
  %v5934 = vadd.f32 0.0, %v5933
  %v5935 = vpop.f32.mrb[0].mxu0
  %5936 = vdwg.mxu0
  %vm5937 = vcmask 64512
  %v5938 = vsel %vm5937, %v5402, -inf
  %5939 = vmax.xlane.f32.xlu0 %v5938
  %v5940 = vpop.xlane.xlu0 %5939
  %v5941 = vsel %vm5937, %v5478, -inf
  %5942 = vmax.xlane.f32.xlu0 %v5941
  %v5943 = vpop.xlane.xlu0 %5942
  %v5944 = vsel %vm5937, %v5554, -inf
  %5945 = vmax.xlane.f32.xlu0 %v5944
  %v5946 = vpop.xlane.xlu0 %5945
  %v5947 = vsel %vm5937, %v5630, -inf
  %5948 = vmax.xlane.f32.xlu0 %v5947
  %v5949 = vpop.xlane.xlu0 %5948
  %v5950 = vsel %vm5937, %v5706, -inf
  %5951 = vmax.xlane.f32.xlu0 %v5950
  %v5952 = vpop.xlane.xlu0 %5951
  %v5953 = vsel %vm5937, %v5782, -inf
  %5954 = vmax.xlane.f32.xlu0 %v5953
  %v5955 = vpop.xlane.xlu0 %5954
  %v5956 = vsel %vm5937, %v5858, -inf
  %5957 = vmax.xlane.f32.xlu0 %v5956
  %v5958 = vpop.xlane.xlu0 %5957
  %v5959 = vsel %vm5937, %v5934, -inf
  %5960 = vmax.xlane.f32.xlu0 %v5959
  %v5961 = vpop.xlane.xlu0 %5960
  %v5962 = vsub.f32 %v5402, %v5940
  %v5963 = vsub.f32 %v5478, %v5943
  %v5964 = vsub.f32 %v5554, %v5946
  %v5965 = vsub.f32 %v5630, %v5949
  %v5966 = vsub.f32 %v5706, %v5952
  %v5967 = vsub.f32 %v5782, %v5955
  %v5968 = vsub.f32 %v5858, %v5958
  %v5969 = vsub.f32 %v5934, %v5961
  %v5970 = vmul.f32 %v5962, 1.442695
  %v5971 = vpow.pop %v5970
  %v5972 = vmul.f32 %v5963, 1.442695
  %v5973 = vpow.pop %v5972
  %v5974 = vmul.f32 %v5964, 1.442695
  %v5975 = vpow.pop %v5974
  %v5976 = vmul.f32 %v5965, 1.442695
  %v5977 = vpow.pop %v5976
  %v5978 = vmul.f32 %v5966, 1.442695
  %v5979 = vpow.pop %v5978
  %v5980 = vmul.f32 %v5967, 1.442695
  %v5981 = vpow.pop %v5980
  %v5982 = vmul.f32 %v5968, 1.442695
  %v5983 = vpow.pop %v5982
  %v5984 = vmul.f32 %v5969, 1.442695
  %v5985 = vpow.pop %v5984
  %v5986 = vsel %vm5937, %v5971, 0.0
  %5987 = vadd.xlane.f32.xlu0 %v5986
  %v5988 = vpop.xlane.xlu0 %5987
  %v5989 = vsel %vm5937, %v5973, 0.0
  %5990 = vadd.xlane.f32.xlu0 %v5989
  %v5991 = vpop.xlane.xlu0 %5990
  %v5992 = vsel %vm5937, %v5975, 0.0
  %5993 = vadd.xlane.f32.xlu0 %v5992
  %v5994 = vpop.xlane.xlu0 %5993
  %v5995 = vsel %vm5937, %v5977, 0.0
  %5996 = vadd.xlane.f32.xlu0 %v5995
  %v5997 = vpop.xlane.xlu0 %5996
  %v5998 = vsel %vm5937, %v5979, 0.0
  %5999 = vadd.xlane.f32.xlu0 %v5998
  %v6000 = vpop.xlane.xlu0 %5999
  %v6001 = vsel %vm5937, %v5981, 0.0
  %6002 = vadd.xlane.f32.xlu0 %v6001
  %v6003 = vpop.xlane.xlu0 %6002
  %v6004 = vsel %vm5937, %v5983, 0.0
  %6005 = vadd.xlane.f32.xlu0 %v6004
  %v6006 = vpop.xlane.xlu0 %6005
  %v6007 = vsel %vm5937, %v5985, 0.0
  %6008 = vadd.xlane.f32.xlu0 %v6007
  %v6009 = vpop.xlane.xlu0 %6008
  %v6010 = vrcp.pop %v5988
  %v6011 = vrcp.pop %v5991
  %v6012 = vrcp.pop %v5994
  %v6013 = vrcp.pop %v5997
  %v6014 = vrcp.pop %v6000
  %v6015 = vrcp.pop %v6003
  %v6016 = vrcp.pop %v6006
  %v6017 = vrcp.pop %v6009
  %v6018 = vmul.f32 %v5971, %v6010
  %v6019 = vmul.f32 %v5973, %v6011
  %v6020 = vmul.f32 %v5975, %v6012
  %v6021 = vmul.f32 %v5977, %v6013
  %v6022 = vmul.f32 %v5979, %v6014
  %v6023 = vmul.f32 %v5981, %v6015
  %v6024 = vmul.f32 %v5983, %v6016
  %v6025 = vmul.f32 %v5985, %v6017
  %v6027 = vsel %vm5937, %v6018, 0
  %6029 = vmatprep.subr.mxu0 0.0
  %6030 = vmatpush1.msra.mxu0 %v5021
  %6031 = vmatprep.subr.mxu0 0.0
  %6032 = vmatpush1.msra.mxu0 0.0
  %6033 = vmatprep.subr.mxu0 0.0
  %6034 = vmatpush1.msra.mxu0 0.0
  %6035 = vmatprep.subr.mxu0 0.0
  %6036 = vmatpush1.msra.mxu0 0.0
  %6037 = vmatprep.subr.mxu0 0.0
  %6038 = vmatpush1.msra.mxu0 0.0
  %6039 = vmatprep.subr.mxu0 0.0
  %6040 = vmatpush1.msra.mxu0 0.0
  %6041 = vmatprep.subr.mxu0 0.0
  %6042 = vmatpush1.msra.mxu0 0.0
  %6043 = vmatprep.subr.mxu0 0.0
  %6044 = vmatpush1.msra.mxu0 0.0
  %6045 = vmatprep.subr.mxu0 0.0
  %6046 = vmatpush1.msra.mxu0 0.0
  %6047 = vmatprep.subr.mxu0 0.0
  %6048 = vmatpush1.msra.mxu0 0.0
  %6049 = vmatprep.subr.mxu0 0.0
  %6050 = vmatpush1.msra.mxu0 0.0
  %6051 = vmatprep.subr.mxu0 0.0
  %6052 = vmatpush1.msra.mxu0 0.0
  %6053 = vmatprep.subr.mxu0 0.0
  %6054 = vmatpush1.msra.mxu0 0.0
  %6055 = vmatprep.subr.mxu0 0.0
  %6056 = vmatpush1.msra.mxu0 0.0
  %6057 = vmatprep.subr.mxu0 0.0
  %6058 = vmatpush1.msra.mxu0 0.0
  %6059 = vmatprep.subr.mxu0 0.0
  %6060 = vmatpush1.msra.mxu0 0.0
  %6061 = vmatprep.subr.mxu0 0.0
  %6062 = vmatpush1.msra.mxu0 0.0
  %6063 = vmatprep.subr.mxu0 0.0
  %6064 = vmatpush1.msra.mxu0 0.0
  %6065 = vmatprep.subr.mxu0 0.0
  %6066 = vmatpush1.msra.mxu0 0.0
  %6067 = vmatprep.subr.mxu0 0.0
  %6068 = vmatpush1.msra.mxu0 0.0
  %6069 = vmatprep.subr.mxu0 0.0
  %6070 = vmatpush1.msra.mxu0 0.0
  %6071 = vmatprep.subr.mxu0 0.0
  %6072 = vmatpush1.msra.mxu0 0.0
  %6073 = vmatprep.subr.mxu0 0.0
  %6074 = vmatpush1.msra.mxu0 0.0
  %6075 = vmatprep.subr.mxu0 0.0
  %6076 = vmatpush1.msra.mxu0 0.0
  %6077 = vmatprep.subr.mxu0 0.0
  %6078 = vmatpush1.msra.mxu0 0.0
  %6079 = vmatprep.subr.mxu0 0.0
  %6080 = vmatpush1.msra.mxu0 0.0
  %6081 = vmatprep.subr.mxu0 0.0
  %6082 = vmatpush1.msra.mxu0 0.0
  %6083 = vmatprep.subr.mxu0 0.0
  %6084 = vmatpush1.msra.mxu0 0.0
  %6085 = vmatprep.subr.mxu0 0.0
  %6086 = vmatpush1.msra.mxu0 0.0
  %6087 = vmatprep.subr.mxu0 0.0
  %6088 = vmatpush1.msra.mxu0 0.0
  %6089 = vmatprep.subr.mxu0 0.0
  %6090 = vmatpush1.msra.mxu0 0.0
  %6091 = vmatprep.subr.mxu0 0.0
  %6092 = vmatpush1.msra.mxu0 0.0
  %6093 = vmatprep.mubr.f32.mxu0 0.0
  %6094 = vmatmul.mubr.f32.gmra.mrb[0].mxu0 %v6027
  %v6095 = vpop.f32.mrb[0].mxu0
  %v6096 = vadd.f32 0.0, %v6095
  %v6097 = vpop.f32.mrb[0].mxu0
  %6098 = vdwg.mxu0
  %v6100 = vsel %vm5937, %v6019, 0
  %6102 = vmatprep.subr.mxu0 0.0
  %6103 = vmatpush1.msra.mxu0 %v5026
  %6104 = vmatprep.subr.mxu0 0.0
  %6105 = vmatpush1.msra.mxu0 0.0
  %6106 = vmatprep.subr.mxu0 0.0
  %6107 = vmatpush1.msra.mxu0 0.0
  %6108 = vmatprep.subr.mxu0 0.0
  %6109 = vmatpush1.msra.mxu0 0.0
  %6110 = vmatprep.subr.mxu0 0.0
  %6111 = vmatpush1.msra.mxu0 0.0
  %6112 = vmatprep.subr.mxu0 0.0
  %6113 = vmatpush1.msra.mxu0 0.0
  %6114 = vmatprep.subr.mxu0 0.0
  %6115 = vmatpush1.msra.mxu0 0.0
  %6116 = vmatprep.subr.mxu0 0.0
  %6117 = vmatpush1.msra.mxu0 0.0
  %6118 = vmatprep.subr.mxu0 0.0
  %6119 = vmatpush1.msra.mxu0 0.0
  %6120 = vmatprep.subr.mxu0 0.0
  %6121 = vmatpush1.msra.mxu0 0.0
  %6122 = vmatprep.subr.mxu0 0.0
  %6123 = vmatpush1.msra.mxu0 0.0
  %6124 = vmatprep.subr.mxu0 0.0
  %6125 = vmatpush1.msra.mxu0 0.0
  %6126 = vmatprep.subr.mxu0 0.0
  %6127 = vmatpush1.msra.mxu0 0.0
  %6128 = vmatprep.subr.mxu0 0.0
  %6129 = vmatpush1.msra.mxu0 0.0
  %6130 = vmatprep.subr.mxu0 0.0
  %6131 = vmatpush1.msra.mxu0 0.0
  %6132 = vmatprep.subr.mxu0 0.0
  %6133 = vmatpush1.msra.mxu0 0.0
  %6134 = vmatprep.subr.mxu0 0.0
  %6135 = vmatpush1.msra.mxu0 0.0
  %6136 = vmatprep.subr.mxu0 0.0
  %6137 = vmatpush1.msra.mxu0 0.0
  %6138 = vmatprep.subr.mxu0 0.0
  %6139 = vmatpush1.msra.mxu0 0.0
  %6140 = vmatprep.subr.mxu0 0.0
  %6141 = vmatpush1.msra.mxu0 0.0
  %6142 = vmatprep.subr.mxu0 0.0
  %6143 = vmatpush1.msra.mxu0 0.0
  %6144 = vmatprep.subr.mxu0 0.0
  %6145 = vmatpush1.msra.mxu0 0.0
  %6146 = vmatprep.subr.mxu0 0.0
  %6147 = vmatpush1.msra.mxu0 0.0
  %6148 = vmatprep.subr.mxu0 0.0
  %6149 = vmatpush1.msra.mxu0 0.0
  %6150 = vmatprep.subr.mxu0 0.0
  %6151 = vmatpush1.msra.mxu0 0.0
  %6152 = vmatprep.subr.mxu0 0.0
  %6153 = vmatpush1.msra.mxu0 0.0
  %6154 = vmatprep.subr.mxu0 0.0
  %6155 = vmatpush1.msra.mxu0 0.0
  %6156 = vmatprep.subr.mxu0 0.0
  %6157 = vmatpush1.msra.mxu0 0.0
  %6158 = vmatprep.subr.mxu0 0.0
  %6159 = vmatpush1.msra.mxu0 0.0
  %6160 = vmatprep.subr.mxu0 0.0
  %6161 = vmatpush1.msra.mxu0 0.0
  %6162 = vmatprep.subr.mxu0 0.0
  %6163 = vmatpush1.msra.mxu0 0.0
  %6164 = vmatprep.subr.mxu0 0.0
  %6165 = vmatpush1.msra.mxu0 0.0
  %6166 = vmatprep.mubr.f32.mxu0 0.0
  %6167 = vmatmul.mubr.f32.gmra.mrb[0].mxu0 %v6100
  %v6168 = vpop.f32.mrb[0].mxu0
  %v6169 = vadd.f32 0.0, %v6168
  %v6170 = vpop.f32.mrb[0].mxu0
  %6171 = vdwg.mxu0
  %v6173 = vsel %vm5937, %v6020, 0
  %6175 = vmatprep.subr.mxu0 0.0
  %6176 = vmatpush1.msra.mxu0 %v5031
  %6177 = vmatprep.subr.mxu0 0.0
  %6178 = vmatpush1.msra.mxu0 0.0
  %6179 = vmatprep.subr.mxu0 0.0
  %6180 = vmatpush1.msra.mxu0 0.0
  %6181 = vmatprep.subr.mxu0 0.0
  %6182 = vmatpush1.msra.mxu0 0.0
  %6183 = vmatprep.subr.mxu0 0.0
  %6184 = vmatpush1.msra.mxu0 0.0
  %6185 = vmatprep.subr.mxu0 0.0
  %6186 = vmatpush1.msra.mxu0 0.0
  %6187 = vmatprep.subr.mxu0 0.0
  %6188 = vmatpush1.msra.mxu0 0.0
  %6189 = vmatprep.subr.mxu0 0.0
  %6190 = vmatpush1.msra.mxu0 0.0
  %6191 = vmatprep.subr.mxu0 0.0
  %6192 = vmatpush1.msra.mxu0 0.0
  %6193 = vmatprep.subr.mxu0 0.0
  %6194 = vmatpush1.msra.mxu0 0.0
  %6195 = vmatprep.subr.mxu0 0.0
  %6196 = vmatpush1.msra.mxu0 0.0
  %6197 = vmatprep.subr.mxu0 0.0
  %6198 = vmatpush1.msra.mxu0 0.0
  %6199 = vmatprep.subr.mxu0 0.0
  %6200 = vmatpush1.msra.mxu0 0.0
  %6201 = vmatprep.subr.mxu0 0.0
  %6202 = vmatpush1.msra.mxu0 0.0
  %6203 = vmatprep.subr.mxu0 0.0
  %6204 = vmatpush1.msra.mxu0 0.0
  %6205 = vmatprep.subr.mxu0 0.0
  %6206 = vmatpush1.msra.mxu0 0.0
  %6207 = vmatprep.subr.mxu0 0.0
  %6208 = vmatpush1.msra.mxu0 0.0
  %6209 = vmatprep.subr.mxu0 0.0
  %6210 = vmatpush1.msra.mxu0 0.0
  %6211 = vmatprep.subr.mxu0 0.0
  %6212 = vmatpush1.msra.mxu0 0.0
  %6213 = vmatprep.subr.mxu0 0.0
  %6214 = vmatpush1.msra.mxu0 0.0
  %6215 = vmatprep.subr.mxu0 0.0
  %6216 = vmatpush1.msra.mxu0 0.0
  %6217 = vmatprep.subr.mxu0 0.0
  %6218 = vmatpush1.msra.mxu0 0.0
  %6219 = vmatprep.subr.mxu0 0.0
  %6220 = vmatpush1.msra.mxu0 0.0
  %6221 = vmatprep.subr.mxu0 0.0
  %6222 = vmatpush1.msra.mxu0 0.0
  %6223 = vmatprep.subr.mxu0 0.0
  %6224 = vmatpush1.msra.mxu0 0.0
  %6225 = vmatprep.subr.mxu0 0.0
  %6226 = vmatpush1.msra.mxu0 0.0
  %6227 = vmatprep.subr.mxu0 0.0
  %6228 = vmatpush1.msra.mxu0 0.0
  %6229 = vmatprep.subr.mxu0 0.0
  %6230 = vmatpush1.msra.mxu0 0.0
  %6231 = vmatprep.subr.mxu0 0.0
  %6232 = vmatpush1.msra.mxu0 0.0
  %6233 = vmatprep.subr.mxu0 0.0
  %6234 = vmatpush1.msra.mxu0 0.0
  %6235 = vmatprep.subr.mxu0 0.0
  %6236 = vmatpush1.msra.mxu0 0.0
  %6237 = vmatprep.subr.mxu0 0.0
  %6238 = vmatpush1.msra.mxu0 0.0
  %6239 = vmatprep.mubr.f32.mxu0 0.0
  %6240 = vmatmul.mubr.f32.gmra.mrb[0].mxu0 %v6173
  %v6241 = vpop.f32.mrb[0].mxu0
  %v6242 = vadd.f32 0.0, %v6241
  %v6243 = vpop.f32.mrb[0].mxu0
  %6244 = vdwg.mxu0
  %v6246 = vsel %vm5937, %v6021, 0
  %6248 = vmatprep.subr.mxu0 0.0
  %6249 = vmatpush1.msra.mxu0 %v5036
  %6250 = vmatprep.subr.mxu0 0.0
  %6251 = vmatpush1.msra.mxu0 0.0
  %6252 = vmatprep.subr.mxu0 0.0
  %6253 = vmatpush1.msra.mxu0 0.0
  %6254 = vmatprep.subr.mxu0 0.0
  %6255 = vmatpush1.msra.mxu0 0.0
  %6256 = vmatprep.subr.mxu0 0.0
  %6257 = vmatpush1.msra.mxu0 0.0
  %6258 = vmatprep.subr.mxu0 0.0
  %6259 = vmatpush1.msra.mxu0 0.0
  %6260 = vmatprep.subr.mxu0 0.0
  %6261 = vmatpush1.msra.mxu0 0.0
  %6262 = vmatprep.subr.mxu0 0.0
  %6263 = vmatpush1.msra.mxu0 0.0
  %6264 = vmatprep.subr.mxu0 0.0
  %6265 = vmatpush1.msra.mxu0 0.0
  %6266 = vmatprep.subr.mxu0 0.0
  %6267 = vmatpush1.msra.mxu0 0.0
  %6268 = vmatprep.subr.mxu0 0.0
  %6269 = vmatpush1.msra.mxu0 0.0
  %6270 = vmatprep.subr.mxu0 0.0
  %6271 = vmatpush1.msra.mxu0 0.0
  %6272 = vmatprep.subr.mxu0 0.0
  %6273 = vmatpush1.msra.mxu0 0.0
  %6274 = vmatprep.subr.mxu0 0.0
  %6275 = vmatpush1.msra.mxu0 0.0
  %6276 = vmatprep.subr.mxu0 0.0
  %6277 = vmatpush1.msra.mxu0 0.0
  %6278 = vmatprep.subr.mxu0 0.0
  %6279 = vmatpush1.msra.mxu0 0.0
  %6280 = vmatprep.subr.mxu0 0.0
  %6281 = vmatpush1.msra.mxu0 0.0
  %6282 = vmatprep.subr.mxu0 0.0
  %6283 = vmatpush1.msra.mxu0 0.0
  %6284 = vmatprep.subr.mxu0 0.0
  %6285 = vmatpush1.msra.mxu0 0.0
  %6286 = vmatprep.subr.mxu0 0.0
  %6287 = vmatpush1.msra.mxu0 0.0
  %6288 = vmatprep.subr.mxu0 0.0
  %6289 = vmatpush1.msra.mxu0 0.0
  %6290 = vmatprep.subr.mxu0 0.0
  %6291 = vmatpush1.msra.mxu0 0.0
  %6292 = vmatprep.subr.mxu0 0.0
  %6293 = vmatpush1.msra.mxu0 0.0
  %6294 = vmatprep.subr.mxu0 0.0
  %6295 = vmatpush1.msra.mxu0 0.0
  %6296 = vmatprep.subr.mxu0 0.0
  %6297 = vmatpush1.msra.mxu0 0.0
  %6298 = vmatprep.subr.mxu0 0.0
  %6299 = vmatpush1.msra.mxu0 0.0
  %6300 = vmatprep.subr.mxu0 0.0
  %6301 = vmatpush1.msra.mxu0 0.0
  %6302 = vmatprep.subr.mxu0 0.0
  %6303 = vmatpush1.msra.mxu0 0.0
  %6304 = vmatprep.subr.mxu0 0.0
  %6305 = vmatpush1.msra.mxu0 0.0
  %6306 = vmatprep.subr.mxu0 0.0
  %6307 = vmatpush1.msra.mxu0 0.0
  %6308 = vmatprep.subr.mxu0 0.0
  %6309 = vmatpush1.msra.mxu0 0.0
  %6310 = vmatprep.subr.mxu0 0.0
  %6311 = vmatpush1.msra.mxu0 0.0
  %6312 = vmatprep.mubr.f32.mxu0 0.0
  %6313 = vmatmul.mubr.f32.gmra.mrb[0].mxu0 %v6246
  %v6314 = vpop.f32.mrb[0].mxu0
  %v6315 = vadd.f32 0.0, %v6314
  %v6316 = vpop.f32.mrb[0].mxu0
  %6317 = vdwg.mxu0
  %v6319 = vsel %vm5937, %v6022, 0
  %6321 = vmatprep.subr.mxu0 0.0
  %6322 = vmatpush1.msra.mxu0 %v5041
  %6323 = vmatprep.subr.mxu0 0.0
  %6324 = vmatpush1.msra.mxu0 0.0
  %6325 = vmatprep.subr.mxu0 0.0
  %6326 = vmatpush1.msra.mxu0 0.0
  %6327 = vmatprep.subr.mxu0 0.0
  %6328 = vmatpush1.msra.mxu0 0.0
  %6329 = vmatprep.subr.mxu0 0.0
  %6330 = vmatpush1.msra.mxu0 0.0
  %6331 = vmatprep.subr.mxu0 0.0
  %6332 = vmatpush1.msra.mxu0 0.0
  %6333 = vmatprep.subr.mxu0 0.0
  %6334 = vmatpush1.msra.mxu0 0.0
  %6335 = vmatprep.subr.mxu0 0.0
  %6336 = vmatpush1.msra.mxu0 0.0
  %6337 = vmatprep.subr.mxu0 0.0
  %6338 = vmatpush1.msra.mxu0 0.0
  %6339 = vmatprep.subr.mxu0 0.0
  %6340 = vmatpush1.msra.mxu0 0.0
  %6341 = vmatprep.subr.mxu0 0.0
  %6342 = vmatpush1.msra.mxu0 0.0
  %6343 = vmatprep.subr.mxu0 0.0
  %6344 = vmatpush1.msra.mxu0 0.0
  %6345 = vmatprep.subr.mxu0 0.0
  %6346 = vmatpush1.msra.mxu0 0.0
  %6347 = vmatprep.subr.mxu0 0.0
  %6348 = vmatpush1.msra.mxu0 0.0
  %6349 = vmatprep.subr.mxu0 0.0
  %6350 = vmatpush1.msra.mxu0 0.0
  %6351 = vmatprep.subr.mxu0 0.0
  %6352 = vmatpush1.msra.mxu0 0.0
  %6353 = vmatprep.subr.mxu0 0.0
  %6354 = vmatpush1.msra.mxu0 0.0
  %6355 = vmatprep.subr.mxu0 0.0
  %6356 = vmatpush1.msra.mxu0 0.0
  %6357 = vmatprep.subr.mxu0 0.0
  %6358 = vmatpush1.msra.mxu0 0.0
  %6359 = vmatprep.subr.mxu0 0.0
  %6360 = vmatpush1.msra.mxu0 0.0
  %6361 = vmatprep.subr.mxu0 0.0
  %6362 = vmatpush1.msra.mxu0 0.0
  %6363 = vmatprep.subr.mxu0 0.0
  %6364 = vmatpush1.msra.mxu0 0.0
  %6365 = vmatprep.subr.mxu0 0.0
  %6366 = vmatpush1.msra.mxu0 0.0
  %6367 = vmatprep.subr.mxu0 0.0
  %6368 = vmatpush1.msra.mxu0 0.0
  %6369 = vmatprep.subr.mxu0 0.0
  %6370 = vmatpush1.msra.mxu0 0.0
  %6371 = vmatprep.subr.mxu0 0.0
  %6372 = vmatpush1.msra.mxu0 0.0
  %6373 = vmatprep.subr.mxu0 0.0
  %6374 = vmatpush1.msra.mxu0 0.0
  %6375 = vmatprep.subr.mxu0 0.0
  %6376 = vmatpush1.msra.mxu0 0.0
  %6377 = vmatprep.subr.mxu0 0.0
  %6378 = vmatpush1.msra.mxu0 0.0
  %6379 = vmatprep.subr.mxu0 0.0
  %6380 = vmatpush1.msra.mxu0 0.0
  %6381 = vmatprep.subr.mxu0 0.0
  %6382 = vmatpush1.msra.mxu0 0.0
  %6383 = vmatprep.subr.mxu0 0.0
  %6384 = vmatpush1.msra.mxu0 0.0
  %6385 = vmatprep.mubr.f32.mxu0 0.0
  %6386 = vmatmul.mubr.f32.gmra.mrb[0].mxu0 %v6319
  %v6387 = vpop.f32.mrb[0].mxu0
  %v6388 = vadd.f32 0.0, %v6387
  %v6389 = vpop.f32.mrb[0].mxu0
  %6390 = vdwg.mxu0
  %v6392 = vsel %vm5937, %v6023, 0
  %6394 = vmatprep.subr.mxu0 0.0
  %6395 = vmatpush1.msra.mxu0 %v5046
  %6396 = vmatprep.subr.mxu0 0.0
  %6397 = vmatpush1.msra.mxu0 0.0
  %6398 = vmatprep.subr.mxu0 0.0
  %6399 = vmatpush1.msra.mxu0 0.0
  %6400 = vmatprep.subr.mxu0 0.0
  %6401 = vmatpush1.msra.mxu0 0.0
  %6402 = vmatprep.subr.mxu0 0.0
  %6403 = vmatpush1.msra.mxu0 0.0
  %6404 = vmatprep.subr.mxu0 0.0
  %6405 = vmatpush1.msra.mxu0 0.0
  %6406 = vmatprep.subr.mxu0 0.0
  %6407 = vmatpush1.msra.mxu0 0.0
  %6408 = vmatprep.subr.mxu0 0.0
  %6409 = vmatpush1.msra.mxu0 0.0
  %6410 = vmatprep.subr.mxu0 0.0
  %6411 = vmatpush1.msra.mxu0 0.0
  %6412 = vmatprep.subr.mxu0 0.0
  %6413 = vmatpush1.msra.mxu0 0.0
  %6414 = vmatprep.subr.mxu0 0.0
  %6415 = vmatpush1.msra.mxu0 0.0
  %6416 = vmatprep.subr.mxu0 0.0
  %6417 = vmatpush1.msra.mxu0 0.0
  %6418 = vmatprep.subr.mxu0 0.0
  %6419 = vmatpush1.msra.mxu0 0.0
  %6420 = vmatprep.subr.mxu0 0.0
  %6421 = vmatpush1.msra.mxu0 0.0
  %6422 = vmatprep.subr.mxu0 0.0
  %6423 = vmatpush1.msra.mxu0 0.0
  %6424 = vmatprep.subr.mxu0 0.0
  %6425 = vmatpush1.msra.mxu0 0.0
  %6426 = vmatprep.subr.mxu0 0.0
  %6427 = vmatpush1.msra.mxu0 0.0
  %6428 = vmatprep.subr.mxu0 0.0
  %6429 = vmatpush1.msra.mxu0 0.0
  %6430 = vmatprep.subr.mxu0 0.0
  %6431 = vmatpush1.msra.mxu0 0.0
  %6432 = vmatprep.subr.mxu0 0.0
  %6433 = vmatpush1.msra.mxu0 0.0
  %6434 = vmatprep.subr.mxu0 0.0
  %6435 = vmatpush1.msra.mxu0 0.0
  %6436 = vmatprep.subr.mxu0 0.0
  %6437 = vmatpush1.msra.mxu0 0.0
  %6438 = vmatprep.subr.mxu0 0.0
  %6439 = vmatpush1.msra.mxu0 0.0
  %6440 = vmatprep.subr.mxu0 0.0
  %6441 = vmatpush1.msra.mxu0 0.0
  %6442 = vmatprep.subr.mxu0 0.0
  %6443 = vmatpush1.msra.mxu0 0.0
  %6444 = vmatprep.subr.mxu0 0.0
  %6445 = vmatpush1.msra.mxu0 0.0
  %6446 = vmatprep.subr.mxu0 0.0
  %6447 = vmatpush1.msra.mxu0 0.0
  %6448 = vmatprep.subr.mxu0 0.0
  %6449 = vmatpush1.msra.mxu0 0.0
  %6450 = vmatprep.subr.mxu0 0.0
  %6451 = vmatpush1.msra.mxu0 0.0
  %6452 = vmatprep.subr.mxu0 0.0
  %6453 = vmatpush1.msra.mxu0 0.0
  %6454 = vmatprep.subr.mxu0 0.0
  %6455 = vmatpush1.msra.mxu0 0.0
  %6456 = vmatprep.subr.mxu0 0.0
  %6457 = vmatpush1.msra.mxu0 0.0
  %6458 = vmatprep.mubr.f32.mxu0 0.0
  %6459 = vmatmul.mubr.f32.gmra.mrb[0].mxu0 %v6392
  %v6460 = vpop.f32.mrb[0].mxu0
  %v6461 = vadd.f32 0.0, %v6460
  %v6462 = vpop.f32.mrb[0].mxu0
  %6463 = vdwg.mxu0
  %v6465 = vsel %vm5937, %v6024, 0
  %6467 = vmatprep.subr.mxu0 0.0
  %6468 = vmatpush1.msra.mxu0 %v5051
  %6469 = vmatprep.subr.mxu0 0.0
  %6470 = vmatpush1.msra.mxu0 0.0
  %6471 = vmatprep.subr.mxu0 0.0
  %6472 = vmatpush1.msra.mxu0 0.0
  %6473 = vmatprep.subr.mxu0 0.0
  %6474 = vmatpush1.msra.mxu0 0.0
  %6475 = vmatprep.subr.mxu0 0.0
  %6476 = vmatpush1.msra.mxu0 0.0
  %6477 = vmatprep.subr.mxu0 0.0
  %6478 = vmatpush1.msra.mxu0 0.0
  %6479 = vmatprep.subr.mxu0 0.0
  %6480 = vmatpush1.msra.mxu0 0.0
  %6481 = vmatprep.subr.mxu0 0.0
  %6482 = vmatpush1.msra.mxu0 0.0
  %6483 = vmatprep.subr.mxu0 0.0
  %6484 = vmatpush1.msra.mxu0 0.0
  %6485 = vmatprep.subr.mxu0 0.0
  %6486 = vmatpush1.msra.mxu0 0.0
  %6487 = vmatprep.subr.mxu0 0.0
  %6488 = vmatpush1.msra.mxu0 0.0
  %6489 = vmatprep.subr.mxu0 0.0
  %6490 = vmatpush1.msra.mxu0 0.0
  %6491 = vmatprep.subr.mxu0 0.0
  %6492 = vmatpush1.msra.mxu0 0.0
  %6493 = vmatprep.subr.mxu0 0.0
  %6494 = vmatpush1.msra.mxu0 0.0
  %6495 = vmatprep.subr.mxu0 0.0
  %6496 = vmatpush1.msra.mxu0 0.0
  %6497 = vmatprep.subr.mxu0 0.0
  %6498 = vmatpush1.msra.mxu0 0.0
  %6499 = vmatprep.subr.mxu0 0.0
  %6500 = vmatpush1.msra.mxu0 0.0
  %6501 = vmatprep.subr.mxu0 0.0
  %6502 = vmatpush1.msra.mxu0 0.0
  %6503 = vmatprep.subr.mxu0 0.0
  %6504 = vmatpush1.msra.mxu0 0.0
  %6505 = vmatprep.subr.mxu0 0.0
  %6506 = vmatpush1.msra.mxu0 0.0
  %6507 = vmatprep.subr.mxu0 0.0
  %6508 = vmatpush1.msra.mxu0 0.0
  %6509 = vmatprep.subr.mxu0 0.0
  %6510 = vmatpush1.msra.mxu0 0.0
  %6511 = vmatprep.subr.mxu0 0.0
  %6512 = vmatpush1.msra.mxu0 0.0
  %6513 = vmatprep.subr.mxu0 0.0
  %6514 = vmatpush1.msra.mxu0 0.0
  %6515 = vmatprep.subr.mxu0 0.0
  %6516 = vmatpush1.msra.mxu0 0.0
  %6517 = vmatprep.subr.mxu0 0.0
  %6518 = vmatpush1.msra.mxu0 0.0
  %6519 = vmatprep.subr.mxu0 0.0
  %6520 = vmatpush1.msra.mxu0 0.0
  %6521 = vmatprep.subr.mxu0 0.0
  %6522 = vmatpush1.msra.mxu0 0.0
  %6523 = vmatprep.subr.mxu0 0.0
  %6524 = vmatpush1.msra.mxu0 0.0
  %6525 = vmatprep.subr.mxu0 0.0
  %6526 = vmatpush1.msra.mxu0 0.0
  %6527 = vmatprep.subr.mxu0 0.0
  %6528 = vmatpush1.msra.mxu0 0.0
  %6529 = vmatprep.subr.mxu0 0.0
  %6530 = vmatpush1.msra.mxu0 0.0
  %6531 = vmatprep.mubr.f32.mxu0 0.0
  %6532 = vmatmul.mubr.f32.gmra.mrb[0].mxu0 %v6465
  %v6533 = vpop.f32.mrb[0].mxu0
  %v6534 = vadd.f32 0.0, %v6533
  %v6535 = vpop.f32.mrb[0].mxu0
  %6536 = vdwg.mxu0
  %v6538 = vsel %vm5937, %v6025, 0
  %6540 = vmatprep.subr.mxu0 0.0
  %6541 = vmatpush1.msra.mxu0 %v5056
  %6542 = vmatprep.subr.mxu0 0.0
  %6543 = vmatpush1.msra.mxu0 0.0
  %6544 = vmatprep.subr.mxu0 0.0
  %6545 = vmatpush1.msra.mxu0 0.0
  %6546 = vmatprep.subr.mxu0 0.0
  %6547 = vmatpush1.msra.mxu0 0.0
  %6548 = vmatprep.subr.mxu0 0.0
  %6549 = vmatpush1.msra.mxu0 0.0
  %6550 = vmatprep.subr.mxu0 0.0
  %6551 = vmatpush1.msra.mxu0 0.0
  %6552 = vmatprep.subr.mxu0 0.0
  %6553 = vmatpush1.msra.mxu0 0.0
  %6554 = vmatprep.subr.mxu0 0.0
  %6555 = vmatpush1.msra.mxu0 0.0
  %6556 = vmatprep.subr.mxu0 0.0
  %6557 = vmatpush1.msra.mxu0 0.0
  %6558 = vmatprep.subr.mxu0 0.0
  %6559 = vmatpush1.msra.mxu0 0.0
  %6560 = vmatprep.subr.mxu0 0.0
  %6561 = vmatpush1.msra.mxu0 0.0
  %6562 = vmatprep.subr.mxu0 0.0
  %6563 = vmatpush1.msra.mxu0 0.0
  %6564 = vmatprep.subr.mxu0 0.0
  %6565 = vmatpush1.msra.mxu0 0.0
  %6566 = vmatprep.subr.mxu0 0.0
  %6567 = vmatpush1.msra.mxu0 0.0
  %6568 = vmatprep.subr.mxu0 0.0
  %6569 = vmatpush1.msra.mxu0 0.0
  %6570 = vmatprep.subr.mxu0 0.0
  %6571 = vmatpush1.msra.mxu0 0.0
  %6572 = vmatprep.subr.mxu0 0.0
  %6573 = vmatpush1.msra.mxu0 0.0
  %6574 = vmatprep.subr.mxu0 0.0
  %6575 = vmatpush1.msra.mxu0 0.0
  %6576 = vmatprep.subr.mxu0 0.0
  %6577 = vmatpush1.msra.mxu0 0.0
  %6578 = vmatprep.subr.mxu0 0.0
  %6579 = vmatpush1.msra.mxu0 0.0
  %6580 = vmatprep.subr.mxu0 0.0
  %6581 = vmatpush1.msra.mxu0 0.0
  %6582 = vmatprep.subr.mxu0 0.0
  %6583 = vmatpush1.msra.mxu0 0.0
  %6584 = vmatprep.subr.mxu0 0.0
  %6585 = vmatpush1.msra.mxu0 0.0
  %6586 = vmatprep.subr.mxu0 0.0
  %6587 = vmatpush1.msra.mxu0 0.0
  %6588 = vmatprep.subr.mxu0 0.0
  %6589 = vmatpush1.msra.mxu0 0.0
  %6590 = vmatprep.subr.mxu0 0.0
  %6591 = vmatpush1.msra.mxu0 0.0
  %6592 = vmatprep.subr.mxu0 0.0
  %6593 = vmatpush1.msra.mxu0 0.0
  %6594 = vmatprep.subr.mxu0 0.0
  %6595 = vmatpush1.msra.mxu0 0.0
  %6596 = vmatprep.subr.mxu0 0.0
  %6597 = vmatpush1.msra.mxu0 0.0
  %6598 = vmatprep.subr.mxu0 0.0
  %6599 = vmatpush1.msra.mxu0 0.0
  %6600 = vmatprep.subr.mxu0 0.0
  %6601 = vmatpush1.msra.mxu0 0.0
  %6602 = vmatprep.subr.mxu0 0.0
  %6603 = vmatpush1.msra.mxu0 0.0
  %6604 = vmatprep.mubr.f32.mxu0 0.0
  %6605 = vmatmul.mubr.f32.gmra.mrb[0].mxu0 %v6538
  %v6606 = vpop.f32.mrb[0].mxu0
  %v6607 = vadd.f32 0.0, %v6606
  %v6608 = vpop.f32.mrb[0].mxu0
  %6609 = vdwg.mxu0
  %v6610 = vld [vmem:[%s15] sm:$0xff]
  %v6611 = vld [vmem:[%s15 + $0x8] sm:$0xff]
  %v6612 = vld [vmem:[%s15 + $0x10] sm:$0xff]
  %v6613 = vld [vmem:[%s15 + $0x18] sm:$0xff]
  %s6614 = scalar_lea.vmem %s15, 32
  %v6615 = vld [vmem:[%s6614] sm:$0xff]
  %v6616 = vld [vmem:[%s6614 + $0x8] sm:$0xff]
  %v6617 = vld [vmem:[%s6614 + $0x10] sm:$0xff]
  %v6618 = vld [vmem:[%s6614 + $0x18] sm:$0xff]
  %6619 = vmatprep.subr.mxu0 0.0
  %6620 = vmatpush1.msra.mxu0 %v6615
  %6621 = vmatprep.subr.mxu0 0.0
  %6622 = vmatpush1.msra.mxu0 %v6616
  %6623 = vmatprep.subr.mxu0 0.0
  %6624 = vmatpush1.msra.mxu0 %v6617
  %6625 = vmatprep.subr.mxu0 0.0
  %6626 = vmatpush1.msra.mxu0 %v6618
  %6627 = vmatprep.subr.mxu0 0.0
  %6628 = vmatpush1.msra.mxu0 0.0
  %6629 = vmatprep.subr.mxu0 0.0
  %6630 = vmatpush1.msra.mxu0 0.0
  %6631 = vmatprep.subr.mxu0 0.0
  %6632 = vmatpush1.msra.mxu0 0.0
  %6633 = vmatprep.subr.mxu0 0.0
  %6634 = vmatpush1.msra.mxu0 0.0
  %6635 = vmatprep.subr.mxu0 0.0
  %6636 = vmatpush1.msra.mxu0 0.0
  %6637 = vmatprep.subr.mxu0 0.0
  %6638 = vmatpush1.msra.mxu0 0.0
  %6639 = vmatprep.subr.mxu0 0.0
  %6640 = vmatpush1.msra.mxu0 0.0
  %6641 = vmatprep.subr.mxu0 0.0
  %6642 = vmatpush1.msra.mxu0 0.0
  %6643 = vmatprep.subr.mxu0 0.0
  %6644 = vmatpush1.msra.mxu0 0.0
  %6645 = vmatprep.subr.mxu0 0.0
  %6646 = vmatpush1.msra.mxu0 0.0
  %6647 = vmatprep.subr.mxu0 0.0
  %6648 = vmatpush1.msra.mxu0 0.0
  %6649 = vmatprep.subr.mxu0 0.0
  %6650 = vmatpush1.msra.mxu0 0.0
  %6651 = vmatprep.subr.mxu0 0.0
  %6652 = vmatpush1.msra.mxu0 0.0
  %6653 = vmatprep.subr.mxu0 0.0
  %6654 = vmatpush1.msra.mxu0 0.0
  %6655 = vmatprep.subr.mxu0 0.0
  %6656 = vmatpush1.msra.mxu0 0.0
  %6657 = vmatprep.subr.mxu0 0.0
  %6658 = vmatpush1.msra.mxu0 0.0
  %6659 = vmatprep.subr.mxu0 0.0
  %6660 = vmatpush1.msra.mxu0 0.0
  %6661 = vmatprep.subr.mxu0 0.0
  %6662 = vmatpush1.msra.mxu0 0.0
  %6663 = vmatprep.subr.mxu0 0.0
  %6664 = vmatpush1.msra.mxu0 0.0
  %6665 = vmatprep.subr.mxu0 0.0
  %6666 = vmatpush1.msra.mxu0 0.0
  %6667 = vmatprep.subr.mxu0 0.0
  %6668 = vmatpush1.msra.mxu0 0.0
  %6669 = vmatprep.subr.mxu0 0.0
  %6670 = vmatpush1.msra.mxu0 0.0
  %6671 = vmatprep.subr.mxu0 0.0
  %6672 = vmatpush1.msra.mxu0 0.0
  %6673 = vmatprep.subr.mxu0 0.0
  %6674 = vmatpush1.msra.mxu0 0.0
  %6675 = vmatprep.subr.mxu0 0.0
  %6676 = vmatpush1.msra.mxu0 0.0
  %6677 = vmatprep.subr.mxu0 0.0
  %6678 = vmatpush1.msra.mxu0 0.0
  %6679 = vmatprep.subr.mxu0 0.0
  %6680 = vmatpush1.msra.mxu0 0.0
  %6681 = vmatprep.subr.mxu0 0.0
  %6682 = vmatpush1.msra.mxu0 0.0
  %6683 = vmatprep.mubr.f32.mxu0 0.0
  %6684 = vmatmul.mubr.f32.gmra.mrb[0].mxu0 %v5201
  %v6685 = vpop.f32.mrb[0].mxu0
  %v6686 = vadd.f32 0.0, %v6685
  %v6687 = vpop.f32.mrb[0].mxu0
  %6688 = vmatprep.mubr.f32.mxu0 0.0
  %6689 = vmatmul.mubr.f32.gmra.mrb[0].mxu0 %v5204
  %v6690 = vpop.f32.mrb[0].mxu0
  %v6691 = vadd.f32 0.0, %v6690
  %v6692 = vpop.f32.mrb[0].mxu0
  %6693 = vmatprep.mubr.f32.mxu0 0.0
  %6694 = vmatmul.mubr.f32.gmra.mrb[0].mxu0 %v5207
  %v6695 = vpop.f32.mrb[0].mxu0
  %v6696 = vadd.f32 0.0, %v6695
  %v6697 = vpop.f32.mrb[0].mxu0
  %6698 = vmatprep.mubr.f32.mxu0 0.0
  %6699 = vmatmul.mubr.f32.gmra.mrb[0].mxu0 %v5210
  %v6700 = vpop.f32.mrb[0].mxu0
  %v6701 = vadd.f32 0.0, %v6700
  %v6702 = vpop.f32.mrb[0].mxu0
  %6703 = vmatprep.mubr.f32.mxu0 0.0
  %6704 = vmatmul.mubr.f32.gmra.mrb[0].mxu0 %v5213
  %v6705 = vpop.f32.mrb[0].mxu0
  %v6706 = vadd.f32 0.0, %v6705
  %v6707 = vpop.f32.mrb[0].mxu0
  %6708 = vmatprep.mubr.f32.mxu0 0.0
  %6709 = vmatmul.mubr.f32.gmra.mrb[0].mxu0 %v5216
  %v6710 = vpop.f32.mrb[0].mxu0
  %v6711 = vadd.f32 0.0, %v6710
  %v6712 = vpop.f32.mrb[0].mxu0
  %6713 = vmatprep.mubr.f32.mxu0 0.0
  %6714 = vmatmul.mubr.f32.gmra.mrb[0].mxu0 %v5219
  %v6715 = vpop.f32.mrb[0].mxu0
  %v6716 = vadd.f32 0.0, %v6715
  %v6717 = vpop.f32.mrb[0].mxu0
  %6718 = vmatprep.mubr.f32.mxu0 0.0
  %6719 = vmatmul.mubr.f32.gmra.mrb[0].mxu0 %v5222
  %v6720 = vpop.f32.mrb[0].mxu0
  %v6721 = vadd.f32 0.0, %v6720
  %v6722 = vpop.f32.mrb[0].mxu0
  %6723 = vdwg.mxu0
  %v6725 = vsel %vm91, %v6096, 0
  %v6728 = vsel %vm91, %v6169, 0
  %v6731 = vsel %vm91, %v6242, 0
  %v6734 = vsel %vm91, %v6315, 0
  %v6737 = vsel %vm91, %v6388, 0
  %v6740 = vsel %vm91, %v6461, 0
  %v6743 = vsel %vm91, %v6534, 0
  %v6746 = vsel %vm91, %v6607, 0
  %6748 = vmatprep.subr.mxu0 0.0
  %6749 = vmatpush1.msra.mxu0 %v6610
  %6750 = vmatprep.subr.mxu0 0.0
  %6751 = vmatpush1.msra.mxu0 %v6611
  %6752 = vmatprep.subr.mxu0 0.0
  %6753 = vmatpush1.msra.mxu0 %v6612
  %6754 = vmatprep.subr.mxu0 0.0
  %6755 = vmatpush1.msra.mxu0 %v6613
  %6756 = vmatprep.subr.mxu0 0.0
  %6757 = vmatpush1.msra.mxu0 0.0
  %6758 = vmatprep.subr.mxu0 0.0
  %6759 = vmatpush1.msra.mxu0 0.0
  %6760 = vmatprep.subr.mxu0 0.0
  %6761 = vmatpush1.msra.mxu0 0.0
  %6762 = vmatprep.subr.mxu0 0.0
  %6763 = vmatpush1.msra.mxu0 0.0
  %6764 = vmatprep.subr.mxu0 0.0
  %6765 = vmatpush1.msra.mxu0 0.0
  %6766 = vmatprep.subr.mxu0 0.0
  %6767 = vmatpush1.msra.mxu0 0.0
  %6768 = vmatprep.subr.mxu0 0.0
  %6769 = vmatpush1.msra.mxu0 0.0
  %6770 = vmatprep.subr.mxu0 0.0
  %6771 = vmatpush1.msra.mxu0 0.0
  %6772 = vmatprep.subr.mxu0 0.0
  %6773 = vmatpush1.msra.mxu0 0.0
  %6774 = vmatprep.subr.mxu0 0.0
  %6775 = vmatpush1.msra.mxu0 0.0
  %6776 = vmatprep.subr.mxu0 0.0
  %6777 = vmatpush1.msra.mxu0 0.0
  %6778 = vmatprep.subr.mxu0 0.0
  %6779 = vmatpush1.msra.mxu0 0.0
  %6780 = vmatprep.subr.mxu0 0.0
  %6781 = vmatpush1.msra.mxu0 0.0
  %6782 = vmatprep.subr.mxu0 0.0
  %6783 = vmatpush1.msra.mxu0 0.0
  %6784 = vmatprep.subr.mxu0 0.0
  %6785 = vmatpush1.msra.mxu0 0.0
  %6786 = vmatprep.subr.mxu0 0.0
  %6787 = vmatpush1.msra.mxu0 0.0
  %6788 = vmatprep.subr.mxu0 0.0
  %6789 = vmatpush1.msra.mxu0 0.0
  %6790 = vmatprep.subr.mxu0 0.0
  %6791 = vmatpush1.msra.mxu0 0.0
  %6792 = vmatprep.subr.mxu0 0.0
  %6793 = vmatpush1.msra.mxu0 0.0
  %6794 = vmatprep.subr.mxu0 0.0
  %6795 = vmatpush1.msra.mxu0 0.0
  %6796 = vmatprep.subr.mxu0 0.0
  %6797 = vmatpush1.msra.mxu0 0.0
  %6798 = vmatprep.subr.mxu0 0.0
  %6799 = vmatpush1.msra.mxu0 0.0
  %6800 = vmatprep.subr.mxu0 0.0
  %6801 = vmatpush1.msra.mxu0 0.0
  %6802 = vmatprep.subr.mxu0 0.0
  %6803 = vmatpush1.msra.mxu0 0.0
  %6804 = vmatprep.subr.mxu0 0.0
  %6805 = vmatpush1.msra.mxu0 0.0
  %6806 = vmatprep.subr.mxu0 0.0
  %6807 = vmatpush1.msra.mxu0 0.0
  %6808 = vmatprep.subr.mxu0 0.0
  %6809 = vmatpush1.msra.mxu0 0.0
  %6810 = vmatprep.subr.mxu0 0.0
  %6811 = vmatpush1.msra.mxu0 0.0
  %6812 = vmatprep.mubr.f32.mxu0 0.0
  %6813 = vmatmul.mubr.f32.gmra.mrb[0].mxu0 %v6725
  %v6814 = vpop.f32.mrb[0].mxu0
  %v6815 = vadd.f32 %v6686, %v6814
  %v6816 = vpop.f32.mrb[0].mxu0
  %6817 = vmatprep.mubr.f32.mxu0 0.0
  %6818 = vmatmul.mubr.f32.gmra.mrb[0].mxu0 %v6728
  %v6819 = vpop.f32.mrb[0].mxu0
  %v6820 = vadd.f32 %v6691, %v6819
  %v6821 = vpop.f32.mrb[0].mxu0
  %6822 = vmatprep.mubr.f32.mxu0 0.0
  %6823 = vmatmul.mubr.f32.gmra.mrb[0].mxu0 %v6731
  %v6824 = vpop.f32.mrb[0].mxu0
  %v6825 = vadd.f32 %v6696, %v6824
  %v6826 = vpop.f32.mrb[0].mxu0
  %6827 = vmatprep.mubr.f32.mxu0 0.0
  %6828 = vmatmul.mubr.f32.gmra.mrb[0].mxu0 %v6734
  %v6829 = vpop.f32.mrb[0].mxu0
  %v6830 = vadd.f32 %v6701, %v6829
  %v6831 = vpop.f32.mrb[0].mxu0
  %6832 = vmatprep.mubr.f32.mxu0 0.0
  %6833 = vmatmul.mubr.f32.gmra.mrb[0].mxu0 %v6737
  %v6834 = vpop.f32.mrb[0].mxu0
  %v6835 = vadd.f32 %v6706, %v6834
  %v6836 = vpop.f32.mrb[0].mxu0
  %6837 = vmatprep.mubr.f32.mxu0 0.0
  %6838 = vmatmul.mubr.f32.gmra.mrb[0].mxu0 %v6740
  %v6839 = vpop.f32.mrb[0].mxu0
  %v6840 = vadd.f32 %v6711, %v6839
  %v6841 = vpop.f32.mrb[0].mxu0
  %6842 = vmatprep.mubr.f32.mxu0 0.0
  %6843 = vmatmul.mubr.f32.gmra.mrb[0].mxu0 %v6743
  %v6844 = vpop.f32.mrb[0].mxu0
  %v6845 = vadd.f32 %v6716, %v6844
  %v6846 = vpop.f32.mrb[0].mxu0
  %6847 = vmatprep.mubr.f32.mxu0 0.0
  %6848 = vmatmul.mubr.f32.gmra.mrb[0].mxu0 %v6746
  %v6849 = vpop.f32.mrb[0].mxu0
  %v6850 = vadd.f32 %v6721, %v6849
  %v6851 = vpop.f32.mrb[0].mxu0
  %6852 = vdwg.mxu0
  %v6853 = vld [vmem:[%s16] sm:$0x1]
  %v6855 = vlaneseq
  %v6856 = vshrl.u32 %v6855, 7
  %v6857 = vsub.s32 0, %v6856
  %v6858 = vrot.slane %v6853, %v6857
  %v6860 = vadd.f32 %v6815, %v6858
  %v6861 = vadd.f32 %v6820, %v6858
  %v6862 = vadd.f32 %v6825, %v6858
  %v6863 = vadd.f32 %v6830, %v6858
  %v6864 = vadd.f32 %v6835, %v6858
  %v6865 = vadd.f32 %v6840, %v6858
  %v6866 = vadd.f32 %v6845, %v6858
  %v6867 = vadd.f32 %v6850, %v6858
  %v6868 = vtanh.pop %v6860
  %v6869 = vtanh.pop %v6861
  %v6870 = vtanh.pop %v6862
  %v6871 = vtanh.pop %v6863
  %v6872 = vtanh.pop %v6864
  %v6873 = vtanh.pop %v6865
  %v6874 = vtanh.pop %v6866
  %v6875 = vtanh.pop %v6867
  %v6876 = vld [vmem:[%s17] sm:$0xff]
  %v6877 = vld [vmem:[%s17 + $0x8] sm:$0xff]
  %v6878 = vld [vmem:[%s17 + $0x10] sm:$0xff]
  %v6879 = vld [vmem:[%s17 + $0x18] sm:$0xff]
  %v6880 = vld [vmem:[%s18] sm:$0x1]
  %v6882 = vlaneseq
  %v6883 = vshrl.u32 %v6882, 7
  %v6884 = vsub.s32 0, %v6883
  %v6885 = vrot.slane %v6880, %v6884
  %v6888 = vsel %vm91, %v6868, 0
  %v6891 = vsel %vm91, %v6869, 0
  %v6894 = vsel %vm91, %v6870, 0
  %v6897 = vsel %vm91, %v6871, 0
  %v6900 = vsel %vm91, %v6872, 0
  %v6903 = vsel %vm91, %v6873, 0
  %v6906 = vsel %vm91, %v6874, 0
  %v6909 = vsel %vm91, %v6875, 0
  %6911 = vmatprep.subr.mxu0 0.0
  %6912 = vmatpush1.msra.mxu0 %v6876
  %6913 = vmatprep.subr.mxu0 0.0
  %6914 = vmatpush1.msra.mxu0 %v6877
  %6915 = vmatprep.subr.mxu0 0.0
  %6916 = vmatpush1.msra.mxu0 %v6878
  %6917 = vmatprep.subr.mxu0 0.0
  %6918 = vmatpush1.msra.mxu0 %v6879
  %6919 = vmatprep.subr.mxu0 0.0
  %6920 = vmatpush1.msra.mxu0 0.0
  %6921 = vmatprep.subr.mxu0 0.0
  %6922 = vmatpush1.msra.mxu0 0.0
  %6923 = vmatprep.subr.mxu0 0.0
  %6924 = vmatpush1.msra.mxu0 0.0
  %6925 = vmatprep.subr.mxu0 0.0
  %6926 = vmatpush1.msra.mxu0 0.0
  %6927 = vmatprep.subr.mxu0 0.0
  %6928 = vmatpush1.msra.mxu0 0.0
  %6929 = vmatprep.subr.mxu0 0.0
  %6930 = vmatpush1.msra.mxu0 0.0
  %6931 = vmatprep.subr.mxu0 0.0
  %6932 = vmatpush1.msra.mxu0 0.0
  %6933 = vmatprep.subr.mxu0 0.0
  %6934 = vmatpush1.msra.mxu0 0.0
  %6935 = vmatprep.subr.mxu0 0.0
  %6936 = vmatpush1.msra.mxu0 0.0
  %6937 = vmatprep.subr.mxu0 0.0
  %6938 = vmatpush1.msra.mxu0 0.0
  %6939 = vmatprep.subr.mxu0 0.0
  %6940 = vmatpush1.msra.mxu0 0.0
  %6941 = vmatprep.subr.mxu0 0.0
  %6942 = vmatpush1.msra.mxu0 0.0
  %6943 = vmatprep.subr.mxu0 0.0
  %6944 = vmatpush1.msra.mxu0 0.0
  %6945 = vmatprep.subr.mxu0 0.0
  %6946 = vmatpush1.msra.mxu0 0.0
  %6947 = vmatprep.subr.mxu0 0.0
  %6948 = vmatpush1.msra.mxu0 0.0
  %6949 = vmatprep.subr.mxu0 0.0
  %6950 = vmatpush1.msra.mxu0 0.0
  %6951 = vmatprep.subr.mxu0 0.0
  %6952 = vmatpush1.msra.mxu0 0.0
  %6953 = vmatprep.subr.mxu0 0.0
  %6954 = vmatpush1.msra.mxu0 0.0
  %6955 = vmatprep.subr.mxu0 0.0
  %6956 = vmatpush1.msra.mxu0 0.0
  %6957 = vmatprep.subr.mxu0 0.0
  %6958 = vmatpush1.msra.mxu0 0.0
  %6959 = vmatprep.subr.mxu0 0.0
  %6960 = vmatpush1.msra.mxu0 0.0
  %6961 = vmatprep.subr.mxu0 0.0
  %6962 = vmatpush1.msra.mxu0 0.0
  %6963 = vmatprep.subr.mxu0 0.0
  %6964 = vmatpush1.msra.mxu0 0.0
  %6965 = vmatprep.subr.mxu0 0.0
  %6966 = vmatpush1.msra.mxu0 0.0
  %6967 = vmatprep.subr.mxu0 0.0
  %6968 = vmatpush1.msra.mxu0 0.0
  %6969 = vmatprep.subr.mxu0 0.0
  %6970 = vmatpush1.msra.mxu0 0.0
  %6971 = vmatprep.subr.mxu0 0.0
  %6972 = vmatpush1.msra.mxu0 0.0
  %6973 = vmatprep.subr.mxu0 0.0
  %6974 = vmatpush1.msra.mxu0 0.0
  %6975 = vmatprep.mubr.f32.mxu0 0.0
  %6976 = vmatmul.mubr.f32.gmra.mrb[0].mxu0 %v6888
  %v6977 = vpop.f32.mrb[0].mxu0
  %v6978 = vadd.f32 %v6885, %v6977
  %v6979 = vpop.f32.mrb[0].mxu0
  %6980 = vmatprep.mubr.f32.mxu0 0.0
  %6981 = vmatmul.mubr.f32.gmra.mrb[0].mxu0 %v6891
  %v6982 = vpop.f32.mrb[0].mxu0
  %v6983 = vadd.f32 %v6885, %v6982
  %v6984 = vpop.f32.mrb[0].mxu0
  %6985 = vmatprep.mubr.f32.mxu0 0.0
  %6986 = vmatmul.mubr.f32.gmra.mrb[0].mxu0 %v6894
  %v6987 = vpop.f32.mrb[0].mxu0
  %v6988 = vadd.f32 %v6885, %v6987
  %v6989 = vpop.f32.mrb[0].mxu0
  %6990 = vmatprep.mubr.f32.mxu0 0.0
  %6991 = vmatmul.mubr.f32.gmra.mrb[0].mxu0 %v6897
  %v6992 = vpop.f32.mrb[0].mxu0
  %v6993 = vadd.f32 %v6885, %v6992
  %v6994 = vpop.f32.mrb[0].mxu0
  %6995 = vmatprep.mubr.f32.mxu0 0.0
  %6996 = vmatmul.mubr.f32.gmra.mrb[0].mxu0 %v6900
  %v6997 = vpop.f32.mrb[0].mxu0
  %v6998 = vadd.f32 %v6885, %v6997
  %v6999 = vpop.f32.mrb[0].mxu0
  %7000 = vmatprep.mubr.f32.mxu0 0.0
  %7001 = vmatmul.mubr.f32.gmra.mrb[0].mxu0 %v6903
  %v7002 = vpop.f32.mrb[0].mxu0
  %v7003 = vadd.f32 %v6885, %v7002
  %v7004 = vpop.f32.mrb[0].mxu0
  %7005 = vmatprep.mubr.f32.mxu0 0.0
  %7006 = vmatmul.mubr.f32.gmra.mrb[0].mxu0 %v6906
  %v7007 = vpop.f32.mrb[0].mxu0
  %v7008 = vadd.f32 %v6885, %v7007
  %v7009 = vpop.f32.mrb[0].mxu0
  %7010 = vmatprep.mubr.f32.mxu0 0.0
  %7011 = vmatmul.mubr.f32.gmra.mrb[0].mxu0 %v6909
  %v7012 = vpop.f32.mrb[0].mxu0
  %v7013 = vadd.f32 %v6885, %v7012
  %v7014 = vpop.f32.mrb[0].mxu0
  %7015 = vdwg.mxu0
  %vm7016 = vcmask 130048
  %v7017 = vsel %vm7016, %v6978, -inf
  %7018 = vmax.xlane.f32.xlu0 %v7017
  %v7019 = vpop.xlane.xlu0 %7018
  %v7020 = vsel %vm7016, %v6983, -inf
  %7021 = vmax.xlane.f32.xlu0 %v7020
  %v7022 = vpop.xlane.xlu0 %7021
  %v7023 = vsel %vm7016, %v6988, -inf
  %7024 = vmax.xlane.f32.xlu0 %v7023
  %v7025 = vpop.xlane.xlu0 %7024
  %v7026 = vsel %vm7016, %v6993, -inf
  %7027 = vmax.xlane.f32.xlu0 %v7026
  %v7028 = vpop.xlane.xlu0 %7027
  %v7029 = vsel %vm7016, %v6998, -inf
  %7030 = vmax.xlane.f32.xlu0 %v7029
  %v7031 = vpop.xlane.xlu0 %7030
  %v7032 = vsel %vm7016, %v7003, -inf
  %7033 = vmax.xlane.f32.xlu0 %v7032
  %v7034 = vpop.xlane.xlu0 %7033
  %v7035 = vsel %vm7016, %v7008, -inf
  %7036 = vmax.xlane.f32.xlu0 %v7035
  %v7037 = vpop.xlane.xlu0 %7036
  %v7038 = vsel %vm7016, %v7013, -inf
  %7039 = vmax.xlane.f32.xlu0 %v7038
  %v7040 = vpop.xlane.xlu0 %7039
  %v7041 = vsub.f32 %v6978, %v7019
  %v7042 = vsub.f32 %v6983, %v7022
  %v7043 = vsub.f32 %v6988, %v7025
  %v7044 = vsub.f32 %v6993, %v7028
  %v7045 = vsub.f32 %v6998, %v7031
  %v7046 = vsub.f32 %v7003, %v7034
  %v7047 = vsub.f32 %v7008, %v7037
  %v7048 = vsub.f32 %v7013, %v7040
  %v7049 = vmul.f32 %v7041, 1.442695
  %v7050 = vpow.pop %v7049
  %v7051 = vmul.f32 %v7042, 1.442695
  %v7052 = vpow.pop %v7051
  %v7053 = vmul.f32 %v7043, 1.442695
  %v7054 = vpow.pop %v7053
  %v7055 = vmul.f32 %v7044, 1.442695
  %v7056 = vpow.pop %v7055
  %v7057 = vmul.f32 %v7045, 1.442695
  %v7058 = vpow.pop %v7057
  %v7059 = vmul.f32 %v7046, 1.442695
  %v7060 = vpow.pop %v7059
  %v7061 = vmul.f32 %v7047, 1.442695
  %v7062 = vpow.pop %v7061
  %v7063 = vmul.f32 %v7048, 1.442695
  %v7064 = vpow.pop %v7063
  %v7065 = vsel %vm7016, %v7050, 0.0
  %7066 = vadd.xlane.f32.xlu0 %v7065
  %v7067 = vpop.xlane.xlu0 %7066
  %v7068 = vsel %vm7016, %v7052, 0.0
  %7069 = vadd.xlane.f32.xlu0 %v7068
  %v7070 = vpop.xlane.xlu0 %7069
  %v7071 = vsel %vm7016, %v7054, 0.0
  %7072 = vadd.xlane.f32.xlu0 %v7071
  %v7073 = vpop.xlane.xlu0 %7072
  %v7074 = vsel %vm7016, %v7056, 0.0
  %7075 = vadd.xlane.f32.xlu0 %v7074
  %v7076 = vpop.xlane.xlu0 %7075
  %v7077 = vsel %vm7016, %v7058, 0.0
  %7078 = vadd.xlane.f32.xlu0 %v7077
  %v7079 = vpop.xlane.xlu0 %7078
  %v7080 = vsel %vm7016, %v7060, 0.0
  %7081 = vadd.xlane.f32.xlu0 %v7080
  %v7082 = vpop.xlane.xlu0 %7081
  %v7083 = vsel %vm7016, %v7062, 0.0
  %7084 = vadd.xlane.f32.xlu0 %v7083
  %v7085 = vpop.xlane.xlu0 %7084
  %v7086 = vsel %vm7016, %v7064, 0.0
  %7087 = vadd.xlane.f32.xlu0 %v7086
  %v7088 = vpop.xlane.xlu0 %7087
  %v7089 = vlog2.pop %v7067
  %v7090 = vmul.f32 %v7089, 0.6931472
  %v7091 = vlog2.pop %v7070
  %v7092 = vmul.f32 %v7091, 0.6931472
  %v7093 = vlog2.pop %v7073
  %v7094 = vmul.f32 %v7093, 0.6931472
  %v7095 = vlog2.pop %v7076
  %v7096 = vmul.f32 %v7095, 0.6931472
  %v7097 = vlog2.pop %v7079
  %v7098 = vmul.f32 %v7097, 0.6931472
  %v7099 = vlog2.pop %v7082
  %v7100 = vmul.f32 %v7099, 0.6931472
  %v7101 = vlog2.pop %v7085
  %v7102 = vmul.f32 %v7101, 0.6931472
  %v7103 = vlog2.pop %v7088
  %v7104 = vmul.f32 %v7103, 0.6931472
  %v7105 = vadd.f32 %v7019, %v7090
  %v7106 = vadd.f32 %v7022, %v7092
  %v7107 = vadd.f32 %v7025, %v7094
  %v7108 = vadd.f32 %v7028, %v7096
  %v7109 = vadd.f32 %v7031, %v7098
  %v7110 = vadd.f32 %v7034, %v7100
  %v7111 = vadd.f32 %v7037, %v7102
  %v7112 = vadd.f32 %v7040, %v7104
  %v7113 = vsub.f32 %v6978, %v7105
  %v7114 = vsub.f32 %v6983, %v7106
  %v7115 = vsub.f32 %v6988, %v7107
  %v7116 = vsub.f32 %v6993, %v7108
  %v7117 = vsub.f32 %v6998, %v7109
  %v7118 = vsub.f32 %v7003, %v7110
  %v7119 = vsub.f32 %v7008, %v7111
  %v7120 = vsub.f32 %v7013, %v7112
  %7121 = vst.msk [vmem:[%s19] sm:$0xff] %vm7016, %v7113
  %7122 = vst.msk [vmem:[%s19 + $0x8] sm:$0xff] %vm7016, %v7114
  %7123 = vst.msk [vmem:[%s19 + $0x10] sm:$0xff] %vm7016, %v7115
  %7124 = vst.msk [vmem:[%s19 + $0x18] sm:$0xff] %vm7016, %v7116
  %7125 = vst.msk [vmem:[%s19 + $0x20] sm:$0xff] %vm7016, %v7117
  %7126 = vst.msk [vmem:[%s19 + $0x28] sm:$0xff] %vm7016, %v7118
  %7127 = vst.msk [vmem:[%s19 + $0x30] sm:$0xff] %vm7016, %v7119
  %7128 = vst.msk [vmem:[%s19 + $0x38] sm:$0xff] %vm7016, %v7120
  // Predicated region
  $region78: #{encoder_decoder_forward.1} parent=0 // pred_check
    _
  $region79: #{encoder_decoder_forward.1} parent=0 // pred_check_branch
    %7130 = sbr.rel (0) target = $region81
  $region80: #{encoder_decoder_forward.1} parent=0 // pred_region
    _
  $region81: #{encoder_decoder_forward.1} parent=0 // pred_fallthru
    _
  // Predicated region
  $region82: #{encoder_decoder_forward.1} parent=0 // pred_check
    _
  $region83: #{encoder_decoder_forward.1} parent=0 // pred_check_branch
    %7132 = sbr.rel (0) target = $region85
  $region84: #{encoder_decoder_forward.1} parent=0 // pred_region
    _
  $region85: #{encoder_decoder_forward.1} parent=0 // pred_fallthru
    _
  // Predicated region
  $region86: #{encoder_decoder_forward.1} parent=0 // pred_check
    _
  $region87: #{encoder_decoder_forward.1} parent=0 // pred_check_branch
    %7134 = sbr.rel (0) target = $region89
  $region88: #{encoder_decoder_forward.1} parent=0 // pred_region
    _
  $region89: #{encoder_decoder_forward.1} parent=0 // pred_fallthru
    _
  // Predicated region
  $region90: #{encoder_decoder_forward.1} parent=0 // pred_check
    _
  $region91: #{encoder_decoder_forward.1} parent=0 // pred_check_branch
    %7136 = sbr.rel (0) target = $region93
  $region92: #{encoder_decoder_forward.1} parent=0 // pred_region
    _
  $region93: #{encoder_decoder_forward.1} parent=0 // pred_fallthru
    _

</llo_original>
